<compile_context>
chip_gen: v6e
topology: v6e:2x2x1
jax: 0.10.0
libtpu: 0.0.40
codegen_flags: <defaults>
</compile_context>

<pallas_src>
import functools
import math

import jax
import jax.numpy as jnp
from jax.experimental import pallas as pl
from jax.experimental.pallas import tpu as pltpu


def _round_up(x, m):
    return (x + m - 1) // m * m


# ----------------------------------------------------------------------------
# Kernel 1: fused Conv3x3 (padding=1) + folded BatchNorm + ReLU, NHWC layout
# ----------------------------------------------------------------------------
def _conv3x3_kernel(x_ref, w_ref, s_ref, b_ref, o_ref, *, H, W):
    """x_ref : (1, H+2, W+2, C)  bf16 zero-padded halo block
       w_ref : (9, C, Cout)      bf16, tap-major (tap = kh*3 + kw)
       s_ref : (1, Cout)         f32 folded BN scale
       b_ref : (1, Cout)         f32 folded BN shift (conv bias included)
       o_ref : (1, H, W, Cout)."""
    C = x_ref.shape[-1]
    Cout = o_ref.shape[-1]
    acc = jnp.zeros((H * W, Cout), jnp.float32)
    for kh in range(3):
        for kw in range(3):
            xs = x_ref[0, kh:kh + H, kw:kw + W, :].reshape(H * W, C)
            acc = acc + jnp.dot(xs, w_ref[kh * 3 + kw],
                                preferred_element_type=jnp.float32)
    y = jnp.maximum(acc * s_ref[...] + b_ref[...], 0.0)
    o_ref[...] = y.reshape(1, H, W, Cout).astype(o_ref.dtype)


def conv3x3_bn_relu(x_nhwc, prep, out_dtype):
    """x_nhwc: (B, H, W, C).  prep: dict(w=(9,C,Cout) bf16, scale/shift=(1,Cout) f32)."""
    B, H, W, C = x_nhwc.shape
    Cout = prep['w'].shape[-1]
    # Spatial zero-pad (padding=1) kept as tiny bf16 JAX glue.
    xp = jnp.pad(x_nhwc.astype(jnp.bfloat16),
                 ((0, 0), (1, 1), (1, 1), (0, 0)))
    return pl.pallas_call(
        functools.partial(_conv3x3_kernel, H=H, W=W),
        out_shape=jax.ShapeDtypeStruct((B, H, W, Cout), out_dtype),
        grid_spec=pltpu.PrefetchScalarGridSpec(
            num_scalar_prefetch=0,
            grid=(B,),
            in_specs=[
                pl.BlockSpec((1, H + 2, W + 2, C), lambda b: (b, 0, 0, 0)),
                pl.BlockSpec((9, C, Cout), lambda b: (0, 0, 0)),
                pl.BlockSpec((1, Cout), lambda b: (0, 0)),
                pl.BlockSpec((1, Cout), lambda b: (0, 0)),
            ],
            out_specs=pl.BlockSpec((1, H, W, Cout), lambda b: (b, 0, 0, 0)),
        ),
        compiler_params=pltpu.CompilerParams(
            dimension_semantics=("parallel",)),
    )(xp, prep['w'], prep['scale'], prep['shift'])


# ----------------------------------------------------------------------------
# Kernel 2: matmul + per-column affine + activation (used for ConvTranspose)
# ----------------------------------------------------------------------------
def _mm_kernel(x_ref, w_ref, s_ref, b_ref, o_ref, acc_ref, *, act, nk):
    partial = jnp.dot(x_ref[...], w_ref[...],
                      preferred_element_type=jnp.float32)

    def epilogue(total):
        y = total * s_ref[...] + b_ref[...]
        if act == "relu":
            y = jnp.maximum(y, 0.0)
        o_ref[...] = y.astype(o_ref.dtype)

    if nk == 1:
        epilogue(partial)
    else:
        k = pl.program_id(2)

        @pl.when(k == 0)
        def _():
            acc_ref[...] = partial

        @pl.when(jnp.logical_and(k > 0, k < nk - 1))
        def _():
            acc_ref[...] += partial

        @pl.when(k == nk - 1)
        def _():
            # Final accumulate fused into the epilogue (no extra load/store).
            epilogue(acc_ref[...] + partial)


def matmul_affine_act(x, w, scale=None, shift=None, act="none",
                      out_dtype=jnp.bfloat16,
                      tm_pref=256, tn_pref=128, tk_pref=2048):
    """out = act((x @ w) * scale + shift); bf16 MXU operands, f32 accumulation."""
    M, K = x.shape
    K2, N = w.shape
    assert K == K2
    if scale is None:
        scale = jnp.ones((N,), jnp.float32)
    if shift is None:
        shift = jnp.zeros((N,), jnp.float32)

    # ---- tile selection ----
    tm = min(tm_pref, _round_up(M, 16))          # bf16 packs 2 rows / sublane
    Mp = _round_up(M, tm)
    tn = min(tn_pref, _round_up(N, 128))         # lane-aligned
    Np = _round_up(N, tn)
    Kp = _round_up(K, 128)
    if Kp <= tk_pref:
        tk = Kp                                   # single reduction step
    else:
        tk = 128                                  # largest 128-mult divisor of Kp
        for cand in range(tk_pref - tk_pref % 128, 127, -128):
            if Kp % cand == 0:
                tk = cand
                break
    nk = Kp // tk

    xp = x.astype(jnp.bfloat16)
    if (Mp, Kp) != (M, K):
        xp = jnp.pad(xp, ((0, Mp - M), (0, Kp - K)))
    wp = w.astype(jnp.bfloat16)
    if (Kp, Np) != (K, N):
        wp = jnp.pad(wp, ((0, Kp - K), (0, Np - N)))
    sp = jnp.pad(scale.astype(jnp.float32), (0, Np - N)).reshape(1, Np)
    bp = jnp.pad(shift.astype(jnp.float32), (0, Np - N)).reshape(1, Np)

    out = pl.pallas_call(
        functools.partial(_mm_kernel, act=act, nk=nk),
        out_shape=jax.ShapeDtypeStruct((Mp, Np), out_dtype),
        grid_spec=pltpu.PrefetchScalarGridSpec(
            num_scalar_prefetch=0,
            grid=(Mp // tm, Np // tn, nk),
            in_specs=[
                pl.BlockSpec((tm, tk), lambda i, j, k: (i, k)),
                pl.BlockSpec((tk, tn), lambda i, j, k: (k, j)),
                pl.BlockSpec((1, tn), lambda i, j, k: (0, j)),
                pl.BlockSpec((1, tn), lambda i, j, k: (0, j)),
            ],
            out_specs=pl.BlockSpec((tm, tn), lambda i, j, k: (i, j)),
            scratch_shapes=[pltpu.VMEM((tm, tn), jnp.float32)],
        ),
        compiler_params=pltpu.CompilerParams(
            dimension_semantics=("parallel", "parallel", "arbitrary")),
    )(xp, wp, sp, bp)
    if (Mp, Np) != (M, N):
        out = out[:M, :N]
    return out


# ----------------------------------------------------------------------------
# Up.forward (NHWC internally; NCHW at the boundary, like PyTorch)
# ----------------------------------------------------------------------------
def up_forward(x1, x2, prep):
    B, Cin, H1, W1 = x1.shape
    Cmid = prep['up']['shift'].shape[0] // 4

    # NCHW -> NHWC once; bf16 feeds for the MXU.
    x1n = jnp.transpose(x1, (0, 2, 3, 1)).astype(jnp.bfloat16)
    x2n = jnp.transpose(x2, (0, 2, 3, 1)).astype(jnp.bfloat16)

    # ConvTranspose2d(k=2, s=2): stride == kernel -> exact matmul + pixel shuffle.
    xm = x1n.reshape(B * H1 * W1, Cin)
    y = matmul_affine_act(xm, prep['up']['w'], None, prep['up']['shift'],
                          act="none", out_dtype=jnp.bfloat16, tn_pref=128)
    y = y.reshape(B, H1, W1, Cmid, 2, 2).transpose(0, 1, 4, 2, 5, 3)
    x1u = y.reshape(B, 2 * H1, 2 * W1, Cmid)

    # Pad to the skip connection's spatial size (same split as F.pad in PyTorch).
    diffY = x2n.shape[1] - x1u.shape[1]
    diffX = x2n.shape[2] - x1u.shape[2]
    x1u = jnp.pad(x1u, ((0, 0),
                        (diffY // 2, diffY - diffY // 2),
                        (diffX // 2, diffX - diffX // 2),
                        (0, 0)))

    # Channel concat (NHWC: channels are last).  Order matches torch.cat([x2, x1]).
    # TODO(synk): could be fused into conv1 as two K-range inputs to skip this copy.
    x = jnp.concatenate([x2n, x1u], axis=-1)

    x = conv3x3_bn_relu(x, prep['c1'], jnp.bfloat16)   # intermediate stays bf16
    x = conv3x3_bn_relu(x, prep['c2'], jnp.float32)    # final output f32
    return jnp.transpose(x, (0, 3, 1, 2))              # back to NCHW


# ----------------------------------------------------------------------------
# Parameters: PyTorch-layout init + one-time inference-layout preparation
# ----------------------------------------------------------------------------
def _init_params(key, in_channels, out_channels):
    keys = iter(jax.random.split(key, 32))

    def nrm(shape, scale):
        return (scale * jax.random.normal(next(keys), shape)).astype(jnp.float32)

    def conv2d(cin, cout, k):
        fan = float(cin * k * k)
        return dict(w=nrm((cout, cin, k, k), 1.0 / math.sqrt(fan)),
                    b=nrm((cout,), 0.01))

    def bn(c):
        return dict(gamma=1.0 + nrm((c,), 0.05), beta=nrm((c,), 0.05),
                    mean=jnp.zeros((c,), jnp.float32),
                    var=jnp.ones((c,), jnp.float32))

    cmid = in_channels // 2
    return dict(
        up=dict(w=nrm((in_channels, cmid, 2, 2), 1.0 / math.sqrt(in_channels * 4.0)),
                b=nrm((cmid,), 0.01)),
        conv=dict(c1=conv2d(in_channels, out_channels, 3), bn1=bn(out_channels),
                  c2=conv2d(out_channels, out_channels, 3), bn2=bn(out_channels)),
    )


def _prepare_params(params):
    """One-time: cast weights to bf16, reshape to kernel layouts, fold BN."""
    up_w = params['up']['w']
    Cin, Cmid = up_w.shape[0], up_w.shape[1]
    up = dict(w=up_w.reshape(Cin, Cmid * 4).astype(jnp.bfloat16),
              shift=jnp.repeat(params['up']['b'], 4).astype(jnp.float32))

    def prep_conv(c, bn):
        cout, cin = c['w'].shape[0], c['w'].shape[1]
        # (Cout, Cin, 3, 3) -> (3, 3, Cin, Cout) -> (9, Cin, Cout), tap = kh*3+kw
        w = c['w'].transpose(2, 3, 1, 0).reshape(9, cin, cout).astype(jnp.bfloat16)
        inv = bn['gamma'] / jnp.sqrt(bn['var'] + 1e-5)
        scale = inv.astype(jnp.float32).reshape(1, cout)
        shift = ((c['b'] - bn['mean']) * inv + bn['beta']
                 ).astype(jnp.float32).reshape(1, cout)
        return dict(w=w, scale=scale, shift=shift)

    return dict(up=up,
                c1=prep_conv(params['conv']['c1'], params['conv']['bn1']),
                c2=prep_conv(params['conv']['c2'], params['conv']['bn2']))


# ----------------------------------------------------------------------------
if __name__ == "__main__":
    in_channels, out_channels = 128, 64
    B = 2
    H1, W1 = 8, 8            # x1: coarse feature map (to be upsampled)
    H2, W2 = 16, 16          # x2: skip connection (in_channels // 2 channels)

    root = jax.random.PRNGKey(0)
    kp, kx1, kx2 = jax.random.split(root, 3)
    params = _init_params(kp, in_channels, out_channels)
    prep = _prepare_params(params)           # one-time weight/BN preparation
    x1 = jax.random.normal(kx1, (B, in_channels, H1, W1), jnp.float32)
    x2 = jax.random.normal(kx2, (B, in_channels // 2, H2, W2), jnp.float32)

    fwd = jax.jit(up_forward)
    out = fwd(x1, x2, prep)
    jax.block_until_ready(out)
    assert out.shape == (B, out_channels, H2, W2), out.shape
    print("KERNEL_OK")
</pallas_src>

<mosaic_0001>
module attributes {stable_mosaic.version = 11 : i64} {
  func.func @_mm_kernel(%arg0: i32, %arg1: i32, %arg2: i32, %arg3: memref<128x128xbf16, #tpu.memory_space<vmem>>, %arg4: memref<128x128xbf16, #tpu.memory_space<vmem>>, %arg5: memref<1x128xf32, #tpu.memory_space<vmem>>, %arg6: memref<1x128xf32, #tpu.memory_space<vmem>>, %arg7: memref<128x128xbf16, #tpu.memory_space<vmem>>, %arg8: memref<128x128xf32, #tpu.memory_space<vmem>>) attributes {dimension_semantics = [#tpu.dimension_semantics<parallel>, #tpu.dimension_semantics<parallel>, #tpu.dimension_semantics<arbitrary>], iteration_bounds = array<i64: 1, 2, 1>, scalar_prefetch = 0 : i64, scratch_operands = 1 : i64, tpu.core_type = #tpu.core_type<tc>, window_params = [{transform_indices = @transform_0, window_bounds = array<i64: 128, 128>}, {transform_indices = @transform_1, window_bounds = array<i64: 128, 128>}, {transform_indices = @transform_2, window_bounds = array<i64: 1, 128>}, {transform_indices = @transform_3, window_bounds = array<i64: 1, 128>}, {transform_indices = @transform_4, window_bounds = array<i64: 128, 128>}]} {
    %c0 = arith.constant 0 : index
    %c0_0 = arith.constant 0 : index
    %0 = vector.load %arg3[%c0, %c0_0] : memref<128x128xbf16, #tpu.memory_space<vmem>>, vector<128x128xbf16>
    %c0_1 = arith.constant 0 : index
    %c0_2 = arith.constant 0 : index
    %1 = vector.load %arg4[%c0_1, %c0_2] : memref<128x128xbf16, #tpu.memory_space<vmem>>, vector<128x128xbf16>
    %cst = arith.constant dense<0.000000e+00> : vector<128x128xf32>
    %2 = tpu.matmul %0, %1, %cst {dimension_numbers = #tpu.dot_dimension_numbers<[1], [0], [0], [1], [0, 0, 1, 1], [], []>} : vector<128x128xbf16>, vector<128x128xbf16>, vector<128x128xf32> -> vector<128x128xf32>
    %c0_3 = arith.constant 0 : index
    %c0_4 = arith.constant 0 : index
    %3 = vector.load %arg5[%c0_3, %c0_4] : memref<1x128xf32, #tpu.memory_space<vmem>>, vector<1x128xf32>
    %4 = vector.broadcast %3 : vector<1x128xf32> to vector<128x128xf32>
    %5 = arith.mulf %2, %4 : vector<128x128xf32>
    %c0_5 = arith.constant 0 : index
    %c0_6 = arith.constant 0 : index
    %6 = vector.load %arg6[%c0_5, %c0_6] : memref<1x128xf32, #tpu.memory_space<vmem>>, vector<1x128xf32>
    %7 = vector.broadcast %6 : vector<1x128xf32> to vector<128x128xf32>
    %8 = arith.addf %5, %7 : vector<128x128xf32>
    %9 = arith.truncf %8 : vector<128x128xf32> to vector<128x128xbf16>
    %c0_7 = arith.constant 0 : index
    %c0_8 = arith.constant 0 : index
    %10 = vector.load %arg7[%c0_7, %c0_8] : memref<128x128xbf16, #tpu.memory_space<vmem>>, vector<128x128xbf16>
    tpu.vector_store %arg7[%c0_7, %c0_8], %9 {strides = array<i32>} : memref<128x128xbf16, #tpu.memory_space<vmem>>, vector<128x128xbf16>,
    return
  }
  func.func @transform_0(%arg0: i32, %arg1: i32, %arg2: i32) -> (i32, i32) {
    %c0_i32 = arith.constant 0 : i32
    return %arg0, %arg2 : i32, i32
  }
  func.func @transform_1(%arg0: i32, %arg1: i32, %arg2: i32) -> (i32, i32) {
    %c0_i32 = arith.constant 0 : i32
    return %arg2, %arg1 : i32, i32
  }
  func.func @transform_2(%arg0: i32, %arg1: i32, %arg2: i32) -> (i32, i32) {
    %c0_i32 = arith.constant 0 : i32
    %c0_i32_0 = arith.constant 0 : i32
    return %c0_i32, %arg1 : i32, i32
  }
  func.func @transform_3(%arg0: i32, %arg1: i32, %arg2: i32) -> (i32, i32) {
    %c0_i32 = arith.constant 0 : i32
    %c0_i32_0 = arith.constant 0 : i32
    return %c0_i32, %arg1 : i32, i32
  }
  func.func @transform_4(%arg0: i32, %arg1: i32, %arg2: i32) -> (i32, i32) {
    %c0_i32 = arith.constant 0 : i32
    return %arg0, %arg1 : i32, i32
  }
}

module attributes {stable_mosaic.version = 11 : i64} {
  func.func @_conv3x3_kernel(%arg0: i32, %arg1: memref<1x18x18x128xbf16, #tpu.memory_space<vmem>>, %arg2: memref<9x128x64xbf16, #tpu.memory_space<vmem>>, %arg3: memref<1x64xf32, #tpu.memory_space<vmem>>, %arg4: memref<1x64xf32, #tpu.memory_space<vmem>>, %arg5: memref<1x16x16x64xbf16, #tpu.memory_space<vmem>>) attributes {dimension_semantics = [#tpu.dimension_semantics<parallel>], iteration_bounds = array<i64: 2>, scalar_prefetch = 0 : i64, scratch_operands = 0 : i64, tpu.core_type = #tpu.core_type<tc>, window_params = [{transform_indices = @transform_0, window_bounds = array<i64: 1, 18, 18, 128>}, {pipeline_mode = #tpu.pipeline_mode<synchronous>, transform_indices = @transform_1, window_bounds = array<i64: 9, 128, 64>}, {pipeline_mode = #tpu.pipeline_mode<synchronous>, transform_indices = @transform_2, window_bounds = array<i64: 1, 64>}, {pipeline_mode = #tpu.pipeline_mode<synchronous>, transform_indices = @transform_3, window_bounds = array<i64: 1, 64>}, {transform_indices = @transform_4, window_bounds = array<i64: 1, 16, 16, 64>}]} {
    %cst = arith.constant 0.000000e+00 : f32
    %0 = vector.broadcast %cst : f32 to vector<256x64xf32>
    %c0 = arith.constant 0 : index
    %c0_0 = arith.constant 0 : index
    %c0_1 = arith.constant 0 : index
    %c0_2 = arith.constant 0 : index
    %1 = vector.load %arg1[%c0, %c0_0, %c0_1, %c0_2] : memref<1x18x18x128xbf16, #tpu.memory_space<vmem>>, vector<1x16x16x128xbf16>
    %2 = vector.shape_cast %1 : vector<1x16x16x128xbf16> to vector<16x16x128xbf16>
    %3 = vector.shape_cast %2 : vector<16x16x128xbf16> to vector<256x128xbf16>
    %c0_3 = arith.constant 0 : index
    %c0_4 = arith.constant 0 : index
    %c0_5 = arith.constant 0 : index
    %4 = vector.load %arg2[%c0_3, %c0_4, %c0_5] : memref<9x128x64xbf16, #tpu.memory_space<vmem>>, vector<1x128x64xbf16>
    %5 = vector.shape_cast %4 : vector<1x128x64xbf16> to vector<128x64xbf16>
    %cst_6 = arith.constant dense<0.000000e+00> : vector<256x64xf32>
    %6 = tpu.matmul %3, %5, %cst_6 {dimension_numbers = #tpu.dot_dimension_numbers<[1], [0], [0], [1], [0, 0, 1, 1], [], []>} : vector<256x128xbf16>, vector<128x64xbf16>, vector<256x64xf32> -> vector<256x64xf32>
    %7 = arith.addf %0, %6 : vector<256x64xf32>
    %c0_7 = arith.constant 0 : index
    %c0_8 = arith.constant 0 : index
    %c1 = arith.constant 1 : index
    %c0_9 = arith.constant 0 : index
    %8 = vector.load %arg1[%c0_7, %c0_8, %c1, %c0_9] : memref<1x18x18x128xbf16, #tpu.memory_space<vmem>>, vector<1x16x16x128xbf16>
    %9 = vector.shape_cast %8 : vector<1x16x16x128xbf16> to vector<16x16x128xbf16>
    %10 = vector.shape_cast %9 : vector<16x16x128xbf16> to vector<256x128xbf16>
    %c1_10 = arith.constant 1 : index
    %c0_11 = arith.constant 0 : index
    %c0_12 = arith.constant 0 : index
    %11 = vector.load %arg2[%c1_10, %c0_11, %c0_12] : memref<9x128x64xbf16, #tpu.memory_space<vmem>>, vector<1x128x64xbf16>
    %12 = vector.shape_cast %11 : vector<1x128x64xbf16> to vector<128x64xbf16>
    %cst_13 = arith.constant dense<0.000000e+00> : vector<256x64xf32>
    %13 = tpu.matmul %10, %12, %cst_13 {dimension_numbers = #tpu.dot_dimension_numbers<[1], [0], [0], [1], [0, 0, 1, 1], [], []>} : vector<256x128xbf16>, vector<128x64xbf16>, vector<256x64xf32> -> vector<256x64xf32>
    %14 = arith.addf %7, %13 : vector<256x64xf32>
    %c0_14 = arith.constant 0 : index
    %c0_15 = arith.constant 0 : index
    %c2 = arith.constant 2 : index
    %c0_16 = arith.constant 0 : index
    %15 = vector.load %arg1[%c0_14, %c0_15, %c2, %c0_16] : memref<1x18x18x128xbf16, #tpu.memory_space<vmem>>, vector<1x16x16x128xbf16>
    %16 = vector.shape_cast %15 : vector<1x16x16x128xbf16> to vector<16x16x128xbf16>
    %17 = vector.shape_cast %16 : vector<16x16x128xbf16> to vector<256x128xbf16>
    %c2_17 = arith.constant 2 : index
    %c0_18 = arith.constant 0 : index
    %c0_19 = arith.constant 0 : index
    %18 = vector.load %arg2[%c2_17, %c0_18, %c0_19] : memref<9x128x64xbf16, #tpu.memory_space<vmem>>, vector<1x128x64xbf16>
    %19 = vector.shape_cast %18 : vector<1x128x64xbf16> to vector<128x64xbf16>
    %cst_20 = arith.constant dense<0.000000e+00> : vector<256x64xf32>
    %20 = tpu.matmul %17, %19, %cst_20 {dimension_numbers = #tpu.dot_dimension_numbers<[1], [0], [0], [1], [0, 0, 1, 1], [], []>} : vector<256x128xbf16>, vector<128x64xbf16>, vector<256x64xf32> -> vector<256x64xf32>
    %21 = arith.addf %14, %20 : vector<256x64xf32>
    %c0_21 = arith.constant 0 : index
    %c1_22 = arith.constant 1 : index
    %c0_23 = arith.constant 0 : index
    %c0_24 = arith.constant 0 : index
    %22 = vector.load %arg1[%c0_21, %c1_22, %c0_23, %c0_24] : memref<1x18x18x128xbf16, #tpu.memory_space<vmem>>, vector<1x16x16x128xbf16>
    %23 = vector.shape_cast %22 : vector<1x16x16x128xbf16> to vector<16x16x128xbf16>
    %24 = vector.shape_cast %23 : vector<16x16x128xbf16> to vector<256x128xbf16>
    %c3 = arith.constant 3 : index
    %c0_25 = arith.constant 0 : index
    %c0_26 = arith.constant 0 : index
    %25 = vector.load %arg2[%c3, %c0_25, %c0_26] : memref<9x128x64xbf16, #tpu.memory_space<vmem>>, vector<1x128x64xbf16>
    %26 = vector.shape_cast %25 : vector<1x128x64xbf16> to vector<128x64xbf16>
    %cst_27 = arith.constant dense<0.000000e+00> : vector<256x64xf32>
    %27 = tpu.matmul %24, %26, %cst_27 {dimension_numbers = #tpu.dot_dimension_numbers<[1], [0], [0], [1], [0, 0, 1, 1], [], []>} : vector<256x128xbf16>, vector<128x64xbf16>, vector<256x64xf32> -> vector<256x64xf32>
    %28 = arith.addf %21, %27 : vector<256x64xf32>
    %c0_28 = arith.constant 0 : index
    %c1_29 = arith.constant 1 : index
    %c1_30 = arith.constant 1 : index
    %c0_31 = arith.constant 0 : index
    %29 = vector.load %arg1[%c0_28, %c1_29, %c1_30, %c0_31] : memref<1x18x18x128xbf16, #tpu.memory_space<vmem>>, vector<1x16x16x128xbf16>
    %30 = vector.shape_cast %29 : vector<1x16x16x128xbf16> to vector<16x16x128xbf16>
    %31 = vector.shape_cast %30 : vector<16x16x128xbf16> to vector<256x128xbf16>
    %c4 = arith.constant 4 : index
    %c0_32 = arith.constant 0 : index
    %c0_33 = arith.constant 0 : index
    %32 = vector.load %arg2[%c4, %c0_32, %c0_33] : memref<9x128x64xbf16, #tpu.memory_space<vmem>>, vector<1x128x64xbf16>
    %33 = vector.shape_cast %32 : vector<1x128x64xbf16> to vector<128x64xbf16>
    %cst_34 = arith.constant dense<0.000000e+00> : vector<256x64xf32>
    %34 = tpu.matmul %31, %33, %cst_34 {dimension_numbers = #tpu.dot_dimension_numbers<[1], [0], [0], [1], [0, 0, 1, 1], [], []>} : vector<256x128xbf16>, vector<128x64xbf16>, vector<256x64xf32> -> vector<256x64xf32>
    %35 = arith.addf %28, %34 : vector<256x64xf32>
    %c0_35 = arith.constant 0 : index
    %c1_36 = arith.constant 1 : index
    %c2_37 = arith.constant 2 : index
    %c0_38 = arith.constant 0 : index
    %36 = vector.load %arg1[%c0_35, %c1_36, %c2_37, %c0_38] : memref<1x18x18x128xbf16, #tpu.memory_space<vmem>>, vector<1x16x16x128xbf16>
    %37 = vector.shape_cast %36 : vector<1x16x16x128xbf16> to vector<16x16x128xbf16>
    %38 = vector.shape_cast %37 : vector<16x16x128xbf16> to vector<256x128xbf16>
    %c5 = arith.constant 5 : index
    %c0_39 = arith.constant 0 : index
    %c0_40 = arith.constant 0 : index
    %39 = vector.load %arg2[%c5, %c0_39, %c0_40] : memref<9x128x64xbf16, #tpu.memory_space<vmem>>, vector<1x128x64xbf16>
    %40 = vector.shape_cast %39 : vector<1x128x64xbf16> to vector<128x64xbf16>
    %cst_41 = arith.constant dense<0.000000e+00> : vector<256x64xf32>
    %41 = tpu.matmul %38, %40, %cst_41 {dimension_numbers = #tpu.dot_dimension_numbers<[1], [0], [0], [1], [0, 0, 1, 1], [], []>} : vector<256x128xbf16>, vector<128x64xbf16>, vector<256x64xf32> -> vector<256x64xf32>
    %42 = arith.addf %35, %41 : vector<256x64xf32>
    %c0_42 = arith.constant 0 : index
    %c2_43 = arith.constant 2 : index
    %c0_44 = arith.constant 0 : index
    %c0_45 = arith.constant 0 : index
    %43 = vector.load %arg1[%c0_42, %c2_43, %c0_44, %c0_45] : memref<1x18x18x128xbf16, #tpu.memory_space<vmem>>, vector<1x16x16x128xbf16>
    %44 = vector.shape_cast %43 : vector<1x16x16x128xbf16> to vector<16x16x128xbf16>
    %45 = vector.shape_cast %44 : vector<16x16x128xbf16> to vector<256x128xbf16>
    %c6 = arith.constant 6 : index
    %c0_46 = arith.constant 0 : index
    %c0_47 = arith.constant 0 : index
    %46 = vector.load %arg2[%c6, %c0_46, %c0_47] : memref<9x128x64xbf16, #tpu.memory_space<vmem>>, vector<1x128x64xbf16>
    %47 = vector.shape_cast %46 : vector<1x128x64xbf16> to vector<128x64xbf16>
    %cst_48 = arith.constant dense<0.000000e+00> : vector<256x64xf32>
    %48 = tpu.matmul %45, %47, %cst_48 {dimension_numbers = #tpu.dot_dimension_numbers<[1], [0], [0], [1], [0, 0, 1, 1], [], []>} : vector<256x128xbf16>, vector<128x64xbf16>, vector<256x64xf32> -> vector<256x64xf32>
    %49 = arith.addf %42, %48 : vector<256x64xf32>
    %c0_49 = arith.constant 0 : index
    %c2_50 = arith.constant 2 : index
    %c1_51 = arith.constant 1 : index
    %c0_52 = arith.constant 0 : index
    %50 = vector.load %arg1[%c0_49, %c2_50, %c1_51, %c0_52] : memref<1x18x18x128xbf16, #tpu.memory_space<vmem>>, vector<1x16x16x128xbf16>
    %51 = vector.shape_cast %50 : vector<1x16x16x128xbf16> to vector<16x16x128xbf16>
    %52 = vector.shape_cast %51 : vector<16x16x128xbf16> to vector<256x128xbf16>
    %c7 = arith.constant 7 : index
    %c0_53 = arith.constant 0 : index
    %c0_54 = arith.constant 0 : index
    %53 = vector.load %arg2[%c7, %c0_53, %c0_54] : memref<9x128x64xbf16, #tpu.memory_space<vmem>>, vector<1x128x64xbf16>
    %54 = vector.shape_cast %53 : vector<1x128x64xbf16> to vector<128x64xbf16>
    %cst_55 = arith.constant dense<0.000000e+00> : vector<256x64xf32>
    %55 = tpu.matmul %52, %54, %cst_55 {dimension_numbers = #tpu.dot_dimension_numbers<[1], [0], [0], [1], [0, 0, 1, 1], [], []>} : vector<256x128xbf16>, vector<128x64xbf16>, vector<256x64xf32> -> vector<256x64xf32>
    %56 = arith.addf %49, %55 : vector<256x64xf32>
    %c0_56 = arith.constant 0 : index
    %c2_57 = arith.constant 2 : index
    %c2_58 = arith.constant 2 : index
    %c0_59 = arith.constant 0 : index
    %57 = vector.load %arg1[%c0_56, %c2_57, %c2_58, %c0_59] : memref<1x18x18x128xbf16, #tpu.memory_space<vmem>>, vector<1x16x16x128xbf16>
    %58 = vector.shape_cast %57 : vector<1x16x16x128xbf16> to vector<16x16x128xbf16>
    %59 = vector.shape_cast %58 : vector<16x16x128xbf16> to vector<256x128xbf16>
    %c8 = arith.constant 8 : index
    %c0_60 = arith.constant 0 : index
    %c0_61 = arith.constant 0 : index
    %60 = vector.load %arg2[%c8, %c0_60, %c0_61] : memref<9x128x64xbf16, #tpu.memory_space<vmem>>, vector<1x128x64xbf16>
    %61 = vector.shape_cast %60 : vector<1x128x64xbf16> to vector<128x64xbf16>
    %cst_62 = arith.constant dense<0.000000e+00> : vector<256x64xf32>
    %62 = tpu.matmul %59, %61, %cst_62 {dimension_numbers = #tpu.dot_dimension_numbers<[1], [0], [0], [1], [0, 0, 1, 1], [], []>} : vector<256x128xbf16>, vector<128x64xbf16>, vector<256x64xf32> -> vector<256x64xf32>
    %63 = arith.addf %56, %62 : vector<256x64xf32>
    %c0_63 = arith.constant 0 : index
    %c0_64 = arith.constant 0 : index
    %64 = vector.load %arg3[%c0_63, %c0_64] : memref<1x64xf32, #tpu.memory_space<vmem>>, vector<1x64xf32>
    %65 = vector.broadcast %64 : vector<1x64xf32> to vector<256x64xf32>
    %66 = arith.mulf %63, %65 : vector<256x64xf32>
    %c0_65 = arith.constant 0 : index
    %c0_66 = arith.constant 0 : index
    %67 = vector.load %arg4[%c0_65, %c0_66] : memref<1x64xf32, #tpu.memory_space<vmem>>, vector<1x64xf32>
    %68 = vector.broadcast %67 : vector<1x64xf32> to vector<256x64xf32>
    %69 = arith.addf %66, %68 : vector<256x64xf32>
    %cst_67 = arith.constant 0.000000e+00 : f32
    %70 = vector.broadcast %cst_67 : f32 to vector<256x64xf32>
    %71 = arith.maximumf %69, %70 : vector<256x64xf32>
    %72 = vector.shape_cast %71 : vector<256x64xf32> to vector<1x16x16x64xf32>
    %73 = arith.truncf %72 : vector<1x16x16x64xf32> to vector<1x16x16x64xbf16>
    %c0_68 = arith.constant 0 : index
    %c0_69 = arith.constant 0 : index
    %c0_70 = arith.constant 0 : index
    %c0_71 = arith.constant 0 : index
    %74 = vector.load %arg5[%c0_68, %c0_69, %c0_70, %c0_71] : memref<1x16x16x64xbf16, #tpu.memory_space<vmem>>, vector<1x16x16x64xbf16>
    tpu.vector_store %arg5[%c0_68, %c0_69, %c0_70, %c0_71], %73 {strides = array<i32>} : memref<1x16x16x64xbf16, #tpu.memory_space<vmem>>, vector<1x16x16x64xbf16>,
    return
  }
  func.func @transform_0(%arg0: i32) -> (i32, i32, i32, i32) {
    %c0_i32 = arith.constant 0 : i32
    %c0_i32_0 = arith.constant 0 : i32
    %c0_i32_1 = arith.constant 0 : i32
    %c0_i32_2 = arith.constant 0 : i32
    return %arg0, %c0_i32, %c0_i32_0, %c0_i32_1 : i32, i32, i32, i32
  }
  func.func @transform_1(%arg0: i32) -> (i32, i32, i32) {
    %c0_i32 = arith.constant 0 : i32
    %c0_i32_0 = arith.constant 0 : i32
    %c0_i32_1 = arith.constant 0 : i32
    %c0_i32_2 = arith.constant 0 : i32
    return %c0_i32, %c0_i32_0, %c0_i32_1 : i32, i32, i32
  }
  func.func @transform_2(%arg0: i32) -> (i32, i32) {
    %c0_i32 = arith.constant 0 : i32
    %c0_i32_0 = arith.constant 0 : i32
    %c0_i32_1 = arith.constant 0 : i32
    return %c0_i32, %c0_i32_0 : i32, i32
  }
  func.func @transform_3(%arg0: i32) -> (i32, i32) {
    %c0_i32 = arith.constant 0 : i32
    %c0_i32_0 = arith.constant 0 : i32
    %c0_i32_1 = arith.constant 0 : i32
    return %c0_i32, %c0_i32_0 : i32, i32
  }
  func.func @transform_4(%arg0: i32) -> (i32, i32, i32, i32) {
    %c0_i32 = arith.constant 0 : i32
    %c0_i32_0 = arith.constant 0 : i32
    %c0_i32_1 = arith.constant 0 : i32
    %c0_i32_2 = arith.constant 0 : i32
    return %arg0, %c0_i32, %c0_i32_0, %c0_i32_1 : i32, i32, i32, i32
  }
}

module attributes {stable_mosaic.version = 11 : i64} {
  func.func @_conv3x3_kernel(%arg0: i32, %arg1: memref<1x18x18x64xbf16, #tpu.memory_space<vmem>>, %arg2: memref<9x64x64xbf16, #tpu.memory_space<vmem>>, %arg3: memref<1x64xf32, #tpu.memory_space<vmem>>, %arg4: memref<1x64xf32, #tpu.memory_space<vmem>>, %arg5: memref<1x16x16x64xf32, #tpu.memory_space<vmem>>) attributes {dimension_semantics = [#tpu.dimension_semantics<parallel>], iteration_bounds = array<i64: 2>, scalar_prefetch = 0 : i64, scratch_operands = 0 : i64, tpu.core_type = #tpu.core_type<tc>, window_params = [{transform_indices = @transform_0, window_bounds = array<i64: 1, 18, 18, 64>}, {pipeline_mode = #tpu.pipeline_mode<synchronous>, transform_indices = @transform_1, window_bounds = array<i64: 9, 64, 64>}, {pipeline_mode = #tpu.pipeline_mode<synchronous>, transform_indices = @transform_2, window_bounds = array<i64: 1, 64>}, {pipeline_mode = #tpu.pipeline_mode<synchronous>, transform_indices = @transform_3, window_bounds = array<i64: 1, 64>}, {transform_indices = @transform_4, window_bounds = array<i64: 1, 16, 16, 64>}]} {
    %cst = arith.constant 0.000000e+00 : f32
    %0 = vector.broadcast %cst : f32 to vector<256x64xf32>
    %c0 = arith.constant 0 : index
    %c0_0 = arith.constant 0 : index
    %c0_1 = arith.constant 0 : index
    %c0_2 = arith.constant 0 : index
    %1 = vector.load %arg1[%c0, %c0_0, %c0_1, %c0_2] : memref<1x18x18x64xbf16, #tpu.memory_space<vmem>>, vector<1x16x16x64xbf16>
    %2 = vector.shape_cast %1 : vector<1x16x16x64xbf16> to vector<16x16x64xbf16>
    %3 = vector.shape_cast %2 : vector<16x16x64xbf16> to vector<256x64xbf16>
    %c0_3 = arith.constant 0 : index
    %c0_4 = arith.constant 0 : index
    %c0_5 = arith.constant 0 : index
    %4 = vector.load %arg2[%c0_3, %c0_4, %c0_5] : memref<9x64x64xbf16, #tpu.memory_space<vmem>>, vector<1x64x64xbf16>
    %5 = vector.shape_cast %4 : vector<1x64x64xbf16> to vector<64x64xbf16>
    %cst_6 = arith.constant dense<0.000000e+00> : vector<256x64xf32>
    %6 = tpu.matmul %3, %5, %cst_6 {dimension_numbers = #tpu.dot_dimension_numbers<[1], [0], [0], [1], [0, 0, 1, 1], [], []>} : vector<256x64xbf16>, vector<64x64xbf16>, vector<256x64xf32> -> vector<256x64xf32>
    %7 = arith.addf %0, %6 : vector<256x64xf32>
    %c0_7 = arith.constant 0 : index
    %c0_8 = arith.constant 0 : index
    %c1 = arith.constant 1 : index
    %c0_9 = arith.constant 0 : index
    %8 = vector.load %arg1[%c0_7, %c0_8, %c1, %c0_9] : memref<1x18x18x64xbf16, #tpu.memory_space<vmem>>, vector<1x16x16x64xbf16>
    %9 = vector.shape_cast %8 : vector<1x16x16x64xbf16> to vector<16x16x64xbf16>
    %10 = vector.shape_cast %9 : vector<16x16x64xbf16> to vector<256x64xbf16>
    %c1_10 = arith.constant 1 : index
    %c0_11 = arith.constant 0 : index
    %c0_12 = arith.constant 0 : index
    %11 = vector.load %arg2[%c1_10, %c0_11, %c0_12] : memref<9x64x64xbf16, #tpu.memory_space<vmem>>, vector<1x64x64xbf16>
    %12 = vector.shape_cast %11 : vector<1x64x64xbf16> to vector<64x64xbf16>
    %cst_13 = arith.constant dense<0.000000e+00> : vector<256x64xf32>
    %13 = tpu.matmul %10, %12, %cst_13 {dimension_numbers = #tpu.dot_dimension_numbers<[1], [0], [0], [1], [0, 0, 1, 1], [], []>} : vector<256x64xbf16>, vector<64x64xbf16>, vector<256x64xf32> -> vector<256x64xf32>
    %14 = arith.addf %7, %13 : vector<256x64xf32>
    %c0_14 = arith.constant 0 : index
    %c0_15 = arith.constant 0 : index
    %c2 = arith.constant 2 : index
    %c0_16 = arith.constant 0 : index
    %15 = vector.load %arg1[%c0_14, %c0_15, %c2, %c0_16] : memref<1x18x18x64xbf16, #tpu.memory_space<vmem>>, vector<1x16x16x64xbf16>
    %16 = vector.shape_cast %15 : vector<1x16x16x64xbf16> to vector<16x16x64xbf16>
    %17 = vector.shape_cast %16 : vector<16x16x64xbf16> to vector<256x64xbf16>
    %c2_17 = arith.constant 2 : index
    %c0_18 = arith.constant 0 : index
    %c0_19 = arith.constant 0 : index
    %18 = vector.load %arg2[%c2_17, %c0_18, %c0_19] : memref<9x64x64xbf16, #tpu.memory_space<vmem>>, vector<1x64x64xbf16>
    %19 = vector.shape_cast %18 : vector<1x64x64xbf16> to vector<64x64xbf16>
    %cst_20 = arith.constant dense<0.000000e+00> : vector<256x64xf32>
    %20 = tpu.matmul %17, %19, %cst_20 {dimension_numbers = #tpu.dot_dimension_numbers<[1], [0], [0], [1], [0, 0, 1, 1], [], []>} : vector<256x64xbf16>, vector<64x64xbf16>, vector<256x64xf32> -> vector<256x64xf32>
    %21 = arith.addf %14, %20 : vector<256x64xf32>
    %c0_21 = arith.constant 0 : index
    %c1_22 = arith.constant 1 : index
    %c0_23 = arith.constant 0 : index
    %c0_24 = arith.constant 0 : index
    %22 = vector.load %arg1[%c0_21, %c1_22, %c0_23, %c0_24] : memref<1x18x18x64xbf16, #tpu.memory_space<vmem>>, vector<1x16x16x64xbf16>
    %23 = vector.shape_cast %22 : vector<1x16x16x64xbf16> to vector<16x16x64xbf16>
    %24 = vector.shape_cast %23 : vector<16x16x64xbf16> to vector<256x64xbf16>
    %c3 = arith.constant 3 : index
    %c0_25 = arith.constant 0 : index
    %c0_26 = arith.constant 0 : index
    %25 = vector.load %arg2[%c3, %c0_25, %c0_26] : memref<9x64x64xbf16, #tpu.memory_space<vmem>>, vector<1x64x64xbf16>
    %26 = vector.shape_cast %25 : vector<1x64x64xbf16> to vector<64x64xbf16>
    %cst_27 = arith.constant dense<0.000000e+00> : vector<256x64xf32>
    %27 = tpu.matmul %24, %26, %cst_27 {dimension_numbers = #tpu.dot_dimension_numbers<[1], [0], [0], [1], [0, 0, 1, 1], [], []>} : vector<256x64xbf16>, vector<64x64xbf16>, vector<256x64xf32> -> vector<256x64xf32>
    %28 = arith.addf %21, %27 : vector<256x64xf32>
    %c0_28 = arith.constant 0 : index
    %c1_29 = arith.constant 1 : index
    %c1_30 = arith.constant 1 : index
    %c0_31 = arith.constant 0 : index
    %29 = vector.load %arg1[%c0_28, %c1_29, %c1_30, %c0_31] : memref<1x18x18x64xbf16, #tpu.memory_space<vmem>>, vector<1x16x16x64xbf16>
    %30 = vector.shape_cast %29 : vector<1x16x16x64xbf16> to vector<16x16x64xbf16>
    %31 = vector.shape_cast %30 : vector<16x16x64xbf16> to vector<256x64xbf16>
    %c4 = arith.constant 4 : index
    %c0_32 = arith.constant 0 : index
    %c0_33 = arith.constant 0 : index
    %32 = vector.load %arg2[%c4, %c0_32, %c0_33] : memref<9x64x64xbf16, #tpu.memory_space<vmem>>, vector<1x64x64xbf16>
    %33 = vector.shape_cast %32 : vector<1x64x64xbf16> to vector<64x64xbf16>
    %cst_34 = arith.constant dense<0.000000e+00> : vector<256x64xf32>
    %34 = tpu.matmul %31, %33, %cst_34 {dimension_numbers = #tpu.dot_dimension_numbers<[1], [0], [0], [1], [0, 0, 1, 1], [], []>} : vector<256x64xbf16>, vector<64x64xbf16>, vector<256x64xf32> -> vector<256x64xf32>
    %35 = arith.addf %28, %34 : vector<256x64xf32>
    %c0_35 = arith.constant 0 : index
    %c1_36 = arith.constant 1 : index
    %c2_37 = arith.constant 2 : index
    %c0_38 = arith.constant 0 : index
    %36 = vector.load %arg1[%c0_35, %c1_36, %c2_37, %c0_38] : memref<1x18x18x64xbf16, #tpu.memory_space<vmem>>, vector<1x16x16x64xbf16>
    %37 = vector.shape_cast %36 : vector<1x16x16x64xbf16> to vector<16x16x64xbf16>
    %38 = vector.shape_cast %37 : vector<16x16x64xbf16> to vector<256x64xbf16>
    %c5 = arith.constant 5 : index
    %c0_39 = arith.constant 0 : index
    %c0_40 = arith.constant 0 : index
    %39 = vector.load %arg2[%c5, %c0_39, %c0_40] : memref<9x64x64xbf16, #tpu.memory_space<vmem>>, vector<1x64x64xbf16>
    %40 = vector.shape_cast %39 : vector<1x64x64xbf16> to vector<64x64xbf16>
    %cst_41 = arith.constant dense<0.000000e+00> : vector<256x64xf32>
    %41 = tpu.matmul %38, %40, %cst_41 {dimension_numbers = #tpu.dot_dimension_numbers<[1], [0], [0], [1], [0, 0, 1, 1], [], []>} : vector<256x64xbf16>, vector<64x64xbf16>, vector<256x64xf32> -> vector<256x64xf32>
    %42 = arith.addf %35, %41 : vector<256x64xf32>
    %c0_42 = arith.constant 0 : index
    %c2_43 = arith.constant 2 : index
    %c0_44 = arith.constant 0 : index
    %c0_45 = arith.constant 0 : index
    %43 = vector.load %arg1[%c0_42, %c2_43, %c0_44, %c0_45] : memref<1x18x18x64xbf16, #tpu.memory_space<vmem>>, vector<1x16x16x64xbf16>
    %44 = vector.shape_cast %43 : vector<1x16x16x64xbf16> to vector<16x16x64xbf16>
    %45 = vector.shape_cast %44 : vector<16x16x64xbf16> to vector<256x64xbf16>
    %c6 = arith.constant 6 : index
    %c0_46 = arith.constant 0 : index
    %c0_47 = arith.constant 0 : index
    %46 = vector.load %arg2[%c6, %c0_46, %c0_47] : memref<9x64x64xbf16, #tpu.memory_space<vmem>>, vector<1x64x64xbf16>
    %47 = vector.shape_cast %46 : vector<1x64x64xbf16> to vector<64x64xbf16>
    %cst_48 = arith.constant dense<0.000000e+00> : vector<256x64xf32>
    %48 = tpu.matmul %45, %47, %cst_48 {dimension_numbers = #tpu.dot_dimension_numbers<[1], [0], [0], [1], [0, 0, 1, 1], [], []>} : vector<256x64xbf16>, vector<64x64xbf16>, vector<256x64xf32> -> vector<256x64xf32>
    %49 = arith.addf %42, %48 : vector<256x64xf32>
    %c0_49 = arith.constant 0 : index
    %c2_50 = arith.constant 2 : index
    %c1_51 = arith.constant 1 : index
    %c0_52 = arith.constant 0 : index
    %50 = vector.load %arg1[%c0_49, %c2_50, %c1_51, %c0_52] : memref<1x18x18x64xbf16, #tpu.memory_space<vmem>>, vector<1x16x16x64xbf16>
    %51 = vector.shape_cast %50 : vector<1x16x16x64xbf16> to vector<16x16x64xbf16>
    %52 = vector.shape_cast %51 : vector<16x16x64xbf16> to vector<256x64xbf16>
    %c7 = arith.constant 7 : index
    %c0_53 = arith.constant 0 : index
    %c0_54 = arith.constant 0 : index
    %53 = vector.load %arg2[%c7, %c0_53, %c0_54] : memref<9x64x64xbf16, #tpu.memory_space<vmem>>, vector<1x64x64xbf16>
    %54 = vector.shape_cast %53 : vector<1x64x64xbf16> to vector<64x64xbf16>
    %cst_55 = arith.constant dense<0.000000e+00> : vector<256x64xf32>
    %55 = tpu.matmul %52, %54, %cst_55 {dimension_numbers = #tpu.dot_dimension_numbers<[1], [0], [0], [1], [0, 0, 1, 1], [], []>} : vector<256x64xbf16>, vector<64x64xbf16>, vector<256x64xf32> -> vector<256x64xf32>
    %56 = arith.addf %49, %55 : vector<256x64xf32>
    %c0_56 = arith.constant 0 : index
    %c2_57 = arith.constant 2 : index
    %c2_58 = arith.constant 2 : index
    %c0_59 = arith.constant 0 : index
    %57 = vector.load %arg1[%c0_56, %c2_57, %c2_58, %c0_59] : memref<1x18x18x64xbf16, #tpu.memory_space<vmem>>, vector<1x16x16x64xbf16>
    %58 = vector.shape_cast %57 : vector<1x16x16x64xbf16> to vector<16x16x64xbf16>
    %59 = vector.shape_cast %58 : vector<16x16x64xbf16> to vector<256x64xbf16>
    %c8 = arith.constant 8 : index
    %c0_60 = arith.constant 0 : index
    %c0_61 = arith.constant 0 : index
    %60 = vector.load %arg2[%c8, %c0_60, %c0_61] : memref<9x64x64xbf16, #tpu.memory_space<vmem>>, vector<1x64x64xbf16>
    %61 = vector.shape_cast %60 : vector<1x64x64xbf16> to vector<64x64xbf16>
    %cst_62 = arith.constant dense<0.000000e+00> : vector<256x64xf32>
    %62 = tpu.matmul %59, %61, %cst_62 {dimension_numbers = #tpu.dot_dimension_numbers<[1], [0], [0], [1], [0, 0, 1, 1], [], []>} : vector<256x64xbf16>, vector<64x64xbf16>, vector<256x64xf32> -> vector<256x64xf32>
    %63 = arith.addf %56, %62 : vector<256x64xf32>
    %c0_63 = arith.constant 0 : index
    %c0_64 = arith.constant 0 : index
    %64 = vector.load %arg3[%c0_63, %c0_64] : memref<1x64xf32, #tpu.memory_space<vmem>>, vector<1x64xf32>
    %65 = vector.broadcast %64 : vector<1x64xf32> to vector<256x64xf32>
    %66 = arith.mulf %63, %65 : vector<256x64xf32>
    %c0_65 = arith.constant 0 : index
    %c0_66 = arith.constant 0 : index
    %67 = vector.load %arg4[%c0_65, %c0_66] : memref<1x64xf32, #tpu.memory_space<vmem>>, vector<1x64xf32>
    %68 = vector.broadcast %67 : vector<1x64xf32> to vector<256x64xf32>
    %69 = arith.addf %66, %68 : vector<256x64xf32>
    %cst_67 = arith.constant 0.000000e+00 : f32
    %70 = vector.broadcast %cst_67 : f32 to vector<256x64xf32>
    %71 = arith.maximumf %69, %70 : vector<256x64xf32>
    %72 = vector.shape_cast %71 : vector<256x64xf32> to vector<1x16x16x64xf32>
    %c0_68 = arith.constant 0 : index
    %c0_69 = arith.constant 0 : index
    %c0_70 = arith.constant 0 : index
    %c0_71 = arith.constant 0 : index
    %73 = vector.load %arg5[%c0_68, %c0_69, %c0_70, %c0_71] : memref<1x16x16x64xf32, #tpu.memory_space<vmem>>, vector<1x16x16x64xf32>
    tpu.vector_store %arg5[%c0_68, %c0_69, %c0_70, %c0_71], %72 {strides = array<i32>} : memref<1x16x16x64xf32, #tpu.memory_space<vmem>>, vector<1x16x16x64xf32>,
    return
  }
  func.func @transform_0(%arg0: i32) -> (i32, i32, i32, i32) {
    %c0_i32 = arith.constant 0 : i32
    %c0_i32_0 = arith.constant 0 : i32
    %c0_i32_1 = arith.constant 0 : i32
    %c0_i32_2 = arith.constant 0 : i32
    return %arg0, %c0_i32, %c0_i32_0, %c0_i32_1 : i32, i32, i32, i32
  }
  func.func @transform_1(%arg0: i32) -> (i32, i32, i32) {
    %c0_i32 = arith.constant 0 : i32
    %c0_i32_0 = arith.constant 0 : i32
    %c0_i32_1 = arith.constant 0 : i32
    %c0_i32_2 = arith.constant 0 : i32
    return %c0_i32, %c0_i32_0, %c0_i32_1 : i32, i32, i32
  }
  func.func @transform_2(%arg0: i32) -> (i32, i32) {
    %c0_i32 = arith.constant 0 : i32
    %c0_i32_0 = arith.constant 0 : i32
    %c0_i32_1 = arith.constant 0 : i32
    return %c0_i32, %c0_i32_0 : i32, i32
  }
  func.func @transform_3(%arg0: i32) -> (i32, i32) {
    %c0_i32 = arith.constant 0 : i32
    %c0_i32_0 = arith.constant 0 : i32
    %c0_i32_1 = arith.constant 0 : i32
    return %c0_i32, %c0_i32_0 : i32, i32
  }
  func.func @transform_4(%arg0: i32) -> (i32, i32, i32, i32) {
    %c0_i32 = arith.constant 0 : i32
    %c0_i32_0 = arith.constant 0 : i32
    %c0_i32_1 = arith.constant 0 : i32
    %c0_i32_2 = arith.constant 0 : i32
    return %arg0, %c0_i32, %c0_i32_0, %c0_i32_1 : i32, i32, i32, i32
  }
}

</mosaic_0001>

<llo_original>
// kernel: up_forward.3
$region0: #{up_forward.3}
  #allocation0 [shape = 'u32[]', space=smem, size = 0x4, offset = 0x4, fixed_abs, tag = 'smem constant byte address 0x4 - core index']
  #allocation1 [shape = 'u32[144,128]{1,0:T(1,128)}', space=vmem, size = 0x12000, scoped, tag = 'internal scratch']
  #allocation2 [shape = 'f32[128,128]{1,0:T(8,128)}', space=vmem, size = 0x10000, scoped, tag = 'scratch operand']
  %s0 = inlined_call_operand.vmem [shape: bf16[128,128], index: 0, kind: input, shape index: {}]
  %s1 = inlined_call_operand.vmem [shape: bf16[128,256], index: 1, kind: input, shape index: {}]
  %s2 = inlined_call_operand.vmem [shape: f32[1,256], index: 2, kind: input, shape index: {}]
  %s3 = inlined_call_operand.vmem [shape: f32[1,256], index: 3, kind: input, shape index: {}]
  %s4 = inlined_call_operand.vmem [shape: bf16[128,256], index: 4, kind: output, shape index: {}]
  %s5 = sld [smem:[#allocation0]]
  $region127: #{up_forward.3} parent=0
    _
  %s7 = ssub.s32 1, %s5
  %s8 = scalar_select 0, %s7, %s5
  $region1: #{up_forward.3} parent=0
    #allocation3 [shape = 'u8[65536]{0}', space=vmem, size = 0x10000, scoped, tag = 'input window, operand 1']
    #allocation4 [shape = 'u8[65536]{0}', space=vmem, size = 0x10000, scoped, tag = 'output window, operand 0']
    loop: start=0, step=1, limit=4
    $region2: #{up_forward.3} parent=1 // loop_pre_header
      _
    $region3: #{up_forward.3} parent=1 // loop_header
      %s10 = sphi 0, %s14
      %p11 = scmp.ge.s32.totalorder %s10, 4
      %s17 = sphi 0, %s36
      %s18 = sphi 0, %s32
      %s19 = sphi 0, %s28
      %s20 = sphi 0, %s17
      %s21 = sphi 0, %s18
      %s22 = sphi 0, %s19
      %s23 = sphi 0, %s20
      %s24 = sphi 0, %s21
      %s25 = sphi 0, %s22
      %s41 = sphi 0, %s43
      %s44 = sphi 0, %s41
      %s45 = sphi 0, %s44
      %s61 = sphi 0, %s45
      %s69 = sphi 0, %s71
      %s72 = sphi 0, %s69
      %s73 = sphi 0, %s72
      %s89 = sphi 0, %s73
      %s95 = sphi 0, %s97
      %s98 = sphi 0, %s95
      %s99 = sphi 0, %s98
      %s115 = sphi 0, %s99
      %s121 = sphi 0, %s123
      %s124 = sphi 0, %s121
      %s125 = sphi 0, %s124
      %s141 = sphi 0, %s125
      %s149 = sphi 0, %s151
      %s152 = sphi 0, %s149
      %s153 = sphi 0, %s152
      %s169 = sphi 0, %s153
    $region4: #{up_forward.3} parent=1 // loop_header_branch
      %13 = sbr.rel (%p11) target = $region8
    $region5: #{up_forward.3} parent=1 // loop_body
      %s15 = ssub.s32 %s10, 1
      %s16 = ssub.s32 %s10, 2
      %s26 = sadd.s32 1, %s19
      %p27 = scmp.ge.s32.totalorder %s26, 1
      %s28 = scalar_select %p27, 0, %s26
      %s29 = sadd.s32 1, %s18
      %s30 = scalar_select %p27, %s29, %s18
      %p31 = scmp.ge.s32.totalorder %s30, 2
      %s32 = scalar_select %p31, 0, %s30
      %s33 = sadd.s32 1, %s17
      %s34 = scalar_select %p31, %s33, %s17
      %p35 = scmp.ge.s32.totalorder %s34, 1
      %s36 = scalar_select %p35, 0, %s34
      %s37 = ssub.s32 %s17, %s36
      %s38 = ssub.s32 %s19, %s28
      %s39 = sor.u32 %s37, %s38
      %p40 = scmp.eq.s32.totalorder %s39, 0
      %s42 = sadd.s32 %s41, 1
      %s43 = scalar_select %p40, %s41, %s42
      %p46 = pneg %p40
      %p47 = scmp.eq.s32.totalorder %s10, 1
      %p48 = por %p46, %p47
      %p49 = scmp.ne.s32.totalorder %s41, %s44
      %p50 = scmp.eq.s32.totalorder %s10, 0
      %p51 = por %p49, %p50
      %p52 = scmp.ne.s32.totalorder %s41, %s44
      %p53 = scmp.eq.s32.totalorder %s15, 1
      %p54 = por %p52, %p53
      %p55 = scmp.ne.s32.totalorder %s44, %s45
      %p56 = scmp.eq.s32.totalorder %s15, 0
      %p57 = por %p55, %p56
      %p58 = scmp.ne.s32.totalorder %s44, %s45
      %p59 = scmp.eq.s32.totalorder %s16, 1
      %p60 = por %p58, %p59
      %p62 = scmp.ne.s32.totalorder %s45, %s61
      %p63 = scmp.eq.s32.totalorder %s16, 0
      %p64 = por %p62, %p63
      %s65 = ssub.s32 %s19, %s28
      %s66 = ssub.s32 %s18, %s32
      %s67 = sor.u32 %s65, %s66
      %p68 = scmp.eq.s32.totalorder %s67, 0
      %s70 = sadd.s32 %s69, 1
      %s71 = scalar_select %p68, %s69, %s70
      %p74 = pneg %p68
      %p75 = scmp.eq.s32.totalorder %s10, 1
      %p76 = por %p74, %p75
      %p77 = scmp.ne.s32.totalorder %s69, %s72
      %p78 = scmp.eq.s32.totalorder %s10, 0
      %p79 = por %p77, %p78
      %p80 = scmp.ne.s32.totalorder %s69, %s72
      %p81 = scmp.eq.s32.totalorder %s15, 1
      %p82 = por %p80, %p81
      %p83 = scmp.ne.s32.totalorder %s72, %s73
      %p84 = scmp.eq.s32.totalorder %s15, 0
      %p85 = por %p83, %p84
      %p86 = scmp.ne.s32.totalorder %s72, %s73
      %p87 = scmp.eq.s32.totalorder %s16, 1
      %p88 = por %p86, %p87
      %p90 = scmp.ne.s32.totalorder %s73, %s89
      %p91 = scmp.eq.s32.totalorder %s16, 0
      %p92 = por %p90, %p91
      %s93 = ssub.s32 %s18, %s32
      %p94 = scmp.eq.s32.totalorder %s93, 0
      %s96 = sadd.s32 %s95, 1
      %s97 = scalar_select %p94, %s95, %s96
      %p100 = pneg %p94
      %p101 = scmp.eq.s32.totalorder %s10, 1
      %p102 = por %p100, %p101
      %p103 = scmp.ne.s32.totalorder %s95, %s98
      %p104 = scmp.eq.s32.totalorder %s10, 0
      %p105 = por %p103, %p104
      %p106 = scmp.ne.s32.totalorder %s95, %s98
      %p107 = scmp.eq.s32.totalorder %s15, 1
      %p108 = por %p106, %p107
      %p109 = scmp.ne.s32.totalorder %s98, %s99
      %p110 = scmp.eq.s32.totalorder %s15, 0
      %p111 = por %p109, %p110
      %p112 = scmp.ne.s32.totalorder %s98, %s99
      %p113 = scmp.eq.s32.totalorder %s16, 1
      %p114 = por %p112, %p113
      %p116 = scmp.ne.s32.totalorder %s99, %s115
      %p117 = scmp.eq.s32.totalorder %s16, 0
      %p118 = por %p116, %p117
      %s119 = ssub.s32 %s18, %s32
      %p120 = scmp.eq.s32.totalorder %s119, 0
      %s122 = sadd.s32 %s121, 1
      %s123 = scalar_select %p120, %s121, %s122
      %p126 = pneg %p120
      %p127 = scmp.eq.s32.totalorder %s10, 1
      %p128 = por %p126, %p127
      %p129 = scmp.ne.s32.totalorder %s121, %s124
      %p130 = scmp.eq.s32.totalorder %s10, 0
      %p131 = por %p129, %p130
      %p132 = scmp.ne.s32.totalorder %s121, %s124
      %p133 = scmp.eq.s32.totalorder %s15, 1
      %p134 = por %p132, %p133
      %p135 = scmp.ne.s32.totalorder %s124, %s125
      %p136 = scmp.eq.s32.totalorder %s15, 0
      %p137 = por %p135, %p136
      %p138 = scmp.ne.s32.totalorder %s124, %s125
      %p139 = scmp.eq.s32.totalorder %s16, 1
      %p140 = por %p138, %p139
      %p142 = scmp.ne.s32.totalorder %s125, %s141
      %p143 = scmp.eq.s32.totalorder %s16, 0
      %p144 = por %p142, %p143
      %s145 = ssub.s32 %s17, %s36
      %s146 = ssub.s32 %s18, %s32
      %s147 = sor.u32 %s145, %s146
      %p148 = scmp.eq.s32.totalorder %s147, 0
      %s150 = sadd.s32 %s149, 1
      %s151 = scalar_select %p148, %s149, %s150
      %p154 = pneg %p148
      %p155 = scmp.eq.s32.totalorder %s10, 1
      %p156 = por %p154, %p155
      %p157 = scmp.ne.s32.totalorder %s149, %s152
      %p158 = scmp.eq.s32.totalorder %s10, 0
      %p159 = por %p157, %p158
      %p160 = scmp.ne.s32.totalorder %s149, %s152
      %p161 = scmp.eq.s32.totalorder %s15, 1
      %p162 = por %p160, %p161
      %p163 = scmp.ne.s32.totalorder %s152, %s153
      %p164 = scmp.eq.s32.totalorder %s15, 0
      %p165 = por %p163, %p164
      %p166 = scmp.ne.s32.totalorder %s152, %s153
      %p167 = scmp.eq.s32.totalorder %s16, 1
      %p168 = por %p166, %p167
      %p170 = scmp.ne.s32.totalorder %s153, %s169
      %p171 = scmp.eq.s32.totalorder %s16, 0
      %p172 = por %p170, %p171
      %p173 = scmp.le.s32.totalorder 1, %s10
      %p174 = scmp.lt.s32.totalorder %s10, 3
      %p175 = pnand %p173, %p174
      %p176 = pneg %p175
      // Predicated region
      $region9: #{up_forward.3} parent=5 // pred_check
        _
      $region10: #{up_forward.3} parent=5 // pred_check_branch
        %178 = sbr.rel (%p175) target = $region12
      $region11: #{up_forward.3} parent=5 // pred_region
        %s179 = ssub.s32 %s10, 1
        // Predicated region
        $region13: #{up_forward.3} parent=11 // pred_check
          %p180 = pneg %p57
        $region14: #{up_forward.3} parent=11 // pred_check_branch
          %182 = sbr.rel (%p180) target = $region16
        $region15: #{up_forward.3} parent=11 // pred_region
          %s183 = smul.u32 16, %s20
          %p184 = scmp.lt.s32.totalorder %s183, 15
          %s185 = scalar_select %p184, %s183, 15
          %p186 = scmp.lt.s32.totalorder %s22, 0
          %s187 = scalar_select %p186, %s22, 0
          %s188 = sadd.s32 %s187, %s185
          %s189 = smul.addr %s188, 4
          %s190 = scalar_lea.vmem %s0, %s189
          %s191 = smul.u32 16, %s20
        $region16: #{up_forward.3} parent=11 // pred_fallthru
          _
      $region12: #{up_forward.3} parent=5 // pred_fallthru
        _
      %p192 = scmp.lt.s32.totalorder %s10, 2
      // Predicated region
      $region17: #{up_forward.3} parent=5 // pred_check
        %p193 = pneg %p192
      $region18: #{up_forward.3} parent=5 // pred_check_branch
        %195 = sbr.rel (%p193) target = $region20
      $region19: #{up_forward.3} parent=5 // pred_region
        // Predicated region
        $region21: #{up_forward.3} parent=19 // pred_check
          %p196 = pneg %p79
        $region22: #{up_forward.3} parent=19 // pred_check_branch
          %198 = sbr.rel (%p196) target = $region24
        $region23: #{up_forward.3} parent=19 // pred_region
          %s199 = sand.u32 %s69, 1
          %s200 = sand.u32 %s69, 1
          %s201 = smul.addr %s200, 64
          %s202 = scalar_lea.vmem [#allocation3], %s201
          %s203 = smul.u32 16, %s19
          %s204 = smul.addr %s203, 2
          %s205 = sadd.s32 %s18, %s204
          %s206 = smul.addr %s205, 4
          %s207 = scalar_lea.vmem %s1, %s206
          // Predicated region
          $region25: #{up_forward.3} parent=23 // pred_check
            _
          $region26: #{up_forward.3} parent=23 // pred_check_branch
            %209 = sbr.rel (0) target = $region28
          $region27: #{up_forward.3} parent=23 // pred_region
            // Predicated region
            $region29: #{up_forward.3} parent=27 // pred_check
              _
            $region30: #{up_forward.3} parent=27 // pred_check_branch
              %211 = sbr.rel target = $region32
            $region31: #{up_forward.3} parent=27 // pred_region
              // Predicated region
              $region44: #{up_forward.3} parent=31 // pred_check
                _
              $region45: #{up_forward.3} parent=31 // pred_check_branch
                %257 = sbr.rel (0) target = $region47
              $region46: #{up_forward.3} parent=31 // pred_region
                loop: start=0, step=1, limit=1
                $region48: #{up_forward.3} parent=46 // loop_pre_header
                  _
                $region49: #{up_forward.3} parent=46 // loop_header
                  %s259 = sphi 0, %s263
                  %p260 = scmp.ge.s32.totalorder %s259, 1
                  %s264 = sphi %s207, %s207
                  %s265 = sphi %s202, %s202
                $region50: #{up_forward.3} parent=46 // loop_header_branch
                  %262 = sbr.rel (%p260) target = $region54
                $region51: #{up_forward.3} parent=46 // loop_body
                  _
                $region52: #{up_forward.3} parent=46 // loop_footer
                  %s263 = sadd.s32 1, %s259
                $region53: #{up_forward.3} parent=46 // loop_footer_branch
                  %258 = sbr.rel target = $region49
                $region54: #{up_forward.3} parent=46 // loop_exit
                  _
                %s267 = ssub.s32 16, 1
                loop: start=0, step=1, limit=1
                $region55: #{up_forward.3} parent=46 // loop_pre_header
                  _
                $region56: #{up_forward.3} parent=46 // loop_header
                  %s269 = sphi 0, %s273
                  %p270 = scmp.ge.s32.totalorder %s269, 1
                  %s274 = sphi %s207, %s207
                  %s275 = sphi %s202, %s202
                $region57: #{up_forward.3} parent=46 // loop_header_branch
                  %272 = sbr.rel (%p270) target = $region61
                $region58: #{up_forward.3} parent=46 // loop_body
                  %v276 = vld [vmem:[%s274] sm:%s267]
                  %277 = vst [vmem:[%s275] sm:%s267] %v276
                  %v278 = vld [vmem:[%s274 + $0x8] sm:%s267]
                  %279 = vst [vmem:[%s275 + $0x4] sm:%s267] %v278
                  %v280 = vld [vmem:[%s274 + $0x10] sm:%s267]
                  %281 = vst [vmem:[%s275 + $0x8] sm:%s267] %v280
                  %v282 = vld [vmem:[%s274 + $0x18] sm:%s267]
                  %283 = vst [vmem:[%s275 + $0xc] sm:%s267] %v282
                  %v284 = vld [vmem:[%s274 + $0x20] sm:%s267]
                  %285 = vst [vmem:[%s275 + $0x10] sm:%s267] %v284
                  %v286 = vld [vmem:[%s274 + $0x28] sm:%s267]
                  %287 = vst [vmem:[%s275 + $0x14] sm:%s267] %v286
                  %v288 = vld [vmem:[%s274 + $0x30] sm:%s267]
                  %289 = vst [vmem:[%s275 + $0x18] sm:%s267] %v288
                  %v290 = vld [vmem:[%s274 + $0x38] sm:%s267]
                  %291 = vst [vmem:[%s275 + $0x1c] sm:%s267] %v290
                  %v292 = vld [vmem:[%s274 + $0x40] sm:%s267]
                  %293 = vst [vmem:[%s275 + $0x20] sm:%s267] %v292
                  %v294 = vld [vmem:[%s274 + $0x48] sm:%s267]
                  %295 = vst [vmem:[%s275 + $0x24] sm:%s267] %v294
                  %v296 = vld [vmem:[%s274 + $0x50] sm:%s267]
                  %297 = vst [vmem:[%s275 + $0x28] sm:%s267] %v296
                  %v298 = vld [vmem:[%s274 + $0x58] sm:%s267]
                  %299 = vst [vmem:[%s275 + $0x2c] sm:%s267] %v298
                  %v300 = vld [vmem:[%s274 + $0x60] sm:%s267]
                  %301 = vst [vmem:[%s275 + $0x30] sm:%s267] %v300
                  %v302 = vld [vmem:[%s274 + $0x68] sm:%s267]
                  %303 = vst [vmem:[%s275 + $0x34] sm:%s267] %v302
                  %v304 = vld [vmem:[%s274 + $0x70] sm:%s267]
                  %305 = vst [vmem:[%s275 + $0x38] sm:%s267] %v304
                  %v306 = vld [vmem:[%s274 + $0x78] sm:%s267]
                  %307 = vst [vmem:[%s275 + $0x3c] sm:%s267] %v306
                $region59: #{up_forward.3} parent=46 // loop_footer
                  %s273 = sadd.s32 1, %s269
                $region60: #{up_forward.3} parent=46 // loop_footer_branch
                  %268 = sbr.rel target = $region56
                $region61: #{up_forward.3} parent=46 // loop_exit
                  _
              $region47: #{up_forward.3} parent=31 // pred_fallthru
                _
            $region32: #{up_forward.3} parent=27 // pred_fallthru
              _
            // Predicated region
            $region33: #{up_forward.3} parent=27 // pred_check
              _
            $region34: #{up_forward.3} parent=27 // pred_check_branch
              %213 = sbr.rel (0) target = $region36
            $region35: #{up_forward.3} parent=27 // pred_region
              %s215 = ssub.s32 16, 1
              loop: start=0, step=1, limit=1
              $region37: #{up_forward.3} parent=35 // loop_pre_header
                _
              $region38: #{up_forward.3} parent=35 // loop_header
                %s217 = sphi 0, %s221
                %p218 = scmp.ge.s32.totalorder %s217, 1
                %s222 = sphi %s207, %s207
                %s223 = sphi %s202, %s202
              $region39: #{up_forward.3} parent=35 // loop_header_branch
                %220 = sbr.rel (%p218) target = $region43
              $region40: #{up_forward.3} parent=35 // loop_body
                %v224 = vld [vmem:[%s222] sm:%s215]
                %225 = vst [vmem:[%s223] sm:%s215] %v224
                %v226 = vld [vmem:[%s222 + $0x8] sm:%s215]
                %227 = vst [vmem:[%s223 + $0x4] sm:%s215] %v226
                %v228 = vld [vmem:[%s222 + $0x10] sm:%s215]
                %229 = vst [vmem:[%s223 + $0x8] sm:%s215] %v228
                %v230 = vld [vmem:[%s222 + $0x18] sm:%s215]
                %231 = vst [vmem:[%s223 + $0xc] sm:%s215] %v230
                %v232 = vld [vmem:[%s222 + $0x20] sm:%s215]
                %233 = vst [vmem:[%s223 + $0x10] sm:%s215] %v232
                %v234 = vld [vmem:[%s222 + $0x28] sm:%s215]
                %235 = vst [vmem:[%s223 + $0x14] sm:%s215] %v234
                %v236 = vld [vmem:[%s222 + $0x30] sm:%s215]
                %237 = vst [vmem:[%s223 + $0x18] sm:%s215] %v236
                %v238 = vld [vmem:[%s222 + $0x38] sm:%s215]
                %239 = vst [vmem:[%s223 + $0x1c] sm:%s215] %v238
                %v240 = vld [vmem:[%s222 + $0x40] sm:%s215]
                %241 = vst [vmem:[%s223 + $0x20] sm:%s215] %v240
                %v242 = vld [vmem:[%s222 + $0x48] sm:%s215]
                %243 = vst [vmem:[%s223 + $0x24] sm:%s215] %v242
                %v244 = vld [vmem:[%s222 + $0x50] sm:%s215]
                %245 = vst [vmem:[%s223 + $0x28] sm:%s215] %v244
                %v246 = vld [vmem:[%s222 + $0x58] sm:%s215]
                %247 = vst [vmem:[%s223 + $0x2c] sm:%s215] %v246
                %v248 = vld [vmem:[%s222 + $0x60] sm:%s215]
                %249 = vst [vmem:[%s223 + $0x30] sm:%s215] %v248
                %v250 = vld [vmem:[%s222 + $0x68] sm:%s215]
                %251 = vst [vmem:[%s223 + $0x34] sm:%s215] %v250
                %v252 = vld [vmem:[%s222 + $0x70] sm:%s215]
                %253 = vst [vmem:[%s223 + $0x38] sm:%s215] %v252
                %v254 = vld [vmem:[%s222 + $0x78] sm:%s215]
                %255 = vst [vmem:[%s223 + $0x3c] sm:%s215] %v254
              $region41: #{up_forward.3} parent=35 // loop_footer
                %s221 = sadd.s32 1, %s217
              $region42: #{up_forward.3} parent=35 // loop_footer_branch
                %216 = sbr.rel target = $region38
              $region43: #{up_forward.3} parent=35 // loop_exit
                _
            $region36: #{up_forward.3} parent=27 // pred_fallthru
              _
          $region28: #{up_forward.3} parent=23 // pred_fallthru
            _
          %308 = vnop
        $region24: #{up_forward.3} parent=19 // pred_fallthru
          _
        // Predicated region
        $region62: #{up_forward.3} parent=19 // pred_check
          %p309 = pneg %p105
        $region63: #{up_forward.3} parent=19 // pred_check_branch
          %311 = sbr.rel (%p309) target = $region65
        $region64: #{up_forward.3} parent=19 // pred_region
          %p312 = scmp.lt.s32.totalorder %s18, 1
          %s313 = scalar_select %p312, %s18, 1
          %s314 = scalar_lea.vmem %s2, %s313
        $region65: #{up_forward.3} parent=19 // pred_fallthru
          _
        // Predicated region
        $region66: #{up_forward.3} parent=19 // pred_check
          %p315 = pneg %p131
        $region67: #{up_forward.3} parent=19 // pred_check_branch
          %317 = sbr.rel (%p315) target = $region69
        $region68: #{up_forward.3} parent=19 // pred_region
          %p318 = scmp.lt.s32.totalorder %s18, 1
          %s319 = scalar_select %p318, %s18, 1
          %s320 = scalar_lea.vmem %s3, %s319
        $region69: #{up_forward.3} parent=19 // pred_fallthru
          _
      $region20: #{up_forward.3} parent=5 // pred_fallthru
        _
      %p321 = scmp.le.s32.totalorder 1, %s10
      %p322 = scmp.lt.s32.totalorder %s10, 3
      %p323 = pnand %p321, %p322
      %p324 = pneg %p323
      // Predicated region
      $region70: #{up_forward.3} parent=5 // pred_check
        _
      $region71: #{up_forward.3} parent=5 // pred_check_branch
        %326 = sbr.rel (%p323) target = $region73
      $region72: #{up_forward.3} parent=5 // pred_region
        %s327 = ssub.s32 %s10, 1
        %s328 = sand.u32 %s72, 1
        %s329 = sand.u32 %s72, 1
        %s330 = smul.addr %s329, 64
        %s331 = scalar_lea.vmem [#allocation3], %s330
        // Predicated region
        $region74: #{up_forward.3} parent=72 // pred_check
          %p332 = pneg %p85
        $region75: #{up_forward.3} parent=72 // pred_check_branch
          %334 = sbr.rel (%p332) target = $region77
        $region76: #{up_forward.3} parent=72 // pred_region
          _
        $region77: #{up_forward.3} parent=72 // pred_fallthru
          _
        %s335 = smul.u32 16, %s20
        %p336 = scmp.lt.s32.totalorder %s335, 15
        %s337 = scalar_select %p336, %s335, 15
        %p338 = scmp.lt.s32.totalorder %s22, 0
        %s339 = scalar_select %p338, %s22, 0
        %s340 = sadd.s32 %s339, %s337
        %s341 = smul.addr %s340, 4
        %s342 = scalar_lea.vmem %s0, %s341
        %p343 = pneg %p57
        %p344 = pneg %p54
        %s345 = sand.u32 %s72, 1
        %s346 = sand.u32 %s72, 1
        %s347 = smul.addr %s346, 64
        %s348 = scalar_lea.vmem [#allocation3], %s347
        %p349 = pneg %p85
        %p350 = pneg %p82
        %p351 = scmp.lt.s32.totalorder %s21, 1
        %s352 = scalar_select %p351, %s21, 1
        %s353 = scalar_lea.vmem %s2, %s352
        %p354 = pneg %p111
        %p355 = pneg %p108
        %p356 = scmp.lt.s32.totalorder %s21, 1
        %s357 = scalar_select %p356, %s21, 1
        %s358 = scalar_lea.vmem %s3, %s357
        %p359 = pneg %p137
        %p360 = pneg %p134
        %p361 = pneg %p165
        %p362 = pneg %p162
        %s363 = sand.u32 %s152, 1
        %s364 = sand.u32 %s152, 1
        %s365 = smul.addr %s364, 64
        %s366 = scalar_lea.vmem [#allocation4], %s365
        %s367 = smul.u32 16, %s20
        %p368 = scmp.lt.s32.totalorder %s367, 15
        %s369 = scalar_select %p368, %s367, 15
        %p370 = scmp.lt.s32.totalorder %s22, 0
        %s371 = scalar_select %p370, %s22, 0
        %s372 = sadd.s32 %s371, %s369
        %s373 = smul.addr %s372, 4
        %s374 = scalar_lea.vmem %s0, %s373
        %s375 = smul.u32 16, %s20
        %s376 = smul.u32 16, %s22
        %p377 = scmp.lt.s32.totalorder %s21, 1
        %s378 = scalar_select %p377, %s21, 1
        %s379 = scalar_lea.vmem %s2, %s378
        %p380 = scmp.lt.s32.totalorder %s21, 1
        %s381 = scalar_select %p380, %s21, 1
        %s382 = scalar_lea.vmem %s3, %s381
        %s383 = smul.u32 16, %s20
        %v385 = vld [vmem:[%s374] sm:$0xf]
        %v386 = vld [vmem:[%s374 + $0x4] sm:$0xf]
        %v387 = vld [vmem:[%s374 + $0x8] sm:$0xf]
        %v388 = vld [vmem:[%s374 + $0xc] sm:$0xf]
        %v389 = vld [vmem:[%s374 + $0x10] sm:$0xf]
        %v390 = vld [vmem:[%s374 + $0x14] sm:$0xf]
        %v391 = vld [vmem:[%s374 + $0x18] sm:$0xf]
        %v392 = vld [vmem:[%s374 + $0x1c] sm:$0xf]
        %v393 = vld [vmem:[%s374 + $0x20] sm:$0xf]
        %v394 = vld [vmem:[%s374 + $0x24] sm:$0xf]
        %v395 = vld [vmem:[%s374 + $0x28] sm:$0xf]
        %v396 = vld [vmem:[%s374 + $0x2c] sm:$0xf]
        %v397 = vld [vmem:[%s374 + $0x30] sm:$0xf]
        %v398 = vld [vmem:[%s374 + $0x34] sm:$0xf]
        %v399 = vld [vmem:[%s374 + $0x38] sm:$0xf]
        %v400 = vld [vmem:[%s374 + $0x3c] sm:$0xf]
        %v401 = vld [vmem:[%s331] sm:$0xf]
        %v402 = vld [vmem:[%s331 + $0x4] sm:$0xf]
        %v403 = vld [vmem:[%s331 + $0x8] sm:$0xf]
        %v404 = vld [vmem:[%s331 + $0xc] sm:$0xf]
        %v405 = vld [vmem:[%s331 + $0x10] sm:$0xf]
        %v406 = vld [vmem:[%s331 + $0x14] sm:$0xf]
        %v407 = vld [vmem:[%s331 + $0x18] sm:$0xf]
        %v408 = vld [vmem:[%s331 + $0x1c] sm:$0xf]
        %v409 = vld [vmem:[%s331 + $0x20] sm:$0xf]
        %v410 = vld [vmem:[%s331 + $0x24] sm:$0xf]
        %v411 = vld [vmem:[%s331 + $0x28] sm:$0xf]
        %v412 = vld [vmem:[%s331 + $0x2c] sm:$0xf]
        %v413 = vld [vmem:[%s331 + $0x30] sm:$0xf]
        %v414 = vld [vmem:[%s331 + $0x34] sm:$0xf]
        %v415 = vld [vmem:[%s331 + $0x38] sm:$0xf]
        %v416 = vld [vmem:[%s331 + $0x3c] sm:$0xf]
        %v433 = vunpack.c.l.b16 %v385
        %v434 = vunpack.c.l.b16 %v386
        %v435 = vunpack.c.l.b16 %v387
        %v436 = vunpack.c.l.b16 %v388
        %v437 = vunpack.c.l.b16 %v389
        %v438 = vunpack.c.l.b16 %v390
        %v439 = vunpack.c.l.b16 %v391
        %v440 = vunpack.c.l.b16 %v392
        %v441 = vunpack.c.l.b16 %v393
        %v442 = vunpack.c.l.b16 %v394
        %v443 = vunpack.c.l.b16 %v395
        %v444 = vunpack.c.l.b16 %v396
        %v445 = vunpack.c.l.b16 %v397
        %v446 = vunpack.c.l.b16 %v398
        %v447 = vunpack.c.l.b16 %v399
        %v448 = vunpack.c.l.b16 %v400
        %v449 = vpack.c.b16 %v434, %v433
        %v450 = vpack.c.b16 %v436, %v435
        %v451 = vpack.c.b16 %v438, %v437
        %v452 = vpack.c.b16 %v440, %v439
        %v453 = vpack.c.b16 %v442, %v441
        %v454 = vpack.c.b16 %v444, %v443
        %v455 = vpack.c.b16 %v446, %v445
        %v456 = vpack.c.b16 %v448, %v447
        %v481 = vunpack.c.l.b16 %v401
        %v482 = vunpack.c.l.b16 %v402
        %v483 = vunpack.c.l.b16 %v403
        %v484 = vunpack.c.l.b16 %v404
        %v485 = vunpack.c.l.b16 %v405
        %v486 = vunpack.c.l.b16 %v406
        %v487 = vunpack.c.l.b16 %v407
        %v488 = vunpack.c.l.b16 %v408
        %v489 = vunpack.c.l.b16 %v409
        %v490 = vunpack.c.l.b16 %v410
        %v491 = vunpack.c.l.b16 %v411
        %v492 = vunpack.c.l.b16 %v412
        %v493 = vunpack.c.l.b16 %v413
        %v494 = vunpack.c.l.b16 %v414
        %v495 = vunpack.c.l.b16 %v415
        %v496 = vunpack.c.l.b16 %v416
        %v497 = vpack.c.b16 %v482, %v481
        %v498 = vpack.c.b16 %v484, %v483
        %v499 = vpack.c.b16 %v486, %v485
        %v500 = vpack.c.b16 %v488, %v487
        %v501 = vpack.c.b16 %v490, %v489
        %v502 = vpack.c.b16 %v492, %v491
        %v503 = vpack.c.b16 %v494, %v493
        %v504 = vpack.c.b16 %v496, %v495
        %513 = vmatprep.subr.bf16.mxu0 0
        %514 = vmatpush1.bf16.msra.mxu0 %v504
        %515 = vmatprep.subr.bf16.mxu0 0
        %516 = vmatpush1.bf16.msra.mxu0 %v503
        %517 = vmatprep.subr.bf16.mxu0 0
        %518 = vmatpush1.bf16.msra.mxu0 %v502
        %519 = vmatprep.subr.bf16.mxu0 0
        %520 = vmatpush1.bf16.msra.mxu0 %v501
        %521 = vmatprep.subr.bf16.mxu0 0
        %522 = vmatpush1.bf16.msra.mxu0 %v500
        %523 = vmatprep.subr.bf16.mxu0 0
        %524 = vmatpush1.bf16.msra.mxu0 %v499
        %525 = vmatprep.subr.bf16.mxu0 0
        %526 = vmatpush1.bf16.msra.mxu0 %v498
        %527 = vmatprep.subr.bf16.mxu0 0
        %528 = vmatpush1.bf16.msra.mxu0 %v497
        %529 = vmatprep.subr.bf16.mxu0 0
        %530 = vmatpush2.bf16.msra.mxu0 0
        %531 = vmatprep.subr.bf16.mxu0 0
        %532 = vmatpush2.bf16.msra.mxu0 0
        %533 = vmatprep.subr.bf16.mxu0 0
        %534 = vmatpush2.bf16.msra.mxu0 0
        %535 = vmatprep.subr.bf16.mxu0 0
        %536 = vmatpush2.bf16.msra.mxu0 0
        %537 = vmatprep.subr.bf16.mxu0 0
        %538 = vmatpush2.bf16.msra.mxu0 0
        %539 = vmatprep.subr.bf16.mxu0 0
        %540 = vmatpush2.bf16.msra.mxu0 0
        %541 = vmatprep.subr.bf16.mxu0 0
        %542 = vmatpush2.bf16.msra.mxu0 0
        %543 = vmatprep.subr.bf16.mxu0 0
        %544 = vmatpush2.bf16.msra.mxu0 0
        %545 = vmatprep.mubr.bf16.mxu0 0
        %546 = vmatmul.mubr.bf16.gmra.mxu0 %v449
        %v547 = vpop.f32.mrf.mxu0
        %v548 = vadd.f32 0.0, %v547
        %v549 = vpop.f32.mrf.mxu0
        %v550 = vpop.f32.mrf.mxu0
        %v551 = vadd.f32 0.0, %v550
        %v552 = vpop.f32.mrf.mxu0
        %553 = vmatprep.mubr.bf16.mxu0 0
        %554 = vmatmul.mubr.bf16.gmra.mxu0 %v450
        %v555 = vpop.f32.mrf.mxu0
        %v556 = vadd.f32 0.0, %v555
        %v557 = vpop.f32.mrf.mxu0
        %v558 = vpop.f32.mrf.mxu0
        %v559 = vadd.f32 0.0, %v558
        %v560 = vpop.f32.mrf.mxu0
        %561 = vmatprep.mubr.bf16.mxu0 0
        %562 = vmatmul.mubr.bf16.gmra.mxu0 %v451
        %v563 = vpop.f32.mrf.mxu0
        %v564 = vadd.f32 0.0, %v563
        %v565 = vpop.f32.mrf.mxu0
        %v566 = vpop.f32.mrf.mxu0
        %v567 = vadd.f32 0.0, %v566
        %v568 = vpop.f32.mrf.mxu0
        %569 = vmatprep.mubr.bf16.mxu0 0
        %570 = vmatmul.mubr.bf16.gmra.mxu0 %v452
        %v571 = vpop.f32.mrf.mxu0
        %v572 = vadd.f32 0.0, %v571
        %v573 = vpop.f32.mrf.mxu0
        %v574 = vpop.f32.mrf.mxu0
        %v575 = vadd.f32 0.0, %v574
        %v576 = vpop.f32.mrf.mxu0
        %577 = vmatprep.mubr.bf16.mxu0 0
        %578 = vmatmul.mubr.bf16.gmra.mxu0 %v453
        %v579 = vpop.f32.mrf.mxu0
        %v580 = vadd.f32 0.0, %v579
        %v581 = vpop.f32.mrf.mxu0
        %v582 = vpop.f32.mrf.mxu0
        %v583 = vadd.f32 0.0, %v582
        %v584 = vpop.f32.mrf.mxu0
        %585 = vmatprep.mubr.bf16.mxu0 0
        %586 = vmatmul.mubr.bf16.gmra.mxu0 %v454
        %v587 = vpop.f32.mrf.mxu0
        %v588 = vadd.f32 0.0, %v587
        %v589 = vpop.f32.mrf.mxu0
        %v590 = vpop.f32.mrf.mxu0
        %v591 = vadd.f32 0.0, %v590
        %v592 = vpop.f32.mrf.mxu0
        %593 = vmatprep.mubr.bf16.mxu0 0
        %594 = vmatmul.mubr.bf16.gmra.mxu0 %v455
        %v595 = vpop.f32.mrf.mxu0
        %v596 = vadd.f32 0.0, %v595
        %v597 = vpop.f32.mrf.mxu0
        %v598 = vpop.f32.mrf.mxu0
        %v599 = vadd.f32 0.0, %v598
        %v600 = vpop.f32.mrf.mxu0
        %601 = vmatprep.mubr.bf16.mxu0 0
        %602 = vmatmul.mubr.bf16.gmra.mxu0 %v456
        %v603 = vpop.f32.mrf.mxu0
        %v604 = vadd.f32 0.0, %v603
        %v605 = vpop.f32.mrf.mxu0
        %v606 = vpop.f32.mrf.mxu0
        %v607 = vadd.f32 0.0, %v606
        %v608 = vpop.f32.mrf.mxu0
        %609 = vdwg.mxu0
        %v610 = vld [vmem:[%s379] sm:$0x1]
        %v612 = vlaneseq
        %v613 = vshrl.u32 %v612, 7
        %v614 = vsub.s32 0, %v613
        %v615 = vrot.slane %v610, %v614
        %v617 = vmul.f32 %v548, %v615
        %v618 = vmul.f32 %v551, %v615
        %v619 = vmul.f32 %v556, %v615
        %v620 = vmul.f32 %v559, %v615
        %v621 = vmul.f32 %v564, %v615
        %v622 = vmul.f32 %v567, %v615
        %v623 = vmul.f32 %v572, %v615
        %v624 = vmul.f32 %v575, %v615
        %v625 = vmul.f32 %v580, %v615
        %v626 = vmul.f32 %v583, %v615
        %v627 = vmul.f32 %v588, %v615
        %v628 = vmul.f32 %v591, %v615
        %v629 = vmul.f32 %v596, %v615
        %v630 = vmul.f32 %v599, %v615
        %v631 = vmul.f32 %v604, %v615
        %v632 = vmul.f32 %v607, %v615
        %v633 = vld [vmem:[%s382] sm:$0x1]
        %v635 = vlaneseq
        %v636 = vshrl.u32 %v635, 7
        %v637 = vsub.s32 0, %v636
        %v638 = vrot.slane %v633, %v637
        %v640 = vadd.f32 %v617, %v638
        %v641 = vadd.f32 %v618, %v638
        %v642 = vadd.f32 %v619, %v638
        %v643 = vadd.f32 %v620, %v638
        %v644 = vadd.f32 %v621, %v638
        %v645 = vadd.f32 %v622, %v638
        %v646 = vadd.f32 %v623, %v638
        %v647 = vadd.f32 %v624, %v638
        %v648 = vadd.f32 %v625, %v638
        %v649 = vadd.f32 %v626, %v638
        %v650 = vadd.f32 %v627, %v638
        %v651 = vadd.f32 %v628, %v638
        %v652 = vadd.f32 %v629, %v638
        %v653 = vadd.f32 %v630, %v638
        %v654 = vadd.f32 %v631, %v638
        %v655 = vadd.f32 %v632, %v638
        %v656 = vpack.c.bf16 %v641, %v640
        %v657 = vpack.c.bf16 %v643, %v642
        %v658 = vpack.c.bf16 %v645, %v644
        %v659 = vpack.c.bf16 %v647, %v646
        %v660 = vpack.c.bf16 %v649, %v648
        %v661 = vpack.c.bf16 %v651, %v650
        %v662 = vpack.c.bf16 %v653, %v652
        %v663 = vpack.c.bf16 %v655, %v654
        %v672 = vunpack.c.l.b16 %v656
        %v673 = vunpack.c.h.b16 %v656
        %v674 = vunpack.c.l.b16 %v657
        %v675 = vunpack.c.h.b16 %v657
        %v676 = vunpack.c.l.b16 %v658
        %v677 = vunpack.c.h.b16 %v658
        %v678 = vunpack.c.l.b16 %v659
        %v679 = vunpack.c.h.b16 %v659
        %v680 = vunpack.c.l.b16 %v660
        %v681 = vunpack.c.h.b16 %v660
        %v682 = vunpack.c.l.b16 %v661
        %v683 = vunpack.c.h.b16 %v661
        %v684 = vunpack.c.l.b16 %v662
        %v685 = vunpack.c.h.b16 %v662
        %v686 = vunpack.c.l.b16 %v663
        %v687 = vunpack.c.h.b16 %v663
        %v688 = vpack.c.b16 %v672, %v672
        %v689 = vpack.c.b16 %v673, %v673
        %v690 = vpack.c.b16 %v674, %v674
        %v691 = vpack.c.b16 %v675, %v675
        %v692 = vpack.c.b16 %v676, %v676
        %v693 = vpack.c.b16 %v677, %v677
        %v694 = vpack.c.b16 %v678, %v678
        %v695 = vpack.c.b16 %v679, %v679
        %v696 = vpack.c.b16 %v680, %v680
        %v697 = vpack.c.b16 %v681, %v681
        %v698 = vpack.c.b16 %v682, %v682
        %v699 = vpack.c.b16 %v683, %v683
        %v700 = vpack.c.b16 %v684, %v684
        %v701 = vpack.c.b16 %v685, %v685
        %v702 = vpack.c.b16 %v686, %v686
        %v703 = vpack.c.b16 %v687, %v687
        %720 = vst [vmem:[%s366] sm:$0xf] %v688
        %721 = vst [vmem:[%s366 + $0x4] sm:$0xf] %v689
        %722 = vst [vmem:[%s366 + $0x8] sm:$0xf] %v690
        %723 = vst [vmem:[%s366 + $0xc] sm:$0xf] %v691
        %724 = vst [vmem:[%s366 + $0x10] sm:$0xf] %v692
        %725 = vst [vmem:[%s366 + $0x14] sm:$0xf] %v693
        %726 = vst [vmem:[%s366 + $0x18] sm:$0xf] %v694
        %727 = vst [vmem:[%s366 + $0x1c] sm:$0xf] %v695
        %728 = vst [vmem:[%s366 + $0x20] sm:$0xf] %v696
        %729 = vst [vmem:[%s366 + $0x24] sm:$0xf] %v697
        %730 = vst [vmem:[%s366 + $0x28] sm:$0xf] %v698
        %731 = vst [vmem:[%s366 + $0x2c] sm:$0xf] %v699
        %732 = vst [vmem:[%s366 + $0x30] sm:$0xf] %v700
        %733 = vst [vmem:[%s366 + $0x34] sm:$0xf] %v701
        %734 = vst [vmem:[%s366 + $0x38] sm:$0xf] %v702
        %735 = vst [vmem:[%s366 + $0x3c] sm:$0xf] %v703
        %s736 = sand.u32 %s152, 1
        %s737 = sand.u32 %s152, 1
        %s738 = smul.addr %s737, 64
        %s739 = scalar_lea.vmem [#allocation4], %s738
        // Predicated region
        $region78: #{up_forward.3} parent=72 // pred_check
          %p740 = pneg %p162
        $region79: #{up_forward.3} parent=72 // pred_check_branch
          %742 = sbr.rel (%p740) target = $region81
        $region80: #{up_forward.3} parent=72 // pred_region
          %s743 = smul.u32 16, %s20
          %s744 = smul.addr %s743, 2
          %s745 = sadd.s32 %s21, %s744
          %s746 = smul.addr %s745, 4
          %s747 = scalar_lea.vmem %s4, %s746
          // Predicated region
          $region82: #{up_forward.3} parent=80 // pred_check
            _
          $region83: #{up_forward.3} parent=80 // pred_check_branch
            %749 = sbr.rel (0) target = $region85
          $region84: #{up_forward.3} parent=80 // pred_region
            // Predicated region
            $region86: #{up_forward.3} parent=84 // pred_check
              _
            $region87: #{up_forward.3} parent=84 // pred_check_branch
              %751 = sbr.rel target = $region89
            $region88: #{up_forward.3} parent=84 // pred_region
              // Predicated region
              $region101: #{up_forward.3} parent=88 // pred_check
                _
              $region102: #{up_forward.3} parent=88 // pred_check_branch
                %797 = sbr.rel (0) target = $region104
              $region103: #{up_forward.3} parent=88 // pred_region
                loop: start=0, step=1, limit=1
                $region105: #{up_forward.3} parent=103 // loop_pre_header
                  _
                $region106: #{up_forward.3} parent=103 // loop_header
                  %s799 = sphi 0, %s803
                  %p800 = scmp.ge.s32.totalorder %s799, 1
                  %s804 = sphi %s739, %s739
                  %s805 = sphi %s747, %s747
                $region107: #{up_forward.3} parent=103 // loop_header_branch
                  %802 = sbr.rel (%p800) target = $region111
                $region108: #{up_forward.3} parent=103 // loop_body
                  _
                $region109: #{up_forward.3} parent=103 // loop_footer
                  %s803 = sadd.s32 1, %s799
                $region110: #{up_forward.3} parent=103 // loop_footer_branch
                  %798 = sbr.rel target = $region106
                $region111: #{up_forward.3} parent=103 // loop_exit
                  _
                %s807 = ssub.s32 16, 1
                loop: start=0, step=1, limit=1
                $region112: #{up_forward.3} parent=103 // loop_pre_header
                  _
                $region113: #{up_forward.3} parent=103 // loop_header
                  %s809 = sphi 0, %s813
                  %p810 = scmp.ge.s32.totalorder %s809, 1
                  %s814 = sphi %s739, %s739
                  %s815 = sphi %s747, %s747
                $region114: #{up_forward.3} parent=103 // loop_header_branch
                  %812 = sbr.rel (%p810) target = $region118
                $region115: #{up_forward.3} parent=103 // loop_body
                  %v816 = vld [vmem:[%s814] sm:%s807]
                  %817 = vst [vmem:[%s815] sm:%s807] %v816
                  %v818 = vld [vmem:[%s814 + $0x4] sm:%s807]
                  %819 = vst [vmem:[%s815 + $0x8] sm:%s807] %v818
                  %v820 = vld [vmem:[%s814 + $0x8] sm:%s807]
                  %821 = vst [vmem:[%s815 + $0x10] sm:%s807] %v820
                  %v822 = vld [vmem:[%s814 + $0xc] sm:%s807]
                  %823 = vst [vmem:[%s815 + $0x18] sm:%s807] %v822
                  %v824 = vld [vmem:[%s814 + $0x10] sm:%s807]
                  %825 = vst [vmem:[%s815 + $0x20] sm:%s807] %v824
                  %v826 = vld [vmem:[%s814 + $0x14] sm:%s807]
                  %827 = vst [vmem:[%s815 + $0x28] sm:%s807] %v826
                  %v828 = vld [vmem:[%s814 + $0x18] sm:%s807]
                  %829 = vst [vmem:[%s815 + $0x30] sm:%s807] %v828
                  %v830 = vld [vmem:[%s814 + $0x1c] sm:%s807]
                  %831 = vst [vmem:[%s815 + $0x38] sm:%s807] %v830
                  %v832 = vld [vmem:[%s814 + $0x20] sm:%s807]
                  %833 = vst [vmem:[%s815 + $0x40] sm:%s807] %v832
                  %v834 = vld [vmem:[%s814 + $0x24] sm:%s807]
                  %835 = vst [vmem:[%s815 + $0x48] sm:%s807] %v834
                  %v836 = vld [vmem:[%s814 + $0x28] sm:%s807]
                  %837 = vst [vmem:[%s815 + $0x50] sm:%s807] %v836
                  %v838 = vld [vmem:[%s814 + $0x2c] sm:%s807]
                  %839 = vst [vmem:[%s815 + $0x58] sm:%s807] %v838
                  %v840 = vld [vmem:[%s814 + $0x30] sm:%s807]
                  %841 = vst [vmem:[%s815 + $0x60] sm:%s807] %v840
                  %v842 = vld [vmem:[%s814 + $0x34] sm:%s807]
                  %843 = vst [vmem:[%s815 + $0x68] sm:%s807] %v842
                  %v844 = vld [vmem:[%s814 + $0x38] sm:%s807]
                  %845 = vst [vmem:[%s815 + $0x70] sm:%s807] %v844
                  %v846 = vld [vmem:[%s814 + $0x3c] sm:%s807]
                  %847 = vst [vmem:[%s815 + $0x78] sm:%s807] %v846
                $region116: #{up_forward.3} parent=103 // loop_footer
                  %s813 = sadd.s32 1, %s809
                $region117: #{up_forward.3} parent=103 // loop_footer_branch
                  %808 = sbr.rel target = $region113
                $region118: #{up_forward.3} parent=103 // loop_exit
                  _
              $region104: #{up_forward.3} parent=88 // pred_fallthru
                _
            $region89: #{up_forward.3} parent=84 // pred_fallthru
              _
            // Predicated region
            $region90: #{up_forward.3} parent=84 // pred_check
              _
            $region91: #{up_forward.3} parent=84 // pred_check_branch
              %753 = sbr.rel (0) target = $region93
            $region92: #{up_forward.3} parent=84 // pred_region
              %s755 = ssub.s32 16, 1
              loop: start=0, step=1, limit=1
              $region94: #{up_forward.3} parent=92 // loop_pre_header
                _
              $region95: #{up_forward.3} parent=92 // loop_header
                %s757 = sphi 0, %s761
                %p758 = scmp.ge.s32.totalorder %s757, 1
                %s762 = sphi %s739, %s739
                %s763 = sphi %s747, %s747
              $region96: #{up_forward.3} parent=92 // loop_header_branch
                %760 = sbr.rel (%p758) target = $region100
              $region97: #{up_forward.3} parent=92 // loop_body
                %v764 = vld [vmem:[%s762] sm:%s755]
                %765 = vst [vmem:[%s763] sm:%s755] %v764
                %v766 = vld [vmem:[%s762 + $0x4] sm:%s755]
                %767 = vst [vmem:[%s763 + $0x8] sm:%s755] %v766
                %v768 = vld [vmem:[%s762 + $0x8] sm:%s755]
                %769 = vst [vmem:[%s763 + $0x10] sm:%s755] %v768
                %v770 = vld [vmem:[%s762 + $0xc] sm:%s755]
                %771 = vst [vmem:[%s763 + $0x18] sm:%s755] %v770
                %v772 = vld [vmem:[%s762 + $0x10] sm:%s755]
                %773 = vst [vmem:[%s763 + $0x20] sm:%s755] %v772
                %v774 = vld [vmem:[%s762 + $0x14] sm:%s755]
                %775 = vst [vmem:[%s763 + $0x28] sm:%s755] %v774
                %v776 = vld [vmem:[%s762 + $0x18] sm:%s755]
                %777 = vst [vmem:[%s763 + $0x30] sm:%s755] %v776
                %v778 = vld [vmem:[%s762 + $0x1c] sm:%s755]
                %779 = vst [vmem:[%s763 + $0x38] sm:%s755] %v778
                %v780 = vld [vmem:[%s762 + $0x20] sm:%s755]
                %781 = vst [vmem:[%s763 + $0x40] sm:%s755] %v780
                %v782 = vld [vmem:[%s762 + $0x24] sm:%s755]
                %783 = vst [vmem:[%s763 + $0x48] sm:%s755] %v782
                %v784 = vld [vmem:[%s762 + $0x28] sm:%s755]
                %785 = vst [vmem:[%s763 + $0x50] sm:%s755] %v784
                %v786 = vld [vmem:[%s762 + $0x2c] sm:%s755]
                %787 = vst [vmem:[%s763 + $0x58] sm:%s755] %v786
                %v788 = vld [vmem:[%s762 + $0x30] sm:%s755]
                %789 = vst [vmem:[%s763 + $0x60] sm:%s755] %v788
                %v790 = vld [vmem:[%s762 + $0x34] sm:%s755]
                %791 = vst [vmem:[%s763 + $0x68] sm:%s755] %v790
                %v792 = vld [vmem:[%s762 + $0x38] sm:%s755]
                %793 = vst [vmem:[%s763 + $0x70] sm:%s755] %v792
                %v794 = vld [vmem:[%s762 + $0x3c] sm:%s755]
                %795 = vst [vmem:[%s763 + $0x78] sm:%s755] %v794
              $region98: #{up_forward.3} parent=92 // loop_footer
                %s761 = sadd.s32 1, %s757
              $region99: #{up_forward.3} parent=92 // loop_footer_branch
                %756 = sbr.rel target = $region95
              $region100: #{up_forward.3} parent=92 // loop_exit
                _
            $region93: #{up_forward.3} parent=84 // pred_fallthru
              _
          $region85: #{up_forward.3} parent=80 // pred_fallthru
            _
          %848 = vnop
        $region81: #{up_forward.3} parent=72 // pred_fallthru
          _
      $region73: #{up_forward.3} parent=5 // pred_fallthru
        _
      %p849 = scmp.le.s32.totalorder 2, %s10
      // Predicated region
      $region119: #{up_forward.3} parent=5 // pred_check
        %p850 = pneg %p849
      $region120: #{up_forward.3} parent=5 // pred_check_branch
        %852 = sbr.rel (%p850) target = $region122
      $region121: #{up_forward.3} parent=5 // pred_region
        %s853 = ssub.s32 %s10, 2
        // Predicated region
        $region123: #{up_forward.3} parent=121 // pred_check
          %p854 = pneg %p168
        $region124: #{up_forward.3} parent=121 // pred_check_branch
          %856 = sbr.rel (%p854) target = $region126
        $region125: #{up_forward.3} parent=121 // pred_region
          %s857 = sand.u32 %s153, 1
          %s858 = sand.u32 %s153, 1
          %s859 = smul.addr %s858, 64
          %s860 = scalar_lea.vmem [#allocation4], %s859
        $region126: #{up_forward.3} parent=121 // pred_fallthru
          _
      $region122: #{up_forward.3} parent=5 // pred_fallthru
        _
    $region6: #{up_forward.3} parent=1 // loop_footer
      %s14 = sadd.s32 1, %s10
    $region7: #{up_forward.3} parent=1 // loop_footer_branch
      %9 = sbr.rel target = $region3
    $region8: #{up_forward.3} parent=1 // loop_exit
      _

// kernel: up_forward.4
$region0: #{up_forward.4}
  #allocation0 [shape = 'u32[]', space=smem, size = 0x4, offset = 0x4, fixed_abs, tag = 'smem constant byte address 0x4 - core index']
  #allocation1 [shape = 'u32[144,128]{1,0:T(1,128)}', space=vmem, size = 0x12000, scoped, tag = 'internal scratch']
  %s0 = inlined_call_operand.vmem [shape: bf16[2,18,18,128], index: 0, kind: input, shape index: {}]
  %s1 = inlined_call_operand.vmem [shape: bf16[9,128,64], index: 1, kind: input, shape index: {}]
  %s2 = inlined_call_operand.vmem [shape: f32[1,64], index: 2, kind: input, shape index: {}]
  %s3 = inlined_call_operand.vmem [shape: f32[1,64], index: 3, kind: input, shape index: {}]
  %s4 = inlined_call_operand.vmem [shape: bf16[2,16,16,64], index: 4, kind: output, shape index: {}]
  %s5 = sld [smem:[#allocation0]]
  $region49: #{up_forward.4} parent=0
    _
  %s7 = ssub.s32 1, %s5
  %s8 = scalar_select 0, %s7, %s5
  loop: start=0, step=1, limit=4
  $region2: #{up_forward.4} parent=0 // loop_pre_header
    _
  $region3: #{up_forward.4} parent=0 // loop_header
    %s10 = sphi 0, %s14
    %p11 = scmp.ge.s32.totalorder %s10, 4
    %s20 = sphi 0, %s22
    %s23 = sphi 0, %s20
    %s24 = sphi 0, %s23
    %s40 = sphi 0, %s24
    %s44 = sphi 0, %s44
    %s46 = sphi 0, %s44
    %s47 = sphi 0, %s46
    %s61 = sphi 0, %s47
    %s65 = sphi 0, %s65
    %s67 = sphi 0, %s65
    %s68 = sphi 0, %s67
    %s82 = sphi 0, %s68
    %s86 = sphi 0, %s86
    %s88 = sphi 0, %s86
    %s89 = sphi 0, %s88
    %s103 = sphi 0, %s89
    %s109 = sphi 0, %s111
    %s112 = sphi 0, %s109
    %s113 = sphi 0, %s112
    %s129 = sphi 0, %s113
  $region4: #{up_forward.4} parent=0 // loop_header_branch
    %13 = sbr.rel (%p11) target = $region8
  $region5: #{up_forward.4} parent=0 // loop_body
    %s15 = ssub.s32 %s10, 1
    %s16 = ssub.s32 %s10, 2
    %s17 = sadd.s32 %s10, 1
    %s18 = ssub.s32 %s10, %s17
    %p19 = scmp.eq.s32.totalorder %s18, 0
    %s21 = sadd.s32 %s20, 1
    %s22 = scalar_select %p19, %s20, %s21
    %p25 = pneg %p19
    %p26 = scmp.eq.s32.totalorder %s10, 1
    %p27 = por %p25, %p26
    %p28 = scmp.ne.s32.totalorder %s20, %s23
    %p29 = scmp.eq.s32.totalorder %s10, 0
    %p30 = por %p28, %p29
    %p31 = scmp.ne.s32.totalorder %s20, %s23
    %p32 = scmp.eq.s32.totalorder %s15, 1
    %p33 = por %p31, %p32
    %p34 = scmp.ne.s32.totalorder %s23, %s24
    %p35 = scmp.eq.s32.totalorder %s15, 0
    %p36 = por %p34, %p35
    %p37 = scmp.ne.s32.totalorder %s23, %s24
    %p38 = scmp.eq.s32.totalorder %s16, 1
    %p39 = por %p37, %p38
    %p41 = scmp.ne.s32.totalorder %s24, %s40
    %p42 = scmp.eq.s32.totalorder %s16, 0
    %p43 = por %p41, %p42
    %s45 = sadd.s32 %s44, 1
    %p48 = scmp.eq.s32.totalorder %s10, 1
    %p49 = scmp.ne.s32.totalorder %s44, %s46
    %p50 = scmp.eq.s32.totalorder %s10, 0
    %p51 = por %p49, %p50
    %p52 = scmp.ne.s32.totalorder %s44, %s46
    %p53 = scmp.eq.s32.totalorder %s15, 1
    %p54 = por %p52, %p53
    %p55 = scmp.ne.s32.totalorder %s46, %s47
    %p56 = scmp.eq.s32.totalorder %s15, 0
    %p57 = por %p55, %p56
    %p58 = scmp.ne.s32.totalorder %s46, %s47
    %p59 = scmp.eq.s32.totalorder %s16, 1
    %p60 = por %p58, %p59
    %p62 = scmp.ne.s32.totalorder %s47, %s61
    %p63 = scmp.eq.s32.totalorder %s16, 0
    %p64 = por %p62, %p63
    %s66 = sadd.s32 %s65, 1
    %p69 = scmp.eq.s32.totalorder %s10, 1
    %p70 = scmp.ne.s32.totalorder %s65, %s67
    %p71 = scmp.eq.s32.totalorder %s10, 0
    %p72 = por %p70, %p71
    %p73 = scmp.ne.s32.totalorder %s65, %s67
    %p74 = scmp.eq.s32.totalorder %s15, 1
    %p75 = por %p73, %p74
    %p76 = scmp.ne.s32.totalorder %s67, %s68
    %p77 = scmp.eq.s32.totalorder %s15, 0
    %p78 = por %p76, %p77
    %p79 = scmp.ne.s32.totalorder %s67, %s68
    %p80 = scmp.eq.s32.totalorder %s16, 1
    %p81 = por %p79, %p80
    %p83 = scmp.ne.s32.totalorder %s68, %s82
    %p84 = scmp.eq.s32.totalorder %s16, 0
    %p85 = por %p83, %p84
    %s87 = sadd.s32 %s86, 1
    %p90 = scmp.eq.s32.totalorder %s10, 1
    %p91 = scmp.ne.s32.totalorder %s86, %s88
    %p92 = scmp.eq.s32.totalorder %s10, 0
    %p93 = por %p91, %p92
    %p94 = scmp.ne.s32.totalorder %s86, %s88
    %p95 = scmp.eq.s32.totalorder %s15, 1
    %p96 = por %p94, %p95
    %p97 = scmp.ne.s32.totalorder %s88, %s89
    %p98 = scmp.eq.s32.totalorder %s15, 0
    %p99 = por %p97, %p98
    %p100 = scmp.ne.s32.totalorder %s88, %s89
    %p101 = scmp.eq.s32.totalorder %s16, 1
    %p102 = por %p100, %p101
    %p104 = scmp.ne.s32.totalorder %s89, %s103
    %p105 = scmp.eq.s32.totalorder %s16, 0
    %p106 = por %p104, %p105
    %s107 = ssub.s32 %s10, %s17
    %p108 = scmp.eq.s32.totalorder %s107, 0
    %s110 = sadd.s32 %s109, 1
    %s111 = scalar_select %p108, %s109, %s110
    %p114 = pneg %p108
    %p115 = scmp.eq.s32.totalorder %s10, 1
    %p116 = por %p114, %p115
    %p117 = scmp.ne.s32.totalorder %s109, %s112
    %p118 = scmp.eq.s32.totalorder %s10, 0
    %p119 = por %p117, %p118
    %p120 = scmp.ne.s32.totalorder %s109, %s112
    %p121 = scmp.eq.s32.totalorder %s15, 1
    %p122 = por %p120, %p121
    %p123 = scmp.ne.s32.totalorder %s112, %s113
    %p124 = scmp.eq.s32.totalorder %s15, 0
    %p125 = por %p123, %p124
    %p126 = scmp.ne.s32.totalorder %s112, %s113
    %p127 = scmp.eq.s32.totalorder %s16, 1
    %p128 = por %p126, %p127
    %p130 = scmp.ne.s32.totalorder %s113, %s129
    %p131 = scmp.eq.s32.totalorder %s16, 0
    %p132 = por %p130, %p131
    %p133 = scmp.le.s32.totalorder 1, %s10
    %p134 = scmp.lt.s32.totalorder %s10, 3
    %p135 = pnand %p133, %p134
    %p136 = pneg %p135
    // Predicated region
    $region9: #{up_forward.4} parent=5 // pred_check
      _
    $region10: #{up_forward.4} parent=5 // pred_check_branch
      %138 = sbr.rel (%p135) target = $region12
    $region11: #{up_forward.4} parent=5 // pred_region
      %s139 = ssub.s32 %s10, 1
      // Predicated region
      $region13: #{up_forward.4} parent=11 // pred_check
        %p140 = pneg %p57
      $region14: #{up_forward.4} parent=11 // pred_check_branch
        %142 = sbr.rel (%p140) target = $region16
      $region15: #{up_forward.4} parent=11 // pred_region
        _
      $region16: #{up_forward.4} parent=11 // pred_fallthru
        _
      // Predicated region
      $region17: #{up_forward.4} parent=11 // pred_check
        %p143 = pneg %p78
      $region18: #{up_forward.4} parent=11 // pred_check_branch
        %145 = sbr.rel (%p143) target = $region20
      $region19: #{up_forward.4} parent=11 // pred_region
        _
      $region20: #{up_forward.4} parent=11 // pred_fallthru
        _
      // Predicated region
      $region21: #{up_forward.4} parent=11 // pred_check
        %p146 = pneg %p99
      $region22: #{up_forward.4} parent=11 // pred_check_branch
        %148 = sbr.rel (%p146) target = $region24
      $region23: #{up_forward.4} parent=11 // pred_region
        _
      $region24: #{up_forward.4} parent=11 // pred_fallthru
        _
    $region12: #{up_forward.4} parent=5 // pred_fallthru
      _
    %p149 = scmp.lt.s32.totalorder %s10, 2
    // Predicated region
    $region25: #{up_forward.4} parent=5 // pred_check
      %p150 = pneg %p149
    $region26: #{up_forward.4} parent=5 // pred_check_branch
      %152 = sbr.rel (%p150) target = $region28
    $region27: #{up_forward.4} parent=5 // pred_region
      // Predicated region
      $region29: #{up_forward.4} parent=27 // pred_check
        %p153 = pneg %p30
      $region30: #{up_forward.4} parent=27 // pred_check_branch
        %155 = sbr.rel (%p153) target = $region32
      $region31: #{up_forward.4} parent=27 // pred_region
        %p156 = scmp.lt.s32.totalorder %s10, 1
        %s157 = scalar_select %p156, %s10, 1
        %s158 = smul.addr %s157, 54
        %s159 = smul.addr %s158, 4
        %s160 = scalar_lea.vmem %s0, %s159
      $region32: #{up_forward.4} parent=27 // pred_fallthru
        _
    $region28: #{up_forward.4} parent=5 // pred_fallthru
      _
    %p161 = scmp.le.s32.totalorder 1, %s10
    %p162 = scmp.lt.s32.totalorder %s10, 3
    %p163 = pnand %p161, %p162
    %p164 = pneg %p163
    // Predicated region
    $region33: #{up_forward.4} parent=5 // pred_check
      _
    $region34: #{up_forward.4} parent=5 // pred_check_branch
      %166 = sbr.rel (%p163) target = $region36
    $region35: #{up_forward.4} parent=5 // pred_region
      %s167 = ssub.s32 %s10, 1
      %p168 = scmp.lt.s32.totalorder %s15, 1
      %s169 = scalar_select %p168, %s15, 1
      %s170 = smul.addr %s169, 54
      %s171 = smul.addr %s170, 4
      %s172 = scalar_lea.vmem %s0, %s171
      %p173 = pneg %p36
      %p174 = pneg %p33
      %p175 = pneg %p57
      %p176 = pneg %p54
      %p177 = pneg %p78
      %p178 = pneg %p75
      %p179 = pneg %p99
      %p180 = pneg %p96
      %p181 = pneg %p125
      %p182 = pneg %p122
      %p183 = scmp.lt.s32.totalorder %s15, 1
      %s184 = scalar_select %p183, %s15, 1
      %s185 = smul.addr %s184, 32
      %s186 = smul.addr %s185, 4
      %s187 = scalar_lea.vmem %s4, %s186
      %p188 = scmp.lt.s32.totalorder %s15, 1
      %s189 = scalar_select %p188, %s15, 1
      %s190 = smul.addr %s189, 54
      %s191 = smul.addr %s190, 4
      %s192 = scalar_lea.vmem %s0, %s191
      %p193 = scmp.lt.s32.totalorder %s15, 1
      %s194 = scalar_select %p193, %s15, 1
      %s195 = smul.addr %s194, 32
      %s196 = smul.addr %s195, 4
      %s197 = scalar_lea.vmem %s4, %s196
      %v199 = vld [vmem:[%s192] sm:$0xf]
      %v200 = vld [vmem:[%s192 + $0x4] sm:$0xf]
      %v201 = vld [vmem:[%s192 + $0xc] sm:$0xf]
      %v202 = vld [vmem:[%s192 + $0x10] sm:$0xf]
      %v203 = vld [vmem:[%s192 + $0x18] sm:$0xf]
      %v204 = vld [vmem:[%s192 + $0x1c] sm:$0xf]
      %v205 = vld [vmem:[%s192 + $0x24] sm:$0xf]
      %v206 = vld [vmem:[%s192 + $0x28] sm:$0xf]
      %v207 = vld [vmem:[%s192 + $0x30] sm:$0xf]
      %v208 = vld [vmem:[%s192 + $0x34] sm:$0xf]
      %v209 = vld [vmem:[%s192 + $0x3c] sm:$0xf]
      %v210 = vld [vmem:[%s192 + $0x40] sm:$0xf]
      %v211 = vld [vmem:[%s192 + $0x48] sm:$0xf]
      %v212 = vld [vmem:[%s192 + $0x4c] sm:$0xf]
      %v213 = vld [vmem:[%s192 + $0x54] sm:$0xf]
      %v214 = vld [vmem:[%s192 + $0x58] sm:$0xf]
      %v215 = vld [vmem:[%s192 + $0x60] sm:$0xf]
      %v216 = vld [vmem:[%s192 + $0x64] sm:$0xf]
      %v217 = vld [vmem:[%s192 + $0x6c] sm:$0xf]
      %v218 = vld [vmem:[%s192 + $0x70] sm:$0xf]
      %v219 = vld [vmem:[%s192 + $0x78] sm:$0xf]
      %v220 = vld [vmem:[%s192 + $0x7c] sm:$0xf]
      %v221 = vld [vmem:[%s192 + $0x84] sm:$0xf]
      %v222 = vld [vmem:[%s192 + $0x88] sm:$0xf]
      %v223 = vld [vmem:[%s192 + $0x90] sm:$0xf]
      %v224 = vld [vmem:[%s192 + $0x94] sm:$0xf]
      %v225 = vld [vmem:[%s192 + $0x9c] sm:$0xf]
      %v226 = vld [vmem:[%s192 + $0xa0] sm:$0xf]
      %v227 = vld [vmem:[%s192 + $0xa8] sm:$0xf]
      %v228 = vld [vmem:[%s192 + $0xac] sm:$0xf]
      %v229 = vld [vmem:[%s192 + $0xb4] sm:$0xf]
      %v230 = vld [vmem:[%s192 + $0xb8] sm:$0xf]
      %v231 = vld [vmem:[%s1] sm:$0xf]
      %v232 = vld [vmem:[%s1 + $0x4] sm:$0xf]
      %v233 = vld [vmem:[%s1 + $0x8] sm:$0xf]
      %v234 = vld [vmem:[%s1 + $0xc] sm:$0xf]
      %v235 = vld [vmem:[%s1 + $0x10] sm:$0xf]
      %v236 = vld [vmem:[%s1 + $0x14] sm:$0xf]
      %v237 = vld [vmem:[%s1 + $0x18] sm:$0xf]
      %v238 = vld [vmem:[%s1 + $0x1c] sm:$0xf]
      %v239 = vld [vmem:[%s1 + $0x20] sm:$0xf]
      %v240 = vld [vmem:[%s1 + $0x24] sm:$0xf]
      %v241 = vld [vmem:[%s1 + $0x28] sm:$0xf]
      %v242 = vld [vmem:[%s1 + $0x2c] sm:$0xf]
      %v243 = vld [vmem:[%s1 + $0x30] sm:$0xf]
      %v244 = vld [vmem:[%s1 + $0x34] sm:$0xf]
      %v245 = vld [vmem:[%s1 + $0x38] sm:$0xf]
      %v246 = vld [vmem:[%s1 + $0x3c] sm:$0xf]
      %v247 = vld [vmem:[%s192 + $0x8] sm:$0x1]
      %v248 = vld [vmem:[%s192 + $0x14] sm:$0x1]
      %v249 = vld [vmem:[%s192 + $0x20] sm:$0x1]
      %v250 = vld [vmem:[%s192 + $0x2c] sm:$0x1]
      %v251 = vld [vmem:[%s192 + $0x38] sm:$0x1]
      %v252 = vld [vmem:[%s192 + $0x44] sm:$0x1]
      %v253 = vld [vmem:[%s192 + $0x50] sm:$0x1]
      %v254 = vld [vmem:[%s192 + $0x5c] sm:$0x1]
      %v255 = vld [vmem:[%s192 + $0x68] sm:$0x1]
      %v256 = vld [vmem:[%s192 + $0x74] sm:$0x1]
      %v257 = vld [vmem:[%s192 + $0x80] sm:$0x1]
      %v258 = vld [vmem:[%s192 + $0x8c] sm:$0x1]
      %v259 = vld [vmem:[%s192 + $0x98] sm:$0x1]
      %v260 = vld [vmem:[%s192 + $0xa4] sm:$0x1]
      %v261 = vld [vmem:[%s192 + $0xb0] sm:$0x1]
      %v262 = vld [vmem:[%s192 + $0xbc] sm:$0x1]
      %vm263 = vsmask.f32 3328
      %vm264 = vsmask.f32 7440
      %vm265 = vmor %vm263, %vm264
      %v267 = vshrl.u32 %v199, 16
      %v269 = vrot.slane %v267, 4
      %v270 = vshll.u32 %v199, 16
      %v272 = vrot.slane %v270, 5
      %v273 = vor.u32 %v269, %v272
      %v274 = vrot.slane %v273, 4
      %v276 = vshll.u32 %v200, 16
      %v278 = vrot.slane %v276, 5
      %v279 = vsel %vm265, %v274, %v278
      %v280 = vshrl.u32 %v200, 16
      %v282 = vrot.slane %v280, 4
      %v283 = vor.u32 %v282, %v278
      %v284 = vrot.slane %v283, 4
      %v286 = vshll.u32 %v247, 16
      %v288 = vrot.slane %v286, 5
      %v289 = vsel %vm265, %v284, %v288
      %v291 = vshrl.u32 %v201, 16
      %v293 = vrot.slane %v291, 4
      %v294 = vshll.u32 %v201, 16
      %v296 = vrot.slane %v294, 5
      %v297 = vor.u32 %v293, %v296
      %v298 = vrot.slane %v297, 4
      %v300 = vshll.u32 %v202, 16
      %v302 = vrot.slane %v300, 5
      %v303 = vsel %vm265, %v298, %v302
      %v304 = vshrl.u32 %v202, 16
      %v306 = vrot.slane %v304, 4
      %v307 = vor.u32 %v306, %v302
      %v308 = vrot.slane %v307, 4
      %v310 = vshll.u32 %v248, 16
      %v312 = vrot.slane %v310, 5
      %v313 = vsel %vm265, %v308, %v312
      %v315 = vshrl.u32 %v203, 16
      %v317 = vrot.slane %v315, 4
      %v318 = vshll.u32 %v203, 16
      %v320 = vrot.slane %v318, 5
      %v321 = vor.u32 %v317, %v320
      %v322 = vrot.slane %v321, 4
      %v324 = vshll.u32 %v204, 16
      %v326 = vrot.slane %v324, 5
      %v327 = vsel %vm265, %v322, %v326
      %v328 = vshrl.u32 %v204, 16
      %v330 = vrot.slane %v328, 4
      %v331 = vor.u32 %v330, %v326
      %v332 = vrot.slane %v331, 4
      %v334 = vshll.u32 %v249, 16
      %v336 = vrot.slane %v334, 5
      %v337 = vsel %vm265, %v332, %v336
      %v339 = vshrl.u32 %v205, 16
      %v341 = vrot.slane %v339, 4
      %v342 = vshll.u32 %v205, 16
      %v344 = vrot.slane %v342, 5
      %v345 = vor.u32 %v341, %v344
      %v346 = vrot.slane %v345, 4
      %v348 = vshll.u32 %v206, 16
      %v350 = vrot.slane %v348, 5
      %v351 = vsel %vm265, %v346, %v350
      %v352 = vshrl.u32 %v206, 16
      %v354 = vrot.slane %v352, 4
      %v355 = vor.u32 %v354, %v350
      %v356 = vrot.slane %v355, 4
      %v358 = vshll.u32 %v250, 16
      %v360 = vrot.slane %v358, 5
      %v361 = vsel %vm265, %v356, %v360
      %v363 = vshrl.u32 %v207, 16
      %v365 = vrot.slane %v363, 4
      %v366 = vshll.u32 %v207, 16
      %v368 = vrot.slane %v366, 5
      %v369 = vor.u32 %v365, %v368
      %v370 = vrot.slane %v369, 4
      %v372 = vshll.u32 %v208, 16
      %v374 = vrot.slane %v372, 5
      %v375 = vsel %vm265, %v370, %v374
      %v376 = vshrl.u32 %v208, 16
      %v378 = vrot.slane %v376, 4
      %v379 = vor.u32 %v378, %v374
      %v380 = vrot.slane %v379, 4
      %v382 = vshll.u32 %v251, 16
      %v384 = vrot.slane %v382, 5
      %v385 = vsel %vm265, %v380, %v384
      %v387 = vshrl.u32 %v209, 16
      %v389 = vrot.slane %v387, 4
      %v390 = vshll.u32 %v209, 16
      %v392 = vrot.slane %v390, 5
      %v393 = vor.u32 %v389, %v392
      %v394 = vrot.slane %v393, 4
      %v396 = vshll.u32 %v210, 16
      %v398 = vrot.slane %v396, 5
      %v399 = vsel %vm265, %v394, %v398
      %v400 = vshrl.u32 %v210, 16
      %v402 = vrot.slane %v400, 4
      %v403 = vor.u32 %v402, %v398
      %v404 = vrot.slane %v403, 4
      %v406 = vshll.u32 %v252, 16
      %v408 = vrot.slane %v406, 5
      %v409 = vsel %vm265, %v404, %v408
      %v411 = vshrl.u32 %v211, 16
      %v413 = vrot.slane %v411, 4
      %v414 = vshll.u32 %v211, 16
      %v416 = vrot.slane %v414, 5
      %v417 = vor.u32 %v413, %v416
      %v418 = vrot.slane %v417, 4
      %v420 = vshll.u32 %v212, 16
      %v422 = vrot.slane %v420, 5
      %v423 = vsel %vm265, %v418, %v422
      %v424 = vshrl.u32 %v212, 16
      %v426 = vrot.slane %v424, 4
      %v427 = vor.u32 %v426, %v422
      %v428 = vrot.slane %v427, 4
      %v430 = vshll.u32 %v253, 16
      %v432 = vrot.slane %v430, 5
      %v433 = vsel %vm265, %v428, %v432
      %v435 = vshrl.u32 %v213, 16
      %v437 = vrot.slane %v435, 4
      %v438 = vshll.u32 %v213, 16
      %v440 = vrot.slane %v438, 5
      %v441 = vor.u32 %v437, %v440
      %v442 = vrot.slane %v441, 4
      %v444 = vshll.u32 %v214, 16
      %v446 = vrot.slane %v444, 5
      %v447 = vsel %vm265, %v442, %v446
      %v448 = vshrl.u32 %v214, 16
      %v450 = vrot.slane %v448, 4
      %v451 = vor.u32 %v450, %v446
      %v452 = vrot.slane %v451, 4
      %v454 = vshll.u32 %v254, 16
      %v456 = vrot.slane %v454, 5
      %v457 = vsel %vm265, %v452, %v456
      %v459 = vshrl.u32 %v215, 16
      %v461 = vrot.slane %v459, 4
      %v462 = vshll.u32 %v215, 16
      %v464 = vrot.slane %v462, 5
      %v465 = vor.u32 %v461, %v464
      %v466 = vrot.slane %v465, 4
      %v468 = vshll.u32 %v216, 16
      %v470 = vrot.slane %v468, 5
      %v471 = vsel %vm265, %v466, %v470
      %v472 = vshrl.u32 %v216, 16
      %v474 = vrot.slane %v472, 4
      %v475 = vor.u32 %v474, %v470
      %v476 = vrot.slane %v475, 4
      %v478 = vshll.u32 %v255, 16
      %v480 = vrot.slane %v478, 5
      %v481 = vsel %vm265, %v476, %v480
      %v483 = vshrl.u32 %v217, 16
      %v485 = vrot.slane %v483, 4
      %v486 = vshll.u32 %v217, 16
      %v488 = vrot.slane %v486, 5
      %v489 = vor.u32 %v485, %v488
      %v490 = vrot.slane %v489, 4
      %v492 = vshll.u32 %v218, 16
      %v494 = vrot.slane %v492, 5
      %v495 = vsel %vm265, %v490, %v494
      %v496 = vshrl.u32 %v218, 16
      %v498 = vrot.slane %v496, 4
      %v499 = vor.u32 %v498, %v494
      %v500 = vrot.slane %v499, 4
      %v502 = vshll.u32 %v256, 16
      %v504 = vrot.slane %v502, 5
      %v505 = vsel %vm265, %v500, %v504
      %v507 = vshrl.u32 %v219, 16
      %v509 = vrot.slane %v507, 4
      %v510 = vshll.u32 %v219, 16
      %v512 = vrot.slane %v510, 5
      %v513 = vor.u32 %v509, %v512
      %v514 = vrot.slane %v513, 4
      %v516 = vshll.u32 %v220, 16
      %v518 = vrot.slane %v516, 5
      %v519 = vsel %vm265, %v514, %v518
      %v520 = vshrl.u32 %v220, 16
      %v522 = vrot.slane %v520, 4
      %v523 = vor.u32 %v522, %v518
      %v524 = vrot.slane %v523, 4
      %v526 = vshll.u32 %v257, 16
      %v528 = vrot.slane %v526, 5
      %v529 = vsel %vm265, %v524, %v528
      %v531 = vshrl.u32 %v221, 16
      %v533 = vrot.slane %v531, 4
      %v534 = vshll.u32 %v221, 16
      %v536 = vrot.slane %v534, 5
      %v537 = vor.u32 %v533, %v536
      %v538 = vrot.slane %v537, 4
      %v540 = vshll.u32 %v222, 16
      %v542 = vrot.slane %v540, 5
      %v543 = vsel %vm265, %v538, %v542
      %v544 = vshrl.u32 %v222, 16
      %v546 = vrot.slane %v544, 4
      %v547 = vor.u32 %v546, %v542
      %v548 = vrot.slane %v547, 4
      %v550 = vshll.u32 %v258, 16
      %v552 = vrot.slane %v550, 5
      %v553 = vsel %vm265, %v548, %v552
      %v555 = vshrl.u32 %v223, 16
      %v557 = vrot.slane %v555, 4
      %v558 = vshll.u32 %v223, 16
      %v560 = vrot.slane %v558, 5
      %v561 = vor.u32 %v557, %v560
      %v562 = vrot.slane %v561, 4
      %v564 = vshll.u32 %v224, 16
      %v566 = vrot.slane %v564, 5
      %v567 = vsel %vm265, %v562, %v566
      %v568 = vshrl.u32 %v224, 16
      %v570 = vrot.slane %v568, 4
      %v571 = vor.u32 %v570, %v566
      %v572 = vrot.slane %v571, 4
      %v574 = vshll.u32 %v259, 16
      %v576 = vrot.slane %v574, 5
      %v577 = vsel %vm265, %v572, %v576
      %v579 = vshrl.u32 %v225, 16
      %v581 = vrot.slane %v579, 4
      %v582 = vshll.u32 %v225, 16
      %v584 = vrot.slane %v582, 5
      %v585 = vor.u32 %v581, %v584
      %v586 = vrot.slane %v585, 4
      %v588 = vshll.u32 %v226, 16
      %v590 = vrot.slane %v588, 5
      %v591 = vsel %vm265, %v586, %v590
      %v592 = vshrl.u32 %v226, 16
      %v594 = vrot.slane %v592, 4
      %v595 = vor.u32 %v594, %v590
      %v596 = vrot.slane %v595, 4
      %v598 = vshll.u32 %v260, 16
      %v600 = vrot.slane %v598, 5
      %v601 = vsel %vm265, %v596, %v600
      %v603 = vshrl.u32 %v227, 16
      %v605 = vrot.slane %v603, 4
      %v606 = vshll.u32 %v227, 16
      %v608 = vrot.slane %v606, 5
      %v609 = vor.u32 %v605, %v608
      %v610 = vrot.slane %v609, 4
      %v612 = vshll.u32 %v228, 16
      %v614 = vrot.slane %v612, 5
      %v615 = vsel %vm265, %v610, %v614
      %v616 = vshrl.u32 %v228, 16
      %v618 = vrot.slane %v616, 4
      %v619 = vor.u32 %v618, %v614
      %v620 = vrot.slane %v619, 4
      %v622 = vshll.u32 %v261, 16
      %v624 = vrot.slane %v622, 5
      %v625 = vsel %vm265, %v620, %v624
      %v627 = vshrl.u32 %v229, 16
      %v629 = vrot.slane %v627, 4
      %v630 = vshll.u32 %v229, 16
      %v632 = vrot.slane %v630, 5
      %v633 = vor.u32 %v629, %v632
      %v634 = vrot.slane %v633, 4
      %v636 = vshll.u32 %v230, 16
      %v638 = vrot.slane %v636, 5
      %v639 = vsel %vm265, %v634, %v638
      %v640 = vshrl.u32 %v230, 16
      %v642 = vrot.slane %v640, 4
      %v643 = vor.u32 %v642, %v638
      %v644 = vrot.slane %v643, 4
      %v646 = vshll.u32 %v262, 16
      %v648 = vrot.slane %v646, 5
      %v649 = vsel %vm265, %v644, %v648
      %s650 = scalar_lea.vmem %s1, 64
      %v651 = vld [vmem:[%s650] sm:$0xf]
      %v652 = vld [vmem:[%s650 + $0x4] sm:$0xf]
      %v653 = vld [vmem:[%s650 + $0x8] sm:$0xf]
      %v654 = vld [vmem:[%s650 + $0xc] sm:$0xf]
      %v655 = vld [vmem:[%s650 + $0x10] sm:$0xf]
      %v656 = vld [vmem:[%s650 + $0x14] sm:$0xf]
      %v657 = vld [vmem:[%s650 + $0x18] sm:$0xf]
      %v658 = vld [vmem:[%s650 + $0x1c] sm:$0xf]
      %v659 = vld [vmem:[%s650 + $0x20] sm:$0xf]
      %v660 = vld [vmem:[%s650 + $0x24] sm:$0xf]
      %v661 = vld [vmem:[%s650 + $0x28] sm:$0xf]
      %v662 = vld [vmem:[%s650 + $0x2c] sm:$0xf]
      %v663 = vld [vmem:[%s650 + $0x30] sm:$0xf]
      %v664 = vld [vmem:[%s650 + $0x34] sm:$0xf]
      %v665 = vld [vmem:[%s650 + $0x38] sm:$0xf]
      %v666 = vld [vmem:[%s650 + $0x3c] sm:$0xf]
      %v667 = vunpack.c.l.b16 %v279
      %v668 = vunpack.c.l.b16 %v289
      %v669 = vunpack.c.l.b16 %v303
      %v670 = vunpack.c.l.b16 %v313
      %v671 = vunpack.c.l.b16 %v327
      %v672 = vunpack.c.l.b16 %v337
      %v673 = vunpack.c.l.b16 %v351
      %v674 = vunpack.c.l.b16 %v361
      %v675 = vunpack.c.l.b16 %v375
      %v676 = vunpack.c.l.b16 %v385
      %v677 = vunpack.c.l.b16 %v399
      %v678 = vunpack.c.l.b16 %v409
      %v679 = vunpack.c.l.b16 %v423
      %v680 = vunpack.c.l.b16 %v433
      %v681 = vunpack.c.l.b16 %v447
      %v682 = vunpack.c.l.b16 %v457
      %v683 = vunpack.c.l.b16 %v471
      %v684 = vunpack.c.l.b16 %v481
      %v685 = vunpack.c.l.b16 %v495
      %v686 = vunpack.c.l.b16 %v505
      %v687 = vunpack.c.l.b16 %v519
      %v688 = vunpack.c.l.b16 %v529
      %v689 = vunpack.c.l.b16 %v543
      %v690 = vunpack.c.l.b16 %v553
      %v691 = vunpack.c.l.b16 %v567
      %v692 = vunpack.c.l.b16 %v577
      %v693 = vunpack.c.l.b16 %v591
      %v694 = vunpack.c.l.b16 %v601
      %v695 = vunpack.c.l.b16 %v615
      %v696 = vunpack.c.l.b16 %v625
      %v697 = vunpack.c.l.b16 %v639
      %v698 = vunpack.c.l.b16 %v649
      %v699 = vpack.c.b16 %v668, %v667
      %v700 = vpack.c.b16 %v670, %v669
      %v701 = vpack.c.b16 %v672, %v671
      %v702 = vpack.c.b16 %v674, %v673
      %v703 = vpack.c.b16 %v676, %v675
      %v704 = vpack.c.b16 %v678, %v677
      %v705 = vpack.c.b16 %v680, %v679
      %v706 = vpack.c.b16 %v682, %v681
      %v707 = vpack.c.b16 %v684, %v683
      %v708 = vpack.c.b16 %v686, %v685
      %v709 = vpack.c.b16 %v688, %v687
      %v710 = vpack.c.b16 %v690, %v689
      %v711 = vpack.c.b16 %v692, %v691
      %v712 = vpack.c.b16 %v694, %v693
      %v713 = vpack.c.b16 %v696, %v695
      %v714 = vpack.c.b16 %v698, %v697
      %v747 = vunpack.c.l.b16 %v651
      %v748 = vunpack.c.l.b16 %v652
      %v749 = vunpack.c.l.b16 %v653
      %v750 = vunpack.c.l.b16 %v654
      %v751 = vunpack.c.l.b16 %v655
      %v752 = vunpack.c.l.b16 %v656
      %v753 = vunpack.c.l.b16 %v657
      %v754 = vunpack.c.l.b16 %v658
      %v755 = vunpack.c.l.b16 %v659
      %v756 = vunpack.c.l.b16 %v660
      %v757 = vunpack.c.l.b16 %v661
      %v758 = vunpack.c.l.b16 %v662
      %v759 = vunpack.c.l.b16 %v663
      %v760 = vunpack.c.l.b16 %v664
      %v761 = vunpack.c.l.b16 %v665
      %v762 = vunpack.c.l.b16 %v666
      %v763 = vpack.c.b16 %v748, %v747
      %v764 = vpack.c.b16 %v750, %v749
      %v765 = vpack.c.b16 %v752, %v751
      %v766 = vpack.c.b16 %v754, %v753
      %v767 = vpack.c.b16 %v756, %v755
      %v768 = vpack.c.b16 %v758, %v757
      %v769 = vpack.c.b16 %v760, %v759
      %v770 = vpack.c.b16 %v762, %v761
      %779 = vmatprep.subr.bf16.mxu0 0
      %780 = vmatpush1.bf16.msra.mxu0 %v770
      %781 = vmatprep.subr.bf16.mxu0 0
      %782 = vmatpush1.bf16.msra.mxu0 %v769
      %783 = vmatprep.subr.bf16.mxu0 0
      %784 = vmatpush1.bf16.msra.mxu0 %v768
      %785 = vmatprep.subr.bf16.mxu0 0
      %786 = vmatpush1.bf16.msra.mxu0 %v767
      %787 = vmatprep.subr.bf16.mxu0 0
      %788 = vmatpush1.bf16.msra.mxu0 %v766
      %789 = vmatprep.subr.bf16.mxu0 0
      %790 = vmatpush1.bf16.msra.mxu0 %v765
      %791 = vmatprep.subr.bf16.mxu0 0
      %792 = vmatpush1.bf16.msra.mxu0 %v764
      %793 = vmatprep.subr.bf16.mxu0 0
      %794 = vmatpush1.bf16.msra.mxu0 %v763
      %795 = vmatprep.subr.bf16.mxu0 0
      %796 = vmatpush2.bf16.msra.mxu0 0
      %797 = vmatprep.subr.bf16.mxu0 0
      %798 = vmatpush2.bf16.msra.mxu0 0
      %799 = vmatprep.subr.bf16.mxu0 0
      %800 = vmatpush2.bf16.msra.mxu0 0
      %801 = vmatprep.subr.bf16.mxu0 0
      %802 = vmatpush2.bf16.msra.mxu0 0
      %803 = vmatprep.subr.bf16.mxu0 0
      %804 = vmatpush2.bf16.msra.mxu0 0
      %805 = vmatprep.subr.bf16.mxu0 0
      %806 = vmatpush2.bf16.msra.mxu0 0
      %807 = vmatprep.subr.bf16.mxu0 0
      %808 = vmatpush2.bf16.msra.mxu0 0
      %809 = vmatprep.subr.bf16.mxu0 0
      %810 = vmatpush2.bf16.msra.mxu0 0
      %811 = vmatprep.mubr.bf16.mxu0 0
      %812 = vmatmul.mubr.bf16.gmra.mxu0 %v699
      %v813 = vpop.f32.mrf.mxu0
      %v814 = vadd.f32 0.0, %v813
      %v815 = vpop.f32.mrf.mxu0
      %v816 = vpop.f32.mrf.mxu0
      %v817 = vadd.f32 0.0, %v816
      %v818 = vpop.f32.mrf.mxu0
      %819 = vmatprep.mubr.bf16.mxu0 0
      %820 = vmatmul.mubr.bf16.gmra.mxu0 %v700
      %v821 = vpop.f32.mrf.mxu0
      %v822 = vadd.f32 0.0, %v821
      %v823 = vpop.f32.mrf.mxu0
      %v824 = vpop.f32.mrf.mxu0
      %v825 = vadd.f32 0.0, %v824
      %v826 = vpop.f32.mrf.mxu0
      %827 = vmatprep.mubr.bf16.mxu0 0
      %828 = vmatmul.mubr.bf16.gmra.mxu0 %v701
      %v829 = vpop.f32.mrf.mxu0
      %v830 = vadd.f32 0.0, %v829
      %v831 = vpop.f32.mrf.mxu0
      %v832 = vpop.f32.mrf.mxu0
      %v833 = vadd.f32 0.0, %v832
      %v834 = vpop.f32.mrf.mxu0
      %835 = vmatprep.mubr.bf16.mxu0 0
      %836 = vmatmul.mubr.bf16.gmra.mxu0 %v702
      %v837 = vpop.f32.mrf.mxu0
      %v838 = vadd.f32 0.0, %v837
      %v839 = vpop.f32.mrf.mxu0
      %v840 = vpop.f32.mrf.mxu0
      %v841 = vadd.f32 0.0, %v840
      %v842 = vpop.f32.mrf.mxu0
      %843 = vmatprep.mubr.bf16.mxu0 0
      %844 = vmatmul.mubr.bf16.gmra.mxu0 %v703
      %v845 = vpop.f32.mrf.mxu0
      %v846 = vadd.f32 0.0, %v845
      %v847 = vpop.f32.mrf.mxu0
      %v848 = vpop.f32.mrf.mxu0
      %v849 = vadd.f32 0.0, %v848
      %v850 = vpop.f32.mrf.mxu0
      %851 = vmatprep.mubr.bf16.mxu0 0
      %852 = vmatmul.mubr.bf16.gmra.mxu0 %v704
      %v853 = vpop.f32.mrf.mxu0
      %v854 = vadd.f32 0.0, %v853
      %v855 = vpop.f32.mrf.mxu0
      %v856 = vpop.f32.mrf.mxu0
      %v857 = vadd.f32 0.0, %v856
      %v858 = vpop.f32.mrf.mxu0
      %859 = vmatprep.mubr.bf16.mxu0 0
      %860 = vmatmul.mubr.bf16.gmra.mxu0 %v705
      %v861 = vpop.f32.mrf.mxu0
      %v862 = vadd.f32 0.0, %v861
      %v863 = vpop.f32.mrf.mxu0
      %v864 = vpop.f32.mrf.mxu0
      %v865 = vadd.f32 0.0, %v864
      %v866 = vpop.f32.mrf.mxu0
      %867 = vmatprep.mubr.bf16.mxu0 0
      %868 = vmatmul.mubr.bf16.gmra.mxu0 %v706
      %v869 = vpop.f32.mrf.mxu0
      %v870 = vadd.f32 0.0, %v869
      %v871 = vpop.f32.mrf.mxu0
      %v872 = vpop.f32.mrf.mxu0
      %v873 = vadd.f32 0.0, %v872
      %v874 = vpop.f32.mrf.mxu0
      %875 = vmatprep.mubr.bf16.mxu0 0
      %876 = vmatmul.mubr.bf16.gmra.mxu0 %v707
      %v877 = vpop.f32.mrf.mxu0
      %v878 = vadd.f32 0.0, %v877
      %v879 = vpop.f32.mrf.mxu0
      %v880 = vpop.f32.mrf.mxu0
      %v881 = vadd.f32 0.0, %v880
      %v882 = vpop.f32.mrf.mxu0
      %883 = vmatprep.mubr.bf16.mxu0 0
      %884 = vmatmul.mubr.bf16.gmra.mxu0 %v708
      %v885 = vpop.f32.mrf.mxu0
      %v886 = vadd.f32 0.0, %v885
      %v887 = vpop.f32.mrf.mxu0
      %v888 = vpop.f32.mrf.mxu0
      %v889 = vadd.f32 0.0, %v888
      %v890 = vpop.f32.mrf.mxu0
      %891 = vmatprep.mubr.bf16.mxu0 0
      %892 = vmatmul.mubr.bf16.gmra.mxu0 %v709
      %v893 = vpop.f32.mrf.mxu0
      %v894 = vadd.f32 0.0, %v893
      %v895 = vpop.f32.mrf.mxu0
      %v896 = vpop.f32.mrf.mxu0
      %v897 = vadd.f32 0.0, %v896
      %v898 = vpop.f32.mrf.mxu0
      %899 = vmatprep.mubr.bf16.mxu0 0
      %900 = vmatmul.mubr.bf16.gmra.mxu0 %v710
      %v901 = vpop.f32.mrf.mxu0
      %v902 = vadd.f32 0.0, %v901
      %v903 = vpop.f32.mrf.mxu0
      %v904 = vpop.f32.mrf.mxu0
      %v905 = vadd.f32 0.0, %v904
      %v906 = vpop.f32.mrf.mxu0
      %907 = vmatprep.mubr.bf16.mxu0 0
      %908 = vmatmul.mubr.bf16.gmra.mxu0 %v711
      %v909 = vpop.f32.mrf.mxu0
      %v910 = vadd.f32 0.0, %v909
      %v911 = vpop.f32.mrf.mxu0
      %v912 = vpop.f32.mrf.mxu0
      %v913 = vadd.f32 0.0, %v912
      %v914 = vpop.f32.mrf.mxu0
      %915 = vmatprep.mubr.bf16.mxu0 0
      %916 = vmatmul.mubr.bf16.gmra.mxu0 %v712
      %v917 = vpop.f32.mrf.mxu0
      %v918 = vadd.f32 0.0, %v917
      %v919 = vpop.f32.mrf.mxu0
      %v920 = vpop.f32.mrf.mxu0
      %v921 = vadd.f32 0.0, %v920
      %v922 = vpop.f32.mrf.mxu0
      %923 = vmatprep.mubr.bf16.mxu0 0
      %924 = vmatmul.mubr.bf16.gmra.mxu0 %v713
      %v925 = vpop.f32.mrf.mxu0
      %v926 = vadd.f32 0.0, %v925
      %v927 = vpop.f32.mrf.mxu0
      %v928 = vpop.f32.mrf.mxu0
      %v929 = vadd.f32 0.0, %v928
      %v930 = vpop.f32.mrf.mxu0
      %931 = vmatprep.mubr.bf16.mxu0 0
      %932 = vmatmul.mubr.bf16.gmra.mxu0 %v714
      %v933 = vpop.f32.mrf.mxu0
      %v934 = vadd.f32 0.0, %v933
      %v935 = vpop.f32.mrf.mxu0
      %v936 = vpop.f32.mrf.mxu0
      %v937 = vadd.f32 0.0, %v936
      %v938 = vpop.f32.mrf.mxu0
      %939 = vdwg.mxu0
      %v972 = vunpack.c.l.b16 %v199
      %v973 = vunpack.c.l.b16 %v200
      %v974 = vunpack.c.l.b16 %v201
      %v975 = vunpack.c.l.b16 %v202
      %v976 = vunpack.c.l.b16 %v203
      %v977 = vunpack.c.l.b16 %v204
      %v978 = vunpack.c.l.b16 %v205
      %v979 = vunpack.c.l.b16 %v206
      %v980 = vunpack.c.l.b16 %v207
      %v981 = vunpack.c.l.b16 %v208
      %v982 = vunpack.c.l.b16 %v209
      %v983 = vunpack.c.l.b16 %v210
      %v984 = vunpack.c.l.b16 %v211
      %v985 = vunpack.c.l.b16 %v212
      %v986 = vunpack.c.l.b16 %v213
      %v987 = vunpack.c.l.b16 %v214
      %v988 = vunpack.c.l.b16 %v215
      %v989 = vunpack.c.l.b16 %v216
      %v990 = vunpack.c.l.b16 %v217
      %v991 = vunpack.c.l.b16 %v218
      %v992 = vunpack.c.l.b16 %v219
      %v993 = vunpack.c.l.b16 %v220
      %v994 = vunpack.c.l.b16 %v221
      %v995 = vunpack.c.l.b16 %v222
      %v996 = vunpack.c.l.b16 %v223
      %v997 = vunpack.c.l.b16 %v224
      %v998 = vunpack.c.l.b16 %v225
      %v999 = vunpack.c.l.b16 %v226
      %v1000 = vunpack.c.l.b16 %v227
      %v1001 = vunpack.c.l.b16 %v228
      %v1002 = vunpack.c.l.b16 %v229
      %v1003 = vunpack.c.l.b16 %v230
      %v1004 = vpack.c.b16 %v973, %v972
      %v1005 = vpack.c.b16 %v975, %v974
      %v1006 = vpack.c.b16 %v977, %v976
      %v1007 = vpack.c.b16 %v979, %v978
      %v1008 = vpack.c.b16 %v981, %v980
      %v1009 = vpack.c.b16 %v983, %v982
      %v1010 = vpack.c.b16 %v985, %v984
      %v1011 = vpack.c.b16 %v987, %v986
      %v1012 = vpack.c.b16 %v989, %v988
      %v1013 = vpack.c.b16 %v991, %v990
      %v1014 = vpack.c.b16 %v993, %v992
      %v1015 = vpack.c.b16 %v995, %v994
      %v1016 = vpack.c.b16 %v997, %v996
      %v1017 = vpack.c.b16 %v999, %v998
      %v1018 = vpack.c.b16 %v1001, %v1000
      %v1019 = vpack.c.b16 %v1003, %v1002
      %v1052 = vunpack.c.l.b16 %v231
      %v1053 = vunpack.c.l.b16 %v232
      %v1054 = vunpack.c.l.b16 %v233
      %v1055 = vunpack.c.l.b16 %v234
      %v1056 = vunpack.c.l.b16 %v235
      %v1057 = vunpack.c.l.b16 %v236
      %v1058 = vunpack.c.l.b16 %v237
      %v1059 = vunpack.c.l.b16 %v238
      %v1060 = vunpack.c.l.b16 %v239
      %v1061 = vunpack.c.l.b16 %v240
      %v1062 = vunpack.c.l.b16 %v241
      %v1063 = vunpack.c.l.b16 %v242
      %v1064 = vunpack.c.l.b16 %v243
      %v1065 = vunpack.c.l.b16 %v244
      %v1066 = vunpack.c.l.b16 %v245
      %v1067 = vunpack.c.l.b16 %v246
      %v1068 = vpack.c.b16 %v1053, %v1052
      %v1069 = vpack.c.b16 %v1055, %v1054
      %v1070 = vpack.c.b16 %v1057, %v1056
      %v1071 = vpack.c.b16 %v1059, %v1058
      %v1072 = vpack.c.b16 %v1061, %v1060
      %v1073 = vpack.c.b16 %v1063, %v1062
      %v1074 = vpack.c.b16 %v1065, %v1064
      %v1075 = vpack.c.b16 %v1067, %v1066
      %1084 = vmatprep.subr.bf16.mxu0 0
      %1085 = vmatpush1.bf16.msra.mxu0 %v1075
      %1086 = vmatprep.subr.bf16.mxu0 0
      %1087 = vmatpush1.bf16.msra.mxu0 %v1074
      %1088 = vmatprep.subr.bf16.mxu0 0
      %1089 = vmatpush1.bf16.msra.mxu0 %v1073
      %1090 = vmatprep.subr.bf16.mxu0 0
      %1091 = vmatpush1.bf16.msra.mxu0 %v1072
      %1092 = vmatprep.subr.bf16.mxu0 0
      %1093 = vmatpush1.bf16.msra.mxu0 %v1071
      %1094 = vmatprep.subr.bf16.mxu0 0
      %1095 = vmatpush1.bf16.msra.mxu0 %v1070
      %1096 = vmatprep.subr.bf16.mxu0 0
      %1097 = vmatpush1.bf16.msra.mxu0 %v1069
      %1098 = vmatprep.subr.bf16.mxu0 0
      %1099 = vmatpush1.bf16.msra.mxu0 %v1068
      %1100 = vmatprep.subr.bf16.mxu0 0
      %1101 = vmatpush2.bf16.msra.mxu0 0
      %1102 = vmatprep.subr.bf16.mxu0 0
      %1103 = vmatpush2.bf16.msra.mxu0 0
      %1104 = vmatprep.subr.bf16.mxu0 0
      %1105 = vmatpush2.bf16.msra.mxu0 0
      %1106 = vmatprep.subr.bf16.mxu0 0
      %1107 = vmatpush2.bf16.msra.mxu0 0
      %1108 = vmatprep.subr.bf16.mxu0 0
      %1109 = vmatpush2.bf16.msra.mxu0 0
      %1110 = vmatprep.subr.bf16.mxu0 0
      %1111 = vmatpush2.bf16.msra.mxu0 0
      %1112 = vmatprep.subr.bf16.mxu0 0
      %1113 = vmatpush2.bf16.msra.mxu0 0
      %1114 = vmatprep.subr.bf16.mxu0 0
      %1115 = vmatpush2.bf16.msra.mxu0 0
      %1116 = vmatprep.mubr.bf16.mxu0 0
      %1117 = vmatmul.mubr.bf16.gmra.mxu0 %v1004
      %v1118 = vpop.f32.mrf.mxu0
      %v1119 = vadd.f32 %v814, %v1118
      %v1120 = vpop.f32.mrf.mxu0
      %v1121 = vpop.f32.mrf.mxu0
      %v1122 = vadd.f32 %v817, %v1121
      %v1123 = vpop.f32.mrf.mxu0
      %1124 = vmatprep.mubr.bf16.mxu0 0
      %1125 = vmatmul.mubr.bf16.gmra.mxu0 %v1005
      %v1126 = vpop.f32.mrf.mxu0
      %v1127 = vadd.f32 %v822, %v1126
      %v1128 = vpop.f32.mrf.mxu0
      %v1129 = vpop.f32.mrf.mxu0
      %v1130 = vadd.f32 %v825, %v1129
      %v1131 = vpop.f32.mrf.mxu0
      %1132 = vmatprep.mubr.bf16.mxu0 0
      %1133 = vmatmul.mubr.bf16.gmra.mxu0 %v1006
      %v1134 = vpop.f32.mrf.mxu0
      %v1135 = vadd.f32 %v830, %v1134
      %v1136 = vpop.f32.mrf.mxu0
      %v1137 = vpop.f32.mrf.mxu0
      %v1138 = vadd.f32 %v833, %v1137
      %v1139 = vpop.f32.mrf.mxu0
      %1140 = vmatprep.mubr.bf16.mxu0 0
      %1141 = vmatmul.mubr.bf16.gmra.mxu0 %v1007
      %v1142 = vpop.f32.mrf.mxu0
      %v1143 = vadd.f32 %v838, %v1142
      %v1144 = vpop.f32.mrf.mxu0
      %v1145 = vpop.f32.mrf.mxu0
      %v1146 = vadd.f32 %v841, %v1145
      %v1147 = vpop.f32.mrf.mxu0
      %1148 = vmatprep.mubr.bf16.mxu0 0
      %1149 = vmatmul.mubr.bf16.gmra.mxu0 %v1008
      %v1150 = vpop.f32.mrf.mxu0
      %v1151 = vadd.f32 %v846, %v1150
      %v1152 = vpop.f32.mrf.mxu0
      %v1153 = vpop.f32.mrf.mxu0
      %v1154 = vadd.f32 %v849, %v1153
      %v1155 = vpop.f32.mrf.mxu0
      %1156 = vmatprep.mubr.bf16.mxu0 0
      %1157 = vmatmul.mubr.bf16.gmra.mxu0 %v1009
      %v1158 = vpop.f32.mrf.mxu0
      %v1159 = vadd.f32 %v854, %v1158
      %v1160 = vpop.f32.mrf.mxu0
      %v1161 = vpop.f32.mrf.mxu0
      %v1162 = vadd.f32 %v857, %v1161
      %v1163 = vpop.f32.mrf.mxu0
      %1164 = vmatprep.mubr.bf16.mxu0 0
      %1165 = vmatmul.mubr.bf16.gmra.mxu0 %v1010
      %v1166 = vpop.f32.mrf.mxu0
      %v1167 = vadd.f32 %v862, %v1166
      %v1168 = vpop.f32.mrf.mxu0
      %v1169 = vpop.f32.mrf.mxu0
      %v1170 = vadd.f32 %v865, %v1169
      %v1171 = vpop.f32.mrf.mxu0
      %1172 = vmatprep.mubr.bf16.mxu0 0
      %1173 = vmatmul.mubr.bf16.gmra.mxu0 %v1011
      %v1174 = vpop.f32.mrf.mxu0
      %v1175 = vadd.f32 %v870, %v1174
      %v1176 = vpop.f32.mrf.mxu0
      %v1177 = vpop.f32.mrf.mxu0
      %v1178 = vadd.f32 %v873, %v1177
      %v1179 = vpop.f32.mrf.mxu0
      %1180 = vmatprep.mubr.bf16.mxu0 0
      %1181 = vmatmul.mubr.bf16.gmra.mxu0 %v1012
      %v1182 = vpop.f32.mrf.mxu0
      %v1183 = vadd.f32 %v878, %v1182
      %v1184 = vpop.f32.mrf.mxu0
      %v1185 = vpop.f32.mrf.mxu0
      %v1186 = vadd.f32 %v881, %v1185
      %v1187 = vpop.f32.mrf.mxu0
      %1188 = vmatprep.mubr.bf16.mxu0 0
      %1189 = vmatmul.mubr.bf16.gmra.mxu0 %v1013
      %v1190 = vpop.f32.mrf.mxu0
      %v1191 = vadd.f32 %v886, %v1190
      %v1192 = vpop.f32.mrf.mxu0
      %v1193 = vpop.f32.mrf.mxu0
      %v1194 = vadd.f32 %v889, %v1193
      %v1195 = vpop.f32.mrf.mxu0
      %1196 = vmatprep.mubr.bf16.mxu0 0
      %1197 = vmatmul.mubr.bf16.gmra.mxu0 %v1014
      %v1198 = vpop.f32.mrf.mxu0
      %v1199 = vadd.f32 %v894, %v1198
      %v1200 = vpop.f32.mrf.mxu0
      %v1201 = vpop.f32.mrf.mxu0
      %v1202 = vadd.f32 %v897, %v1201
      %v1203 = vpop.f32.mrf.mxu0
      %1204 = vmatprep.mubr.bf16.mxu0 0
      %1205 = vmatmul.mubr.bf16.gmra.mxu0 %v1015
      %v1206 = vpop.f32.mrf.mxu0
      %v1207 = vadd.f32 %v902, %v1206
      %v1208 = vpop.f32.mrf.mxu0
      %v1209 = vpop.f32.mrf.mxu0
      %v1210 = vadd.f32 %v905, %v1209
      %v1211 = vpop.f32.mrf.mxu0
      %1212 = vmatprep.mubr.bf16.mxu0 0
      %1213 = vmatmul.mubr.bf16.gmra.mxu0 %v1016
      %v1214 = vpop.f32.mrf.mxu0
      %v1215 = vadd.f32 %v910, %v1214
      %v1216 = vpop.f32.mrf.mxu0
      %v1217 = vpop.f32.mrf.mxu0
      %v1218 = vadd.f32 %v913, %v1217
      %v1219 = vpop.f32.mrf.mxu0
      %1220 = vmatprep.mubr.bf16.mxu0 0
      %1221 = vmatmul.mubr.bf16.gmra.mxu0 %v1017
      %v1222 = vpop.f32.mrf.mxu0
      %v1223 = vadd.f32 %v918, %v1222
      %v1224 = vpop.f32.mrf.mxu0
      %v1225 = vpop.f32.mrf.mxu0
      %v1226 = vadd.f32 %v921, %v1225
      %v1227 = vpop.f32.mrf.mxu0
      %1228 = vmatprep.mubr.bf16.mxu0 0
      %1229 = vmatmul.mubr.bf16.gmra.mxu0 %v1018
      %v1230 = vpop.f32.mrf.mxu0
      %v1231 = vadd.f32 %v926, %v1230
      %v1232 = vpop.f32.mrf.mxu0
      %v1233 = vpop.f32.mrf.mxu0
      %v1234 = vadd.f32 %v929, %v1233
      %v1235 = vpop.f32.mrf.mxu0
      %1236 = vmatprep.mubr.bf16.mxu0 0
      %1237 = vmatmul.mubr.bf16.gmra.mxu0 %v1019
      %v1238 = vpop.f32.mrf.mxu0
      %v1239 = vadd.f32 %v934, %v1238
      %v1240 = vpop.f32.mrf.mxu0
      %v1241 = vpop.f32.mrf.mxu0
      %v1242 = vadd.f32 %v937, %v1241
      %v1243 = vpop.f32.mrf.mxu0
      %1244 = vdwg.mxu0
      %v1245 = vld [vmem:[%s192] sm:$0xe]
      %v1246 = vld [vmem:[%s192 + $0xc] sm:$0xe]
      %v1247 = vld [vmem:[%s192 + $0x18] sm:$0xe]
      %v1248 = vld [vmem:[%s192 + $0x24] sm:$0xe]
      %v1249 = vld [vmem:[%s192 + $0x30] sm:$0xe]
      %v1250 = vld [vmem:[%s192 + $0x3c] sm:$0xe]
      %v1251 = vld [vmem:[%s192 + $0x48] sm:$0xe]
      %v1252 = vld [vmem:[%s192 + $0x54] sm:$0xe]
      %v1253 = vld [vmem:[%s192 + $0x60] sm:$0xe]
      %v1254 = vld [vmem:[%s192 + $0x6c] sm:$0xe]
      %v1255 = vld [vmem:[%s192 + $0x78] sm:$0xe]
      %v1256 = vld [vmem:[%s192 + $0x84] sm:$0xe]
      %v1257 = vld [vmem:[%s192 + $0x90] sm:$0xe]
      %v1258 = vld [vmem:[%s192 + $0x9c] sm:$0xe]
      %v1259 = vld [vmem:[%s192 + $0xa8] sm:$0xe]
      %v1260 = vld [vmem:[%s192 + $0xb4] sm:$0xe]
      %vm1293 = vcmask 1042432
      %vm1294 = vcmask 1046532
      %vm1295 = vmor %vm1293, %vm1294
      %v1296 = vrot.slane %v1245, 5
      %v1297 = vrot.slane %v1296, 4
      %v1298 = vrot.slane %v200, 5
      %v1299 = vsel %vm1295, %v1297, %v1298
      %v1300 = vrot.slane %v1298, 4
      %v1301 = vrot.slane %v247, 5
      %v1302 = vsel %vm1295, %v1300, %v1301
      %v1303 = vrot.slane %v1246, 5
      %v1304 = vrot.slane %v1303, 4
      %v1305 = vrot.slane %v202, 5
      %v1306 = vsel %vm1295, %v1304, %v1305
      %v1307 = vrot.slane %v1305, 4
      %v1308 = vrot.slane %v248, 5
      %v1309 = vsel %vm1295, %v1307, %v1308
      %v1310 = vrot.slane %v1247, 5
      %v1311 = vrot.slane %v1310, 4
      %v1312 = vrot.slane %v204, 5
      %v1313 = vsel %vm1295, %v1311, %v1312
      %v1314 = vrot.slane %v1312, 4
      %v1315 = vrot.slane %v249, 5
      %v1316 = vsel %vm1295, %v1314, %v1315
      %v1317 = vrot.slane %v1248, 5
      %v1318 = vrot.slane %v1317, 4
      %v1319 = vrot.slane %v206, 5
      %v1320 = vsel %vm1295, %v1318, %v1319
      %v1321 = vrot.slane %v1319, 4
      %v1322 = vrot.slane %v250, 5
      %v1323 = vsel %vm1295, %v1321, %v1322
      %v1324 = vrot.slane %v1249, 5
      %v1325 = vrot.slane %v1324, 4
      %v1326 = vrot.slane %v208, 5
      %v1327 = vsel %vm1295, %v1325, %v1326
      %v1328 = vrot.slane %v1326, 4
      %v1329 = vrot.slane %v251, 5
      %v1330 = vsel %vm1295, %v1328, %v1329
      %v1331 = vrot.slane %v1250, 5
      %v1332 = vrot.slane %v1331, 4
      %v1333 = vrot.slane %v210, 5
      %v1334 = vsel %vm1295, %v1332, %v1333
      %v1335 = vrot.slane %v1333, 4
      %v1336 = vrot.slane %v252, 5
      %v1337 = vsel %vm1295, %v1335, %v1336
      %v1338 = vrot.slane %v1251, 5
      %v1339 = vrot.slane %v1338, 4
      %v1340 = vrot.slane %v212, 5
      %v1341 = vsel %vm1295, %v1339, %v1340
      %v1342 = vrot.slane %v1340, 4
      %v1343 = vrot.slane %v253, 5
      %v1344 = vsel %vm1295, %v1342, %v1343
      %v1345 = vrot.slane %v1252, 5
      %v1346 = vrot.slane %v1345, 4
      %v1347 = vrot.slane %v214, 5
      %v1348 = vsel %vm1295, %v1346, %v1347
      %v1349 = vrot.slane %v1347, 4
      %v1350 = vrot.slane %v254, 5
      %v1351 = vsel %vm1295, %v1349, %v1350
      %v1352 = vrot.slane %v1253, 5
      %v1353 = vrot.slane %v1352, 4
      %v1354 = vrot.slane %v216, 5
      %v1355 = vsel %vm1295, %v1353, %v1354
      %v1356 = vrot.slane %v1354, 4
      %v1357 = vrot.slane %v255, 5
      %v1358 = vsel %vm1295, %v1356, %v1357
      %v1359 = vrot.slane %v1254, 5
      %v1360 = vrot.slane %v1359, 4
      %v1361 = vrot.slane %v218, 5
      %v1362 = vsel %vm1295, %v1360, %v1361
      %v1363 = vrot.slane %v1361, 4
      %v1364 = vrot.slane %v256, 5
      %v1365 = vsel %vm1295, %v1363, %v1364
      %v1366 = vrot.slane %v1255, 5
      %v1367 = vrot.slane %v1366, 4
      %v1368 = vrot.slane %v220, 5
      %v1369 = vsel %vm1295, %v1367, %v1368
      %v1370 = vrot.slane %v1368, 4
      %v1371 = vrot.slane %v257, 5
      %v1372 = vsel %vm1295, %v1370, %v1371
      %v1373 = vrot.slane %v1256, 5
      %v1374 = vrot.slane %v1373, 4
      %v1375 = vrot.slane %v222, 5
      %v1376 = vsel %vm1295, %v1374, %v1375
      %v1377 = vrot.slane %v1375, 4
      %v1378 = vrot.slane %v258, 5
      %v1379 = vsel %vm1295, %v1377, %v1378
      %v1380 = vrot.slane %v1257, 5
      %v1381 = vrot.slane %v1380, 4
      %v1382 = vrot.slane %v224, 5
      %v1383 = vsel %vm1295, %v1381, %v1382
      %v1384 = vrot.slane %v1382, 4
      %v1385 = vrot.slane %v259, 5
      %v1386 = vsel %vm1295, %v1384, %v1385
      %v1387 = vrot.slane %v1258, 5
      %v1388 = vrot.slane %v1387, 4
      %v1389 = vrot.slane %v226, 5
      %v1390 = vsel %vm1295, %v1388, %v1389
      %v1391 = vrot.slane %v1389, 4
      %v1392 = vrot.slane %v260, 5
      %v1393 = vsel %vm1295, %v1391, %v1392
      %v1394 = vrot.slane %v1259, 5
      %v1395 = vrot.slane %v1394, 4
      %v1396 = vrot.slane %v228, 5
      %v1397 = vsel %vm1295, %v1395, %v1396
      %v1398 = vrot.slane %v1396, 4
      %v1399 = vrot.slane %v261, 5
      %v1400 = vsel %vm1295, %v1398, %v1399
      %v1401 = vrot.slane %v1260, 5
      %v1402 = vrot.slane %v1401, 4
      %v1403 = vrot.slane %v230, 5
      %v1404 = vsel %vm1295, %v1402, %v1403
      %v1405 = vrot.slane %v1403, 4
      %v1406 = vrot.slane %v262, 5
      %v1407 = vsel %vm1295, %v1405, %v1406
      %s1408 = scalar_lea.vmem %s1, 128
      %v1409 = vld [vmem:[%s1408] sm:$0xf]
      %v1410 = vld [vmem:[%s1408 + $0x4] sm:$0xf]
      %v1411 = vld [vmem:[%s1408 + $0x8] sm:$0xf]
      %v1412 = vld [vmem:[%s1408 + $0xc] sm:$0xf]
      %v1413 = vld [vmem:[%s1408 + $0x10] sm:$0xf]
      %v1414 = vld [vmem:[%s1408 + $0x14] sm:$0xf]
      %v1415 = vld [vmem:[%s1408 + $0x18] sm:$0xf]
      %v1416 = vld [vmem:[%s1408 + $0x1c] sm:$0xf]
      %v1417 = vld [vmem:[%s1408 + $0x20] sm:$0xf]
      %v1418 = vld [vmem:[%s1408 + $0x24] sm:$0xf]
      %v1419 = vld [vmem:[%s1408 + $0x28] sm:$0xf]
      %v1420 = vld [vmem:[%s1408 + $0x2c] sm:$0xf]
      %v1421 = vld [vmem:[%s1408 + $0x30] sm:$0xf]
      %v1422 = vld [vmem:[%s1408 + $0x34] sm:$0xf]
      %v1423 = vld [vmem:[%s1408 + $0x38] sm:$0xf]
      %v1424 = vld [vmem:[%s1408 + $0x3c] sm:$0xf]
      %v1425 = vunpack.c.l.b16 %v1299
      %v1426 = vunpack.c.l.b16 %v1302
      %v1427 = vunpack.c.l.b16 %v1306
      %v1428 = vunpack.c.l.b16 %v1309
      %v1429 = vunpack.c.l.b16 %v1313
      %v1430 = vunpack.c.l.b16 %v1316
      %v1431 = vunpack.c.l.b16 %v1320
      %v1432 = vunpack.c.l.b16 %v1323
      %v1433 = vunpack.c.l.b16 %v1327
      %v1434 = vunpack.c.l.b16 %v1330
      %v1435 = vunpack.c.l.b16 %v1334
      %v1436 = vunpack.c.l.b16 %v1337
      %v1437 = vunpack.c.l.b16 %v1341
      %v1438 = vunpack.c.l.b16 %v1344
      %v1439 = vunpack.c.l.b16 %v1348
      %v1440 = vunpack.c.l.b16 %v1351
      %v1441 = vunpack.c.l.b16 %v1355
      %v1442 = vunpack.c.l.b16 %v1358
      %v1443 = vunpack.c.l.b16 %v1362
      %v1444 = vunpack.c.l.b16 %v1365
      %v1445 = vunpack.c.l.b16 %v1369
      %v1446 = vunpack.c.l.b16 %v1372
      %v1447 = vunpack.c.l.b16 %v1376
      %v1448 = vunpack.c.l.b16 %v1379
      %v1449 = vunpack.c.l.b16 %v1383
      %v1450 = vunpack.c.l.b16 %v1386
      %v1451 = vunpack.c.l.b16 %v1390
      %v1452 = vunpack.c.l.b16 %v1393
      %v1453 = vunpack.c.l.b16 %v1397
      %v1454 = vunpack.c.l.b16 %v1400
      %v1455 = vunpack.c.l.b16 %v1404
      %v1456 = vunpack.c.l.b16 %v1407
      %v1457 = vpack.c.b16 %v1426, %v1425
      %v1458 = vpack.c.b16 %v1428, %v1427
      %v1459 = vpack.c.b16 %v1430, %v1429
      %v1460 = vpack.c.b16 %v1432, %v1431
      %v1461 = vpack.c.b16 %v1434, %v1433
      %v1462 = vpack.c.b16 %v1436, %v1435
      %v1463 = vpack.c.b16 %v1438, %v1437
      %v1464 = vpack.c.b16 %v1440, %v1439
      %v1465 = vpack.c.b16 %v1442, %v1441
      %v1466 = vpack.c.b16 %v1444, %v1443
      %v1467 = vpack.c.b16 %v1446, %v1445
      %v1468 = vpack.c.b16 %v1448, %v1447
      %v1469 = vpack.c.b16 %v1450, %v1449
      %v1470 = vpack.c.b16 %v1452, %v1451
      %v1471 = vpack.c.b16 %v1454, %v1453
      %v1472 = vpack.c.b16 %v1456, %v1455
      %v1505 = vunpack.c.l.b16 %v1409
      %v1506 = vunpack.c.l.b16 %v1410
      %v1507 = vunpack.c.l.b16 %v1411
      %v1508 = vunpack.c.l.b16 %v1412
      %v1509 = vunpack.c.l.b16 %v1413
      %v1510 = vunpack.c.l.b16 %v1414
      %v1511 = vunpack.c.l.b16 %v1415
      %v1512 = vunpack.c.l.b16 %v1416
      %v1513 = vunpack.c.l.b16 %v1417
      %v1514 = vunpack.c.l.b16 %v1418
      %v1515 = vunpack.c.l.b16 %v1419
      %v1516 = vunpack.c.l.b16 %v1420
      %v1517 = vunpack.c.l.b16 %v1421
      %v1518 = vunpack.c.l.b16 %v1422
      %v1519 = vunpack.c.l.b16 %v1423
      %v1520 = vunpack.c.l.b16 %v1424
      %v1521 = vpack.c.b16 %v1506, %v1505
      %v1522 = vpack.c.b16 %v1508, %v1507
      %v1523 = vpack.c.b16 %v1510, %v1509
      %v1524 = vpack.c.b16 %v1512, %v1511
      %v1525 = vpack.c.b16 %v1514, %v1513
      %v1526 = vpack.c.b16 %v1516, %v1515
      %v1527 = vpack.c.b16 %v1518, %v1517
      %v1528 = vpack.c.b16 %v1520, %v1519
      %1537 = vmatprep.subr.bf16.mxu0 0
      %1538 = vmatpush1.bf16.msra.mxu0 %v1528
      %1539 = vmatprep.subr.bf16.mxu0 0
      %1540 = vmatpush1.bf16.msra.mxu0 %v1527
      %1541 = vmatprep.subr.bf16.mxu0 0
      %1542 = vmatpush1.bf16.msra.mxu0 %v1526
      %1543 = vmatprep.subr.bf16.mxu0 0
      %1544 = vmatpush1.bf16.msra.mxu0 %v1525
      %1545 = vmatprep.subr.bf16.mxu0 0
      %1546 = vmatpush1.bf16.msra.mxu0 %v1524
      %1547 = vmatprep.subr.bf16.mxu0 0
      %1548 = vmatpush1.bf16.msra.mxu0 %v1523
      %1549 = vmatprep.subr.bf16.mxu0 0
      %1550 = vmatpush1.bf16.msra.mxu0 %v1522
      %1551 = vmatprep.subr.bf16.mxu0 0
      %1552 = vmatpush1.bf16.msra.mxu0 %v1521
      %1553 = vmatprep.subr.bf16.mxu0 0
      %1554 = vmatpush2.bf16.msra.mxu0 0
      %1555 = vmatprep.subr.bf16.mxu0 0
      %1556 = vmatpush2.bf16.msra.mxu0 0
      %1557 = vmatprep.subr.bf16.mxu0 0
      %1558 = vmatpush2.bf16.msra.mxu0 0
      %1559 = vmatprep.subr.bf16.mxu0 0
      %1560 = vmatpush2.bf16.msra.mxu0 0
      %1561 = vmatprep.subr.bf16.mxu0 0
      %1562 = vmatpush2.bf16.msra.mxu0 0
      %1563 = vmatprep.subr.bf16.mxu0 0
      %1564 = vmatpush2.bf16.msra.mxu0 0
      %1565 = vmatprep.subr.bf16.mxu0 0
      %1566 = vmatpush2.bf16.msra.mxu0 0
      %1567 = vmatprep.subr.bf16.mxu0 0
      %1568 = vmatpush2.bf16.msra.mxu0 0
      %1569 = vmatprep.mubr.bf16.mxu0 0
      %1570 = vmatmul.mubr.bf16.gmra.mxu0 %v1457
      %v1571 = vpop.f32.mrf.mxu0
      %v1572 = vadd.f32 0.0, %v1571
      %v1573 = vpop.f32.mrf.mxu0
      %v1574 = vpop.f32.mrf.mxu0
      %v1575 = vadd.f32 0.0, %v1574
      %v1576 = vpop.f32.mrf.mxu0
      %1577 = vmatprep.mubr.bf16.mxu0 0
      %1578 = vmatmul.mubr.bf16.gmra.mxu0 %v1458
      %v1579 = vpop.f32.mrf.mxu0
      %v1580 = vadd.f32 0.0, %v1579
      %v1581 = vpop.f32.mrf.mxu0
      %v1582 = vpop.f32.mrf.mxu0
      %v1583 = vadd.f32 0.0, %v1582
      %v1584 = vpop.f32.mrf.mxu0
      %1585 = vmatprep.mubr.bf16.mxu0 0
      %1586 = vmatmul.mubr.bf16.gmra.mxu0 %v1459
      %v1587 = vpop.f32.mrf.mxu0
      %v1588 = vadd.f32 0.0, %v1587
      %v1589 = vpop.f32.mrf.mxu0
      %v1590 = vpop.f32.mrf.mxu0
      %v1591 = vadd.f32 0.0, %v1590
      %v1592 = vpop.f32.mrf.mxu0
      %1593 = vmatprep.mubr.bf16.mxu0 0
      %1594 = vmatmul.mubr.bf16.gmra.mxu0 %v1460
      %v1595 = vpop.f32.mrf.mxu0
      %v1596 = vadd.f32 0.0, %v1595
      %v1597 = vpop.f32.mrf.mxu0
      %v1598 = vpop.f32.mrf.mxu0
      %v1599 = vadd.f32 0.0, %v1598
      %v1600 = vpop.f32.mrf.mxu0
      %1601 = vmatprep.mubr.bf16.mxu0 0
      %1602 = vmatmul.mubr.bf16.gmra.mxu0 %v1461
      %v1603 = vpop.f32.mrf.mxu0
      %v1604 = vadd.f32 0.0, %v1603
      %v1605 = vpop.f32.mrf.mxu0
      %v1606 = vpop.f32.mrf.mxu0
      %v1607 = vadd.f32 0.0, %v1606
      %v1608 = vpop.f32.mrf.mxu0
      %1609 = vmatprep.mubr.bf16.mxu0 0
      %1610 = vmatmul.mubr.bf16.gmra.mxu0 %v1462
      %v1611 = vpop.f32.mrf.mxu0
      %v1612 = vadd.f32 0.0, %v1611
      %v1613 = vpop.f32.mrf.mxu0
      %v1614 = vpop.f32.mrf.mxu0
      %v1615 = vadd.f32 0.0, %v1614
      %v1616 = vpop.f32.mrf.mxu0
      %1617 = vmatprep.mubr.bf16.mxu0 0
      %1618 = vmatmul.mubr.bf16.gmra.mxu0 %v1463
      %v1619 = vpop.f32.mrf.mxu0
      %v1620 = vadd.f32 0.0, %v1619
      %v1621 = vpop.f32.mrf.mxu0
      %v1622 = vpop.f32.mrf.mxu0
      %v1623 = vadd.f32 0.0, %v1622
      %v1624 = vpop.f32.mrf.mxu0
      %1625 = vmatprep.mubr.bf16.mxu0 0
      %1626 = vmatmul.mubr.bf16.gmra.mxu0 %v1464
      %v1627 = vpop.f32.mrf.mxu0
      %v1628 = vadd.f32 0.0, %v1627
      %v1629 = vpop.f32.mrf.mxu0
      %v1630 = vpop.f32.mrf.mxu0
      %v1631 = vadd.f32 0.0, %v1630
      %v1632 = vpop.f32.mrf.mxu0
      %1633 = vmatprep.mubr.bf16.mxu0 0
      %1634 = vmatmul.mubr.bf16.gmra.mxu0 %v1465
      %v1635 = vpop.f32.mrf.mxu0
      %v1636 = vadd.f32 0.0, %v1635
      %v1637 = vpop.f32.mrf.mxu0
      %v1638 = vpop.f32.mrf.mxu0
      %v1639 = vadd.f32 0.0, %v1638
      %v1640 = vpop.f32.mrf.mxu0
      %1641 = vmatprep.mubr.bf16.mxu0 0
      %1642 = vmatmul.mubr.bf16.gmra.mxu0 %v1466
      %v1643 = vpop.f32.mrf.mxu0
      %v1644 = vadd.f32 0.0, %v1643
      %v1645 = vpop.f32.mrf.mxu0
      %v1646 = vpop.f32.mrf.mxu0
      %v1647 = vadd.f32 0.0, %v1646
      %v1648 = vpop.f32.mrf.mxu0
      %1649 = vmatprep.mubr.bf16.mxu0 0
      %1650 = vmatmul.mubr.bf16.gmra.mxu0 %v1467
      %v1651 = vpop.f32.mrf.mxu0
      %v1652 = vadd.f32 0.0, %v1651
      %v1653 = vpop.f32.mrf.mxu0
      %v1654 = vpop.f32.mrf.mxu0
      %v1655 = vadd.f32 0.0, %v1654
      %v1656 = vpop.f32.mrf.mxu0
      %1657 = vmatprep.mubr.bf16.mxu0 0
      %1658 = vmatmul.mubr.bf16.gmra.mxu0 %v1468
      %v1659 = vpop.f32.mrf.mxu0
      %v1660 = vadd.f32 0.0, %v1659
      %v1661 = vpop.f32.mrf.mxu0
      %v1662 = vpop.f32.mrf.mxu0
      %v1663 = vadd.f32 0.0, %v1662
      %v1664 = vpop.f32.mrf.mxu0
      %1665 = vmatprep.mubr.bf16.mxu0 0
      %1666 = vmatmul.mubr.bf16.gmra.mxu0 %v1469
      %v1667 = vpop.f32.mrf.mxu0
      %v1668 = vadd.f32 0.0, %v1667
      %v1669 = vpop.f32.mrf.mxu0
      %v1670 = vpop.f32.mrf.mxu0
      %v1671 = vadd.f32 0.0, %v1670
      %v1672 = vpop.f32.mrf.mxu0
      %1673 = vmatprep.mubr.bf16.mxu0 0
      %1674 = vmatmul.mubr.bf16.gmra.mxu0 %v1470
      %v1675 = vpop.f32.mrf.mxu0
      %v1676 = vadd.f32 0.0, %v1675
      %v1677 = vpop.f32.mrf.mxu0
      %v1678 = vpop.f32.mrf.mxu0
      %v1679 = vadd.f32 0.0, %v1678
      %v1680 = vpop.f32.mrf.mxu0
      %1681 = vmatprep.mubr.bf16.mxu0 0
      %1682 = vmatmul.mubr.bf16.gmra.mxu0 %v1471
      %v1683 = vpop.f32.mrf.mxu0
      %v1684 = vadd.f32 0.0, %v1683
      %v1685 = vpop.f32.mrf.mxu0
      %v1686 = vpop.f32.mrf.mxu0
      %v1687 = vadd.f32 0.0, %v1686
      %v1688 = vpop.f32.mrf.mxu0
      %1689 = vmatprep.mubr.bf16.mxu0 0
      %1690 = vmatmul.mubr.bf16.gmra.mxu0 %v1472
      %v1691 = vpop.f32.mrf.mxu0
      %v1692 = vadd.f32 0.0, %v1691
      %v1693 = vpop.f32.mrf.mxu0
      %v1694 = vpop.f32.mrf.mxu0
      %v1695 = vadd.f32 0.0, %v1694
      %v1696 = vpop.f32.mrf.mxu0
      %1697 = vdwg.mxu0
      %v1698 = vadd.f32 %v1119, %v1572
      %v1699 = vadd.f32 %v1122, %v1575
      %v1700 = vadd.f32 %v1127, %v1580
      %v1701 = vadd.f32 %v1130, %v1583
      %v1702 = vadd.f32 %v1135, %v1588
      %v1703 = vadd.f32 %v1138, %v1591
      %v1704 = vadd.f32 %v1143, %v1596
      %v1705 = vadd.f32 %v1146, %v1599
      %v1706 = vadd.f32 %v1151, %v1604
      %v1707 = vadd.f32 %v1154, %v1607
      %v1708 = vadd.f32 %v1159, %v1612
      %v1709 = vadd.f32 %v1162, %v1615
      %v1710 = vadd.f32 %v1167, %v1620
      %v1711 = vadd.f32 %v1170, %v1623
      %v1712 = vadd.f32 %v1175, %v1628
      %v1713 = vadd.f32 %v1178, %v1631
      %v1714 = vadd.f32 %v1183, %v1636
      %v1715 = vadd.f32 %v1186, %v1639
      %v1716 = vadd.f32 %v1191, %v1644
      %v1717 = vadd.f32 %v1194, %v1647
      %v1718 = vadd.f32 %v1199, %v1652
      %v1719 = vadd.f32 %v1202, %v1655
      %v1720 = vadd.f32 %v1207, %v1660
      %v1721 = vadd.f32 %v1210, %v1663
      %v1722 = vadd.f32 %v1215, %v1668
      %v1723 = vadd.f32 %v1218, %v1671
      %v1724 = vadd.f32 %v1223, %v1676
      %v1725 = vadd.f32 %v1226, %v1679
      %v1726 = vadd.f32 %v1231, %v1684
      %v1727 = vadd.f32 %v1234, %v1687
      %v1728 = vadd.f32 %v1239, %v1692
      %v1729 = vadd.f32 %v1242, %v1695
      %s1730 = scalar_lea.vmem %s192, 12
      %v1731 = vld [vmem:[%s1730] sm:$0xf]
      %v1732 = vld [vmem:[%s1730 + $0x4] sm:$0xf]
      %v1733 = vld [vmem:[%s1730 + $0xc] sm:$0xf]
      %v1734 = vld [vmem:[%s1730 + $0x10] sm:$0xf]
      %v1735 = vld [vmem:[%s1730 + $0x18] sm:$0xf]
      %v1736 = vld [vmem:[%s1730 + $0x1c] sm:$0xf]
      %v1737 = vld [vmem:[%s1730 + $0x24] sm:$0xf]
      %v1738 = vld [vmem:[%s1730 + $0x28] sm:$0xf]
      %v1739 = vld [vmem:[%s1730 + $0x30] sm:$0xf]
      %v1740 = vld [vmem:[%s1730 + $0x34] sm:$0xf]
      %v1741 = vld [vmem:[%s1730 + $0x3c] sm:$0xf]
      %v1742 = vld [vmem:[%s1730 + $0x40] sm:$0xf]
      %v1743 = vld [vmem:[%s1730 + $0x48] sm:$0xf]
      %v1744 = vld [vmem:[%s1730 + $0x4c] sm:$0xf]
      %v1745 = vld [vmem:[%s1730 + $0x54] sm:$0xf]
      %v1746 = vld [vmem:[%s1730 + $0x58] sm:$0xf]
      %v1747 = vld [vmem:[%s1730 + $0x60] sm:$0xf]
      %v1748 = vld [vmem:[%s1730 + $0x64] sm:$0xf]
      %v1749 = vld [vmem:[%s1730 + $0x6c] sm:$0xf]
      %v1750 = vld [vmem:[%s1730 + $0x70] sm:$0xf]
      %v1751 = vld [vmem:[%s1730 + $0x78] sm:$0xf]
      %v1752 = vld [vmem:[%s1730 + $0x7c] sm:$0xf]
      %v1753 = vld [vmem:[%s1730 + $0x84] sm:$0xf]
      %v1754 = vld [vmem:[%s1730 + $0x88] sm:$0xf]
      %v1755 = vld [vmem:[%s1730 + $0x90] sm:$0xf]
      %v1756 = vld [vmem:[%s1730 + $0x94] sm:$0xf]
      %v1757 = vld [vmem:[%s1730 + $0x9c] sm:$0xf]
      %v1758 = vld [vmem:[%s1730 + $0xa0] sm:$0xf]
      %v1759 = vld [vmem:[%s1730 + $0xa8] sm:$0xf]
      %v1760 = vld [vmem:[%s1730 + $0xac] sm:$0xf]
      %v1761 = vld [vmem:[%s1730 + $0xb4] sm:$0xf]
      %v1762 = vld [vmem:[%s1730 + $0xb8] sm:$0xf]
      %s1763 = scalar_lea.vmem %s1, 192
      %v1764 = vld [vmem:[%s1763] sm:$0xf]
      %v1765 = vld [vmem:[%s1763 + $0x4] sm:$0xf]
      %v1766 = vld [vmem:[%s1763 + $0x8] sm:$0xf]
      %v1767 = vld [vmem:[%s1763 + $0xc] sm:$0xf]
      %v1768 = vld [vmem:[%s1763 + $0x10] sm:$0xf]
      %v1769 = vld [vmem:[%s1763 + $0x14] sm:$0xf]
      %v1770 = vld [vmem:[%s1763 + $0x18] sm:$0xf]
      %v1771 = vld [vmem:[%s1763 + $0x1c] sm:$0xf]
      %v1772 = vld [vmem:[%s1763 + $0x20] sm:$0xf]
      %v1773 = vld [vmem:[%s1763 + $0x24] sm:$0xf]
      %v1774 = vld [vmem:[%s1763 + $0x28] sm:$0xf]
      %v1775 = vld [vmem:[%s1763 + $0x2c] sm:$0xf]
      %v1776 = vld [vmem:[%s1763 + $0x30] sm:$0xf]
      %v1777 = vld [vmem:[%s1763 + $0x34] sm:$0xf]
      %v1778 = vld [vmem:[%s1763 + $0x38] sm:$0xf]
      %v1779 = vld [vmem:[%s1763 + $0x3c] sm:$0xf]
      %v1812 = vunpack.c.l.b16 %v1731
      %v1813 = vunpack.c.l.b16 %v1732
      %v1814 = vunpack.c.l.b16 %v1733
      %v1815 = vunpack.c.l.b16 %v1734
      %v1816 = vunpack.c.l.b16 %v1735
      %v1817 = vunpack.c.l.b16 %v1736
      %v1818 = vunpack.c.l.b16 %v1737
      %v1819 = vunpack.c.l.b16 %v1738
      %v1820 = vunpack.c.l.b16 %v1739
      %v1821 = vunpack.c.l.b16 %v1740
      %v1822 = vunpack.c.l.b16 %v1741
      %v1823 = vunpack.c.l.b16 %v1742
      %v1824 = vunpack.c.l.b16 %v1743
      %v1825 = vunpack.c.l.b16 %v1744
      %v1826 = vunpack.c.l.b16 %v1745
      %v1827 = vunpack.c.l.b16 %v1746
      %v1828 = vunpack.c.l.b16 %v1747
      %v1829 = vunpack.c.l.b16 %v1748
      %v1830 = vunpack.c.l.b16 %v1749
      %v1831 = vunpack.c.l.b16 %v1750
      %v1832 = vunpack.c.l.b16 %v1751
      %v1833 = vunpack.c.l.b16 %v1752
      %v1834 = vunpack.c.l.b16 %v1753
      %v1835 = vunpack.c.l.b16 %v1754
      %v1836 = vunpack.c.l.b16 %v1755
      %v1837 = vunpack.c.l.b16 %v1756
      %v1838 = vunpack.c.l.b16 %v1757
      %v1839 = vunpack.c.l.b16 %v1758
      %v1840 = vunpack.c.l.b16 %v1759
      %v1841 = vunpack.c.l.b16 %v1760
      %v1842 = vunpack.c.l.b16 %v1761
      %v1843 = vunpack.c.l.b16 %v1762
      %v1844 = vpack.c.b16 %v1813, %v1812
      %v1845 = vpack.c.b16 %v1815, %v1814
      %v1846 = vpack.c.b16 %v1817, %v1816
      %v1847 = vpack.c.b16 %v1819, %v1818
      %v1848 = vpack.c.b16 %v1821, %v1820
      %v1849 = vpack.c.b16 %v1823, %v1822
      %v1850 = vpack.c.b16 %v1825, %v1824
      %v1851 = vpack.c.b16 %v1827, %v1826
      %v1852 = vpack.c.b16 %v1829, %v1828
      %v1853 = vpack.c.b16 %v1831, %v1830
      %v1854 = vpack.c.b16 %v1833, %v1832
      %v1855 = vpack.c.b16 %v1835, %v1834
      %v1856 = vpack.c.b16 %v1837, %v1836
      %v1857 = vpack.c.b16 %v1839, %v1838
      %v1858 = vpack.c.b16 %v1841, %v1840
      %v1859 = vpack.c.b16 %v1843, %v1842
      %v1892 = vunpack.c.l.b16 %v1764
      %v1893 = vunpack.c.l.b16 %v1765
      %v1894 = vunpack.c.l.b16 %v1766
      %v1895 = vunpack.c.l.b16 %v1767
      %v1896 = vunpack.c.l.b16 %v1768
      %v1897 = vunpack.c.l.b16 %v1769
      %v1898 = vunpack.c.l.b16 %v1770
      %v1899 = vunpack.c.l.b16 %v1771
      %v1900 = vunpack.c.l.b16 %v1772
      %v1901 = vunpack.c.l.b16 %v1773
      %v1902 = vunpack.c.l.b16 %v1774
      %v1903 = vunpack.c.l.b16 %v1775
      %v1904 = vunpack.c.l.b16 %v1776
      %v1905 = vunpack.c.l.b16 %v1777
      %v1906 = vunpack.c.l.b16 %v1778
      %v1907 = vunpack.c.l.b16 %v1779
      %v1908 = vpack.c.b16 %v1893, %v1892
      %v1909 = vpack.c.b16 %v1895, %v1894
      %v1910 = vpack.c.b16 %v1897, %v1896
      %v1911 = vpack.c.b16 %v1899, %v1898
      %v1912 = vpack.c.b16 %v1901, %v1900
      %v1913 = vpack.c.b16 %v1903, %v1902
      %v1914 = vpack.c.b16 %v1905, %v1904
      %v1915 = vpack.c.b16 %v1907, %v1906
      %1924 = vmatprep.subr.bf16.mxu0 0
      %1925 = vmatpush1.bf16.msra.mxu0 %v1915
      %1926 = vmatprep.subr.bf16.mxu0 0
      %1927 = vmatpush1.bf16.msra.mxu0 %v1914
      %1928 = vmatprep.subr.bf16.mxu0 0
      %1929 = vmatpush1.bf16.msra.mxu0 %v1913
      %1930 = vmatprep.subr.bf16.mxu0 0
      %1931 = vmatpush1.bf16.msra.mxu0 %v1912
      %1932 = vmatprep.subr.bf16.mxu0 0
      %1933 = vmatpush1.bf16.msra.mxu0 %v1911
      %1934 = vmatprep.subr.bf16.mxu0 0
      %1935 = vmatpush1.bf16.msra.mxu0 %v1910
      %1936 = vmatprep.subr.bf16.mxu0 0
      %1937 = vmatpush1.bf16.msra.mxu0 %v1909
      %1938 = vmatprep.subr.bf16.mxu0 0
      %1939 = vmatpush1.bf16.msra.mxu0 %v1908
      %1940 = vmatprep.subr.bf16.mxu0 0
      %1941 = vmatpush2.bf16.msra.mxu0 0
      %1942 = vmatprep.subr.bf16.mxu0 0
      %1943 = vmatpush2.bf16.msra.mxu0 0
      %1944 = vmatprep.subr.bf16.mxu0 0
      %1945 = vmatpush2.bf16.msra.mxu0 0
      %1946 = vmatprep.subr.bf16.mxu0 0
      %1947 = vmatpush2.bf16.msra.mxu0 0
      %1948 = vmatprep.subr.bf16.mxu0 0
      %1949 = vmatpush2.bf16.msra.mxu0 0
      %1950 = vmatprep.subr.bf16.mxu0 0
      %1951 = vmatpush2.bf16.msra.mxu0 0
      %1952 = vmatprep.subr.bf16.mxu0 0
      %1953 = vmatpush2.bf16.msra.mxu0 0
      %1954 = vmatprep.subr.bf16.mxu0 0
      %1955 = vmatpush2.bf16.msra.mxu0 0
      %1956 = vmatprep.mubr.bf16.mxu0 0
      %1957 = vmatmul.mubr.bf16.gmra.mxu0 %v1844
      %v1958 = vpop.f32.mrf.mxu0
      %v1959 = vadd.f32 0.0, %v1958
      %v1960 = vpop.f32.mrf.mxu0
      %v1961 = vpop.f32.mrf.mxu0
      %v1962 = vadd.f32 0.0, %v1961
      %v1963 = vpop.f32.mrf.mxu0
      %1964 = vmatprep.mubr.bf16.mxu0 0
      %1965 = vmatmul.mubr.bf16.gmra.mxu0 %v1845
      %v1966 = vpop.f32.mrf.mxu0
      %v1967 = vadd.f32 0.0, %v1966
      %v1968 = vpop.f32.mrf.mxu0
      %v1969 = vpop.f32.mrf.mxu0
      %v1970 = vadd.f32 0.0, %v1969
      %v1971 = vpop.f32.mrf.mxu0
      %1972 = vmatprep.mubr.bf16.mxu0 0
      %1973 = vmatmul.mubr.bf16.gmra.mxu0 %v1846
      %v1974 = vpop.f32.mrf.mxu0
      %v1975 = vadd.f32 0.0, %v1974
      %v1976 = vpop.f32.mrf.mxu0
      %v1977 = vpop.f32.mrf.mxu0
      %v1978 = vadd.f32 0.0, %v1977
      %v1979 = vpop.f32.mrf.mxu0
      %1980 = vmatprep.mubr.bf16.mxu0 0
      %1981 = vmatmul.mubr.bf16.gmra.mxu0 %v1847
      %v1982 = vpop.f32.mrf.mxu0
      %v1983 = vadd.f32 0.0, %v1982
      %v1984 = vpop.f32.mrf.mxu0
      %v1985 = vpop.f32.mrf.mxu0
      %v1986 = vadd.f32 0.0, %v1985
      %v1987 = vpop.f32.mrf.mxu0
      %1988 = vmatprep.mubr.bf16.mxu0 0
      %1989 = vmatmul.mubr.bf16.gmra.mxu0 %v1848
      %v1990 = vpop.f32.mrf.mxu0
      %v1991 = vadd.f32 0.0, %v1990
      %v1992 = vpop.f32.mrf.mxu0
      %v1993 = vpop.f32.mrf.mxu0
      %v1994 = vadd.f32 0.0, %v1993
      %v1995 = vpop.f32.mrf.mxu0
      %1996 = vmatprep.mubr.bf16.mxu0 0
      %1997 = vmatmul.mubr.bf16.gmra.mxu0 %v1849
      %v1998 = vpop.f32.mrf.mxu0
      %v1999 = vadd.f32 0.0, %v1998
      %v2000 = vpop.f32.mrf.mxu0
      %v2001 = vpop.f32.mrf.mxu0
      %v2002 = vadd.f32 0.0, %v2001
      %v2003 = vpop.f32.mrf.mxu0
      %2004 = vmatprep.mubr.bf16.mxu0 0
      %2005 = vmatmul.mubr.bf16.gmra.mxu0 %v1850
      %v2006 = vpop.f32.mrf.mxu0
      %v2007 = vadd.f32 0.0, %v2006
      %v2008 = vpop.f32.mrf.mxu0
      %v2009 = vpop.f32.mrf.mxu0
      %v2010 = vadd.f32 0.0, %v2009
      %v2011 = vpop.f32.mrf.mxu0
      %2012 = vmatprep.mubr.bf16.mxu0 0
      %2013 = vmatmul.mubr.bf16.gmra.mxu0 %v1851
      %v2014 = vpop.f32.mrf.mxu0
      %v2015 = vadd.f32 0.0, %v2014
      %v2016 = vpop.f32.mrf.mxu0
      %v2017 = vpop.f32.mrf.mxu0
      %v2018 = vadd.f32 0.0, %v2017
      %v2019 = vpop.f32.mrf.mxu0
      %2020 = vmatprep.mubr.bf16.mxu0 0
      %2021 = vmatmul.mubr.bf16.gmra.mxu0 %v1852
      %v2022 = vpop.f32.mrf.mxu0
      %v2023 = vadd.f32 0.0, %v2022
      %v2024 = vpop.f32.mrf.mxu0
      %v2025 = vpop.f32.mrf.mxu0
      %v2026 = vadd.f32 0.0, %v2025
      %v2027 = vpop.f32.mrf.mxu0
      %2028 = vmatprep.mubr.bf16.mxu0 0
      %2029 = vmatmul.mubr.bf16.gmra.mxu0 %v1853
      %v2030 = vpop.f32.mrf.mxu0
      %v2031 = vadd.f32 0.0, %v2030
      %v2032 = vpop.f32.mrf.mxu0
      %v2033 = vpop.f32.mrf.mxu0
      %v2034 = vadd.f32 0.0, %v2033
      %v2035 = vpop.f32.mrf.mxu0
      %2036 = vmatprep.mubr.bf16.mxu0 0
      %2037 = vmatmul.mubr.bf16.gmra.mxu0 %v1854
      %v2038 = vpop.f32.mrf.mxu0
      %v2039 = vadd.f32 0.0, %v2038
      %v2040 = vpop.f32.mrf.mxu0
      %v2041 = vpop.f32.mrf.mxu0
      %v2042 = vadd.f32 0.0, %v2041
      %v2043 = vpop.f32.mrf.mxu0
      %2044 = vmatprep.mubr.bf16.mxu0 0
      %2045 = vmatmul.mubr.bf16.gmra.mxu0 %v1855
      %v2046 = vpop.f32.mrf.mxu0
      %v2047 = vadd.f32 0.0, %v2046
      %v2048 = vpop.f32.mrf.mxu0
      %v2049 = vpop.f32.mrf.mxu0
      %v2050 = vadd.f32 0.0, %v2049
      %v2051 = vpop.f32.mrf.mxu0
      %2052 = vmatprep.mubr.bf16.mxu0 0
      %2053 = vmatmul.mubr.bf16.gmra.mxu0 %v1856
      %v2054 = vpop.f32.mrf.mxu0
      %v2055 = vadd.f32 0.0, %v2054
      %v2056 = vpop.f32.mrf.mxu0
      %v2057 = vpop.f32.mrf.mxu0
      %v2058 = vadd.f32 0.0, %v2057
      %v2059 = vpop.f32.mrf.mxu0
      %2060 = vmatprep.mubr.bf16.mxu0 0
      %2061 = vmatmul.mubr.bf16.gmra.mxu0 %v1857
      %v2062 = vpop.f32.mrf.mxu0
      %v2063 = vadd.f32 0.0, %v2062
      %v2064 = vpop.f32.mrf.mxu0
      %v2065 = vpop.f32.mrf.mxu0
      %v2066 = vadd.f32 0.0, %v2065
      %v2067 = vpop.f32.mrf.mxu0
      %2068 = vmatprep.mubr.bf16.mxu0 0
      %2069 = vmatmul.mubr.bf16.gmra.mxu0 %v1858
      %v2070 = vpop.f32.mrf.mxu0
      %v2071 = vadd.f32 0.0, %v2070
      %v2072 = vpop.f32.mrf.mxu0
      %v2073 = vpop.f32.mrf.mxu0
      %v2074 = vadd.f32 0.0, %v2073
      %v2075 = vpop.f32.mrf.mxu0
      %2076 = vmatprep.mubr.bf16.mxu0 0
      %2077 = vmatmul.mubr.bf16.gmra.mxu0 %v1859
      %v2078 = vpop.f32.mrf.mxu0
      %v2079 = vadd.f32 0.0, %v2078
      %v2080 = vpop.f32.mrf.mxu0
      %v2081 = vpop.f32.mrf.mxu0
      %v2082 = vadd.f32 0.0, %v2081
      %v2083 = vpop.f32.mrf.mxu0
      %2084 = vdwg.mxu0
      %v2085 = vadd.f32 %v1698, %v1959
      %v2086 = vadd.f32 %v1699, %v1962
      %v2087 = vadd.f32 %v1700, %v1967
      %v2088 = vadd.f32 %v1701, %v1970
      %v2089 = vadd.f32 %v1702, %v1975
      %v2090 = vadd.f32 %v1703, %v1978
      %v2091 = vadd.f32 %v1704, %v1983
      %v2092 = vadd.f32 %v1705, %v1986
      %v2093 = vadd.f32 %v1706, %v1991
      %v2094 = vadd.f32 %v1707, %v1994
      %v2095 = vadd.f32 %v1708, %v1999
      %v2096 = vadd.f32 %v1709, %v2002
      %v2097 = vadd.f32 %v1710, %v2007
      %v2098 = vadd.f32 %v1711, %v2010
      %v2099 = vadd.f32 %v1712, %v2015
      %v2100 = vadd.f32 %v1713, %v2018
      %v2101 = vadd.f32 %v1714, %v2023
      %v2102 = vadd.f32 %v1715, %v2026
      %v2103 = vadd.f32 %v1716, %v2031
      %v2104 = vadd.f32 %v1717, %v2034
      %v2105 = vadd.f32 %v1718, %v2039
      %v2106 = vadd.f32 %v1719, %v2042
      %v2107 = vadd.f32 %v1720, %v2047
      %v2108 = vadd.f32 %v1721, %v2050
      %v2109 = vadd.f32 %v1722, %v2055
      %v2110 = vadd.f32 %v1723, %v2058
      %v2111 = vadd.f32 %v1724, %v2063
      %v2112 = vadd.f32 %v1725, %v2066
      %v2113 = vadd.f32 %v1726, %v2071
      %v2114 = vadd.f32 %v1727, %v2074
      %v2115 = vadd.f32 %v1728, %v2079
      %v2116 = vadd.f32 %v1729, %v2082
      %v2117 = vld [vmem:[%s1730] sm:$0xf]
      %v2118 = vld [vmem:[%s1730 + $0x4] sm:$0xf]
      %v2119 = vld [vmem:[%s1730 + $0x8] sm:$0x1]
      %v2120 = vld [vmem:[%s1730 + $0xc] sm:$0xf]
      %v2121 = vld [vmem:[%s1730 + $0x10] sm:$0xf]
      %v2122 = vld [vmem:[%s1730 + $0x14] sm:$0x1]
      %v2123 = vld [vmem:[%s1730 + $0x18] sm:$0xf]
      %v2124 = vld [vmem:[%s1730 + $0x1c] sm:$0xf]
      %v2125 = vld [vmem:[%s1730 + $0x20] sm:$0x1]
      %v2126 = vld [vmem:[%s1730 + $0x24] sm:$0xf]
      %v2127 = vld [vmem:[%s1730 + $0x28] sm:$0xf]
      %v2128 = vld [vmem:[%s1730 + $0x2c] sm:$0x1]
      %v2129 = vld [vmem:[%s1730 + $0x30] sm:$0xf]
      %v2130 = vld [vmem:[%s1730 + $0x34] sm:$0xf]
      %v2131 = vld [vmem:[%s1730 + $0x38] sm:$0x1]
      %v2132 = vld [vmem:[%s1730 + $0x3c] sm:$0xf]
      %v2133 = vld [vmem:[%s1730 + $0x40] sm:$0xf]
      %v2134 = vld [vmem:[%s1730 + $0x44] sm:$0x1]
      %v2135 = vld [vmem:[%s1730 + $0x48] sm:$0xf]
      %v2136 = vld [vmem:[%s1730 + $0x4c] sm:$0xf]
      %v2137 = vld [vmem:[%s1730 + $0x50] sm:$0x1]
      %v2138 = vld [vmem:[%s1730 + $0x54] sm:$0xf]
      %v2139 = vld [vmem:[%s1730 + $0x58] sm:$0xf]
      %v2140 = vld [vmem:[%s1730 + $0x5c] sm:$0x1]
      %v2141 = vld [vmem:[%s1730 + $0x60] sm:$0xf]
      %v2142 = vld [vmem:[%s1730 + $0x64] sm:$0xf]
      %v2143 = vld [vmem:[%s1730 + $0x68] sm:$0x1]
      %v2144 = vld [vmem:[%s1730 + $0x6c] sm:$0xf]
      %v2145 = vld [vmem:[%s1730 + $0x70] sm:$0xf]
      %v2146 = vld [vmem:[%s1730 + $0x74] sm:$0x1]
      %v2147 = vld [vmem:[%s1730 + $0x78] sm:$0xf]
      %v2148 = vld [vmem:[%s1730 + $0x7c] sm:$0xf]
      %v2149 = vld [vmem:[%s1730 + $0x80] sm:$0x1]
      %v2150 = vld [vmem:[%s1730 + $0x84] sm:$0xf]
      %v2151 = vld [vmem:[%s1730 + $0x88] sm:$0xf]
      %v2152 = vld [vmem:[%s1730 + $0x8c] sm:$0x1]
      %v2153 = vld [vmem:[%s1730 + $0x90] sm:$0xf]
      %v2154 = vld [vmem:[%s1730 + $0x94] sm:$0xf]
      %v2155 = vld [vmem:[%s1730 + $0x98] sm:$0x1]
      %v2156 = vld [vmem:[%s1730 + $0x9c] sm:$0xf]
      %v2157 = vld [vmem:[%s1730 + $0xa0] sm:$0xf]
      %v2158 = vld [vmem:[%s1730 + $0xa4] sm:$0x1]
      %v2159 = vld [vmem:[%s1730 + $0xa8] sm:$0xf]
      %v2160 = vld [vmem:[%s1730 + $0xac] sm:$0xf]
      %v2161 = vld [vmem:[%s1730 + $0xb0] sm:$0x1]
      %v2162 = vld [vmem:[%s1730 + $0xb4] sm:$0xf]
      %v2163 = vld [vmem:[%s1730 + $0xb8] sm:$0xf]
      %v2164 = vld [vmem:[%s1730 + $0xbc] sm:$0x1]
      %v2166 = vshrl.u32 %v2117, 16
      %v2168 = vrot.slane %v2166, 4
      %v2169 = vshll.u32 %v2117, 16
      %v2171 = vrot.slane %v2169, 5
      %v2172 = vor.u32 %v2168, %v2171
      %v2173 = vrot.slane %v2172, 4
      %v2175 = vshll.u32 %v2118, 16
      %v2177 = vrot.slane %v2175, 5
      %v2178 = vsel %vm265, %v2173, %v2177
      %v2179 = vshrl.u32 %v2118, 16
      %v2181 = vrot.slane %v2179, 4
      %v2182 = vor.u32 %v2181, %v2177
      %v2183 = vrot.slane %v2182, 4
      %v2185 = vshll.u32 %v2119, 16
      %v2187 = vrot.slane %v2185, 5
      %v2188 = vsel %vm265, %v2183, %v2187
      %v2190 = vshrl.u32 %v2120, 16
      %v2192 = vrot.slane %v2190, 4
      %v2193 = vshll.u32 %v2120, 16
      %v2195 = vrot.slane %v2193, 5
      %v2196 = vor.u32 %v2192, %v2195
      %v2197 = vrot.slane %v2196, 4
      %v2199 = vshll.u32 %v2121, 16
      %v2201 = vrot.slane %v2199, 5
      %v2202 = vsel %vm265, %v2197, %v2201
      %v2203 = vshrl.u32 %v2121, 16
      %v2205 = vrot.slane %v2203, 4
      %v2206 = vor.u32 %v2205, %v2201
      %v2207 = vrot.slane %v2206, 4
      %v2209 = vshll.u32 %v2122, 16
      %v2211 = vrot.slane %v2209, 5
      %v2212 = vsel %vm265, %v2207, %v2211
      %v2214 = vshrl.u32 %v2123, 16
      %v2216 = vrot.slane %v2214, 4
      %v2217 = vshll.u32 %v2123, 16
      %v2219 = vrot.slane %v2217, 5
      %v2220 = vor.u32 %v2216, %v2219
      %v2221 = vrot.slane %v2220, 4
      %v2223 = vshll.u32 %v2124, 16
      %v2225 = vrot.slane %v2223, 5
      %v2226 = vsel %vm265, %v2221, %v2225
      %v2227 = vshrl.u32 %v2124, 16
      %v2229 = vrot.slane %v2227, 4
      %v2230 = vor.u32 %v2229, %v2225
      %v2231 = vrot.slane %v2230, 4
      %v2233 = vshll.u32 %v2125, 16
      %v2235 = vrot.slane %v2233, 5
      %v2236 = vsel %vm265, %v2231, %v2235
      %v2238 = vshrl.u32 %v2126, 16
      %v2240 = vrot.slane %v2238, 4
      %v2241 = vshll.u32 %v2126, 16
      %v2243 = vrot.slane %v2241, 5
      %v2244 = vor.u32 %v2240, %v2243
      %v2245 = vrot.slane %v2244, 4
      %v2247 = vshll.u32 %v2127, 16
      %v2249 = vrot.slane %v2247, 5
      %v2250 = vsel %vm265, %v2245, %v2249
      %v2251 = vshrl.u32 %v2127, 16
      %v2253 = vrot.slane %v2251, 4
      %v2254 = vor.u32 %v2253, %v2249
      %v2255 = vrot.slane %v2254, 4
      %v2257 = vshll.u32 %v2128, 16
      %v2259 = vrot.slane %v2257, 5
      %v2260 = vsel %vm265, %v2255, %v2259
      %v2262 = vshrl.u32 %v2129, 16
      %v2264 = vrot.slane %v2262, 4
      %v2265 = vshll.u32 %v2129, 16
      %v2267 = vrot.slane %v2265, 5
      %v2268 = vor.u32 %v2264, %v2267
      %v2269 = vrot.slane %v2268, 4
      %v2271 = vshll.u32 %v2130, 16
      %v2273 = vrot.slane %v2271, 5
      %v2274 = vsel %vm265, %v2269, %v2273
      %v2275 = vshrl.u32 %v2130, 16
      %v2277 = vrot.slane %v2275, 4
      %v2278 = vor.u32 %v2277, %v2273
      %v2279 = vrot.slane %v2278, 4
      %v2281 = vshll.u32 %v2131, 16
      %v2283 = vrot.slane %v2281, 5
      %v2284 = vsel %vm265, %v2279, %v2283
      %v2286 = vshrl.u32 %v2132, 16
      %v2288 = vrot.slane %v2286, 4
      %v2289 = vshll.u32 %v2132, 16
      %v2291 = vrot.slane %v2289, 5
      %v2292 = vor.u32 %v2288, %v2291
      %v2293 = vrot.slane %v2292, 4
      %v2295 = vshll.u32 %v2133, 16
      %v2297 = vrot.slane %v2295, 5
      %v2298 = vsel %vm265, %v2293, %v2297
      %v2299 = vshrl.u32 %v2133, 16
      %v2301 = vrot.slane %v2299, 4
      %v2302 = vor.u32 %v2301, %v2297
      %v2303 = vrot.slane %v2302, 4
      %v2305 = vshll.u32 %v2134, 16
      %v2307 = vrot.slane %v2305, 5
      %v2308 = vsel %vm265, %v2303, %v2307
      %v2310 = vshrl.u32 %v2135, 16
      %v2312 = vrot.slane %v2310, 4
      %v2313 = vshll.u32 %v2135, 16
      %v2315 = vrot.slane %v2313, 5
      %v2316 = vor.u32 %v2312, %v2315
      %v2317 = vrot.slane %v2316, 4
      %v2319 = vshll.u32 %v2136, 16
      %v2321 = vrot.slane %v2319, 5
      %v2322 = vsel %vm265, %v2317, %v2321
      %v2323 = vshrl.u32 %v2136, 16
      %v2325 = vrot.slane %v2323, 4
      %v2326 = vor.u32 %v2325, %v2321
      %v2327 = vrot.slane %v2326, 4
      %v2329 = vshll.u32 %v2137, 16
      %v2331 = vrot.slane %v2329, 5
      %v2332 = vsel %vm265, %v2327, %v2331
      %v2334 = vshrl.u32 %v2138, 16
      %v2336 = vrot.slane %v2334, 4
      %v2337 = vshll.u32 %v2138, 16
      %v2339 = vrot.slane %v2337, 5
      %v2340 = vor.u32 %v2336, %v2339
      %v2341 = vrot.slane %v2340, 4
      %v2343 = vshll.u32 %v2139, 16
      %v2345 = vrot.slane %v2343, 5
      %v2346 = vsel %vm265, %v2341, %v2345
      %v2347 = vshrl.u32 %v2139, 16
      %v2349 = vrot.slane %v2347, 4
      %v2350 = vor.u32 %v2349, %v2345
      %v2351 = vrot.slane %v2350, 4
      %v2353 = vshll.u32 %v2140, 16
      %v2355 = vrot.slane %v2353, 5
      %v2356 = vsel %vm265, %v2351, %v2355
      %v2358 = vshrl.u32 %v2141, 16
      %v2360 = vrot.slane %v2358, 4
      %v2361 = vshll.u32 %v2141, 16
      %v2363 = vrot.slane %v2361, 5
      %v2364 = vor.u32 %v2360, %v2363
      %v2365 = vrot.slane %v2364, 4
      %v2367 = vshll.u32 %v2142, 16
      %v2369 = vrot.slane %v2367, 5
      %v2370 = vsel %vm265, %v2365, %v2369
      %v2371 = vshrl.u32 %v2142, 16
      %v2373 = vrot.slane %v2371, 4
      %v2374 = vor.u32 %v2373, %v2369
      %v2375 = vrot.slane %v2374, 4
      %v2377 = vshll.u32 %v2143, 16
      %v2379 = vrot.slane %v2377, 5
      %v2380 = vsel %vm265, %v2375, %v2379
      %v2382 = vshrl.u32 %v2144, 16
      %v2384 = vrot.slane %v2382, 4
      %v2385 = vshll.u32 %v2144, 16
      %v2387 = vrot.slane %v2385, 5
      %v2388 = vor.u32 %v2384, %v2387
      %v2389 = vrot.slane %v2388, 4
      %v2391 = vshll.u32 %v2145, 16
      %v2393 = vrot.slane %v2391, 5
      %v2394 = vsel %vm265, %v2389, %v2393
      %v2395 = vshrl.u32 %v2145, 16
      %v2397 = vrot.slane %v2395, 4
      %v2398 = vor.u32 %v2397, %v2393
      %v2399 = vrot.slane %v2398, 4
      %v2401 = vshll.u32 %v2146, 16
      %v2403 = vrot.slane %v2401, 5
      %v2404 = vsel %vm265, %v2399, %v2403
      %v2406 = vshrl.u32 %v2147, 16
      %v2408 = vrot.slane %v2406, 4
      %v2409 = vshll.u32 %v2147, 16
      %v2411 = vrot.slane %v2409, 5
      %v2412 = vor.u32 %v2408, %v2411
      %v2413 = vrot.slane %v2412, 4
      %v2415 = vshll.u32 %v2148, 16
      %v2417 = vrot.slane %v2415, 5
      %v2418 = vsel %vm265, %v2413, %v2417
      %v2419 = vshrl.u32 %v2148, 16
      %v2421 = vrot.slane %v2419, 4
      %v2422 = vor.u32 %v2421, %v2417
      %v2423 = vrot.slane %v2422, 4
      %v2425 = vshll.u32 %v2149, 16
      %v2427 = vrot.slane %v2425, 5
      %v2428 = vsel %vm265, %v2423, %v2427
      %v2430 = vshrl.u32 %v2150, 16
      %v2432 = vrot.slane %v2430, 4
      %v2433 = vshll.u32 %v2150, 16
      %v2435 = vrot.slane %v2433, 5
      %v2436 = vor.u32 %v2432, %v2435
      %v2437 = vrot.slane %v2436, 4
      %v2439 = vshll.u32 %v2151, 16
      %v2441 = vrot.slane %v2439, 5
      %v2442 = vsel %vm265, %v2437, %v2441
      %v2443 = vshrl.u32 %v2151, 16
      %v2445 = vrot.slane %v2443, 4
      %v2446 = vor.u32 %v2445, %v2441
      %v2447 = vrot.slane %v2446, 4
      %v2449 = vshll.u32 %v2152, 16
      %v2451 = vrot.slane %v2449, 5
      %v2452 = vsel %vm265, %v2447, %v2451
      %v2454 = vshrl.u32 %v2153, 16
      %v2456 = vrot.slane %v2454, 4
      %v2457 = vshll.u32 %v2153, 16
      %v2459 = vrot.slane %v2457, 5
      %v2460 = vor.u32 %v2456, %v2459
      %v2461 = vrot.slane %v2460, 4
      %v2463 = vshll.u32 %v2154, 16
      %v2465 = vrot.slane %v2463, 5
      %v2466 = vsel %vm265, %v2461, %v2465
      %v2467 = vshrl.u32 %v2154, 16
      %v2469 = vrot.slane %v2467, 4
      %v2470 = vor.u32 %v2469, %v2465
      %v2471 = vrot.slane %v2470, 4
      %v2473 = vshll.u32 %v2155, 16
      %v2475 = vrot.slane %v2473, 5
      %v2476 = vsel %vm265, %v2471, %v2475
      %v2478 = vshrl.u32 %v2156, 16
      %v2480 = vrot.slane %v2478, 4
      %v2481 = vshll.u32 %v2156, 16
      %v2483 = vrot.slane %v2481, 5
      %v2484 = vor.u32 %v2480, %v2483
      %v2485 = vrot.slane %v2484, 4
      %v2487 = vshll.u32 %v2157, 16
      %v2489 = vrot.slane %v2487, 5
      %v2490 = vsel %vm265, %v2485, %v2489
      %v2491 = vshrl.u32 %v2157, 16
      %v2493 = vrot.slane %v2491, 4
      %v2494 = vor.u32 %v2493, %v2489
      %v2495 = vrot.slane %v2494, 4
      %v2497 = vshll.u32 %v2158, 16
      %v2499 = vrot.slane %v2497, 5
      %v2500 = vsel %vm265, %v2495, %v2499
      %v2502 = vshrl.u32 %v2159, 16
      %v2504 = vrot.slane %v2502, 4
      %v2505 = vshll.u32 %v2159, 16
      %v2507 = vrot.slane %v2505, 5
      %v2508 = vor.u32 %v2504, %v2507
      %v2509 = vrot.slane %v2508, 4
      %v2511 = vshll.u32 %v2160, 16
      %v2513 = vrot.slane %v2511, 5
      %v2514 = vsel %vm265, %v2509, %v2513
      %v2515 = vshrl.u32 %v2160, 16
      %v2517 = vrot.slane %v2515, 4
      %v2518 = vor.u32 %v2517, %v2513
      %v2519 = vrot.slane %v2518, 4
      %v2521 = vshll.u32 %v2161, 16
      %v2523 = vrot.slane %v2521, 5
      %v2524 = vsel %vm265, %v2519, %v2523
      %v2526 = vshrl.u32 %v2162, 16
      %v2528 = vrot.slane %v2526, 4
      %v2529 = vshll.u32 %v2162, 16
      %v2531 = vrot.slane %v2529, 5
      %v2532 = vor.u32 %v2528, %v2531
      %v2533 = vrot.slane %v2532, 4
      %v2535 = vshll.u32 %v2163, 16
      %v2537 = vrot.slane %v2535, 5
      %v2538 = vsel %vm265, %v2533, %v2537
      %v2539 = vshrl.u32 %v2163, 16
      %v2541 = vrot.slane %v2539, 4
      %v2542 = vor.u32 %v2541, %v2537
      %v2543 = vrot.slane %v2542, 4
      %v2545 = vshll.u32 %v2164, 16
      %v2547 = vrot.slane %v2545, 5
      %v2548 = vsel %vm265, %v2543, %v2547
      %s2549 = scalar_lea.vmem %s1, 256
      %v2550 = vld [vmem:[%s2549] sm:$0xf]
      %v2551 = vld [vmem:[%s2549 + $0x4] sm:$0xf]
      %v2552 = vld [vmem:[%s2549 + $0x8] sm:$0xf]
      %v2553 = vld [vmem:[%s2549 + $0xc] sm:$0xf]
      %v2554 = vld [vmem:[%s2549 + $0x10] sm:$0xf]
      %v2555 = vld [vmem:[%s2549 + $0x14] sm:$0xf]
      %v2556 = vld [vmem:[%s2549 + $0x18] sm:$0xf]
      %v2557 = vld [vmem:[%s2549 + $0x1c] sm:$0xf]
      %v2558 = vld [vmem:[%s2549 + $0x20] sm:$0xf]
      %v2559 = vld [vmem:[%s2549 + $0x24] sm:$0xf]
      %v2560 = vld [vmem:[%s2549 + $0x28] sm:$0xf]
      %v2561 = vld [vmem:[%s2549 + $0x2c] sm:$0xf]
      %v2562 = vld [vmem:[%s2549 + $0x30] sm:$0xf]
      %v2563 = vld [vmem:[%s2549 + $0x34] sm:$0xf]
      %v2564 = vld [vmem:[%s2549 + $0x38] sm:$0xf]
      %v2565 = vld [vmem:[%s2549 + $0x3c] sm:$0xf]
      %v2566 = vunpack.c.l.b16 %v2178
      %v2567 = vunpack.c.l.b16 %v2188
      %v2568 = vunpack.c.l.b16 %v2202
      %v2569 = vunpack.c.l.b16 %v2212
      %v2570 = vunpack.c.l.b16 %v2226
      %v2571 = vunpack.c.l.b16 %v2236
      %v2572 = vunpack.c.l.b16 %v2250
      %v2573 = vunpack.c.l.b16 %v2260
      %v2574 = vunpack.c.l.b16 %v2274
      %v2575 = vunpack.c.l.b16 %v2284
      %v2576 = vunpack.c.l.b16 %v2298
      %v2577 = vunpack.c.l.b16 %v2308
      %v2578 = vunpack.c.l.b16 %v2322
      %v2579 = vunpack.c.l.b16 %v2332
      %v2580 = vunpack.c.l.b16 %v2346
      %v2581 = vunpack.c.l.b16 %v2356
      %v2582 = vunpack.c.l.b16 %v2370
      %v2583 = vunpack.c.l.b16 %v2380
      %v2584 = vunpack.c.l.b16 %v2394
      %v2585 = vunpack.c.l.b16 %v2404
      %v2586 = vunpack.c.l.b16 %v2418
      %v2587 = vunpack.c.l.b16 %v2428
      %v2588 = vunpack.c.l.b16 %v2442
      %v2589 = vunpack.c.l.b16 %v2452
      %v2590 = vunpack.c.l.b16 %v2466
      %v2591 = vunpack.c.l.b16 %v2476
      %v2592 = vunpack.c.l.b16 %v2490
      %v2593 = vunpack.c.l.b16 %v2500
      %v2594 = vunpack.c.l.b16 %v2514
      %v2595 = vunpack.c.l.b16 %v2524
      %v2596 = vunpack.c.l.b16 %v2538
      %v2597 = vunpack.c.l.b16 %v2548
      %v2598 = vpack.c.b16 %v2567, %v2566
      %v2599 = vpack.c.b16 %v2569, %v2568
      %v2600 = vpack.c.b16 %v2571, %v2570
      %v2601 = vpack.c.b16 %v2573, %v2572
      %v2602 = vpack.c.b16 %v2575, %v2574
      %v2603 = vpack.c.b16 %v2577, %v2576
      %v2604 = vpack.c.b16 %v2579, %v2578
      %v2605 = vpack.c.b16 %v2581, %v2580
      %v2606 = vpack.c.b16 %v2583, %v2582
      %v2607 = vpack.c.b16 %v2585, %v2584
      %v2608 = vpack.c.b16 %v2587, %v2586
      %v2609 = vpack.c.b16 %v2589, %v2588
      %v2610 = vpack.c.b16 %v2591, %v2590
      %v2611 = vpack.c.b16 %v2593, %v2592
      %v2612 = vpack.c.b16 %v2595, %v2594
      %v2613 = vpack.c.b16 %v2597, %v2596
      %v2646 = vunpack.c.l.b16 %v2550
      %v2647 = vunpack.c.l.b16 %v2551
      %v2648 = vunpack.c.l.b16 %v2552
      %v2649 = vunpack.c.l.b16 %v2553
      %v2650 = vunpack.c.l.b16 %v2554
      %v2651 = vunpack.c.l.b16 %v2555
      %v2652 = vunpack.c.l.b16 %v2556
      %v2653 = vunpack.c.l.b16 %v2557
      %v2654 = vunpack.c.l.b16 %v2558
      %v2655 = vunpack.c.l.b16 %v2559
      %v2656 = vunpack.c.l.b16 %v2560
      %v2657 = vunpack.c.l.b16 %v2561
      %v2658 = vunpack.c.l.b16 %v2562
      %v2659 = vunpack.c.l.b16 %v2563
      %v2660 = vunpack.c.l.b16 %v2564
      %v2661 = vunpack.c.l.b16 %v2565
      %v2662 = vpack.c.b16 %v2647, %v2646
      %v2663 = vpack.c.b16 %v2649, %v2648
      %v2664 = vpack.c.b16 %v2651, %v2650
      %v2665 = vpack.c.b16 %v2653, %v2652
      %v2666 = vpack.c.b16 %v2655, %v2654
      %v2667 = vpack.c.b16 %v2657, %v2656
      %v2668 = vpack.c.b16 %v2659, %v2658
      %v2669 = vpack.c.b16 %v2661, %v2660
      %2678 = vmatprep.subr.bf16.mxu0 0
      %2679 = vmatpush1.bf16.msra.mxu0 %v2669
      %2680 = vmatprep.subr.bf16.mxu0 0
      %2681 = vmatpush1.bf16.msra.mxu0 %v2668
      %2682 = vmatprep.subr.bf16.mxu0 0
      %2683 = vmatpush1.bf16.msra.mxu0 %v2667
      %2684 = vmatprep.subr.bf16.mxu0 0
      %2685 = vmatpush1.bf16.msra.mxu0 %v2666
      %2686 = vmatprep.subr.bf16.mxu0 0
      %2687 = vmatpush1.bf16.msra.mxu0 %v2665
      %2688 = vmatprep.subr.bf16.mxu0 0
      %2689 = vmatpush1.bf16.msra.mxu0 %v2664
      %2690 = vmatprep.subr.bf16.mxu0 0
      %2691 = vmatpush1.bf16.msra.mxu0 %v2663
      %2692 = vmatprep.subr.bf16.mxu0 0
      %2693 = vmatpush1.bf16.msra.mxu0 %v2662
      %2694 = vmatprep.subr.bf16.mxu0 0
      %2695 = vmatpush2.bf16.msra.mxu0 0
      %2696 = vmatprep.subr.bf16.mxu0 0
      %2697 = vmatpush2.bf16.msra.mxu0 0
      %2698 = vmatprep.subr.bf16.mxu0 0
      %2699 = vmatpush2.bf16.msra.mxu0 0
      %2700 = vmatprep.subr.bf16.mxu0 0
      %2701 = vmatpush2.bf16.msra.mxu0 0
      %2702 = vmatprep.subr.bf16.mxu0 0
      %2703 = vmatpush2.bf16.msra.mxu0 0
      %2704 = vmatprep.subr.bf16.mxu0 0
      %2705 = vmatpush2.bf16.msra.mxu0 0
      %2706 = vmatprep.subr.bf16.mxu0 0
      %2707 = vmatpush2.bf16.msra.mxu0 0
      %2708 = vmatprep.subr.bf16.mxu0 0
      %2709 = vmatpush2.bf16.msra.mxu0 0
      %2710 = vmatprep.mubr.bf16.mxu0 0
      %2711 = vmatmul.mubr.bf16.gmra.mxu0 %v2598
      %v2712 = vpop.f32.mrf.mxu0
      %v2713 = vadd.f32 0.0, %v2712
      %v2714 = vpop.f32.mrf.mxu0
      %v2715 = vpop.f32.mrf.mxu0
      %v2716 = vadd.f32 0.0, %v2715
      %v2717 = vpop.f32.mrf.mxu0
      %2718 = vmatprep.mubr.bf16.mxu0 0
      %2719 = vmatmul.mubr.bf16.gmra.mxu0 %v2599
      %v2720 = vpop.f32.mrf.mxu0
      %v2721 = vadd.f32 0.0, %v2720
      %v2722 = vpop.f32.mrf.mxu0
      %v2723 = vpop.f32.mrf.mxu0
      %v2724 = vadd.f32 0.0, %v2723
      %v2725 = vpop.f32.mrf.mxu0
      %2726 = vmatprep.mubr.bf16.mxu0 0
      %2727 = vmatmul.mubr.bf16.gmra.mxu0 %v2600
      %v2728 = vpop.f32.mrf.mxu0
      %v2729 = vadd.f32 0.0, %v2728
      %v2730 = vpop.f32.mrf.mxu0
      %v2731 = vpop.f32.mrf.mxu0
      %v2732 = vadd.f32 0.0, %v2731
      %v2733 = vpop.f32.mrf.mxu0
      %2734 = vmatprep.mubr.bf16.mxu0 0
      %2735 = vmatmul.mubr.bf16.gmra.mxu0 %v2601
      %v2736 = vpop.f32.mrf.mxu0
      %v2737 = vadd.f32 0.0, %v2736
      %v2738 = vpop.f32.mrf.mxu0
      %v2739 = vpop.f32.mrf.mxu0
      %v2740 = vadd.f32 0.0, %v2739
      %v2741 = vpop.f32.mrf.mxu0
      %2742 = vmatprep.mubr.bf16.mxu0 0
      %2743 = vmatmul.mubr.bf16.gmra.mxu0 %v2602
      %v2744 = vpop.f32.mrf.mxu0
      %v2745 = vadd.f32 0.0, %v2744
      %v2746 = vpop.f32.mrf.mxu0
      %v2747 = vpop.f32.mrf.mxu0
      %v2748 = vadd.f32 0.0, %v2747
      %v2749 = vpop.f32.mrf.mxu0
      %2750 = vmatprep.mubr.bf16.mxu0 0
      %2751 = vmatmul.mubr.bf16.gmra.mxu0 %v2603
      %v2752 = vpop.f32.mrf.mxu0
      %v2753 = vadd.f32 0.0, %v2752
      %v2754 = vpop.f32.mrf.mxu0
      %v2755 = vpop.f32.mrf.mxu0
      %v2756 = vadd.f32 0.0, %v2755
      %v2757 = vpop.f32.mrf.mxu0
      %2758 = vmatprep.mubr.bf16.mxu0 0
      %2759 = vmatmul.mubr.bf16.gmra.mxu0 %v2604
      %v2760 = vpop.f32.mrf.mxu0
      %v2761 = vadd.f32 0.0, %v2760
      %v2762 = vpop.f32.mrf.mxu0
      %v2763 = vpop.f32.mrf.mxu0
      %v2764 = vadd.f32 0.0, %v2763
      %v2765 = vpop.f32.mrf.mxu0
      %2766 = vmatprep.mubr.bf16.mxu0 0
      %2767 = vmatmul.mubr.bf16.gmra.mxu0 %v2605
      %v2768 = vpop.f32.mrf.mxu0
      %v2769 = vadd.f32 0.0, %v2768
      %v2770 = vpop.f32.mrf.mxu0
      %v2771 = vpop.f32.mrf.mxu0
      %v2772 = vadd.f32 0.0, %v2771
      %v2773 = vpop.f32.mrf.mxu0
      %2774 = vmatprep.mubr.bf16.mxu0 0
      %2775 = vmatmul.mubr.bf16.gmra.mxu0 %v2606
      %v2776 = vpop.f32.mrf.mxu0
      %v2777 = vadd.f32 0.0, %v2776
      %v2778 = vpop.f32.mrf.mxu0
      %v2779 = vpop.f32.mrf.mxu0
      %v2780 = vadd.f32 0.0, %v2779
      %v2781 = vpop.f32.mrf.mxu0
      %2782 = vmatprep.mubr.bf16.mxu0 0
      %2783 = vmatmul.mubr.bf16.gmra.mxu0 %v2607
      %v2784 = vpop.f32.mrf.mxu0
      %v2785 = vadd.f32 0.0, %v2784
      %v2786 = vpop.f32.mrf.mxu0
      %v2787 = vpop.f32.mrf.mxu0
      %v2788 = vadd.f32 0.0, %v2787
      %v2789 = vpop.f32.mrf.mxu0
      %2790 = vmatprep.mubr.bf16.mxu0 0
      %2791 = vmatmul.mubr.bf16.gmra.mxu0 %v2608
      %v2792 = vpop.f32.mrf.mxu0
      %v2793 = vadd.f32 0.0, %v2792
      %v2794 = vpop.f32.mrf.mxu0
      %v2795 = vpop.f32.mrf.mxu0
      %v2796 = vadd.f32 0.0, %v2795
      %v2797 = vpop.f32.mrf.mxu0
      %2798 = vmatprep.mubr.bf16.mxu0 0
      %2799 = vmatmul.mubr.bf16.gmra.mxu0 %v2609
      %v2800 = vpop.f32.mrf.mxu0
      %v2801 = vadd.f32 0.0, %v2800
      %v2802 = vpop.f32.mrf.mxu0
      %v2803 = vpop.f32.mrf.mxu0
      %v2804 = vadd.f32 0.0, %v2803
      %v2805 = vpop.f32.mrf.mxu0
      %2806 = vmatprep.mubr.bf16.mxu0 0
      %2807 = vmatmul.mubr.bf16.gmra.mxu0 %v2610
      %v2808 = vpop.f32.mrf.mxu0
      %v2809 = vadd.f32 0.0, %v2808
      %v2810 = vpop.f32.mrf.mxu0
      %v2811 = vpop.f32.mrf.mxu0
      %v2812 = vadd.f32 0.0, %v2811
      %v2813 = vpop.f32.mrf.mxu0
      %2814 = vmatprep.mubr.bf16.mxu0 0
      %2815 = vmatmul.mubr.bf16.gmra.mxu0 %v2611
      %v2816 = vpop.f32.mrf.mxu0
      %v2817 = vadd.f32 0.0, %v2816
      %v2818 = vpop.f32.mrf.mxu0
      %v2819 = vpop.f32.mrf.mxu0
      %v2820 = vadd.f32 0.0, %v2819
      %v2821 = vpop.f32.mrf.mxu0
      %2822 = vmatprep.mubr.bf16.mxu0 0
      %2823 = vmatmul.mubr.bf16.gmra.mxu0 %v2612
      %v2824 = vpop.f32.mrf.mxu0
      %v2825 = vadd.f32 0.0, %v2824
      %v2826 = vpop.f32.mrf.mxu0
      %v2827 = vpop.f32.mrf.mxu0
      %v2828 = vadd.f32 0.0, %v2827
      %v2829 = vpop.f32.mrf.mxu0
      %2830 = vmatprep.mubr.bf16.mxu0 0
      %2831 = vmatmul.mubr.bf16.gmra.mxu0 %v2613
      %v2832 = vpop.f32.mrf.mxu0
      %v2833 = vadd.f32 0.0, %v2832
      %v2834 = vpop.f32.mrf.mxu0
      %v2835 = vpop.f32.mrf.mxu0
      %v2836 = vadd.f32 0.0, %v2835
      %v2837 = vpop.f32.mrf.mxu0
      %2838 = vdwg.mxu0
      %v2839 = vadd.f32 %v2085, %v2713
      %v2840 = vadd.f32 %v2086, %v2716
      %v2841 = vadd.f32 %v2087, %v2721
      %v2842 = vadd.f32 %v2088, %v2724
      %v2843 = vadd.f32 %v2089, %v2729
      %v2844 = vadd.f32 %v2090, %v2732
      %v2845 = vadd.f32 %v2091, %v2737
      %v2846 = vadd.f32 %v2092, %v2740
      %v2847 = vadd.f32 %v2093, %v2745
      %v2848 = vadd.f32 %v2094, %v2748
      %v2849 = vadd.f32 %v2095, %v2753
      %v2850 = vadd.f32 %v2096, %v2756
      %v2851 = vadd.f32 %v2097, %v2761
      %v2852 = vadd.f32 %v2098, %v2764
      %v2853 = vadd.f32 %v2099, %v2769
      %v2854 = vadd.f32 %v2100, %v2772
      %v2855 = vadd.f32 %v2101, %v2777
      %v2856 = vadd.f32 %v2102, %v2780
      %v2857 = vadd.f32 %v2103, %v2785
      %v2858 = vadd.f32 %v2104, %v2788
      %v2859 = vadd.f32 %v2105, %v2793
      %v2860 = vadd.f32 %v2106, %v2796
      %v2861 = vadd.f32 %v2107, %v2801
      %v2862 = vadd.f32 %v2108, %v2804
      %v2863 = vadd.f32 %v2109, %v2809
      %v2864 = vadd.f32 %v2110, %v2812
      %v2865 = vadd.f32 %v2111, %v2817
      %v2866 = vadd.f32 %v2112, %v2820
      %v2867 = vadd.f32 %v2113, %v2825
      %v2868 = vadd.f32 %v2114, %v2828
      %v2869 = vadd.f32 %v2115, %v2833
      %v2870 = vadd.f32 %v2116, %v2836
      %v2871 = vld [vmem:[%s1730] sm:$0xe]
      %v2872 = vld [vmem:[%s1730 + $0xc] sm:$0xe]
      %v2873 = vld [vmem:[%s1730 + $0x18] sm:$0xe]
      %v2874 = vld [vmem:[%s1730 + $0x24] sm:$0xe]
      %v2875 = vld [vmem:[%s1730 + $0x30] sm:$0xe]
      %v2876 = vld [vmem:[%s1730 + $0x3c] sm:$0xe]
      %v2877 = vld [vmem:[%s1730 + $0x48] sm:$0xe]
      %v2878 = vld [vmem:[%s1730 + $0x54] sm:$0xe]
      %v2879 = vld [vmem:[%s1730 + $0x60] sm:$0xe]
      %v2880 = vld [vmem:[%s1730 + $0x6c] sm:$0xe]
      %v2881 = vld [vmem:[%s1730 + $0x78] sm:$0xe]
      %v2882 = vld [vmem:[%s1730 + $0x84] sm:$0xe]
      %v2883 = vld [vmem:[%s1730 + $0x90] sm:$0xe]
      %v2884 = vld [vmem:[%s1730 + $0x9c] sm:$0xe]
      %v2885 = vld [vmem:[%s1730 + $0xa8] sm:$0xe]
      %v2886 = vld [vmem:[%s1730 + $0xb4] sm:$0xe]
      %v2935 = vrot.slane %v2871, 5
      %v2936 = vrot.slane %v2935, 4
      %v2937 = vrot.slane %v2118, 5
      %v2938 = vsel %vm1295, %v2936, %v2937
      %v2939 = vrot.slane %v2937, 4
      %v2940 = vrot.slane %v2119, 5
      %v2941 = vsel %vm1295, %v2939, %v2940
      %v2942 = vrot.slane %v2872, 5
      %v2943 = vrot.slane %v2942, 4
      %v2944 = vrot.slane %v2121, 5
      %v2945 = vsel %vm1295, %v2943, %v2944
      %v2946 = vrot.slane %v2944, 4
      %v2947 = vrot.slane %v2122, 5
      %v2948 = vsel %vm1295, %v2946, %v2947
      %v2949 = vrot.slane %v2873, 5
      %v2950 = vrot.slane %v2949, 4
      %v2951 = vrot.slane %v2124, 5
      %v2952 = vsel %vm1295, %v2950, %v2951
      %v2953 = vrot.slane %v2951, 4
      %v2954 = vrot.slane %v2125, 5
      %v2955 = vsel %vm1295, %v2953, %v2954
      %v2956 = vrot.slane %v2874, 5
      %v2957 = vrot.slane %v2956, 4
      %v2958 = vrot.slane %v2127, 5
      %v2959 = vsel %vm1295, %v2957, %v2958
      %v2960 = vrot.slane %v2958, 4
      %v2961 = vrot.slane %v2128, 5
      %v2962 = vsel %vm1295, %v2960, %v2961
      %v2963 = vrot.slane %v2875, 5
      %v2964 = vrot.slane %v2963, 4
      %v2965 = vrot.slane %v2130, 5
      %v2966 = vsel %vm1295, %v2964, %v2965
      %v2967 = vrot.slane %v2965, 4
      %v2968 = vrot.slane %v2131, 5
      %v2969 = vsel %vm1295, %v2967, %v2968
      %v2970 = vrot.slane %v2876, 5
      %v2971 = vrot.slane %v2970, 4
      %v2972 = vrot.slane %v2133, 5
      %v2973 = vsel %vm1295, %v2971, %v2972
      %v2974 = vrot.slane %v2972, 4
      %v2975 = vrot.slane %v2134, 5
      %v2976 = vsel %vm1295, %v2974, %v2975
      %v2977 = vrot.slane %v2877, 5
      %v2978 = vrot.slane %v2977, 4
      %v2979 = vrot.slane %v2136, 5
      %v2980 = vsel %vm1295, %v2978, %v2979
      %v2981 = vrot.slane %v2979, 4
      %v2982 = vrot.slane %v2137, 5
      %v2983 = vsel %vm1295, %v2981, %v2982
      %v2984 = vrot.slane %v2878, 5
      %v2985 = vrot.slane %v2984, 4
      %v2986 = vrot.slane %v2139, 5
      %v2987 = vsel %vm1295, %v2985, %v2986
      %v2988 = vrot.slane %v2986, 4
      %v2989 = vrot.slane %v2140, 5
      %v2990 = vsel %vm1295, %v2988, %v2989
      %v2991 = vrot.slane %v2879, 5
      %v2992 = vrot.slane %v2991, 4
      %v2993 = vrot.slane %v2142, 5
      %v2994 = vsel %vm1295, %v2992, %v2993
      %v2995 = vrot.slane %v2993, 4
      %v2996 = vrot.slane %v2143, 5
      %v2997 = vsel %vm1295, %v2995, %v2996
      %v2998 = vrot.slane %v2880, 5
      %v2999 = vrot.slane %v2998, 4
      %v3000 = vrot.slane %v2145, 5
      %v3001 = vsel %vm1295, %v2999, %v3000
      %v3002 = vrot.slane %v3000, 4
      %v3003 = vrot.slane %v2146, 5
      %v3004 = vsel %vm1295, %v3002, %v3003
      %v3005 = vrot.slane %v2881, 5
      %v3006 = vrot.slane %v3005, 4
      %v3007 = vrot.slane %v2148, 5
      %v3008 = vsel %vm1295, %v3006, %v3007
      %v3009 = vrot.slane %v3007, 4
      %v3010 = vrot.slane %v2149, 5
      %v3011 = vsel %vm1295, %v3009, %v3010
      %v3012 = vrot.slane %v2882, 5
      %v3013 = vrot.slane %v3012, 4
      %v3014 = vrot.slane %v2151, 5
      %v3015 = vsel %vm1295, %v3013, %v3014
      %v3016 = vrot.slane %v3014, 4
      %v3017 = vrot.slane %v2152, 5
      %v3018 = vsel %vm1295, %v3016, %v3017
      %v3019 = vrot.slane %v2883, 5
      %v3020 = vrot.slane %v3019, 4
      %v3021 = vrot.slane %v2154, 5
      %v3022 = vsel %vm1295, %v3020, %v3021
      %v3023 = vrot.slane %v3021, 4
      %v3024 = vrot.slane %v2155, 5
      %v3025 = vsel %vm1295, %v3023, %v3024
      %v3026 = vrot.slane %v2884, 5
      %v3027 = vrot.slane %v3026, 4
      %v3028 = vrot.slane %v2157, 5
      %v3029 = vsel %vm1295, %v3027, %v3028
      %v3030 = vrot.slane %v3028, 4
      %v3031 = vrot.slane %v2158, 5
      %v3032 = vsel %vm1295, %v3030, %v3031
      %v3033 = vrot.slane %v2885, 5
      %v3034 = vrot.slane %v3033, 4
      %v3035 = vrot.slane %v2160, 5
      %v3036 = vsel %vm1295, %v3034, %v3035
      %v3037 = vrot.slane %v3035, 4
      %v3038 = vrot.slane %v2161, 5
      %v3039 = vsel %vm1295, %v3037, %v3038
      %v3040 = vrot.slane %v2886, 5
      %v3041 = vrot.slane %v3040, 4
      %v3042 = vrot.slane %v2163, 5
      %v3043 = vsel %vm1295, %v3041, %v3042
      %v3044 = vrot.slane %v3042, 4
      %v3045 = vrot.slane %v2164, 5
      %v3046 = vsel %vm1295, %v3044, %v3045
      %s3047 = scalar_lea.vmem %s1, 320
      %v3048 = vld [vmem:[%s3047] sm:$0xf]
      %v3049 = vld [vmem:[%s3047 + $0x4] sm:$0xf]
      %v3050 = vld [vmem:[%s3047 + $0x8] sm:$0xf]
      %v3051 = vld [vmem:[%s3047 + $0xc] sm:$0xf]
      %v3052 = vld [vmem:[%s3047 + $0x10] sm:$0xf]
      %v3053 = vld [vmem:[%s3047 + $0x14] sm:$0xf]
      %v3054 = vld [vmem:[%s3047 + $0x18] sm:$0xf]
      %v3055 = vld [vmem:[%s3047 + $0x1c] sm:$0xf]
      %v3056 = vld [vmem:[%s3047 + $0x20] sm:$0xf]
      %v3057 = vld [vmem:[%s3047 + $0x24] sm:$0xf]
      %v3058 = vld [vmem:[%s3047 + $0x28] sm:$0xf]
      %v3059 = vld [vmem:[%s3047 + $0x2c] sm:$0xf]
      %v3060 = vld [vmem:[%s3047 + $0x30] sm:$0xf]
      %v3061 = vld [vmem:[%s3047 + $0x34] sm:$0xf]
      %v3062 = vld [vmem:[%s3047 + $0x38] sm:$0xf]
      %v3063 = vld [vmem:[%s3047 + $0x3c] sm:$0xf]
      %v3064 = vunpack.c.l.b16 %v2938
      %v3065 = vunpack.c.l.b16 %v2941
      %v3066 = vunpack.c.l.b16 %v2945
      %v3067 = vunpack.c.l.b16 %v2948
      %v3068 = vunpack.c.l.b16 %v2952
      %v3069 = vunpack.c.l.b16 %v2955
      %v3070 = vunpack.c.l.b16 %v2959
      %v3071 = vunpack.c.l.b16 %v2962
      %v3072 = vunpack.c.l.b16 %v2966
      %v3073 = vunpack.c.l.b16 %v2969
      %v3074 = vunpack.c.l.b16 %v2973
      %v3075 = vunpack.c.l.b16 %v2976
      %v3076 = vunpack.c.l.b16 %v2980
      %v3077 = vunpack.c.l.b16 %v2983
      %v3078 = vunpack.c.l.b16 %v2987
      %v3079 = vunpack.c.l.b16 %v2990
      %v3080 = vunpack.c.l.b16 %v2994
      %v3081 = vunpack.c.l.b16 %v2997
      %v3082 = vunpack.c.l.b16 %v3001
      %v3083 = vunpack.c.l.b16 %v3004
      %v3084 = vunpack.c.l.b16 %v3008
      %v3085 = vunpack.c.l.b16 %v3011
      %v3086 = vunpack.c.l.b16 %v3015
      %v3087 = vunpack.c.l.b16 %v3018
      %v3088 = vunpack.c.l.b16 %v3022
      %v3089 = vunpack.c.l.b16 %v3025
      %v3090 = vunpack.c.l.b16 %v3029
      %v3091 = vunpack.c.l.b16 %v3032
      %v3092 = vunpack.c.l.b16 %v3036
      %v3093 = vunpack.c.l.b16 %v3039
      %v3094 = vunpack.c.l.b16 %v3043
      %v3095 = vunpack.c.l.b16 %v3046
      %v3096 = vpack.c.b16 %v3065, %v3064
      %v3097 = vpack.c.b16 %v3067, %v3066
      %v3098 = vpack.c.b16 %v3069, %v3068
      %v3099 = vpack.c.b16 %v3071, %v3070
      %v3100 = vpack.c.b16 %v3073, %v3072
      %v3101 = vpack.c.b16 %v3075, %v3074
      %v3102 = vpack.c.b16 %v3077, %v3076
      %v3103 = vpack.c.b16 %v3079, %v3078
      %v3104 = vpack.c.b16 %v3081, %v3080
      %v3105 = vpack.c.b16 %v3083, %v3082
      %v3106 = vpack.c.b16 %v3085, %v3084
      %v3107 = vpack.c.b16 %v3087, %v3086
      %v3108 = vpack.c.b16 %v3089, %v3088
      %v3109 = vpack.c.b16 %v3091, %v3090
      %v3110 = vpack.c.b16 %v3093, %v3092
      %v3111 = vpack.c.b16 %v3095, %v3094
      %v3144 = vunpack.c.l.b16 %v3048
      %v3145 = vunpack.c.l.b16 %v3049
      %v3146 = vunpack.c.l.b16 %v3050
      %v3147 = vunpack.c.l.b16 %v3051
      %v3148 = vunpack.c.l.b16 %v3052
      %v3149 = vunpack.c.l.b16 %v3053
      %v3150 = vunpack.c.l.b16 %v3054
      %v3151 = vunpack.c.l.b16 %v3055
      %v3152 = vunpack.c.l.b16 %v3056
      %v3153 = vunpack.c.l.b16 %v3057
      %v3154 = vunpack.c.l.b16 %v3058
      %v3155 = vunpack.c.l.b16 %v3059
      %v3156 = vunpack.c.l.b16 %v3060
      %v3157 = vunpack.c.l.b16 %v3061
      %v3158 = vunpack.c.l.b16 %v3062
      %v3159 = vunpack.c.l.b16 %v3063
      %v3160 = vpack.c.b16 %v3145, %v3144
      %v3161 = vpack.c.b16 %v3147, %v3146
      %v3162 = vpack.c.b16 %v3149, %v3148
      %v3163 = vpack.c.b16 %v3151, %v3150
      %v3164 = vpack.c.b16 %v3153, %v3152
      %v3165 = vpack.c.b16 %v3155, %v3154
      %v3166 = vpack.c.b16 %v3157, %v3156
      %v3167 = vpack.c.b16 %v3159, %v3158
      %3176 = vmatprep.subr.bf16.mxu0 0
      %3177 = vmatpush1.bf16.msra.mxu0 %v3167
      %3178 = vmatprep.subr.bf16.mxu0 0
      %3179 = vmatpush1.bf16.msra.mxu0 %v3166
      %3180 = vmatprep.subr.bf16.mxu0 0
      %3181 = vmatpush1.bf16.msra.mxu0 %v3165
      %3182 = vmatprep.subr.bf16.mxu0 0
      %3183 = vmatpush1.bf16.msra.mxu0 %v3164
      %3184 = vmatprep.subr.bf16.mxu0 0
      %3185 = vmatpush1.bf16.msra.mxu0 %v3163
      %3186 = vmatprep.subr.bf16.mxu0 0
      %3187 = vmatpush1.bf16.msra.mxu0 %v3162
      %3188 = vmatprep.subr.bf16.mxu0 0
      %3189 = vmatpush1.bf16.msra.mxu0 %v3161
      %3190 = vmatprep.subr.bf16.mxu0 0
      %3191 = vmatpush1.bf16.msra.mxu0 %v3160
      %3192 = vmatprep.subr.bf16.mxu0 0
      %3193 = vmatpush2.bf16.msra.mxu0 0
      %3194 = vmatprep.subr.bf16.mxu0 0
      %3195 = vmatpush2.bf16.msra.mxu0 0
      %3196 = vmatprep.subr.bf16.mxu0 0
      %3197 = vmatpush2.bf16.msra.mxu0 0
      %3198 = vmatprep.subr.bf16.mxu0 0
      %3199 = vmatpush2.bf16.msra.mxu0 0
      %3200 = vmatprep.subr.bf16.mxu0 0
      %3201 = vmatpush2.bf16.msra.mxu0 0
      %3202 = vmatprep.subr.bf16.mxu0 0
      %3203 = vmatpush2.bf16.msra.mxu0 0
      %3204 = vmatprep.subr.bf16.mxu0 0
      %3205 = vmatpush2.bf16.msra.mxu0 0
      %3206 = vmatprep.subr.bf16.mxu0 0
      %3207 = vmatpush2.bf16.msra.mxu0 0
      %3208 = vmatprep.mubr.bf16.mxu0 0
      %3209 = vmatmul.mubr.bf16.gmra.mxu0 %v3096
      %v3210 = vpop.f32.mrf.mxu0
      %v3211 = vadd.f32 0.0, %v3210
      %v3212 = vpop.f32.mrf.mxu0
      %v3213 = vpop.f32.mrf.mxu0
      %v3214 = vadd.f32 0.0, %v3213
      %v3215 = vpop.f32.mrf.mxu0
      %3216 = vmatprep.mubr.bf16.mxu0 0
      %3217 = vmatmul.mubr.bf16.gmra.mxu0 %v3097
      %v3218 = vpop.f32.mrf.mxu0
      %v3219 = vadd.f32 0.0, %v3218
      %v3220 = vpop.f32.mrf.mxu0
      %v3221 = vpop.f32.mrf.mxu0
      %v3222 = vadd.f32 0.0, %v3221
      %v3223 = vpop.f32.mrf.mxu0
      %3224 = vmatprep.mubr.bf16.mxu0 0
      %3225 = vmatmul.mubr.bf16.gmra.mxu0 %v3098
      %v3226 = vpop.f32.mrf.mxu0
      %v3227 = vadd.f32 0.0, %v3226
      %v3228 = vpop.f32.mrf.mxu0
      %v3229 = vpop.f32.mrf.mxu0
      %v3230 = vadd.f32 0.0, %v3229
      %v3231 = vpop.f32.mrf.mxu0
      %3232 = vmatprep.mubr.bf16.mxu0 0
      %3233 = vmatmul.mubr.bf16.gmra.mxu0 %v3099
      %v3234 = vpop.f32.mrf.mxu0
      %v3235 = vadd.f32 0.0, %v3234
      %v3236 = vpop.f32.mrf.mxu0
      %v3237 = vpop.f32.mrf.mxu0
      %v3238 = vadd.f32 0.0, %v3237
      %v3239 = vpop.f32.mrf.mxu0
      %3240 = vmatprep.mubr.bf16.mxu0 0
      %3241 = vmatmul.mubr.bf16.gmra.mxu0 %v3100
      %v3242 = vpop.f32.mrf.mxu0
      %v3243 = vadd.f32 0.0, %v3242
      %v3244 = vpop.f32.mrf.mxu0
      %v3245 = vpop.f32.mrf.mxu0
      %v3246 = vadd.f32 0.0, %v3245
      %v3247 = vpop.f32.mrf.mxu0
      %3248 = vmatprep.mubr.bf16.mxu0 0
      %3249 = vmatmul.mubr.bf16.gmra.mxu0 %v3101
      %v3250 = vpop.f32.mrf.mxu0
      %v3251 = vadd.f32 0.0, %v3250
      %v3252 = vpop.f32.mrf.mxu0
      %v3253 = vpop.f32.mrf.mxu0
      %v3254 = vadd.f32 0.0, %v3253
      %v3255 = vpop.f32.mrf.mxu0
      %3256 = vmatprep.mubr.bf16.mxu0 0
      %3257 = vmatmul.mubr.bf16.gmra.mxu0 %v3102
      %v3258 = vpop.f32.mrf.mxu0
      %v3259 = vadd.f32 0.0, %v3258
      %v3260 = vpop.f32.mrf.mxu0
      %v3261 = vpop.f32.mrf.mxu0
      %v3262 = vadd.f32 0.0, %v3261
      %v3263 = vpop.f32.mrf.mxu0
      %3264 = vmatprep.mubr.bf16.mxu0 0
      %3265 = vmatmul.mubr.bf16.gmra.mxu0 %v3103
      %v3266 = vpop.f32.mrf.mxu0
      %v3267 = vadd.f32 0.0, %v3266
      %v3268 = vpop.f32.mrf.mxu0
      %v3269 = vpop.f32.mrf.mxu0
      %v3270 = vadd.f32 0.0, %v3269
      %v3271 = vpop.f32.mrf.mxu0
      %3272 = vmatprep.mubr.bf16.mxu0 0
      %3273 = vmatmul.mubr.bf16.gmra.mxu0 %v3104
      %v3274 = vpop.f32.mrf.mxu0
      %v3275 = vadd.f32 0.0, %v3274
      %v3276 = vpop.f32.mrf.mxu0
      %v3277 = vpop.f32.mrf.mxu0
      %v3278 = vadd.f32 0.0, %v3277
      %v3279 = vpop.f32.mrf.mxu0
      %3280 = vmatprep.mubr.bf16.mxu0 0
      %3281 = vmatmul.mubr.bf16.gmra.mxu0 %v3105
      %v3282 = vpop.f32.mrf.mxu0
      %v3283 = vadd.f32 0.0, %v3282
      %v3284 = vpop.f32.mrf.mxu0
      %v3285 = vpop.f32.mrf.mxu0
      %v3286 = vadd.f32 0.0, %v3285
      %v3287 = vpop.f32.mrf.mxu0
      %3288 = vmatprep.mubr.bf16.mxu0 0
      %3289 = vmatmul.mubr.bf16.gmra.mxu0 %v3106
      %v3290 = vpop.f32.mrf.mxu0
      %v3291 = vadd.f32 0.0, %v3290
      %v3292 = vpop.f32.mrf.mxu0
      %v3293 = vpop.f32.mrf.mxu0
      %v3294 = vadd.f32 0.0, %v3293
      %v3295 = vpop.f32.mrf.mxu0
      %3296 = vmatprep.mubr.bf16.mxu0 0
      %3297 = vmatmul.mubr.bf16.gmra.mxu0 %v3107
      %v3298 = vpop.f32.mrf.mxu0
      %v3299 = vadd.f32 0.0, %v3298
      %v3300 = vpop.f32.mrf.mxu0
      %v3301 = vpop.f32.mrf.mxu0
      %v3302 = vadd.f32 0.0, %v3301
      %v3303 = vpop.f32.mrf.mxu0
      %3304 = vmatprep.mubr.bf16.mxu0 0
      %3305 = vmatmul.mubr.bf16.gmra.mxu0 %v3108
      %v3306 = vpop.f32.mrf.mxu0
      %v3307 = vadd.f32 0.0, %v3306
      %v3308 = vpop.f32.mrf.mxu0
      %v3309 = vpop.f32.mrf.mxu0
      %v3310 = vadd.f32 0.0, %v3309
      %v3311 = vpop.f32.mrf.mxu0
      %3312 = vmatprep.mubr.bf16.mxu0 0
      %3313 = vmatmul.mubr.bf16.gmra.mxu0 %v3109
      %v3314 = vpop.f32.mrf.mxu0
      %v3315 = vadd.f32 0.0, %v3314
      %v3316 = vpop.f32.mrf.mxu0
      %v3317 = vpop.f32.mrf.mxu0
      %v3318 = vadd.f32 0.0, %v3317
      %v3319 = vpop.f32.mrf.mxu0
      %3320 = vmatprep.mubr.bf16.mxu0 0
      %3321 = vmatmul.mubr.bf16.gmra.mxu0 %v3110
      %v3322 = vpop.f32.mrf.mxu0
      %v3323 = vadd.f32 0.0, %v3322
      %v3324 = vpop.f32.mrf.mxu0
      %v3325 = vpop.f32.mrf.mxu0
      %v3326 = vadd.f32 0.0, %v3325
      %v3327 = vpop.f32.mrf.mxu0
      %3328 = vmatprep.mubr.bf16.mxu0 0
      %3329 = vmatmul.mubr.bf16.gmra.mxu0 %v3111
      %v3330 = vpop.f32.mrf.mxu0
      %v3331 = vadd.f32 0.0, %v3330
      %v3332 = vpop.f32.mrf.mxu0
      %v3333 = vpop.f32.mrf.mxu0
      %v3334 = vadd.f32 0.0, %v3333
      %v3335 = vpop.f32.mrf.mxu0
      %3336 = vdwg.mxu0
      %v3337 = vadd.f32 %v2839, %v3211
      %v3338 = vadd.f32 %v2840, %v3214
      %v3339 = vadd.f32 %v2841, %v3219
      %v3340 = vadd.f32 %v2842, %v3222
      %v3341 = vadd.f32 %v2843, %v3227
      %v3342 = vadd.f32 %v2844, %v3230
      %v3343 = vadd.f32 %v2845, %v3235
      %v3344 = vadd.f32 %v2846, %v3238
      %v3345 = vadd.f32 %v2847, %v3243
      %v3346 = vadd.f32 %v2848, %v3246
      %v3347 = vadd.f32 %v2849, %v3251
      %v3348 = vadd.f32 %v2850, %v3254
      %v3349 = vadd.f32 %v2851, %v3259
      %v3350 = vadd.f32 %v2852, %v3262
      %v3351 = vadd.f32 %v2853, %v3267
      %v3352 = vadd.f32 %v2854, %v3270
      %v3353 = vadd.f32 %v2855, %v3275
      %v3354 = vadd.f32 %v2856, %v3278
      %v3355 = vadd.f32 %v2857, %v3283
      %v3356 = vadd.f32 %v2858, %v3286
      %v3357 = vadd.f32 %v2859, %v3291
      %v3358 = vadd.f32 %v2860, %v3294
      %v3359 = vadd.f32 %v2861, %v3299
      %v3360 = vadd.f32 %v2862, %v3302
      %v3361 = vadd.f32 %v2863, %v3307
      %v3362 = vadd.f32 %v2864, %v3310
      %v3363 = vadd.f32 %v2865, %v3315
      %v3364 = vadd.f32 %v2866, %v3318
      %v3365 = vadd.f32 %v2867, %v3323
      %v3366 = vadd.f32 %v2868, %v3326
      %v3367 = vadd.f32 %v2869, %v3331
      %v3368 = vadd.f32 %v2870, %v3334
      %s3369 = scalar_lea.vmem %s192, 24
      %v3370 = vld [vmem:[%s3369] sm:$0xf]
      %v3371 = vld [vmem:[%s3369 + $0x4] sm:$0xf]
      %v3372 = vld [vmem:[%s3369 + $0xc] sm:$0xf]
      %v3373 = vld [vmem:[%s3369 + $0x10] sm:$0xf]
      %v3374 = vld [vmem:[%s3369 + $0x18] sm:$0xf]
      %v3375 = vld [vmem:[%s3369 + $0x1c] sm:$0xf]
      %v3376 = vld [vmem:[%s3369 + $0x24] sm:$0xf]
      %v3377 = vld [vmem:[%s3369 + $0x28] sm:$0xf]
      %v3378 = vld [vmem:[%s3369 + $0x30] sm:$0xf]
      %v3379 = vld [vmem:[%s3369 + $0x34] sm:$0xf]
      %v3380 = vld [vmem:[%s3369 + $0x3c] sm:$0xf]
      %v3381 = vld [vmem:[%s3369 + $0x40] sm:$0xf]
      %v3382 = vld [vmem:[%s3369 + $0x48] sm:$0xf]
      %v3383 = vld [vmem:[%s3369 + $0x4c] sm:$0xf]
      %v3384 = vld [vmem:[%s3369 + $0x54] sm:$0xf]
      %v3385 = vld [vmem:[%s3369 + $0x58] sm:$0xf]
      %v3386 = vld [vmem:[%s3369 + $0x60] sm:$0xf]
      %v3387 = vld [vmem:[%s3369 + $0x64] sm:$0xf]
      %v3388 = vld [vmem:[%s3369 + $0x6c] sm:$0xf]
      %v3389 = vld [vmem:[%s3369 + $0x70] sm:$0xf]
      %v3390 = vld [vmem:[%s3369 + $0x78] sm:$0xf]
      %v3391 = vld [vmem:[%s3369 + $0x7c] sm:$0xf]
      %v3392 = vld [vmem:[%s3369 + $0x84] sm:$0xf]
      %v3393 = vld [vmem:[%s3369 + $0x88] sm:$0xf]
      %v3394 = vld [vmem:[%s3369 + $0x90] sm:$0xf]
      %v3395 = vld [vmem:[%s3369 + $0x94] sm:$0xf]
      %v3396 = vld [vmem:[%s3369 + $0x9c] sm:$0xf]
      %v3397 = vld [vmem:[%s3369 + $0xa0] sm:$0xf]
      %v3398 = vld [vmem:[%s3369 + $0xa8] sm:$0xf]
      %v3399 = vld [vmem:[%s3369 + $0xac] sm:$0xf]
      %v3400 = vld [vmem:[%s3369 + $0xb4] sm:$0xf]
      %v3401 = vld [vmem:[%s3369 + $0xb8] sm:$0xf]
      %s3402 = scalar_lea.vmem %s1, 384
      %v3403 = vld [vmem:[%s3402] sm:$0xf]
      %v3404 = vld [vmem:[%s3402 + $0x4] sm:$0xf]
      %v3405 = vld [vmem:[%s3402 + $0x8] sm:$0xf]
      %v3406 = vld [vmem:[%s3402 + $0xc] sm:$0xf]
      %v3407 = vld [vmem:[%s3402 + $0x10] sm:$0xf]
      %v3408 = vld [vmem:[%s3402 + $0x14] sm:$0xf]
      %v3409 = vld [vmem:[%s3402 + $0x18] sm:$0xf]
      %v3410 = vld [vmem:[%s3402 + $0x1c] sm:$0xf]
      %v3411 = vld [vmem:[%s3402 + $0x20] sm:$0xf]
      %v3412 = vld [vmem:[%s3402 + $0x24] sm:$0xf]
      %v3413 = vld [vmem:[%s3402 + $0x28] sm:$0xf]
      %v3414 = vld [vmem:[%s3402 + $0x2c] sm:$0xf]
      %v3415 = vld [vmem:[%s3402 + $0x30] sm:$0xf]
      %v3416 = vld [vmem:[%s3402 + $0x34] sm:$0xf]
      %v3417 = vld [vmem:[%s3402 + $0x38] sm:$0xf]
      %v3418 = vld [vmem:[%s3402 + $0x3c] sm:$0xf]
      %v3451 = vunpack.c.l.b16 %v3370
      %v3452 = vunpack.c.l.b16 %v3371
      %v3453 = vunpack.c.l.b16 %v3372
      %v3454 = vunpack.c.l.b16 %v3373
      %v3455 = vunpack.c.l.b16 %v3374
      %v3456 = vunpack.c.l.b16 %v3375
      %v3457 = vunpack.c.l.b16 %v3376
      %v3458 = vunpack.c.l.b16 %v3377
      %v3459 = vunpack.c.l.b16 %v3378
      %v3460 = vunpack.c.l.b16 %v3379
      %v3461 = vunpack.c.l.b16 %v3380
      %v3462 = vunpack.c.l.b16 %v3381
      %v3463 = vunpack.c.l.b16 %v3382
      %v3464 = vunpack.c.l.b16 %v3383
      %v3465 = vunpack.c.l.b16 %v3384
      %v3466 = vunpack.c.l.b16 %v3385
      %v3467 = vunpack.c.l.b16 %v3386
      %v3468 = vunpack.c.l.b16 %v3387
      %v3469 = vunpack.c.l.b16 %v3388
      %v3470 = vunpack.c.l.b16 %v3389
      %v3471 = vunpack.c.l.b16 %v3390
      %v3472 = vunpack.c.l.b16 %v3391
      %v3473 = vunpack.c.l.b16 %v3392
      %v3474 = vunpack.c.l.b16 %v3393
      %v3475 = vunpack.c.l.b16 %v3394
      %v3476 = vunpack.c.l.b16 %v3395
      %v3477 = vunpack.c.l.b16 %v3396
      %v3478 = vunpack.c.l.b16 %v3397
      %v3479 = vunpack.c.l.b16 %v3398
      %v3480 = vunpack.c.l.b16 %v3399
      %v3481 = vunpack.c.l.b16 %v3400
      %v3482 = vunpack.c.l.b16 %v3401
      %v3483 = vpack.c.b16 %v3452, %v3451
      %v3484 = vpack.c.b16 %v3454, %v3453
      %v3485 = vpack.c.b16 %v3456, %v3455
      %v3486 = vpack.c.b16 %v3458, %v3457
      %v3487 = vpack.c.b16 %v3460, %v3459
      %v3488 = vpack.c.b16 %v3462, %v3461
      %v3489 = vpack.c.b16 %v3464, %v3463
      %v3490 = vpack.c.b16 %v3466, %v3465
      %v3491 = vpack.c.b16 %v3468, %v3467
      %v3492 = vpack.c.b16 %v3470, %v3469
      %v3493 = vpack.c.b16 %v3472, %v3471
      %v3494 = vpack.c.b16 %v3474, %v3473
      %v3495 = vpack.c.b16 %v3476, %v3475
      %v3496 = vpack.c.b16 %v3478, %v3477
      %v3497 = vpack.c.b16 %v3480, %v3479
      %v3498 = vpack.c.b16 %v3482, %v3481
      %v3531 = vunpack.c.l.b16 %v3403
      %v3532 = vunpack.c.l.b16 %v3404
      %v3533 = vunpack.c.l.b16 %v3405
      %v3534 = vunpack.c.l.b16 %v3406
      %v3535 = vunpack.c.l.b16 %v3407
      %v3536 = vunpack.c.l.b16 %v3408
      %v3537 = vunpack.c.l.b16 %v3409
      %v3538 = vunpack.c.l.b16 %v3410
      %v3539 = vunpack.c.l.b16 %v3411
      %v3540 = vunpack.c.l.b16 %v3412
      %v3541 = vunpack.c.l.b16 %v3413
      %v3542 = vunpack.c.l.b16 %v3414
      %v3543 = vunpack.c.l.b16 %v3415
      %v3544 = vunpack.c.l.b16 %v3416
      %v3545 = vunpack.c.l.b16 %v3417
      %v3546 = vunpack.c.l.b16 %v3418
      %v3547 = vpack.c.b16 %v3532, %v3531
      %v3548 = vpack.c.b16 %v3534, %v3533
      %v3549 = vpack.c.b16 %v3536, %v3535
      %v3550 = vpack.c.b16 %v3538, %v3537
      %v3551 = vpack.c.b16 %v3540, %v3539
      %v3552 = vpack.c.b16 %v3542, %v3541
      %v3553 = vpack.c.b16 %v3544, %v3543
      %v3554 = vpack.c.b16 %v3546, %v3545
      %3563 = vmatprep.subr.bf16.mxu0 0
      %3564 = vmatpush1.bf16.msra.mxu0 %v3554
      %3565 = vmatprep.subr.bf16.mxu0 0
      %3566 = vmatpush1.bf16.msra.mxu0 %v3553
      %3567 = vmatprep.subr.bf16.mxu0 0
      %3568 = vmatpush1.bf16.msra.mxu0 %v3552
      %3569 = vmatprep.subr.bf16.mxu0 0
      %3570 = vmatpush1.bf16.msra.mxu0 %v3551
      %3571 = vmatprep.subr.bf16.mxu0 0
      %3572 = vmatpush1.bf16.msra.mxu0 %v3550
      %3573 = vmatprep.subr.bf16.mxu0 0
      %3574 = vmatpush1.bf16.msra.mxu0 %v3549
      %3575 = vmatprep.subr.bf16.mxu0 0
      %3576 = vmatpush1.bf16.msra.mxu0 %v3548
      %3577 = vmatprep.subr.bf16.mxu0 0
      %3578 = vmatpush1.bf16.msra.mxu0 %v3547
      %3579 = vmatprep.subr.bf16.mxu0 0
      %3580 = vmatpush2.bf16.msra.mxu0 0
      %3581 = vmatprep.subr.bf16.mxu0 0
      %3582 = vmatpush2.bf16.msra.mxu0 0
      %3583 = vmatprep.subr.bf16.mxu0 0
      %3584 = vmatpush2.bf16.msra.mxu0 0
      %3585 = vmatprep.subr.bf16.mxu0 0
      %3586 = vmatpush2.bf16.msra.mxu0 0
      %3587 = vmatprep.subr.bf16.mxu0 0
      %3588 = vmatpush2.bf16.msra.mxu0 0
      %3589 = vmatprep.subr.bf16.mxu0 0
      %3590 = vmatpush2.bf16.msra.mxu0 0
      %3591 = vmatprep.subr.bf16.mxu0 0
      %3592 = vmatpush2.bf16.msra.mxu0 0
      %3593 = vmatprep.subr.bf16.mxu0 0
      %3594 = vmatpush2.bf16.msra.mxu0 0
      %3595 = vmatprep.mubr.bf16.mxu0 0
      %3596 = vmatmul.mubr.bf16.gmra.mxu0 %v3483
      %v3597 = vpop.f32.mrf.mxu0
      %v3598 = vadd.f32 0.0, %v3597
      %v3599 = vpop.f32.mrf.mxu0
      %v3600 = vpop.f32.mrf.mxu0
      %v3601 = vadd.f32 0.0, %v3600
      %v3602 = vpop.f32.mrf.mxu0
      %3603 = vmatprep.mubr.bf16.mxu0 0
      %3604 = vmatmul.mubr.bf16.gmra.mxu0 %v3484
      %v3605 = vpop.f32.mrf.mxu0
      %v3606 = vadd.f32 0.0, %v3605
      %v3607 = vpop.f32.mrf.mxu0
      %v3608 = vpop.f32.mrf.mxu0
      %v3609 = vadd.f32 0.0, %v3608
      %v3610 = vpop.f32.mrf.mxu0
      %3611 = vmatprep.mubr.bf16.mxu0 0
      %3612 = vmatmul.mubr.bf16.gmra.mxu0 %v3485
      %v3613 = vpop.f32.mrf.mxu0
      %v3614 = vadd.f32 0.0, %v3613
      %v3615 = vpop.f32.mrf.mxu0
      %v3616 = vpop.f32.mrf.mxu0
      %v3617 = vadd.f32 0.0, %v3616
      %v3618 = vpop.f32.mrf.mxu0
      %3619 = vmatprep.mubr.bf16.mxu0 0
      %3620 = vmatmul.mubr.bf16.gmra.mxu0 %v3486
      %v3621 = vpop.f32.mrf.mxu0
      %v3622 = vadd.f32 0.0, %v3621
      %v3623 = vpop.f32.mrf.mxu0
      %v3624 = vpop.f32.mrf.mxu0
      %v3625 = vadd.f32 0.0, %v3624
      %v3626 = vpop.f32.mrf.mxu0
      %3627 = vmatprep.mubr.bf16.mxu0 0
      %3628 = vmatmul.mubr.bf16.gmra.mxu0 %v3487
      %v3629 = vpop.f32.mrf.mxu0
      %v3630 = vadd.f32 0.0, %v3629
      %v3631 = vpop.f32.mrf.mxu0
      %v3632 = vpop.f32.mrf.mxu0
      %v3633 = vadd.f32 0.0, %v3632
      %v3634 = vpop.f32.mrf.mxu0
      %3635 = vmatprep.mubr.bf16.mxu0 0
      %3636 = vmatmul.mubr.bf16.gmra.mxu0 %v3488
      %v3637 = vpop.f32.mrf.mxu0
      %v3638 = vadd.f32 0.0, %v3637
      %v3639 = vpop.f32.mrf.mxu0
      %v3640 = vpop.f32.mrf.mxu0
      %v3641 = vadd.f32 0.0, %v3640
      %v3642 = vpop.f32.mrf.mxu0
      %3643 = vmatprep.mubr.bf16.mxu0 0
      %3644 = vmatmul.mubr.bf16.gmra.mxu0 %v3489
      %v3645 = vpop.f32.mrf.mxu0
      %v3646 = vadd.f32 0.0, %v3645
      %v3647 = vpop.f32.mrf.mxu0
      %v3648 = vpop.f32.mrf.mxu0
      %v3649 = vadd.f32 0.0, %v3648
      %v3650 = vpop.f32.mrf.mxu0
      %3651 = vmatprep.mubr.bf16.mxu0 0
      %3652 = vmatmul.mubr.bf16.gmra.mxu0 %v3490
      %v3653 = vpop.f32.mrf.mxu0
      %v3654 = vadd.f32 0.0, %v3653
      %v3655 = vpop.f32.mrf.mxu0
      %v3656 = vpop.f32.mrf.mxu0
      %v3657 = vadd.f32 0.0, %v3656
      %v3658 = vpop.f32.mrf.mxu0
      %3659 = vmatprep.mubr.bf16.mxu0 0
      %3660 = vmatmul.mubr.bf16.gmra.mxu0 %v3491
      %v3661 = vpop.f32.mrf.mxu0
      %v3662 = vadd.f32 0.0, %v3661
      %v3663 = vpop.f32.mrf.mxu0
      %v3664 = vpop.f32.mrf.mxu0
      %v3665 = vadd.f32 0.0, %v3664
      %v3666 = vpop.f32.mrf.mxu0
      %3667 = vmatprep.mubr.bf16.mxu0 0
      %3668 = vmatmul.mubr.bf16.gmra.mxu0 %v3492
      %v3669 = vpop.f32.mrf.mxu0
      %v3670 = vadd.f32 0.0, %v3669
      %v3671 = vpop.f32.mrf.mxu0
      %v3672 = vpop.f32.mrf.mxu0
      %v3673 = vadd.f32 0.0, %v3672
      %v3674 = vpop.f32.mrf.mxu0
      %3675 = vmatprep.mubr.bf16.mxu0 0
      %3676 = vmatmul.mubr.bf16.gmra.mxu0 %v3493
      %v3677 = vpop.f32.mrf.mxu0
      %v3678 = vadd.f32 0.0, %v3677
      %v3679 = vpop.f32.mrf.mxu0
      %v3680 = vpop.f32.mrf.mxu0
      %v3681 = vadd.f32 0.0, %v3680
      %v3682 = vpop.f32.mrf.mxu0
      %3683 = vmatprep.mubr.bf16.mxu0 0
      %3684 = vmatmul.mubr.bf16.gmra.mxu0 %v3494
      %v3685 = vpop.f32.mrf.mxu0
      %v3686 = vadd.f32 0.0, %v3685
      %v3687 = vpop.f32.mrf.mxu0
      %v3688 = vpop.f32.mrf.mxu0
      %v3689 = vadd.f32 0.0, %v3688
      %v3690 = vpop.f32.mrf.mxu0
      %3691 = vmatprep.mubr.bf16.mxu0 0
      %3692 = vmatmul.mubr.bf16.gmra.mxu0 %v3495
      %v3693 = vpop.f32.mrf.mxu0
      %v3694 = vadd.f32 0.0, %v3693
      %v3695 = vpop.f32.mrf.mxu0
      %v3696 = vpop.f32.mrf.mxu0
      %v3697 = vadd.f32 0.0, %v3696
      %v3698 = vpop.f32.mrf.mxu0
      %3699 = vmatprep.mubr.bf16.mxu0 0
      %3700 = vmatmul.mubr.bf16.gmra.mxu0 %v3496
      %v3701 = vpop.f32.mrf.mxu0
      %v3702 = vadd.f32 0.0, %v3701
      %v3703 = vpop.f32.mrf.mxu0
      %v3704 = vpop.f32.mrf.mxu0
      %v3705 = vadd.f32 0.0, %v3704
      %v3706 = vpop.f32.mrf.mxu0
      %3707 = vmatprep.mubr.bf16.mxu0 0
      %3708 = vmatmul.mubr.bf16.gmra.mxu0 %v3497
      %v3709 = vpop.f32.mrf.mxu0
      %v3710 = vadd.f32 0.0, %v3709
      %v3711 = vpop.f32.mrf.mxu0
      %v3712 = vpop.f32.mrf.mxu0
      %v3713 = vadd.f32 0.0, %v3712
      %v3714 = vpop.f32.mrf.mxu0
      %3715 = vmatprep.mubr.bf16.mxu0 0
      %3716 = vmatmul.mubr.bf16.gmra.mxu0 %v3498
      %v3717 = vpop.f32.mrf.mxu0
      %v3718 = vadd.f32 0.0, %v3717
      %v3719 = vpop.f32.mrf.mxu0
      %v3720 = vpop.f32.mrf.mxu0
      %v3721 = vadd.f32 0.0, %v3720
      %v3722 = vpop.f32.mrf.mxu0
      %3723 = vdwg.mxu0
      %v3724 = vadd.f32 %v3337, %v3598
      %v3725 = vadd.f32 %v3338, %v3601
      %v3726 = vadd.f32 %v3339, %v3606
      %v3727 = vadd.f32 %v3340, %v3609
      %v3728 = vadd.f32 %v3341, %v3614
      %v3729 = vadd.f32 %v3342, %v3617
      %v3730 = vadd.f32 %v3343, %v3622
      %v3731 = vadd.f32 %v3344, %v3625
      %v3732 = vadd.f32 %v3345, %v3630
      %v3733 = vadd.f32 %v3346, %v3633
      %v3734 = vadd.f32 %v3347, %v3638
      %v3735 = vadd.f32 %v3348, %v3641
      %v3736 = vadd.f32 %v3349, %v3646
      %v3737 = vadd.f32 %v3350, %v3649
      %v3738 = vadd.f32 %v3351, %v3654
      %v3739 = vadd.f32 %v3352, %v3657
      %v3740 = vadd.f32 %v3353, %v3662
      %v3741 = vadd.f32 %v3354, %v3665
      %v3742 = vadd.f32 %v3355, %v3670
      %v3743 = vadd.f32 %v3356, %v3673
      %v3744 = vadd.f32 %v3357, %v3678
      %v3745 = vadd.f32 %v3358, %v3681
      %v3746 = vadd.f32 %v3359, %v3686
      %v3747 = vadd.f32 %v3360, %v3689
      %v3748 = vadd.f32 %v3361, %v3694
      %v3749 = vadd.f32 %v3362, %v3697
      %v3750 = vadd.f32 %v3363, %v3702
      %v3751 = vadd.f32 %v3364, %v3705
      %v3752 = vadd.f32 %v3365, %v3710
      %v3753 = vadd.f32 %v3366, %v3713
      %v3754 = vadd.f32 %v3367, %v3718
      %v3755 = vadd.f32 %v3368, %v3721
      %v3756 = vld [vmem:[%s3369] sm:$0xf]
      %v3757 = vld [vmem:[%s3369 + $0x4] sm:$0xf]
      %v3758 = vld [vmem:[%s3369 + $0x8] sm:$0x1]
      %v3759 = vld [vmem:[%s3369 + $0xc] sm:$0xf]
      %v3760 = vld [vmem:[%s3369 + $0x10] sm:$0xf]
      %v3761 = vld [vmem:[%s3369 + $0x14] sm:$0x1]
      %v3762 = vld [vmem:[%s3369 + $0x18] sm:$0xf]
      %v3763 = vld [vmem:[%s3369 + $0x1c] sm:$0xf]
      %v3764 = vld [vmem:[%s3369 + $0x20] sm:$0x1]
      %v3765 = vld [vmem:[%s3369 + $0x24] sm:$0xf]
      %v3766 = vld [vmem:[%s3369 + $0x28] sm:$0xf]
      %v3767 = vld [vmem:[%s3369 + $0x2c] sm:$0x1]
      %v3768 = vld [vmem:[%s3369 + $0x30] sm:$0xf]
      %v3769 = vld [vmem:[%s3369 + $0x34] sm:$0xf]
      %v3770 = vld [vmem:[%s3369 + $0x38] sm:$0x1]
      %v3771 = vld [vmem:[%s3369 + $0x3c] sm:$0xf]
      %v3772 = vld [vmem:[%s3369 + $0x40] sm:$0xf]
      %v3773 = vld [vmem:[%s3369 + $0x44] sm:$0x1]
      %v3774 = vld [vmem:[%s3369 + $0x48] sm:$0xf]
      %v3775 = vld [vmem:[%s3369 + $0x4c] sm:$0xf]
      %v3776 = vld [vmem:[%s3369 + $0x50] sm:$0x1]
      %v3777 = vld [vmem:[%s3369 + $0x54] sm:$0xf]
      %v3778 = vld [vmem:[%s3369 + $0x58] sm:$0xf]
      %v3779 = vld [vmem:[%s3369 + $0x5c] sm:$0x1]
      %v3780 = vld [vmem:[%s3369 + $0x60] sm:$0xf]
      %v3781 = vld [vmem:[%s3369 + $0x64] sm:$0xf]
      %v3782 = vld [vmem:[%s3369 + $0x68] sm:$0x1]
      %v3783 = vld [vmem:[%s3369 + $0x6c] sm:$0xf]
      %v3784 = vld [vmem:[%s3369 + $0x70] sm:$0xf]
      %v3785 = vld [vmem:[%s3369 + $0x74] sm:$0x1]
      %v3786 = vld [vmem:[%s3369 + $0x78] sm:$0xf]
      %v3787 = vld [vmem:[%s3369 + $0x7c] sm:$0xf]
      %v3788 = vld [vmem:[%s3369 + $0x80] sm:$0x1]
      %v3789 = vld [vmem:[%s3369 + $0x84] sm:$0xf]
      %v3790 = vld [vmem:[%s3369 + $0x88] sm:$0xf]
      %v3791 = vld [vmem:[%s3369 + $0x8c] sm:$0x1]
      %v3792 = vld [vmem:[%s3369 + $0x90] sm:$0xf]
      %v3793 = vld [vmem:[%s3369 + $0x94] sm:$0xf]
      %v3794 = vld [vmem:[%s3369 + $0x98] sm:$0x1]
      %v3795 = vld [vmem:[%s3369 + $0x9c] sm:$0xf]
      %v3796 = vld [vmem:[%s3369 + $0xa0] sm:$0xf]
      %v3797 = vld [vmem:[%s3369 + $0xa4] sm:$0x1]
      %v3798 = vld [vmem:[%s3369 + $0xa8] sm:$0xf]
      %v3799 = vld [vmem:[%s3369 + $0xac] sm:$0xf]
      %v3800 = vld [vmem:[%s3369 + $0xb0] sm:$0x1]
      %v3801 = vld [vmem:[%s3369 + $0xb4] sm:$0xf]
      %v3802 = vld [vmem:[%s3369 + $0xb8] sm:$0xf]
      %v3803 = vld [vmem:[%s3369 + $0xbc] sm:$0x1]
      %v3805 = vshrl.u32 %v3756, 16
      %v3807 = vrot.slane %v3805, 4
      %v3808 = vshll.u32 %v3756, 16
      %v3810 = vrot.slane %v3808, 5
      %v3811 = vor.u32 %v3807, %v3810
      %v3812 = vrot.slane %v3811, 4
      %v3814 = vshll.u32 %v3757, 16
      %v3816 = vrot.slane %v3814, 5
      %v3817 = vsel %vm265, %v3812, %v3816
      %v3818 = vshrl.u32 %v3757, 16
      %v3820 = vrot.slane %v3818, 4
      %v3821 = vor.u32 %v3820, %v3816
      %v3822 = vrot.slane %v3821, 4
      %v3824 = vshll.u32 %v3758, 16
      %v3826 = vrot.slane %v3824, 5
      %v3827 = vsel %vm265, %v3822, %v3826
      %v3829 = vshrl.u32 %v3759, 16
      %v3831 = vrot.slane %v3829, 4
      %v3832 = vshll.u32 %v3759, 16
      %v3834 = vrot.slane %v3832, 5
      %v3835 = vor.u32 %v3831, %v3834
      %v3836 = vrot.slane %v3835, 4
      %v3838 = vshll.u32 %v3760, 16
      %v3840 = vrot.slane %v3838, 5
      %v3841 = vsel %vm265, %v3836, %v3840
      %v3842 = vshrl.u32 %v3760, 16
      %v3844 = vrot.slane %v3842, 4
      %v3845 = vor.u32 %v3844, %v3840
      %v3846 = vrot.slane %v3845, 4
      %v3848 = vshll.u32 %v3761, 16
      %v3850 = vrot.slane %v3848, 5
      %v3851 = vsel %vm265, %v3846, %v3850
      %v3853 = vshrl.u32 %v3762, 16
      %v3855 = vrot.slane %v3853, 4
      %v3856 = vshll.u32 %v3762, 16
      %v3858 = vrot.slane %v3856, 5
      %v3859 = vor.u32 %v3855, %v3858
      %v3860 = vrot.slane %v3859, 4
      %v3862 = vshll.u32 %v3763, 16
      %v3864 = vrot.slane %v3862, 5
      %v3865 = vsel %vm265, %v3860, %v3864
      %v3866 = vshrl.u32 %v3763, 16
      %v3868 = vrot.slane %v3866, 4
      %v3869 = vor.u32 %v3868, %v3864
      %v3870 = vrot.slane %v3869, 4
      %v3872 = vshll.u32 %v3764, 16
      %v3874 = vrot.slane %v3872, 5
      %v3875 = vsel %vm265, %v3870, %v3874
      %v3877 = vshrl.u32 %v3765, 16
      %v3879 = vrot.slane %v3877, 4
      %v3880 = vshll.u32 %v3765, 16
      %v3882 = vrot.slane %v3880, 5
      %v3883 = vor.u32 %v3879, %v3882
      %v3884 = vrot.slane %v3883, 4
      %v3886 = vshll.u32 %v3766, 16
      %v3888 = vrot.slane %v3886, 5
      %v3889 = vsel %vm265, %v3884, %v3888
      %v3890 = vshrl.u32 %v3766, 16
      %v3892 = vrot.slane %v3890, 4
      %v3893 = vor.u32 %v3892, %v3888
      %v3894 = vrot.slane %v3893, 4
      %v3896 = vshll.u32 %v3767, 16
      %v3898 = vrot.slane %v3896, 5
      %v3899 = vsel %vm265, %v3894, %v3898
      %v3901 = vshrl.u32 %v3768, 16
      %v3903 = vrot.slane %v3901, 4
      %v3904 = vshll.u32 %v3768, 16
      %v3906 = vrot.slane %v3904, 5
      %v3907 = vor.u32 %v3903, %v3906
      %v3908 = vrot.slane %v3907, 4
      %v3910 = vshll.u32 %v3769, 16
      %v3912 = vrot.slane %v3910, 5
      %v3913 = vsel %vm265, %v3908, %v3912
      %v3914 = vshrl.u32 %v3769, 16
      %v3916 = vrot.slane %v3914, 4
      %v3917 = vor.u32 %v3916, %v3912
      %v3918 = vrot.slane %v3917, 4
      %v3920 = vshll.u32 %v3770, 16
      %v3922 = vrot.slane %v3920, 5
      %v3923 = vsel %vm265, %v3918, %v3922
      %v3925 = vshrl.u32 %v3771, 16
      %v3927 = vrot.slane %v3925, 4
      %v3928 = vshll.u32 %v3771, 16
      %v3930 = vrot.slane %v3928, 5
      %v3931 = vor.u32 %v3927, %v3930
      %v3932 = vrot.slane %v3931, 4
      %v3934 = vshll.u32 %v3772, 16
      %v3936 = vrot.slane %v3934, 5
      %v3937 = vsel %vm265, %v3932, %v3936
      %v3938 = vshrl.u32 %v3772, 16
      %v3940 = vrot.slane %v3938, 4
      %v3941 = vor.u32 %v3940, %v3936
      %v3942 = vrot.slane %v3941, 4
      %v3944 = vshll.u32 %v3773, 16
      %v3946 = vrot.slane %v3944, 5
      %v3947 = vsel %vm265, %v3942, %v3946
      %v3949 = vshrl.u32 %v3774, 16
      %v3951 = vrot.slane %v3949, 4
      %v3952 = vshll.u32 %v3774, 16
      %v3954 = vrot.slane %v3952, 5
      %v3955 = vor.u32 %v3951, %v3954
      %v3956 = vrot.slane %v3955, 4
      %v3958 = vshll.u32 %v3775, 16
      %v3960 = vrot.slane %v3958, 5
      %v3961 = vsel %vm265, %v3956, %v3960
      %v3962 = vshrl.u32 %v3775, 16
      %v3964 = vrot.slane %v3962, 4
      %v3965 = vor.u32 %v3964, %v3960
      %v3966 = vrot.slane %v3965, 4
      %v3968 = vshll.u32 %v3776, 16
      %v3970 = vrot.slane %v3968, 5
      %v3971 = vsel %vm265, %v3966, %v3970
      %v3973 = vshrl.u32 %v3777, 16
      %v3975 = vrot.slane %v3973, 4
      %v3976 = vshll.u32 %v3777, 16
      %v3978 = vrot.slane %v3976, 5
      %v3979 = vor.u32 %v3975, %v3978
      %v3980 = vrot.slane %v3979, 4
      %v3982 = vshll.u32 %v3778, 16
      %v3984 = vrot.slane %v3982, 5
      %v3985 = vsel %vm265, %v3980, %v3984
      %v3986 = vshrl.u32 %v3778, 16
      %v3988 = vrot.slane %v3986, 4
      %v3989 = vor.u32 %v3988, %v3984
      %v3990 = vrot.slane %v3989, 4
      %v3992 = vshll.u32 %v3779, 16
      %v3994 = vrot.slane %v3992, 5
      %v3995 = vsel %vm265, %v3990, %v3994
      %v3997 = vshrl.u32 %v3780, 16
      %v3999 = vrot.slane %v3997, 4
      %v4000 = vshll.u32 %v3780, 16
      %v4002 = vrot.slane %v4000, 5
      %v4003 = vor.u32 %v3999, %v4002
      %v4004 = vrot.slane %v4003, 4
      %v4006 = vshll.u32 %v3781, 16
      %v4008 = vrot.slane %v4006, 5
      %v4009 = vsel %vm265, %v4004, %v4008
      %v4010 = vshrl.u32 %v3781, 16
      %v4012 = vrot.slane %v4010, 4
      %v4013 = vor.u32 %v4012, %v4008
      %v4014 = vrot.slane %v4013, 4
      %v4016 = vshll.u32 %v3782, 16
      %v4018 = vrot.slane %v4016, 5
      %v4019 = vsel %vm265, %v4014, %v4018
      %v4021 = vshrl.u32 %v3783, 16
      %v4023 = vrot.slane %v4021, 4
      %v4024 = vshll.u32 %v3783, 16
      %v4026 = vrot.slane %v4024, 5
      %v4027 = vor.u32 %v4023, %v4026
      %v4028 = vrot.slane %v4027, 4
      %v4030 = vshll.u32 %v3784, 16
      %v4032 = vrot.slane %v4030, 5
      %v4033 = vsel %vm265, %v4028, %v4032
      %v4034 = vshrl.u32 %v3784, 16
      %v4036 = vrot.slane %v4034, 4
      %v4037 = vor.u32 %v4036, %v4032
      %v4038 = vrot.slane %v4037, 4
      %v4040 = vshll.u32 %v3785, 16
      %v4042 = vrot.slane %v4040, 5
      %v4043 = vsel %vm265, %v4038, %v4042
      %v4045 = vshrl.u32 %v3786, 16
      %v4047 = vrot.slane %v4045, 4
      %v4048 = vshll.u32 %v3786, 16
      %v4050 = vrot.slane %v4048, 5
      %v4051 = vor.u32 %v4047, %v4050
      %v4052 = vrot.slane %v4051, 4
      %v4054 = vshll.u32 %v3787, 16
      %v4056 = vrot.slane %v4054, 5
      %v4057 = vsel %vm265, %v4052, %v4056
      %v4058 = vshrl.u32 %v3787, 16
      %v4060 = vrot.slane %v4058, 4
      %v4061 = vor.u32 %v4060, %v4056
      %v4062 = vrot.slane %v4061, 4
      %v4064 = vshll.u32 %v3788, 16
      %v4066 = vrot.slane %v4064, 5
      %v4067 = vsel %vm265, %v4062, %v4066
      %v4069 = vshrl.u32 %v3789, 16
      %v4071 = vrot.slane %v4069, 4
      %v4072 = vshll.u32 %v3789, 16
      %v4074 = vrot.slane %v4072, 5
      %v4075 = vor.u32 %v4071, %v4074
      %v4076 = vrot.slane %v4075, 4
      %v4078 = vshll.u32 %v3790, 16
      %v4080 = vrot.slane %v4078, 5
      %v4081 = vsel %vm265, %v4076, %v4080
      %v4082 = vshrl.u32 %v3790, 16
      %v4084 = vrot.slane %v4082, 4
      %v4085 = vor.u32 %v4084, %v4080
      %v4086 = vrot.slane %v4085, 4
      %v4088 = vshll.u32 %v3791, 16
      %v4090 = vrot.slane %v4088, 5
      %v4091 = vsel %vm265, %v4086, %v4090
      %v4093 = vshrl.u32 %v3792, 16
      %v4095 = vrot.slane %v4093, 4
      %v4096 = vshll.u32 %v3792, 16
      %v4098 = vrot.slane %v4096, 5
      %v4099 = vor.u32 %v4095, %v4098
      %v4100 = vrot.slane %v4099, 4
      %v4102 = vshll.u32 %v3793, 16
      %v4104 = vrot.slane %v4102, 5
      %v4105 = vsel %vm265, %v4100, %v4104
      %v4106 = vshrl.u32 %v3793, 16
      %v4108 = vrot.slane %v4106, 4
      %v4109 = vor.u32 %v4108, %v4104
      %v4110 = vrot.slane %v4109, 4
      %v4112 = vshll.u32 %v3794, 16
      %v4114 = vrot.slane %v4112, 5
      %v4115 = vsel %vm265, %v4110, %v4114
      %v4117 = vshrl.u32 %v3795, 16
      %v4119 = vrot.slane %v4117, 4
      %v4120 = vshll.u32 %v3795, 16
      %v4122 = vrot.slane %v4120, 5
      %v4123 = vor.u32 %v4119, %v4122
      %v4124 = vrot.slane %v4123, 4
      %v4126 = vshll.u32 %v3796, 16
      %v4128 = vrot.slane %v4126, 5
      %v4129 = vsel %vm265, %v4124, %v4128
      %v4130 = vshrl.u32 %v3796, 16
      %v4132 = vrot.slane %v4130, 4
      %v4133 = vor.u32 %v4132, %v4128
      %v4134 = vrot.slane %v4133, 4
      %v4136 = vshll.u32 %v3797, 16
      %v4138 = vrot.slane %v4136, 5
      %v4139 = vsel %vm265, %v4134, %v4138
      %v4141 = vshrl.u32 %v3798, 16
      %v4143 = vrot.slane %v4141, 4
      %v4144 = vshll.u32 %v3798, 16
      %v4146 = vrot.slane %v4144, 5
      %v4147 = vor.u32 %v4143, %v4146
      %v4148 = vrot.slane %v4147, 4
      %v4150 = vshll.u32 %v3799, 16
      %v4152 = vrot.slane %v4150, 5
      %v4153 = vsel %vm265, %v4148, %v4152
      %v4154 = vshrl.u32 %v3799, 16
      %v4156 = vrot.slane %v4154, 4
      %v4157 = vor.u32 %v4156, %v4152
      %v4158 = vrot.slane %v4157, 4
      %v4160 = vshll.u32 %v3800, 16
      %v4162 = vrot.slane %v4160, 5
      %v4163 = vsel %vm265, %v4158, %v4162
      %v4165 = vshrl.u32 %v3801, 16
      %v4167 = vrot.slane %v4165, 4
      %v4168 = vshll.u32 %v3801, 16
      %v4170 = vrot.slane %v4168, 5
      %v4171 = vor.u32 %v4167, %v4170
      %v4172 = vrot.slane %v4171, 4
      %v4174 = vshll.u32 %v3802, 16
      %v4176 = vrot.slane %v4174, 5
      %v4177 = vsel %vm265, %v4172, %v4176
      %v4178 = vshrl.u32 %v3802, 16
      %v4180 = vrot.slane %v4178, 4
      %v4181 = vor.u32 %v4180, %v4176
      %v4182 = vrot.slane %v4181, 4
      %v4184 = vshll.u32 %v3803, 16
      %v4186 = vrot.slane %v4184, 5
      %v4187 = vsel %vm265, %v4182, %v4186
      %s4188 = scalar_lea.vmem %s1, 448
      %v4189 = vld [vmem:[%s4188] sm:$0xf]
      %v4190 = vld [vmem:[%s4188 + $0x4] sm:$0xf]
      %v4191 = vld [vmem:[%s4188 + $0x8] sm:$0xf]
      %v4192 = vld [vmem:[%s4188 + $0xc] sm:$0xf]
      %v4193 = vld [vmem:[%s4188 + $0x10] sm:$0xf]
      %v4194 = vld [vmem:[%s4188 + $0x14] sm:$0xf]
      %v4195 = vld [vmem:[%s4188 + $0x18] sm:$0xf]
      %v4196 = vld [vmem:[%s4188 + $0x1c] sm:$0xf]
      %v4197 = vld [vmem:[%s4188 + $0x20] sm:$0xf]
      %v4198 = vld [vmem:[%s4188 + $0x24] sm:$0xf]
      %v4199 = vld [vmem:[%s4188 + $0x28] sm:$0xf]
      %v4200 = vld [vmem:[%s4188 + $0x2c] sm:$0xf]
      %v4201 = vld [vmem:[%s4188 + $0x30] sm:$0xf]
      %v4202 = vld [vmem:[%s4188 + $0x34] sm:$0xf]
      %v4203 = vld [vmem:[%s4188 + $0x38] sm:$0xf]
      %v4204 = vld [vmem:[%s4188 + $0x3c] sm:$0xf]
      %v4205 = vunpack.c.l.b16 %v3817
      %v4206 = vunpack.c.l.b16 %v3827
      %v4207 = vunpack.c.l.b16 %v3841
      %v4208 = vunpack.c.l.b16 %v3851
      %v4209 = vunpack.c.l.b16 %v3865
      %v4210 = vunpack.c.l.b16 %v3875
      %v4211 = vunpack.c.l.b16 %v3889
      %v4212 = vunpack.c.l.b16 %v3899
      %v4213 = vunpack.c.l.b16 %v3913
      %v4214 = vunpack.c.l.b16 %v3923
      %v4215 = vunpack.c.l.b16 %v3937
      %v4216 = vunpack.c.l.b16 %v3947
      %v4217 = vunpack.c.l.b16 %v3961
      %v4218 = vunpack.c.l.b16 %v3971
      %v4219 = vunpack.c.l.b16 %v3985
      %v4220 = vunpack.c.l.b16 %v3995
      %v4221 = vunpack.c.l.b16 %v4009
      %v4222 = vunpack.c.l.b16 %v4019
      %v4223 = vunpack.c.l.b16 %v4033
      %v4224 = vunpack.c.l.b16 %v4043
      %v4225 = vunpack.c.l.b16 %v4057
      %v4226 = vunpack.c.l.b16 %v4067
      %v4227 = vunpack.c.l.b16 %v4081
      %v4228 = vunpack.c.l.b16 %v4091
      %v4229 = vunpack.c.l.b16 %v4105
      %v4230 = vunpack.c.l.b16 %v4115
      %v4231 = vunpack.c.l.b16 %v4129
      %v4232 = vunpack.c.l.b16 %v4139
      %v4233 = vunpack.c.l.b16 %v4153
      %v4234 = vunpack.c.l.b16 %v4163
      %v4235 = vunpack.c.l.b16 %v4177
      %v4236 = vunpack.c.l.b16 %v4187
      %v4237 = vpack.c.b16 %v4206, %v4205
      %v4238 = vpack.c.b16 %v4208, %v4207
      %v4239 = vpack.c.b16 %v4210, %v4209
      %v4240 = vpack.c.b16 %v4212, %v4211
      %v4241 = vpack.c.b16 %v4214, %v4213
      %v4242 = vpack.c.b16 %v4216, %v4215
      %v4243 = vpack.c.b16 %v4218, %v4217
      %v4244 = vpack.c.b16 %v4220, %v4219
      %v4245 = vpack.c.b16 %v4222, %v4221
      %v4246 = vpack.c.b16 %v4224, %v4223
      %v4247 = vpack.c.b16 %v4226, %v4225
      %v4248 = vpack.c.b16 %v4228, %v4227
      %v4249 = vpack.c.b16 %v4230, %v4229
      %v4250 = vpack.c.b16 %v4232, %v4231
      %v4251 = vpack.c.b16 %v4234, %v4233
      %v4252 = vpack.c.b16 %v4236, %v4235
      %v4285 = vunpack.c.l.b16 %v4189
      %v4286 = vunpack.c.l.b16 %v4190
      %v4287 = vunpack.c.l.b16 %v4191
      %v4288 = vunpack.c.l.b16 %v4192
      %v4289 = vunpack.c.l.b16 %v4193
      %v4290 = vunpack.c.l.b16 %v4194
      %v4291 = vunpack.c.l.b16 %v4195
      %v4292 = vunpack.c.l.b16 %v4196
      %v4293 = vunpack.c.l.b16 %v4197
      %v4294 = vunpack.c.l.b16 %v4198
      %v4295 = vunpack.c.l.b16 %v4199
      %v4296 = vunpack.c.l.b16 %v4200
      %v4297 = vunpack.c.l.b16 %v4201
      %v4298 = vunpack.c.l.b16 %v4202
      %v4299 = vunpack.c.l.b16 %v4203
      %v4300 = vunpack.c.l.b16 %v4204
      %v4301 = vpack.c.b16 %v4286, %v4285
      %v4302 = vpack.c.b16 %v4288, %v4287
      %v4303 = vpack.c.b16 %v4290, %v4289
      %v4304 = vpack.c.b16 %v4292, %v4291
      %v4305 = vpack.c.b16 %v4294, %v4293
      %v4306 = vpack.c.b16 %v4296, %v4295
      %v4307 = vpack.c.b16 %v4298, %v4297
      %v4308 = vpack.c.b16 %v4300, %v4299
      %4317 = vmatprep.subr.bf16.mxu0 0
      %4318 = vmatpush1.bf16.msra.mxu0 %v4308
      %4319 = vmatprep.subr.bf16.mxu0 0
      %4320 = vmatpush1.bf16.msra.mxu0 %v4307
      %4321 = vmatprep.subr.bf16.mxu0 0
      %4322 = vmatpush1.bf16.msra.mxu0 %v4306
      %4323 = vmatprep.subr.bf16.mxu0 0
      %4324 = vmatpush1.bf16.msra.mxu0 %v4305
      %4325 = vmatprep.subr.bf16.mxu0 0
      %4326 = vmatpush1.bf16.msra.mxu0 %v4304
      %4327 = vmatprep.subr.bf16.mxu0 0
      %4328 = vmatpush1.bf16.msra.mxu0 %v4303
      %4329 = vmatprep.subr.bf16.mxu0 0
      %4330 = vmatpush1.bf16.msra.mxu0 %v4302
      %4331 = vmatprep.subr.bf16.mxu0 0
      %4332 = vmatpush1.bf16.msra.mxu0 %v4301
      %4333 = vmatprep.subr.bf16.mxu0 0
      %4334 = vmatpush2.bf16.msra.mxu0 0
      %4335 = vmatprep.subr.bf16.mxu0 0
      %4336 = vmatpush2.bf16.msra.mxu0 0
      %4337 = vmatprep.subr.bf16.mxu0 0
      %4338 = vmatpush2.bf16.msra.mxu0 0
      %4339 = vmatprep.subr.bf16.mxu0 0
      %4340 = vmatpush2.bf16.msra.mxu0 0
      %4341 = vmatprep.subr.bf16.mxu0 0
      %4342 = vmatpush2.bf16.msra.mxu0 0
      %4343 = vmatprep.subr.bf16.mxu0 0
      %4344 = vmatpush2.bf16.msra.mxu0 0
      %4345 = vmatprep.subr.bf16.mxu0 0
      %4346 = vmatpush2.bf16.msra.mxu0 0
      %4347 = vmatprep.subr.bf16.mxu0 0
      %4348 = vmatpush2.bf16.msra.mxu0 0
      %4349 = vmatprep.mubr.bf16.mxu0 0
      %4350 = vmatmul.mubr.bf16.gmra.mxu0 %v4237
      %v4351 = vpop.f32.mrf.mxu0
      %v4352 = vadd.f32 0.0, %v4351
      %v4353 = vpop.f32.mrf.mxu0
      %v4354 = vpop.f32.mrf.mxu0
      %v4355 = vadd.f32 0.0, %v4354
      %v4356 = vpop.f32.mrf.mxu0
      %4357 = vmatprep.mubr.bf16.mxu0 0
      %4358 = vmatmul.mubr.bf16.gmra.mxu0 %v4238
      %v4359 = vpop.f32.mrf.mxu0
      %v4360 = vadd.f32 0.0, %v4359
      %v4361 = vpop.f32.mrf.mxu0
      %v4362 = vpop.f32.mrf.mxu0
      %v4363 = vadd.f32 0.0, %v4362
      %v4364 = vpop.f32.mrf.mxu0
      %4365 = vmatprep.mubr.bf16.mxu0 0
      %4366 = vmatmul.mubr.bf16.gmra.mxu0 %v4239
      %v4367 = vpop.f32.mrf.mxu0
      %v4368 = vadd.f32 0.0, %v4367
      %v4369 = vpop.f32.mrf.mxu0
      %v4370 = vpop.f32.mrf.mxu0
      %v4371 = vadd.f32 0.0, %v4370
      %v4372 = vpop.f32.mrf.mxu0
      %4373 = vmatprep.mubr.bf16.mxu0 0
      %4374 = vmatmul.mubr.bf16.gmra.mxu0 %v4240
      %v4375 = vpop.f32.mrf.mxu0
      %v4376 = vadd.f32 0.0, %v4375
      %v4377 = vpop.f32.mrf.mxu0
      %v4378 = vpop.f32.mrf.mxu0
      %v4379 = vadd.f32 0.0, %v4378
      %v4380 = vpop.f32.mrf.mxu0
      %4381 = vmatprep.mubr.bf16.mxu0 0
      %4382 = vmatmul.mubr.bf16.gmra.mxu0 %v4241
      %v4383 = vpop.f32.mrf.mxu0
      %v4384 = vadd.f32 0.0, %v4383
      %v4385 = vpop.f32.mrf.mxu0
      %v4386 = vpop.f32.mrf.mxu0
      %v4387 = vadd.f32 0.0, %v4386
      %v4388 = vpop.f32.mrf.mxu0
      %4389 = vmatprep.mubr.bf16.mxu0 0
      %4390 = vmatmul.mubr.bf16.gmra.mxu0 %v4242
      %v4391 = vpop.f32.mrf.mxu0
      %v4392 = vadd.f32 0.0, %v4391
      %v4393 = vpop.f32.mrf.mxu0
      %v4394 = vpop.f32.mrf.mxu0
      %v4395 = vadd.f32 0.0, %v4394
      %v4396 = vpop.f32.mrf.mxu0
      %4397 = vmatprep.mubr.bf16.mxu0 0
      %4398 = vmatmul.mubr.bf16.gmra.mxu0 %v4243
      %v4399 = vpop.f32.mrf.mxu0
      %v4400 = vadd.f32 0.0, %v4399
      %v4401 = vpop.f32.mrf.mxu0
      %v4402 = vpop.f32.mrf.mxu0
      %v4403 = vadd.f32 0.0, %v4402
      %v4404 = vpop.f32.mrf.mxu0
      %4405 = vmatprep.mubr.bf16.mxu0 0
      %4406 = vmatmul.mubr.bf16.gmra.mxu0 %v4244
      %v4407 = vpop.f32.mrf.mxu0
      %v4408 = vadd.f32 0.0, %v4407
      %v4409 = vpop.f32.mrf.mxu0
      %v4410 = vpop.f32.mrf.mxu0
      %v4411 = vadd.f32 0.0, %v4410
      %v4412 = vpop.f32.mrf.mxu0
      %4413 = vmatprep.mubr.bf16.mxu0 0
      %4414 = vmatmul.mubr.bf16.gmra.mxu0 %v4245
      %v4415 = vpop.f32.mrf.mxu0
      %v4416 = vadd.f32 0.0, %v4415
      %v4417 = vpop.f32.mrf.mxu0
      %v4418 = vpop.f32.mrf.mxu0
      %v4419 = vadd.f32 0.0, %v4418
      %v4420 = vpop.f32.mrf.mxu0
      %4421 = vmatprep.mubr.bf16.mxu0 0
      %4422 = vmatmul.mubr.bf16.gmra.mxu0 %v4246
      %v4423 = vpop.f32.mrf.mxu0
      %v4424 = vadd.f32 0.0, %v4423
      %v4425 = vpop.f32.mrf.mxu0
      %v4426 = vpop.f32.mrf.mxu0
      %v4427 = vadd.f32 0.0, %v4426
      %v4428 = vpop.f32.mrf.mxu0
      %4429 = vmatprep.mubr.bf16.mxu0 0
      %4430 = vmatmul.mubr.bf16.gmra.mxu0 %v4247
      %v4431 = vpop.f32.mrf.mxu0
      %v4432 = vadd.f32 0.0, %v4431
      %v4433 = vpop.f32.mrf.mxu0
      %v4434 = vpop.f32.mrf.mxu0
      %v4435 = vadd.f32 0.0, %v4434
      %v4436 = vpop.f32.mrf.mxu0
      %4437 = vmatprep.mubr.bf16.mxu0 0
      %4438 = vmatmul.mubr.bf16.gmra.mxu0 %v4248
      %v4439 = vpop.f32.mrf.mxu0
      %v4440 = vadd.f32 0.0, %v4439
      %v4441 = vpop.f32.mrf.mxu0
      %v4442 = vpop.f32.mrf.mxu0
      %v4443 = vadd.f32 0.0, %v4442
      %v4444 = vpop.f32.mrf.mxu0
      %4445 = vmatprep.mubr.bf16.mxu0 0
      %4446 = vmatmul.mubr.bf16.gmra.mxu0 %v4249
      %v4447 = vpop.f32.mrf.mxu0
      %v4448 = vadd.f32 0.0, %v4447
      %v4449 = vpop.f32.mrf.mxu0
      %v4450 = vpop.f32.mrf.mxu0
      %v4451 = vadd.f32 0.0, %v4450
      %v4452 = vpop.f32.mrf.mxu0
      %4453 = vmatprep.mubr.bf16.mxu0 0
      %4454 = vmatmul.mubr.bf16.gmra.mxu0 %v4250
      %v4455 = vpop.f32.mrf.mxu0
      %v4456 = vadd.f32 0.0, %v4455
      %v4457 = vpop.f32.mrf.mxu0
      %v4458 = vpop.f32.mrf.mxu0
      %v4459 = vadd.f32 0.0, %v4458
      %v4460 = vpop.f32.mrf.mxu0
      %4461 = vmatprep.mubr.bf16.mxu0 0
      %4462 = vmatmul.mubr.bf16.gmra.mxu0 %v4251
      %v4463 = vpop.f32.mrf.mxu0
      %v4464 = vadd.f32 0.0, %v4463
      %v4465 = vpop.f32.mrf.mxu0
      %v4466 = vpop.f32.mrf.mxu0
      %v4467 = vadd.f32 0.0, %v4466
      %v4468 = vpop.f32.mrf.mxu0
      %4469 = vmatprep.mubr.bf16.mxu0 0
      %4470 = vmatmul.mubr.bf16.gmra.mxu0 %v4252
      %v4471 = vpop.f32.mrf.mxu0
      %v4472 = vadd.f32 0.0, %v4471
      %v4473 = vpop.f32.mrf.mxu0
      %v4474 = vpop.f32.mrf.mxu0
      %v4475 = vadd.f32 0.0, %v4474
      %v4476 = vpop.f32.mrf.mxu0
      %4477 = vdwg.mxu0
      %v4478 = vadd.f32 %v3724, %v4352
      %v4479 = vadd.f32 %v3725, %v4355
      %v4480 = vadd.f32 %v3726, %v4360
      %v4481 = vadd.f32 %v3727, %v4363
      %v4482 = vadd.f32 %v3728, %v4368
      %v4483 = vadd.f32 %v3729, %v4371
      %v4484 = vadd.f32 %v3730, %v4376
      %v4485 = vadd.f32 %v3731, %v4379
      %v4486 = vadd.f32 %v3732, %v4384
      %v4487 = vadd.f32 %v3733, %v4387
      %v4488 = vadd.f32 %v3734, %v4392
      %v4489 = vadd.f32 %v3735, %v4395
      %v4490 = vadd.f32 %v3736, %v4400
      %v4491 = vadd.f32 %v3737, %v4403
      %v4492 = vadd.f32 %v3738, %v4408
      %v4493 = vadd.f32 %v3739, %v4411
      %v4494 = vadd.f32 %v3740, %v4416
      %v4495 = vadd.f32 %v3741, %v4419
      %v4496 = vadd.f32 %v3742, %v4424
      %v4497 = vadd.f32 %v3743, %v4427
      %v4498 = vadd.f32 %v3744, %v4432
      %v4499 = vadd.f32 %v3745, %v4435
      %v4500 = vadd.f32 %v3746, %v4440
      %v4501 = vadd.f32 %v3747, %v4443
      %v4502 = vadd.f32 %v3748, %v4448
      %v4503 = vadd.f32 %v3749, %v4451
      %v4504 = vadd.f32 %v3750, %v4456
      %v4505 = vadd.f32 %v3751, %v4459
      %v4506 = vadd.f32 %v3752, %v4464
      %v4507 = vadd.f32 %v3753, %v4467
      %v4508 = vadd.f32 %v3754, %v4472
      %v4509 = vadd.f32 %v3755, %v4475
      %v4510 = vld [vmem:[%s3369] sm:$0xe]
      %v4511 = vld [vmem:[%s3369 + $0xc] sm:$0xe]
      %v4512 = vld [vmem:[%s3369 + $0x18] sm:$0xe]
      %v4513 = vld [vmem:[%s3369 + $0x24] sm:$0xe]
      %v4514 = vld [vmem:[%s3369 + $0x30] sm:$0xe]
      %v4515 = vld [vmem:[%s3369 + $0x3c] sm:$0xe]
      %v4516 = vld [vmem:[%s3369 + $0x48] sm:$0xe]
      %v4517 = vld [vmem:[%s3369 + $0x54] sm:$0xe]
      %v4518 = vld [vmem:[%s3369 + $0x60] sm:$0xe]
      %v4519 = vld [vmem:[%s3369 + $0x6c] sm:$0xe]
      %v4520 = vld [vmem:[%s3369 + $0x78] sm:$0xe]
      %v4521 = vld [vmem:[%s3369 + $0x84] sm:$0xe]
      %v4522 = vld [vmem:[%s3369 + $0x90] sm:$0xe]
      %v4523 = vld [vmem:[%s3369 + $0x9c] sm:$0xe]
      %v4524 = vld [vmem:[%s3369 + $0xa8] sm:$0xe]
      %v4525 = vld [vmem:[%s3369 + $0xb4] sm:$0xe]
      %v4574 = vrot.slane %v4510, 5
      %v4575 = vrot.slane %v4574, 4
      %v4576 = vrot.slane %v3757, 5
      %v4577 = vsel %vm1295, %v4575, %v4576
      %v4578 = vrot.slane %v4576, 4
      %v4579 = vrot.slane %v3758, 5
      %v4580 = vsel %vm1295, %v4578, %v4579
      %v4581 = vrot.slane %v4511, 5
      %v4582 = vrot.slane %v4581, 4
      %v4583 = vrot.slane %v3760, 5
      %v4584 = vsel %vm1295, %v4582, %v4583
      %v4585 = vrot.slane %v4583, 4
      %v4586 = vrot.slane %v3761, 5
      %v4587 = vsel %vm1295, %v4585, %v4586
      %v4588 = vrot.slane %v4512, 5
      %v4589 = vrot.slane %v4588, 4
      %v4590 = vrot.slane %v3763, 5
      %v4591 = vsel %vm1295, %v4589, %v4590
      %v4592 = vrot.slane %v4590, 4
      %v4593 = vrot.slane %v3764, 5
      %v4594 = vsel %vm1295, %v4592, %v4593
      %v4595 = vrot.slane %v4513, 5
      %v4596 = vrot.slane %v4595, 4
      %v4597 = vrot.slane %v3766, 5
      %v4598 = vsel %vm1295, %v4596, %v4597
      %v4599 = vrot.slane %v4597, 4
      %v4600 = vrot.slane %v3767, 5
      %v4601 = vsel %vm1295, %v4599, %v4600
      %v4602 = vrot.slane %v4514, 5
      %v4603 = vrot.slane %v4602, 4
      %v4604 = vrot.slane %v3769, 5
      %v4605 = vsel %vm1295, %v4603, %v4604
      %v4606 = vrot.slane %v4604, 4
      %v4607 = vrot.slane %v3770, 5
      %v4608 = vsel %vm1295, %v4606, %v4607
      %v4609 = vrot.slane %v4515, 5
      %v4610 = vrot.slane %v4609, 4
      %v4611 = vrot.slane %v3772, 5
      %v4612 = vsel %vm1295, %v4610, %v4611
      %v4613 = vrot.slane %v4611, 4
      %v4614 = vrot.slane %v3773, 5
      %v4615 = vsel %vm1295, %v4613, %v4614
      %v4616 = vrot.slane %v4516, 5
      %v4617 = vrot.slane %v4616, 4
      %v4618 = vrot.slane %v3775, 5
      %v4619 = vsel %vm1295, %v4617, %v4618
      %v4620 = vrot.slane %v4618, 4
      %v4621 = vrot.slane %v3776, 5
      %v4622 = vsel %vm1295, %v4620, %v4621
      %v4623 = vrot.slane %v4517, 5
      %v4624 = vrot.slane %v4623, 4
      %v4625 = vrot.slane %v3778, 5
      %v4626 = vsel %vm1295, %v4624, %v4625
      %v4627 = vrot.slane %v4625, 4
      %v4628 = vrot.slane %v3779, 5
      %v4629 = vsel %vm1295, %v4627, %v4628
      %v4630 = vrot.slane %v4518, 5
      %v4631 = vrot.slane %v4630, 4
      %v4632 = vrot.slane %v3781, 5
      %v4633 = vsel %vm1295, %v4631, %v4632
      %v4634 = vrot.slane %v4632, 4
      %v4635 = vrot.slane %v3782, 5
      %v4636 = vsel %vm1295, %v4634, %v4635
      %v4637 = vrot.slane %v4519, 5
      %v4638 = vrot.slane %v4637, 4
      %v4639 = vrot.slane %v3784, 5
      %v4640 = vsel %vm1295, %v4638, %v4639
      %v4641 = vrot.slane %v4639, 4
      %v4642 = vrot.slane %v3785, 5
      %v4643 = vsel %vm1295, %v4641, %v4642
      %v4644 = vrot.slane %v4520, 5
      %v4645 = vrot.slane %v4644, 4
      %v4646 = vrot.slane %v3787, 5
      %v4647 = vsel %vm1295, %v4645, %v4646
      %v4648 = vrot.slane %v4646, 4
      %v4649 = vrot.slane %v3788, 5
      %v4650 = vsel %vm1295, %v4648, %v4649
      %v4651 = vrot.slane %v4521, 5
      %v4652 = vrot.slane %v4651, 4
      %v4653 = vrot.slane %v3790, 5
      %v4654 = vsel %vm1295, %v4652, %v4653
      %v4655 = vrot.slane %v4653, 4
      %v4656 = vrot.slane %v3791, 5
      %v4657 = vsel %vm1295, %v4655, %v4656
      %v4658 = vrot.slane %v4522, 5
      %v4659 = vrot.slane %v4658, 4
      %v4660 = vrot.slane %v3793, 5
      %v4661 = vsel %vm1295, %v4659, %v4660
      %v4662 = vrot.slane %v4660, 4
      %v4663 = vrot.slane %v3794, 5
      %v4664 = vsel %vm1295, %v4662, %v4663
      %v4665 = vrot.slane %v4523, 5
      %v4666 = vrot.slane %v4665, 4
      %v4667 = vrot.slane %v3796, 5
      %v4668 = vsel %vm1295, %v4666, %v4667
      %v4669 = vrot.slane %v4667, 4
      %v4670 = vrot.slane %v3797, 5
      %v4671 = vsel %vm1295, %v4669, %v4670
      %v4672 = vrot.slane %v4524, 5
      %v4673 = vrot.slane %v4672, 4
      %v4674 = vrot.slane %v3799, 5
      %v4675 = vsel %vm1295, %v4673, %v4674
      %v4676 = vrot.slane %v4674, 4
      %v4677 = vrot.slane %v3800, 5
      %v4678 = vsel %vm1295, %v4676, %v4677
      %v4679 = vrot.slane %v4525, 5
      %v4680 = vrot.slane %v4679, 4
      %v4681 = vrot.slane %v3802, 5
      %v4682 = vsel %vm1295, %v4680, %v4681
      %v4683 = vrot.slane %v4681, 4
      %v4684 = vrot.slane %v3803, 5
      %v4685 = vsel %vm1295, %v4683, %v4684
      %s4686 = scalar_lea.vmem %s1, 512
      %v4687 = vld [vmem:[%s4686] sm:$0xf]
      %v4688 = vld [vmem:[%s4686 + $0x4] sm:$0xf]
      %v4689 = vld [vmem:[%s4686 + $0x8] sm:$0xf]
      %v4690 = vld [vmem:[%s4686 + $0xc] sm:$0xf]
      %v4691 = vld [vmem:[%s4686 + $0x10] sm:$0xf]
      %v4692 = vld [vmem:[%s4686 + $0x14] sm:$0xf]
      %v4693 = vld [vmem:[%s4686 + $0x18] sm:$0xf]
      %v4694 = vld [vmem:[%s4686 + $0x1c] sm:$0xf]
      %v4695 = vld [vmem:[%s4686 + $0x20] sm:$0xf]
      %v4696 = vld [vmem:[%s4686 + $0x24] sm:$0xf]
      %v4697 = vld [vmem:[%s4686 + $0x28] sm:$0xf]
      %v4698 = vld [vmem:[%s4686 + $0x2c] sm:$0xf]
      %v4699 = vld [vmem:[%s4686 + $0x30] sm:$0xf]
      %v4700 = vld [vmem:[%s4686 + $0x34] sm:$0xf]
      %v4701 = vld [vmem:[%s4686 + $0x38] sm:$0xf]
      %v4702 = vld [vmem:[%s4686 + $0x3c] sm:$0xf]
      %v4703 = vunpack.c.l.b16 %v4577
      %v4704 = vunpack.c.l.b16 %v4580
      %v4705 = vunpack.c.l.b16 %v4584
      %v4706 = vunpack.c.l.b16 %v4587
      %v4707 = vunpack.c.l.b16 %v4591
      %v4708 = vunpack.c.l.b16 %v4594
      %v4709 = vunpack.c.l.b16 %v4598
      %v4710 = vunpack.c.l.b16 %v4601
      %v4711 = vunpack.c.l.b16 %v4605
      %v4712 = vunpack.c.l.b16 %v4608
      %v4713 = vunpack.c.l.b16 %v4612
      %v4714 = vunpack.c.l.b16 %v4615
      %v4715 = vunpack.c.l.b16 %v4619
      %v4716 = vunpack.c.l.b16 %v4622
      %v4717 = vunpack.c.l.b16 %v4626
      %v4718 = vunpack.c.l.b16 %v4629
      %v4719 = vunpack.c.l.b16 %v4633
      %v4720 = vunpack.c.l.b16 %v4636
      %v4721 = vunpack.c.l.b16 %v4640
      %v4722 = vunpack.c.l.b16 %v4643
      %v4723 = vunpack.c.l.b16 %v4647
      %v4724 = vunpack.c.l.b16 %v4650
      %v4725 = vunpack.c.l.b16 %v4654
      %v4726 = vunpack.c.l.b16 %v4657
      %v4727 = vunpack.c.l.b16 %v4661
      %v4728 = vunpack.c.l.b16 %v4664
      %v4729 = vunpack.c.l.b16 %v4668
      %v4730 = vunpack.c.l.b16 %v4671
      %v4731 = vunpack.c.l.b16 %v4675
      %v4732 = vunpack.c.l.b16 %v4678
      %v4733 = vunpack.c.l.b16 %v4682
      %v4734 = vunpack.c.l.b16 %v4685
      %v4735 = vpack.c.b16 %v4704, %v4703
      %v4736 = vpack.c.b16 %v4706, %v4705
      %v4737 = vpack.c.b16 %v4708, %v4707
      %v4738 = vpack.c.b16 %v4710, %v4709
      %v4739 = vpack.c.b16 %v4712, %v4711
      %v4740 = vpack.c.b16 %v4714, %v4713
      %v4741 = vpack.c.b16 %v4716, %v4715
      %v4742 = vpack.c.b16 %v4718, %v4717
      %v4743 = vpack.c.b16 %v4720, %v4719
      %v4744 = vpack.c.b16 %v4722, %v4721
      %v4745 = vpack.c.b16 %v4724, %v4723
      %v4746 = vpack.c.b16 %v4726, %v4725
      %v4747 = vpack.c.b16 %v4728, %v4727
      %v4748 = vpack.c.b16 %v4730, %v4729
      %v4749 = vpack.c.b16 %v4732, %v4731
      %v4750 = vpack.c.b16 %v4734, %v4733
      %v4783 = vunpack.c.l.b16 %v4687
      %v4784 = vunpack.c.l.b16 %v4688
      %v4785 = vunpack.c.l.b16 %v4689
      %v4786 = vunpack.c.l.b16 %v4690
      %v4787 = vunpack.c.l.b16 %v4691
      %v4788 = vunpack.c.l.b16 %v4692
      %v4789 = vunpack.c.l.b16 %v4693
      %v4790 = vunpack.c.l.b16 %v4694
      %v4791 = vunpack.c.l.b16 %v4695
      %v4792 = vunpack.c.l.b16 %v4696
      %v4793 = vunpack.c.l.b16 %v4697
      %v4794 = vunpack.c.l.b16 %v4698
      %v4795 = vunpack.c.l.b16 %v4699
      %v4796 = vunpack.c.l.b16 %v4700
      %v4797 = vunpack.c.l.b16 %v4701
      %v4798 = vunpack.c.l.b16 %v4702
      %v4799 = vpack.c.b16 %v4784, %v4783
      %v4800 = vpack.c.b16 %v4786, %v4785
      %v4801 = vpack.c.b16 %v4788, %v4787
      %v4802 = vpack.c.b16 %v4790, %v4789
      %v4803 = vpack.c.b16 %v4792, %v4791
      %v4804 = vpack.c.b16 %v4794, %v4793
      %v4805 = vpack.c.b16 %v4796, %v4795
      %v4806 = vpack.c.b16 %v4798, %v4797
      %4815 = vmatprep.subr.bf16.mxu0 0
      %4816 = vmatpush1.bf16.msra.mxu0 %v4806
      %4817 = vmatprep.subr.bf16.mxu0 0
      %4818 = vmatpush1.bf16.msra.mxu0 %v4805
      %4819 = vmatprep.subr.bf16.mxu0 0
      %4820 = vmatpush1.bf16.msra.mxu0 %v4804
      %4821 = vmatprep.subr.bf16.mxu0 0
      %4822 = vmatpush1.bf16.msra.mxu0 %v4803
      %4823 = vmatprep.subr.bf16.mxu0 0
      %4824 = vmatpush1.bf16.msra.mxu0 %v4802
      %4825 = vmatprep.subr.bf16.mxu0 0
      %4826 = vmatpush1.bf16.msra.mxu0 %v4801
      %4827 = vmatprep.subr.bf16.mxu0 0
      %4828 = vmatpush1.bf16.msra.mxu0 %v4800
      %4829 = vmatprep.subr.bf16.mxu0 0
      %4830 = vmatpush1.bf16.msra.mxu0 %v4799
      %4831 = vmatprep.subr.bf16.mxu0 0
      %4832 = vmatpush2.bf16.msra.mxu0 0
      %4833 = vmatprep.subr.bf16.mxu0 0
      %4834 = vmatpush2.bf16.msra.mxu0 0
      %4835 = vmatprep.subr.bf16.mxu0 0
      %4836 = vmatpush2.bf16.msra.mxu0 0
      %4837 = vmatprep.subr.bf16.mxu0 0
      %4838 = vmatpush2.bf16.msra.mxu0 0
      %4839 = vmatprep.subr.bf16.mxu0 0
      %4840 = vmatpush2.bf16.msra.mxu0 0
      %4841 = vmatprep.subr.bf16.mxu0 0
      %4842 = vmatpush2.bf16.msra.mxu0 0
      %4843 = vmatprep.subr.bf16.mxu0 0
      %4844 = vmatpush2.bf16.msra.mxu0 0
      %4845 = vmatprep.subr.bf16.mxu0 0
      %4846 = vmatpush2.bf16.msra.mxu0 0
      %4847 = vmatprep.mubr.bf16.mxu0 0
      %4848 = vmatmul.mubr.bf16.gmra.mxu0 %v4735
      %v4849 = vpop.f32.mrf.mxu0
      %v4850 = vadd.f32 0.0, %v4849
      %v4851 = vpop.f32.mrf.mxu0
      %v4852 = vpop.f32.mrf.mxu0
      %v4853 = vadd.f32 0.0, %v4852
      %v4854 = vpop.f32.mrf.mxu0
      %4855 = vmatprep.mubr.bf16.mxu0 0
      %4856 = vmatmul.mubr.bf16.gmra.mxu0 %v4736
      %v4857 = vpop.f32.mrf.mxu0
      %v4858 = vadd.f32 0.0, %v4857
      %v4859 = vpop.f32.mrf.mxu0
      %v4860 = vpop.f32.mrf.mxu0
      %v4861 = vadd.f32 0.0, %v4860
      %v4862 = vpop.f32.mrf.mxu0
      %4863 = vmatprep.mubr.bf16.mxu0 0
      %4864 = vmatmul.mubr.bf16.gmra.mxu0 %v4737
      %v4865 = vpop.f32.mrf.mxu0
      %v4866 = vadd.f32 0.0, %v4865
      %v4867 = vpop.f32.mrf.mxu0
      %v4868 = vpop.f32.mrf.mxu0
      %v4869 = vadd.f32 0.0, %v4868
      %v4870 = vpop.f32.mrf.mxu0
      %4871 = vmatprep.mubr.bf16.mxu0 0
      %4872 = vmatmul.mubr.bf16.gmra.mxu0 %v4738
      %v4873 = vpop.f32.mrf.mxu0
      %v4874 = vadd.f32 0.0, %v4873
      %v4875 = vpop.f32.mrf.mxu0
      %v4876 = vpop.f32.mrf.mxu0
      %v4877 = vadd.f32 0.0, %v4876
      %v4878 = vpop.f32.mrf.mxu0
      %4879 = vmatprep.mubr.bf16.mxu0 0
      %4880 = vmatmul.mubr.bf16.gmra.mxu0 %v4739
      %v4881 = vpop.f32.mrf.mxu0
      %v4882 = vadd.f32 0.0, %v4881
      %v4883 = vpop.f32.mrf.mxu0
      %v4884 = vpop.f32.mrf.mxu0
      %v4885 = vadd.f32 0.0, %v4884
      %v4886 = vpop.f32.mrf.mxu0
      %4887 = vmatprep.mubr.bf16.mxu0 0
      %4888 = vmatmul.mubr.bf16.gmra.mxu0 %v4740
      %v4889 = vpop.f32.mrf.mxu0
      %v4890 = vadd.f32 0.0, %v4889
      %v4891 = vpop.f32.mrf.mxu0
      %v4892 = vpop.f32.mrf.mxu0
      %v4893 = vadd.f32 0.0, %v4892
      %v4894 = vpop.f32.mrf.mxu0
      %4895 = vmatprep.mubr.bf16.mxu0 0
      %4896 = vmatmul.mubr.bf16.gmra.mxu0 %v4741
      %v4897 = vpop.f32.mrf.mxu0
      %v4898 = vadd.f32 0.0, %v4897
      %v4899 = vpop.f32.mrf.mxu0
      %v4900 = vpop.f32.mrf.mxu0
      %v4901 = vadd.f32 0.0, %v4900
      %v4902 = vpop.f32.mrf.mxu0
      %4903 = vmatprep.mubr.bf16.mxu0 0
      %4904 = vmatmul.mubr.bf16.gmra.mxu0 %v4742
      %v4905 = vpop.f32.mrf.mxu0
      %v4906 = vadd.f32 0.0, %v4905
      %v4907 = vpop.f32.mrf.mxu0
      %v4908 = vpop.f32.mrf.mxu0
      %v4909 = vadd.f32 0.0, %v4908
      %v4910 = vpop.f32.mrf.mxu0
      %4911 = vmatprep.mubr.bf16.mxu0 0
      %4912 = vmatmul.mubr.bf16.gmra.mxu0 %v4743
      %v4913 = vpop.f32.mrf.mxu0
      %v4914 = vadd.f32 0.0, %v4913
      %v4915 = vpop.f32.mrf.mxu0
      %v4916 = vpop.f32.mrf.mxu0
      %v4917 = vadd.f32 0.0, %v4916
      %v4918 = vpop.f32.mrf.mxu0
      %4919 = vmatprep.mubr.bf16.mxu0 0
      %4920 = vmatmul.mubr.bf16.gmra.mxu0 %v4744
      %v4921 = vpop.f32.mrf.mxu0
      %v4922 = vadd.f32 0.0, %v4921
      %v4923 = vpop.f32.mrf.mxu0
      %v4924 = vpop.f32.mrf.mxu0
      %v4925 = vadd.f32 0.0, %v4924
      %v4926 = vpop.f32.mrf.mxu0
      %4927 = vmatprep.mubr.bf16.mxu0 0
      %4928 = vmatmul.mubr.bf16.gmra.mxu0 %v4745
      %v4929 = vpop.f32.mrf.mxu0
      %v4930 = vadd.f32 0.0, %v4929
      %v4931 = vpop.f32.mrf.mxu0
      %v4932 = vpop.f32.mrf.mxu0
      %v4933 = vadd.f32 0.0, %v4932
      %v4934 = vpop.f32.mrf.mxu0
      %4935 = vmatprep.mubr.bf16.mxu0 0
      %4936 = vmatmul.mubr.bf16.gmra.mxu0 %v4746
      %v4937 = vpop.f32.mrf.mxu0
      %v4938 = vadd.f32 0.0, %v4937
      %v4939 = vpop.f32.mrf.mxu0
      %v4940 = vpop.f32.mrf.mxu0
      %v4941 = vadd.f32 0.0, %v4940
      %v4942 = vpop.f32.mrf.mxu0
      %4943 = vmatprep.mubr.bf16.mxu0 0
      %4944 = vmatmul.mubr.bf16.gmra.mxu0 %v4747
      %v4945 = vpop.f32.mrf.mxu0
      %v4946 = vadd.f32 0.0, %v4945
      %v4947 = vpop.f32.mrf.mxu0
      %v4948 = vpop.f32.mrf.mxu0
      %v4949 = vadd.f32 0.0, %v4948
      %v4950 = vpop.f32.mrf.mxu0
      %4951 = vmatprep.mubr.bf16.mxu0 0
      %4952 = vmatmul.mubr.bf16.gmra.mxu0 %v4748
      %v4953 = vpop.f32.mrf.mxu0
      %v4954 = vadd.f32 0.0, %v4953
      %v4955 = vpop.f32.mrf.mxu0
      %v4956 = vpop.f32.mrf.mxu0
      %v4957 = vadd.f32 0.0, %v4956
      %v4958 = vpop.f32.mrf.mxu0
      %4959 = vmatprep.mubr.bf16.mxu0 0
      %4960 = vmatmul.mubr.bf16.gmra.mxu0 %v4749
      %v4961 = vpop.f32.mrf.mxu0
      %v4962 = vadd.f32 0.0, %v4961
      %v4963 = vpop.f32.mrf.mxu0
      %v4964 = vpop.f32.mrf.mxu0
      %v4965 = vadd.f32 0.0, %v4964
      %v4966 = vpop.f32.mrf.mxu0
      %4967 = vmatprep.mubr.bf16.mxu0 0
      %4968 = vmatmul.mubr.bf16.gmra.mxu0 %v4750
      %v4969 = vpop.f32.mrf.mxu0
      %v4970 = vadd.f32 0.0, %v4969
      %v4971 = vpop.f32.mrf.mxu0
      %v4972 = vpop.f32.mrf.mxu0
      %v4973 = vadd.f32 0.0, %v4972
      %v4974 = vpop.f32.mrf.mxu0
      %4975 = vdwg.mxu0
      %v4976 = vadd.f32 %v4478, %v4850
      %v4977 = vadd.f32 %v4479, %v4853
      %v4978 = vadd.f32 %v4480, %v4858
      %v4979 = vadd.f32 %v4481, %v4861
      %v4980 = vadd.f32 %v4482, %v4866
      %v4981 = vadd.f32 %v4483, %v4869
      %v4982 = vadd.f32 %v4484, %v4874
      %v4983 = vadd.f32 %v4485, %v4877
      %v4984 = vadd.f32 %v4486, %v4882
      %v4985 = vadd.f32 %v4487, %v4885
      %v4986 = vadd.f32 %v4488, %v4890
      %v4987 = vadd.f32 %v4489, %v4893
      %v4988 = vadd.f32 %v4490, %v4898
      %v4989 = vadd.f32 %v4491, %v4901
      %v4990 = vadd.f32 %v4492, %v4906
      %v4991 = vadd.f32 %v4493, %v4909
      %v4992 = vadd.f32 %v4494, %v4914
      %v4993 = vadd.f32 %v4495, %v4917
      %v4994 = vadd.f32 %v4496, %v4922
      %v4995 = vadd.f32 %v4497, %v4925
      %v4996 = vadd.f32 %v4498, %v4930
      %v4997 = vadd.f32 %v4499, %v4933
      %v4998 = vadd.f32 %v4500, %v4938
      %v4999 = vadd.f32 %v4501, %v4941
      %v5000 = vadd.f32 %v4502, %v4946
      %v5001 = vadd.f32 %v4503, %v4949
      %v5002 = vadd.f32 %v4504, %v4954
      %v5003 = vadd.f32 %v4505, %v4957
      %v5004 = vadd.f32 %v4506, %v4962
      %v5005 = vadd.f32 %v4507, %v4965
      %v5006 = vadd.f32 %v4508, %v4970
      %v5007 = vadd.f32 %v4509, %v4973
      %v5008 = vld [vmem:[%s2] sm:$0x1]
      %v5010 = vlaneseq
      %v5011 = vshrl.u32 %v5010, 7
      %v5012 = vsub.s32 0, %v5011
      %v5013 = vrot.slane %v5008, %v5012
      %v5015 = vmul.f32 %v4976, %v5013
      %v5016 = vmul.f32 %v4977, %v5013
      %v5017 = vmul.f32 %v4978, %v5013
      %v5018 = vmul.f32 %v4979, %v5013
      %v5019 = vmul.f32 %v4980, %v5013
      %v5020 = vmul.f32 %v4981, %v5013
      %v5021 = vmul.f32 %v4982, %v5013
      %v5022 = vmul.f32 %v4983, %v5013
      %v5023 = vmul.f32 %v4984, %v5013
      %v5024 = vmul.f32 %v4985, %v5013
      %v5025 = vmul.f32 %v4986, %v5013
      %v5026 = vmul.f32 %v4987, %v5013
      %v5027 = vmul.f32 %v4988, %v5013
      %v5028 = vmul.f32 %v4989, %v5013
      %v5029 = vmul.f32 %v4990, %v5013
      %v5030 = vmul.f32 %v4991, %v5013
      %v5031 = vmul.f32 %v4992, %v5013
      %v5032 = vmul.f32 %v4993, %v5013
      %v5033 = vmul.f32 %v4994, %v5013
      %v5034 = vmul.f32 %v4995, %v5013
      %v5035 = vmul.f32 %v4996, %v5013
      %v5036 = vmul.f32 %v4997, %v5013
      %v5037 = vmul.f32 %v4998, %v5013
      %v5038 = vmul.f32 %v4999, %v5013
      %v5039 = vmul.f32 %v5000, %v5013
      %v5040 = vmul.f32 %v5001, %v5013
      %v5041 = vmul.f32 %v5002, %v5013
      %v5042 = vmul.f32 %v5003, %v5013
      %v5043 = vmul.f32 %v5004, %v5013
      %v5044 = vmul.f32 %v5005, %v5013
      %v5045 = vmul.f32 %v5006, %v5013
      %v5046 = vmul.f32 %v5007, %v5013
      %v5047 = vld [vmem:[%s3] sm:$0x1]
      %v5049 = vlaneseq
      %v5050 = vshrl.u32 %v5049, 7
      %v5051 = vsub.s32 0, %v5050
      %v5052 = vrot.slane %v5047, %v5051
      %v5054 = vadd.f32 %v5015, %v5052
      %v5055 = vadd.f32 %v5016, %v5052
      %v5056 = vadd.f32 %v5017, %v5052
      %v5057 = vadd.f32 %v5018, %v5052
      %v5058 = vadd.f32 %v5019, %v5052
      %v5059 = vadd.f32 %v5020, %v5052
      %v5060 = vadd.f32 %v5021, %v5052
      %v5061 = vadd.f32 %v5022, %v5052
      %v5062 = vadd.f32 %v5023, %v5052
      %v5063 = vadd.f32 %v5024, %v5052
      %v5064 = vadd.f32 %v5025, %v5052
      %v5065 = vadd.f32 %v5026, %v5052
      %v5066 = vadd.f32 %v5027, %v5052
      %v5067 = vadd.f32 %v5028, %v5052
      %v5068 = vadd.f32 %v5029, %v5052
      %v5069 = vadd.f32 %v5030, %v5052
      %v5070 = vadd.f32 %v5031, %v5052
      %v5071 = vadd.f32 %v5032, %v5052
      %v5072 = vadd.f32 %v5033, %v5052
      %v5073 = vadd.f32 %v5034, %v5052
      %v5074 = vadd.f32 %v5035, %v5052
      %v5075 = vadd.f32 %v5036, %v5052
      %v5076 = vadd.f32 %v5037, %v5052
      %v5077 = vadd.f32 %v5038, %v5052
      %v5078 = vadd.f32 %v5039, %v5052
      %v5079 = vadd.f32 %v5040, %v5052
      %v5080 = vadd.f32 %v5041, %v5052
      %v5081 = vadd.f32 %v5042, %v5052
      %v5082 = vadd.f32 %v5043, %v5052
      %v5083 = vadd.f32 %v5044, %v5052
      %v5084 = vadd.f32 %v5045, %v5052
      %v5085 = vadd.f32 %v5046, %v5052
      %v5086 = vmax.f32 %v5054, 0.0
      %v5087 = vmax.f32 %v5055, 0.0
      %v5088 = vmax.f32 %v5056, 0.0
      %v5089 = vmax.f32 %v5057, 0.0
      %v5090 = vmax.f32 %v5058, 0.0
      %v5091 = vmax.f32 %v5059, 0.0
      %v5092 = vmax.f32 %v5060, 0.0
      %v5093 = vmax.f32 %v5061, 0.0
      %v5094 = vmax.f32 %v5062, 0.0
      %v5095 = vmax.f32 %v5063, 0.0
      %v5096 = vmax.f32 %v5064, 0.0
      %v5097 = vmax.f32 %v5065, 0.0
      %v5098 = vmax.f32 %v5066, 0.0
      %v5099 = vmax.f32 %v5067, 0.0
      %v5100 = vmax.f32 %v5068, 0.0
      %v5101 = vmax.f32 %v5069, 0.0
      %v5102 = vmax.f32 %v5070, 0.0
      %v5103 = vmax.f32 %v5071, 0.0
      %v5104 = vmax.f32 %v5072, 0.0
      %v5105 = vmax.f32 %v5073, 0.0
      %v5106 = vmax.f32 %v5074, 0.0
      %v5107 = vmax.f32 %v5075, 0.0
      %v5108 = vmax.f32 %v5076, 0.0
      %v5109 = vmax.f32 %v5077, 0.0
      %v5110 = vmax.f32 %v5078, 0.0
      %v5111 = vmax.f32 %v5079, 0.0
      %v5112 = vmax.f32 %v5080, 0.0
      %v5113 = vmax.f32 %v5081, 0.0
      %v5114 = vmax.f32 %v5082, 0.0
      %v5115 = vmax.f32 %v5083, 0.0
      %v5116 = vmax.f32 %v5084, 0.0
      %v5117 = vmax.f32 %v5085, 0.0
      %v5118 = vpack.c.bf16 %v5087, %v5086
      %v5119 = vpack.c.bf16 %v5089, %v5088
      %v5120 = vpack.c.bf16 %v5091, %v5090
      %v5121 = vpack.c.bf16 %v5093, %v5092
      %v5122 = vpack.c.bf16 %v5095, %v5094
      %v5123 = vpack.c.bf16 %v5097, %v5096
      %v5124 = vpack.c.bf16 %v5099, %v5098
      %v5125 = vpack.c.bf16 %v5101, %v5100
      %v5126 = vpack.c.bf16 %v5103, %v5102
      %v5127 = vpack.c.bf16 %v5105, %v5104
      %v5128 = vpack.c.bf16 %v5107, %v5106
      %v5129 = vpack.c.bf16 %v5109, %v5108
      %v5130 = vpack.c.bf16 %v5111, %v5110
      %v5131 = vpack.c.bf16 %v5113, %v5112
      %v5132 = vpack.c.bf16 %v5115, %v5114
      %v5133 = vpack.c.bf16 %v5117, %v5116
      %v5150 = vunpack.c.l.b16 %v5118
      %v5151 = vunpack.c.h.b16 %v5118
      %v5152 = vunpack.c.l.b16 %v5119
      %v5153 = vunpack.c.h.b16 %v5119
      %v5154 = vunpack.c.l.b16 %v5120
      %v5155 = vunpack.c.h.b16 %v5120
      %v5156 = vunpack.c.l.b16 %v5121
      %v5157 = vunpack.c.h.b16 %v5121
      %v5158 = vunpack.c.l.b16 %v5122
      %v5159 = vunpack.c.h.b16 %v5122
      %v5160 = vunpack.c.l.b16 %v5123
      %v5161 = vunpack.c.h.b16 %v5123
      %v5162 = vunpack.c.l.b16 %v5124
      %v5163 = vunpack.c.h.b16 %v5124
      %v5164 = vunpack.c.l.b16 %v5125
      %v5165 = vunpack.c.h.b16 %v5125
      %v5166 = vunpack.c.l.b16 %v5126
      %v5167 = vunpack.c.h.b16 %v5126
      %v5168 = vunpack.c.l.b16 %v5127
      %v5169 = vunpack.c.h.b16 %v5127
      %v5170 = vunpack.c.l.b16 %v5128
      %v5171 = vunpack.c.h.b16 %v5128
      %v5172 = vunpack.c.l.b16 %v5129
      %v5173 = vunpack.c.h.b16 %v5129
      %v5174 = vunpack.c.l.b16 %v5130
      %v5175 = vunpack.c.h.b16 %v5130
      %v5176 = vunpack.c.l.b16 %v5131
      %v5177 = vunpack.c.h.b16 %v5131
      %v5178 = vunpack.c.l.b16 %v5132
      %v5179 = vunpack.c.h.b16 %v5132
      %v5180 = vunpack.c.l.b16 %v5133
      %v5181 = vunpack.c.h.b16 %v5133
      %v5182 = vpack.c.b16 %v5150, %v5150
      %v5183 = vpack.c.b16 %v5151, %v5151
      %v5184 = vpack.c.b16 %v5152, %v5152
      %v5185 = vpack.c.b16 %v5153, %v5153
      %v5186 = vpack.c.b16 %v5154, %v5154
      %v5187 = vpack.c.b16 %v5155, %v5155
      %v5188 = vpack.c.b16 %v5156, %v5156
      %v5189 = vpack.c.b16 %v5157, %v5157
      %v5190 = vpack.c.b16 %v5158, %v5158
      %v5191 = vpack.c.b16 %v5159, %v5159
      %v5192 = vpack.c.b16 %v5160, %v5160
      %v5193 = vpack.c.b16 %v5161, %v5161
      %v5194 = vpack.c.b16 %v5162, %v5162
      %v5195 = vpack.c.b16 %v5163, %v5163
      %v5196 = vpack.c.b16 %v5164, %v5164
      %v5197 = vpack.c.b16 %v5165, %v5165
      %v5198 = vpack.c.b16 %v5166, %v5166
      %v5199 = vpack.c.b16 %v5167, %v5167
      %v5200 = vpack.c.b16 %v5168, %v5168
      %v5201 = vpack.c.b16 %v5169, %v5169
      %v5202 = vpack.c.b16 %v5170, %v5170
      %v5203 = vpack.c.b16 %v5171, %v5171
      %v5204 = vpack.c.b16 %v5172, %v5172
      %v5205 = vpack.c.b16 %v5173, %v5173
      %v5206 = vpack.c.b16 %v5174, %v5174
      %v5207 = vpack.c.b16 %v5175, %v5175
      %v5208 = vpack.c.b16 %v5176, %v5176
      %v5209 = vpack.c.b16 %v5177, %v5177
      %v5210 = vpack.c.b16 %v5178, %v5178
      %v5211 = vpack.c.b16 %v5179, %v5179
      %v5212 = vpack.c.b16 %v5180, %v5180
      %v5213 = vpack.c.b16 %v5181, %v5181
      %vm5246 = vcmask 519168
      %5247 = vst.msk [vmem:[%s197] sm:$0xf] %vm5246, %v5182
      %5248 = vst.msk [vmem:[%s197 + $0x4] sm:$0xf] %vm5246, %v5183
      %5249 = vst.msk [vmem:[%s197 + $0x8] sm:$0xf] %vm5246, %v5184
      %5250 = vst.msk [vmem:[%s197 + $0xc] sm:$0xf] %vm5246, %v5185
      %5251 = vst.msk [vmem:[%s197 + $0x10] sm:$0xf] %vm5246, %v5186
      %5252 = vst.msk [vmem:[%s197 + $0x14] sm:$0xf] %vm5246, %v5187
      %5253 = vst.msk [vmem:[%s197 + $0x18] sm:$0xf] %vm5246, %v5188
      %5254 = vst.msk [vmem:[%s197 + $0x1c] sm:$0xf] %vm5246, %v5189
      %5255 = vst.msk [vmem:[%s197 + $0x20] sm:$0xf] %vm5246, %v5190
      %5256 = vst.msk [vmem:[%s197 + $0x24] sm:$0xf] %vm5246, %v5191
      %5257 = vst.msk [vmem:[%s197 + $0x28] sm:$0xf] %vm5246, %v5192
      %5258 = vst.msk [vmem:[%s197 + $0x2c] sm:$0xf] %vm5246, %v5193
      %5259 = vst.msk [vmem:[%s197 + $0x30] sm:$0xf] %vm5246, %v5194
      %5260 = vst.msk [vmem:[%s197 + $0x34] sm:$0xf] %vm5246, %v5195
      %5261 = vst.msk [vmem:[%s197 + $0x38] sm:$0xf] %vm5246, %v5196
      %5262 = vst.msk [vmem:[%s197 + $0x3c] sm:$0xf] %vm5246, %v5197
      %5263 = vst.msk [vmem:[%s197 + $0x40] sm:$0xf] %vm5246, %v5198
      %5264 = vst.msk [vmem:[%s197 + $0x44] sm:$0xf] %vm5246, %v5199
      %5265 = vst.msk [vmem:[%s197 + $0x48] sm:$0xf] %vm5246, %v5200
      %5266 = vst.msk [vmem:[%s197 + $0x4c] sm:$0xf] %vm5246, %v5201
      %5267 = vst.msk [vmem:[%s197 + $0x50] sm:$0xf] %vm5246, %v5202
      %5268 = vst.msk [vmem:[%s197 + $0x54] sm:$0xf] %vm5246, %v5203
      %5269 = vst.msk [vmem:[%s197 + $0x58] sm:$0xf] %vm5246, %v5204
      %5270 = vst.msk [vmem:[%s197 + $0x5c] sm:$0xf] %vm5246, %v5205
      %5271 = vst.msk [vmem:[%s197 + $0x60] sm:$0xf] %vm5246, %v5206
      %5272 = vst.msk [vmem:[%s197 + $0x64] sm:$0xf] %vm5246, %v5207
      %5273 = vst.msk [vmem:[%s197 + $0x68] sm:$0xf] %vm5246, %v5208
      %5274 = vst.msk [vmem:[%s197 + $0x6c] sm:$0xf] %vm5246, %v5209
      %5275 = vst.msk [vmem:[%s197 + $0x70] sm:$0xf] %vm5246, %v5210
      %5276 = vst.msk [vmem:[%s197 + $0x74] sm:$0xf] %vm5246, %v5211
      %5277 = vst.msk [vmem:[%s197 + $0x78] sm:$0xf] %vm5246, %v5212
      %5278 = vst.msk [vmem:[%s197 + $0x7c] sm:$0xf] %vm5246, %v5213
      %p5279 = scmp.lt.s32.totalorder %s15, 1
      %s5280 = scalar_select %p5279, %s15, 1
      %s5281 = smul.addr %s5280, 32
      %s5282 = smul.addr %s5281, 4
      %s5283 = scalar_lea.vmem %s4, %s5282
      // Predicated region
      $region37: #{up_forward.4} parent=35 // pred_check
        %p5284 = pneg %p122
      $region38: #{up_forward.4} parent=35 // pred_check_branch
        %5286 = sbr.rel (%p5284) target = $region40
      $region39: #{up_forward.4} parent=35 // pred_region
        _
      $region40: #{up_forward.4} parent=35 // pred_fallthru
        _
    $region36: #{up_forward.4} parent=5 // pred_fallthru
      _
    %p5287 = scmp.le.s32.totalorder 2, %s10
    // Predicated region
    $region41: #{up_forward.4} parent=5 // pred_check
      %p5288 = pneg %p5287
    $region42: #{up_forward.4} parent=5 // pred_check_branch
      %5290 = sbr.rel (%p5288) target = $region44
    $region43: #{up_forward.4} parent=5 // pred_region
      %s5291 = ssub.s32 %s10, 2
      // Predicated region
      $region45: #{up_forward.4} parent=43 // pred_check
        %p5292 = pneg %p128
      $region46: #{up_forward.4} parent=43 // pred_check_branch
        %5294 = sbr.rel (%p5292) target = $region48
      $region47: #{up_forward.4} parent=43 // pred_region
        %p5295 = scmp.lt.s32.totalorder %s16, 1
        %s5296 = scalar_select %p5295, %s16, 1
        %s5297 = smul.addr %s5296, 32
        %s5298 = smul.addr %s5297, 4
        %s5299 = scalar_lea.vmem %s4, %s5298
      $region48: #{up_forward.4} parent=43 // pred_fallthru
        _
    $region44: #{up_forward.4} parent=5 // pred_fallthru
      _
  $region6: #{up_forward.4} parent=0 // loop_footer
    %s14 = sadd.s32 1, %s10
  $region7: #{up_forward.4} parent=0 // loop_footer_branch
    %9 = sbr.rel target = $region3
  $region8: #{up_forward.4} parent=0 // loop_exit
    _

// kernel: up_forward.5
$region0: #{up_forward.5}
  #allocation0 [shape = 'u32[]', space=smem, size = 0x4, offset = 0x4, fixed_abs, tag = 'smem constant byte address 0x4 - core index']
  #allocation1 [shape = 'u32[144,128]{1,0:T(1,128)}', space=vmem, size = 0x12000, scoped, tag = 'internal scratch']
  %s0 = inlined_call_operand.vmem [shape: bf16[2,18,18,64], index: 0, kind: input, shape index: {}]
  %s1 = inlined_call_operand.vmem [shape: bf16[9,64,64], index: 1, kind: input, shape index: {}]
  %s2 = inlined_call_operand.vmem [shape: f32[1,64], index: 2, kind: input, shape index: {}]
  %s3 = inlined_call_operand.vmem [shape: f32[1,64], index: 3, kind: input, shape index: {}]
  %s4 = inlined_call_operand.hbm [shape: f32[2,16,16,64], index: 4, kind: output, shape index: {}]
  %s5 = sld [smem:[#allocation0]]
  $region49: #{up_forward.5} parent=0
    _
  %s7 = ssub.s32 1, %s5
  %s8 = scalar_select 0, %s7, %s5
  $region1: #{up_forward.5} parent=0
    #allocation2 [shape = 'u8[262144]{0}', space=vmem, size = 0x40000, scoped, tag = 'output window, operand 0']
    #allocation3 [shape = 's32[2]{0}', space=sflag, size = 0x8, scoped, tag = 'scoped memory for up_forward.5']
    %9 = vsyncpa [#allocation3], 0
    %s10 = scalar_lea.sflag [#allocation3], 1
    %11 = vsyncpa %s10, 0
    loop: start=0, step=1, limit=4
    $region2: #{up_forward.5} parent=1 // loop_pre_header
      _
    $region3: #{up_forward.5} parent=1 // loop_header
      %s13 = sphi 0, %s17
      %p14 = scmp.ge.s32.totalorder %s13, 4
      %s23 = sphi 0, %s25
      %s26 = sphi 0, %s23
      %s27 = sphi 0, %s26
      %s43 = sphi 0, %s27
      %s47 = sphi 0, %s47
      %s49 = sphi 0, %s47
      %s50 = sphi 0, %s49
      %s64 = sphi 0, %s50
      %s68 = sphi 0, %s68
      %s70 = sphi 0, %s68
      %s71 = sphi 0, %s70
      %s85 = sphi 0, %s71
      %s89 = sphi 0, %s89
      %s91 = sphi 0, %s89
      %s92 = sphi 0, %s91
      %s106 = sphi 0, %s92
      %s112 = sphi 0, %s114
      %s115 = sphi 0, %s112
      %s116 = sphi 0, %s115
      %s132 = sphi 0, %s116
    $region4: #{up_forward.5} parent=1 // loop_header_branch
      %16 = sbr.rel (%p14) target = $region8
    $region5: #{up_forward.5} parent=1 // loop_body
      %s18 = ssub.s32 %s13, 1
      %s19 = ssub.s32 %s13, 2
      %s20 = sadd.s32 %s13, 1
      %s21 = ssub.s32 %s13, %s20
      %p22 = scmp.eq.s32.totalorder %s21, 0
      %s24 = sadd.s32 %s23, 1
      %s25 = scalar_select %p22, %s23, %s24
      %p28 = pneg %p22
      %p29 = scmp.eq.s32.totalorder %s13, 1
      %p30 = por %p28, %p29
      %p31 = scmp.ne.s32.totalorder %s23, %s26
      %p32 = scmp.eq.s32.totalorder %s13, 0
      %p33 = por %p31, %p32
      %p34 = scmp.ne.s32.totalorder %s23, %s26
      %p35 = scmp.eq.s32.totalorder %s18, 1
      %p36 = por %p34, %p35
      %p37 = scmp.ne.s32.totalorder %s26, %s27
      %p38 = scmp.eq.s32.totalorder %s18, 0
      %p39 = por %p37, %p38
      %p40 = scmp.ne.s32.totalorder %s26, %s27
      %p41 = scmp.eq.s32.totalorder %s19, 1
      %p42 = por %p40, %p41
      %p44 = scmp.ne.s32.totalorder %s27, %s43
      %p45 = scmp.eq.s32.totalorder %s19, 0
      %p46 = por %p44, %p45
      %s48 = sadd.s32 %s47, 1
      %p51 = scmp.eq.s32.totalorder %s13, 1
      %p52 = scmp.ne.s32.totalorder %s47, %s49
      %p53 = scmp.eq.s32.totalorder %s13, 0
      %p54 = por %p52, %p53
      %p55 = scmp.ne.s32.totalorder %s47, %s49
      %p56 = scmp.eq.s32.totalorder %s18, 1
      %p57 = por %p55, %p56
      %p58 = scmp.ne.s32.totalorder %s49, %s50
      %p59 = scmp.eq.s32.totalorder %s18, 0
      %p60 = por %p58, %p59
      %p61 = scmp.ne.s32.totalorder %s49, %s50
      %p62 = scmp.eq.s32.totalorder %s19, 1
      %p63 = por %p61, %p62
      %p65 = scmp.ne.s32.totalorder %s50, %s64
      %p66 = scmp.eq.s32.totalorder %s19, 0
      %p67 = por %p65, %p66
      %s69 = sadd.s32 %s68, 1
      %p72 = scmp.eq.s32.totalorder %s13, 1
      %p73 = scmp.ne.s32.totalorder %s68, %s70
      %p74 = scmp.eq.s32.totalorder %s13, 0
      %p75 = por %p73, %p74
      %p76 = scmp.ne.s32.totalorder %s68, %s70
      %p77 = scmp.eq.s32.totalorder %s18, 1
      %p78 = por %p76, %p77
      %p79 = scmp.ne.s32.totalorder %s70, %s71
      %p80 = scmp.eq.s32.totalorder %s18, 0
      %p81 = por %p79, %p80
      %p82 = scmp.ne.s32.totalorder %s70, %s71
      %p83 = scmp.eq.s32.totalorder %s19, 1
      %p84 = por %p82, %p83
      %p86 = scmp.ne.s32.totalorder %s71, %s85
      %p87 = scmp.eq.s32.totalorder %s19, 0
      %p88 = por %p86, %p87
      %s90 = sadd.s32 %s89, 1
      %p93 = scmp.eq.s32.totalorder %s13, 1
      %p94 = scmp.ne.s32.totalorder %s89, %s91
      %p95 = scmp.eq.s32.totalorder %s13, 0
      %p96 = por %p94, %p95
      %p97 = scmp.ne.s32.totalorder %s89, %s91
      %p98 = scmp.eq.s32.totalorder %s18, 1
      %p99 = por %p97, %p98
      %p100 = scmp.ne.s32.totalorder %s91, %s92
      %p101 = scmp.eq.s32.totalorder %s18, 0
      %p102 = por %p100, %p101
      %p103 = scmp.ne.s32.totalorder %s91, %s92
      %p104 = scmp.eq.s32.totalorder %s19, 1
      %p105 = por %p103, %p104
      %p107 = scmp.ne.s32.totalorder %s92, %s106
      %p108 = scmp.eq.s32.totalorder %s19, 0
      %p109 = por %p107, %p108
      %s110 = ssub.s32 %s13, %s20
      %p111 = scmp.eq.s32.totalorder %s110, 0
      %s113 = sadd.s32 %s112, 1
      %s114 = scalar_select %p111, %s112, %s113
      %p117 = pneg %p111
      %p118 = scmp.eq.s32.totalorder %s13, 1
      %p119 = por %p117, %p118
      %p120 = scmp.ne.s32.totalorder %s112, %s115
      %p121 = scmp.eq.s32.totalorder %s13, 0
      %p122 = por %p120, %p121
      %p123 = scmp.ne.s32.totalorder %s112, %s115
      %p124 = scmp.eq.s32.totalorder %s18, 1
      %p125 = por %p123, %p124
      %p126 = scmp.ne.s32.totalorder %s115, %s116
      %p127 = scmp.eq.s32.totalorder %s18, 0
      %p128 = por %p126, %p127
      %p129 = scmp.ne.s32.totalorder %s115, %s116
      %p130 = scmp.eq.s32.totalorder %s19, 1
      %p131 = por %p129, %p130
      %p133 = scmp.ne.s32.totalorder %s116, %s132
      %p134 = scmp.eq.s32.totalorder %s19, 0
      %p135 = por %p133, %p134
      %p136 = scmp.le.s32.totalorder 1, %s13
      %p137 = scmp.lt.s32.totalorder %s13, 3
      %p138 = pnand %p136, %p137
      %p139 = pneg %p138
      // Predicated region
      $region9: #{up_forward.5} parent=5 // pred_check
        _
      $region10: #{up_forward.5} parent=5 // pred_check_branch
        %141 = sbr.rel (%p138) target = $region12
      $region11: #{up_forward.5} parent=5 // pred_region
        %s142 = ssub.s32 %s13, 1
        // Predicated region
        $region13: #{up_forward.5} parent=11 // pred_check
          %p143 = pneg %p60
        $region14: #{up_forward.5} parent=11 // pred_check_branch
          %145 = sbr.rel (%p143) target = $region16
        $region15: #{up_forward.5} parent=11 // pred_region
          _
        $region16: #{up_forward.5} parent=11 // pred_fallthru
          _
        // Predicated region
        $region17: #{up_forward.5} parent=11 // pred_check
          %p146 = pneg %p81
        $region18: #{up_forward.5} parent=11 // pred_check_branch
          %148 = sbr.rel (%p146) target = $region20
        $region19: #{up_forward.5} parent=11 // pred_region
          _
        $region20: #{up_forward.5} parent=11 // pred_fallthru
          _
        // Predicated region
        $region21: #{up_forward.5} parent=11 // pred_check
          %p149 = pneg %p102
        $region22: #{up_forward.5} parent=11 // pred_check_branch
          %151 = sbr.rel (%p149) target = $region24
        $region23: #{up_forward.5} parent=11 // pred_region
          _
        $region24: #{up_forward.5} parent=11 // pred_fallthru
          _
      $region12: #{up_forward.5} parent=5 // pred_fallthru
        _
      %p152 = scmp.lt.s32.totalorder %s13, 2
      // Predicated region
      $region25: #{up_forward.5} parent=5 // pred_check
        %p153 = pneg %p152
      $region26: #{up_forward.5} parent=5 // pred_check_branch
        %155 = sbr.rel (%p153) target = $region28
      $region27: #{up_forward.5} parent=5 // pred_region
        // Predicated region
        $region29: #{up_forward.5} parent=27 // pred_check
          %p156 = pneg %p33
        $region30: #{up_forward.5} parent=27 // pred_check_branch
          %158 = sbr.rel (%p156) target = $region32
        $region31: #{up_forward.5} parent=27 // pred_region
          %p159 = scmp.lt.s32.totalorder %s13, 1
          %s160 = scalar_select %p159, %s13, 1
          %s161 = smul.addr %s160, 54
          %s162 = smul.addr %s161, 4
          %s163 = scalar_lea.vmem %s0, %s162
        $region32: #{up_forward.5} parent=27 // pred_fallthru
          _
      $region28: #{up_forward.5} parent=5 // pred_fallthru
        _
      %p164 = scmp.le.s32.totalorder 1, %s13
      %p165 = scmp.lt.s32.totalorder %s13, 3
      %p166 = pnand %p164, %p165
      %p167 = pneg %p166
      // Predicated region
      $region33: #{up_forward.5} parent=5 // pred_check
        _
      $region34: #{up_forward.5} parent=5 // pred_check_branch
        %169 = sbr.rel (%p166) target = $region36
      $region35: #{up_forward.5} parent=5 // pred_region
        %s170 = ssub.s32 %s13, 1
        %p171 = scmp.lt.s32.totalorder %s18, 1
        %s172 = scalar_select %p171, %s18, 1
        %s173 = smul.addr %s172, 54
        %s174 = smul.addr %s173, 4
        %s175 = scalar_lea.vmem %s0, %s174
        %p176 = pneg %p39
        %p177 = pneg %p36
        %p178 = pneg %p60
        %p179 = pneg %p57
        %p180 = pneg %p81
        %p181 = pneg %p78
        %p182 = pneg %p102
        %p183 = pneg %p99
        %p184 = pneg %p128
        %p185 = pneg %p125
        %s186 = sand.u32 %s115, 1
        %s187 = scalar_lea.sflag [#allocation3], %s186
        %s188 = sand.u32 %s115, 1
        %s189 = smul.addr %s188, 256
        %s190 = scalar_lea.vmem [#allocation2], %s189
        %p191 = scmp.lt.s32.totalorder %s18, 1
        %s192 = scalar_select %p191, %s18, 1
        %s193 = smul.addr %s192, 54
        %s194 = smul.addr %s193, 4
        %s195 = scalar_lea.vmem %s0, %s194
        %v197 = vld [vmem:[%s195] sm:$0xf]
        %v198 = vld [vmem:[%s195 + $0x4] sm:$0xf]
        %v199 = vld [vmem:[%s195 + $0xc] sm:$0xf]
        %v200 = vld [vmem:[%s195 + $0x10] sm:$0xf]
        %v201 = vld [vmem:[%s195 + $0x18] sm:$0xf]
        %v202 = vld [vmem:[%s195 + $0x1c] sm:$0xf]
        %v203 = vld [vmem:[%s195 + $0x24] sm:$0xf]
        %v204 = vld [vmem:[%s195 + $0x28] sm:$0xf]
        %v205 = vld [vmem:[%s195 + $0x30] sm:$0xf]
        %v206 = vld [vmem:[%s195 + $0x34] sm:$0xf]
        %v207 = vld [vmem:[%s195 + $0x3c] sm:$0xf]
        %v208 = vld [vmem:[%s195 + $0x40] sm:$0xf]
        %v209 = vld [vmem:[%s195 + $0x48] sm:$0xf]
        %v210 = vld [vmem:[%s195 + $0x4c] sm:$0xf]
        %v211 = vld [vmem:[%s195 + $0x54] sm:$0xf]
        %v212 = vld [vmem:[%s195 + $0x58] sm:$0xf]
        %v213 = vld [vmem:[%s195 + $0x60] sm:$0xf]
        %v214 = vld [vmem:[%s195 + $0x64] sm:$0xf]
        %v215 = vld [vmem:[%s195 + $0x6c] sm:$0xf]
        %v216 = vld [vmem:[%s195 + $0x70] sm:$0xf]
        %v217 = vld [vmem:[%s195 + $0x78] sm:$0xf]
        %v218 = vld [vmem:[%s195 + $0x7c] sm:$0xf]
        %v219 = vld [vmem:[%s195 + $0x84] sm:$0xf]
        %v220 = vld [vmem:[%s195 + $0x88] sm:$0xf]
        %v221 = vld [vmem:[%s195 + $0x90] sm:$0xf]
        %v222 = vld [vmem:[%s195 + $0x94] sm:$0xf]
        %v223 = vld [vmem:[%s195 + $0x9c] sm:$0xf]
        %v224 = vld [vmem:[%s195 + $0xa0] sm:$0xf]
        %v225 = vld [vmem:[%s195 + $0xa8] sm:$0xf]
        %v226 = vld [vmem:[%s195 + $0xac] sm:$0xf]
        %v227 = vld [vmem:[%s195 + $0xb4] sm:$0xf]
        %v228 = vld [vmem:[%s195 + $0xb8] sm:$0xf]
        %v229 = vld [vmem:[%s1] sm:$0xf]
        %v230 = vld [vmem:[%s1 + $0x4] sm:$0xf]
        %v231 = vld [vmem:[%s1 + $0x8] sm:$0xf]
        %v232 = vld [vmem:[%s1 + $0xc] sm:$0xf]
        %v233 = vld [vmem:[%s1 + $0x10] sm:$0xf]
        %v234 = vld [vmem:[%s1 + $0x14] sm:$0xf]
        %v235 = vld [vmem:[%s1 + $0x18] sm:$0xf]
        %v236 = vld [vmem:[%s1 + $0x1c] sm:$0xf]
        %v237 = vld [vmem:[%s195 + $0x8] sm:$0x1]
        %v238 = vld [vmem:[%s195 + $0x14] sm:$0x1]
        %v239 = vld [vmem:[%s195 + $0x20] sm:$0x1]
        %v240 = vld [vmem:[%s195 + $0x2c] sm:$0x1]
        %v241 = vld [vmem:[%s195 + $0x38] sm:$0x1]
        %v242 = vld [vmem:[%s195 + $0x44] sm:$0x1]
        %v243 = vld [vmem:[%s195 + $0x50] sm:$0x1]
        %v244 = vld [vmem:[%s195 + $0x5c] sm:$0x1]
        %v245 = vld [vmem:[%s195 + $0x68] sm:$0x1]
        %v246 = vld [vmem:[%s195 + $0x74] sm:$0x1]
        %v247 = vld [vmem:[%s195 + $0x80] sm:$0x1]
        %v248 = vld [vmem:[%s195 + $0x8c] sm:$0x1]
        %v249 = vld [vmem:[%s195 + $0x98] sm:$0x1]
        %v250 = vld [vmem:[%s195 + $0xa4] sm:$0x1]
        %v251 = vld [vmem:[%s195 + $0xb0] sm:$0x1]
        %v252 = vld [vmem:[%s195 + $0xbc] sm:$0x1]
        %vm253 = vsmask.f32 3328
        %vm254 = vsmask.f32 7440
        %vm255 = vmor %vm253, %vm254
        %v257 = vshrl.u32 %v197, 16
        %v259 = vrot.slane %v257, 4
        %v260 = vshll.u32 %v197, 16
        %v262 = vrot.slane %v260, 5
        %v263 = vor.u32 %v259, %v262
        %v264 = vrot.slane %v263, 4
        %v266 = vshll.u32 %v198, 16
        %v268 = vrot.slane %v266, 5
        %v269 = vsel %vm255, %v264, %v268
        %v270 = vshrl.u32 %v198, 16
        %v272 = vrot.slane %v270, 4
        %v273 = vor.u32 %v272, %v268
        %v274 = vrot.slane %v273, 4
        %v276 = vshll.u32 %v237, 16
        %v278 = vrot.slane %v276, 5
        %v279 = vsel %vm255, %v274, %v278
        %v281 = vshrl.u32 %v199, 16
        %v283 = vrot.slane %v281, 4
        %v284 = vshll.u32 %v199, 16
        %v286 = vrot.slane %v284, 5
        %v287 = vor.u32 %v283, %v286
        %v288 = vrot.slane %v287, 4
        %v290 = vshll.u32 %v200, 16
        %v292 = vrot.slane %v290, 5
        %v293 = vsel %vm255, %v288, %v292
        %v294 = vshrl.u32 %v200, 16
        %v296 = vrot.slane %v294, 4
        %v297 = vor.u32 %v296, %v292
        %v298 = vrot.slane %v297, 4
        %v300 = vshll.u32 %v238, 16
        %v302 = vrot.slane %v300, 5
        %v303 = vsel %vm255, %v298, %v302
        %v305 = vshrl.u32 %v201, 16
        %v307 = vrot.slane %v305, 4
        %v308 = vshll.u32 %v201, 16
        %v310 = vrot.slane %v308, 5
        %v311 = vor.u32 %v307, %v310
        %v312 = vrot.slane %v311, 4
        %v314 = vshll.u32 %v202, 16
        %v316 = vrot.slane %v314, 5
        %v317 = vsel %vm255, %v312, %v316
        %v318 = vshrl.u32 %v202, 16
        %v320 = vrot.slane %v318, 4
        %v321 = vor.u32 %v320, %v316
        %v322 = vrot.slane %v321, 4
        %v324 = vshll.u32 %v239, 16
        %v326 = vrot.slane %v324, 5
        %v327 = vsel %vm255, %v322, %v326
        %v329 = vshrl.u32 %v203, 16
        %v331 = vrot.slane %v329, 4
        %v332 = vshll.u32 %v203, 16
        %v334 = vrot.slane %v332, 5
        %v335 = vor.u32 %v331, %v334
        %v336 = vrot.slane %v335, 4
        %v338 = vshll.u32 %v204, 16
        %v340 = vrot.slane %v338, 5
        %v341 = vsel %vm255, %v336, %v340
        %v342 = vshrl.u32 %v204, 16
        %v344 = vrot.slane %v342, 4
        %v345 = vor.u32 %v344, %v340
        %v346 = vrot.slane %v345, 4
        %v348 = vshll.u32 %v240, 16
        %v350 = vrot.slane %v348, 5
        %v351 = vsel %vm255, %v346, %v350
        %v353 = vshrl.u32 %v205, 16
        %v355 = vrot.slane %v353, 4
        %v356 = vshll.u32 %v205, 16
        %v358 = vrot.slane %v356, 5
        %v359 = vor.u32 %v355, %v358
        %v360 = vrot.slane %v359, 4
        %v362 = vshll.u32 %v206, 16
        %v364 = vrot.slane %v362, 5
        %v365 = vsel %vm255, %v360, %v364
        %v366 = vshrl.u32 %v206, 16
        %v368 = vrot.slane %v366, 4
        %v369 = vor.u32 %v368, %v364
        %v370 = vrot.slane %v369, 4
        %v372 = vshll.u32 %v241, 16
        %v374 = vrot.slane %v372, 5
        %v375 = vsel %vm255, %v370, %v374
        %v377 = vshrl.u32 %v207, 16
        %v379 = vrot.slane %v377, 4
        %v380 = vshll.u32 %v207, 16
        %v382 = vrot.slane %v380, 5
        %v383 = vor.u32 %v379, %v382
        %v384 = vrot.slane %v383, 4
        %v386 = vshll.u32 %v208, 16
        %v388 = vrot.slane %v386, 5
        %v389 = vsel %vm255, %v384, %v388
        %v390 = vshrl.u32 %v208, 16
        %v392 = vrot.slane %v390, 4
        %v393 = vor.u32 %v392, %v388
        %v394 = vrot.slane %v393, 4
        %v396 = vshll.u32 %v242, 16
        %v398 = vrot.slane %v396, 5
        %v399 = vsel %vm255, %v394, %v398
        %v401 = vshrl.u32 %v209, 16
        %v403 = vrot.slane %v401, 4
        %v404 = vshll.u32 %v209, 16
        %v406 = vrot.slane %v404, 5
        %v407 = vor.u32 %v403, %v406
        %v408 = vrot.slane %v407, 4
        %v410 = vshll.u32 %v210, 16
        %v412 = vrot.slane %v410, 5
        %v413 = vsel %vm255, %v408, %v412
        %v414 = vshrl.u32 %v210, 16
        %v416 = vrot.slane %v414, 4
        %v417 = vor.u32 %v416, %v412
        %v418 = vrot.slane %v417, 4
        %v420 = vshll.u32 %v243, 16
        %v422 = vrot.slane %v420, 5
        %v423 = vsel %vm255, %v418, %v422
        %v425 = vshrl.u32 %v211, 16
        %v427 = vrot.slane %v425, 4
        %v428 = vshll.u32 %v211, 16
        %v430 = vrot.slane %v428, 5
        %v431 = vor.u32 %v427, %v430
        %v432 = vrot.slane %v431, 4
        %v434 = vshll.u32 %v212, 16
        %v436 = vrot.slane %v434, 5
        %v437 = vsel %vm255, %v432, %v436
        %v438 = vshrl.u32 %v212, 16
        %v440 = vrot.slane %v438, 4
        %v441 = vor.u32 %v440, %v436
        %v442 = vrot.slane %v441, 4
        %v444 = vshll.u32 %v244, 16
        %v446 = vrot.slane %v444, 5
        %v447 = vsel %vm255, %v442, %v446
        %v449 = vshrl.u32 %v213, 16
        %v451 = vrot.slane %v449, 4
        %v452 = vshll.u32 %v213, 16
        %v454 = vrot.slane %v452, 5
        %v455 = vor.u32 %v451, %v454
        %v456 = vrot.slane %v455, 4
        %v458 = vshll.u32 %v214, 16
        %v460 = vrot.slane %v458, 5
        %v461 = vsel %vm255, %v456, %v460
        %v462 = vshrl.u32 %v214, 16
        %v464 = vrot.slane %v462, 4
        %v465 = vor.u32 %v464, %v460
        %v466 = vrot.slane %v465, 4
        %v468 = vshll.u32 %v245, 16
        %v470 = vrot.slane %v468, 5
        %v471 = vsel %vm255, %v466, %v470
        %v473 = vshrl.u32 %v215, 16
        %v475 = vrot.slane %v473, 4
        %v476 = vshll.u32 %v215, 16
        %v478 = vrot.slane %v476, 5
        %v479 = vor.u32 %v475, %v478
        %v480 = vrot.slane %v479, 4
        %v482 = vshll.u32 %v216, 16
        %v484 = vrot.slane %v482, 5
        %v485 = vsel %vm255, %v480, %v484
        %v486 = vshrl.u32 %v216, 16
        %v488 = vrot.slane %v486, 4
        %v489 = vor.u32 %v488, %v484
        %v490 = vrot.slane %v489, 4
        %v492 = vshll.u32 %v246, 16
        %v494 = vrot.slane %v492, 5
        %v495 = vsel %vm255, %v490, %v494
        %v497 = vshrl.u32 %v217, 16
        %v499 = vrot.slane %v497, 4
        %v500 = vshll.u32 %v217, 16
        %v502 = vrot.slane %v500, 5
        %v503 = vor.u32 %v499, %v502
        %v504 = vrot.slane %v503, 4
        %v506 = vshll.u32 %v218, 16
        %v508 = vrot.slane %v506, 5
        %v509 = vsel %vm255, %v504, %v508
        %v510 = vshrl.u32 %v218, 16
        %v512 = vrot.slane %v510, 4
        %v513 = vor.u32 %v512, %v508
        %v514 = vrot.slane %v513, 4
        %v516 = vshll.u32 %v247, 16
        %v518 = vrot.slane %v516, 5
        %v519 = vsel %vm255, %v514, %v518
        %v521 = vshrl.u32 %v219, 16
        %v523 = vrot.slane %v521, 4
        %v524 = vshll.u32 %v219, 16
        %v526 = vrot.slane %v524, 5
        %v527 = vor.u32 %v523, %v526
        %v528 = vrot.slane %v527, 4
        %v530 = vshll.u32 %v220, 16
        %v532 = vrot.slane %v530, 5
        %v533 = vsel %vm255, %v528, %v532
        %v534 = vshrl.u32 %v220, 16
        %v536 = vrot.slane %v534, 4
        %v537 = vor.u32 %v536, %v532
        %v538 = vrot.slane %v537, 4
        %v540 = vshll.u32 %v248, 16
        %v542 = vrot.slane %v540, 5
        %v543 = vsel %vm255, %v538, %v542
        %v545 = vshrl.u32 %v221, 16
        %v547 = vrot.slane %v545, 4
        %v548 = vshll.u32 %v221, 16
        %v550 = vrot.slane %v548, 5
        %v551 = vor.u32 %v547, %v550
        %v552 = vrot.slane %v551, 4
        %v554 = vshll.u32 %v222, 16
        %v556 = vrot.slane %v554, 5
        %v557 = vsel %vm255, %v552, %v556
        %v558 = vshrl.u32 %v222, 16
        %v560 = vrot.slane %v558, 4
        %v561 = vor.u32 %v560, %v556
        %v562 = vrot.slane %v561, 4
        %v564 = vshll.u32 %v249, 16
        %v566 = vrot.slane %v564, 5
        %v567 = vsel %vm255, %v562, %v566
        %v569 = vshrl.u32 %v223, 16
        %v571 = vrot.slane %v569, 4
        %v572 = vshll.u32 %v223, 16
        %v574 = vrot.slane %v572, 5
        %v575 = vor.u32 %v571, %v574
        %v576 = vrot.slane %v575, 4
        %v578 = vshll.u32 %v224, 16
        %v580 = vrot.slane %v578, 5
        %v581 = vsel %vm255, %v576, %v580
        %v582 = vshrl.u32 %v224, 16
        %v584 = vrot.slane %v582, 4
        %v585 = vor.u32 %v584, %v580
        %v586 = vrot.slane %v585, 4
        %v588 = vshll.u32 %v250, 16
        %v590 = vrot.slane %v588, 5
        %v591 = vsel %vm255, %v586, %v590
        %v593 = vshrl.u32 %v225, 16
        %v595 = vrot.slane %v593, 4
        %v596 = vshll.u32 %v225, 16
        %v598 = vrot.slane %v596, 5
        %v599 = vor.u32 %v595, %v598
        %v600 = vrot.slane %v599, 4
        %v602 = vshll.u32 %v226, 16
        %v604 = vrot.slane %v602, 5
        %v605 = vsel %vm255, %v600, %v604
        %v606 = vshrl.u32 %v226, 16
        %v608 = vrot.slane %v606, 4
        %v609 = vor.u32 %v608, %v604
        %v610 = vrot.slane %v609, 4
        %v612 = vshll.u32 %v251, 16
        %v614 = vrot.slane %v612, 5
        %v615 = vsel %vm255, %v610, %v614
        %v617 = vshrl.u32 %v227, 16
        %v619 = vrot.slane %v617, 4
        %v620 = vshll.u32 %v227, 16
        %v622 = vrot.slane %v620, 5
        %v623 = vor.u32 %v619, %v622
        %v624 = vrot.slane %v623, 4
        %v626 = vshll.u32 %v228, 16
        %v628 = vrot.slane %v626, 5
        %v629 = vsel %vm255, %v624, %v628
        %v630 = vshrl.u32 %v228, 16
        %v632 = vrot.slane %v630, 4
        %v633 = vor.u32 %v632, %v628
        %v634 = vrot.slane %v633, 4
        %v636 = vshll.u32 %v252, 16
        %v638 = vrot.slane %v636, 5
        %v639 = vsel %vm255, %v634, %v638
        %s640 = scalar_lea.vmem %s1, 32
        %v641 = vld [vmem:[%s640] sm:$0xf]
        %v642 = vld [vmem:[%s640 + $0x4] sm:$0xf]
        %v643 = vld [vmem:[%s640 + $0x8] sm:$0xf]
        %v644 = vld [vmem:[%s640 + $0xc] sm:$0xf]
        %v645 = vld [vmem:[%s640 + $0x10] sm:$0xf]
        %v646 = vld [vmem:[%s640 + $0x14] sm:$0xf]
        %v647 = vld [vmem:[%s640 + $0x18] sm:$0xf]
        %v648 = vld [vmem:[%s640 + $0x1c] sm:$0xf]
        %v649 = vunpack.c.l.b16 %v269
        %v650 = vunpack.c.l.b16 %v279
        %v651 = vunpack.c.l.b16 %v293
        %v652 = vunpack.c.l.b16 %v303
        %v653 = vunpack.c.l.b16 %v317
        %v654 = vunpack.c.l.b16 %v327
        %v655 = vunpack.c.l.b16 %v341
        %v656 = vunpack.c.l.b16 %v351
        %v657 = vunpack.c.l.b16 %v365
        %v658 = vunpack.c.l.b16 %v375
        %v659 = vunpack.c.l.b16 %v389
        %v660 = vunpack.c.l.b16 %v399
        %v661 = vunpack.c.l.b16 %v413
        %v662 = vunpack.c.l.b16 %v423
        %v663 = vunpack.c.l.b16 %v437
        %v664 = vunpack.c.l.b16 %v447
        %v665 = vunpack.c.l.b16 %v461
        %v666 = vunpack.c.l.b16 %v471
        %v667 = vunpack.c.l.b16 %v485
        %v668 = vunpack.c.l.b16 %v495
        %v669 = vunpack.c.l.b16 %v509
        %v670 = vunpack.c.l.b16 %v519
        %v671 = vunpack.c.l.b16 %v533
        %v672 = vunpack.c.l.b16 %v543
        %v673 = vunpack.c.l.b16 %v557
        %v674 = vunpack.c.l.b16 %v567
        %v675 = vunpack.c.l.b16 %v581
        %v676 = vunpack.c.l.b16 %v591
        %v677 = vunpack.c.l.b16 %v605
        %v678 = vunpack.c.l.b16 %v615
        %v679 = vunpack.c.l.b16 %v629
        %v680 = vunpack.c.l.b16 %v639
        %v681 = vpack.c.b16 %v650, %v649
        %v682 = vpack.c.b16 %v652, %v651
        %v683 = vpack.c.b16 %v654, %v653
        %v684 = vpack.c.b16 %v656, %v655
        %v685 = vpack.c.b16 %v658, %v657
        %v686 = vpack.c.b16 %v660, %v659
        %v687 = vpack.c.b16 %v662, %v661
        %v688 = vpack.c.b16 %v664, %v663
        %v689 = vpack.c.b16 %v666, %v665
        %v690 = vpack.c.b16 %v668, %v667
        %v691 = vpack.c.b16 %v670, %v669
        %v692 = vpack.c.b16 %v672, %v671
        %v693 = vpack.c.b16 %v674, %v673
        %v694 = vpack.c.b16 %v676, %v675
        %v695 = vpack.c.b16 %v678, %v677
        %v696 = vpack.c.b16 %v680, %v679
        %v705 = vunpack.c.l.b16 %v641
        %v706 = vunpack.c.l.b16 %v642
        %v707 = vunpack.c.l.b16 %v643
        %v708 = vunpack.c.l.b16 %v644
        %v709 = vunpack.c.l.b16 %v645
        %v710 = vunpack.c.l.b16 %v646
        %v711 = vunpack.c.l.b16 %v647
        %v712 = vunpack.c.l.b16 %v648
        %v713 = vpack.c.b16 %v706, %v705
        %v714 = vpack.c.b16 %v708, %v707
        %v715 = vpack.c.b16 %v710, %v709
        %v716 = vpack.c.b16 %v712, %v711
        %vm721 = vcmask 523264
        %v723 = vsel %vm721, %v681, 0
        %v726 = vsel %vm721, %v682, 0
        %v729 = vsel %vm721, %v683, 0
        %v732 = vsel %vm721, %v684, 0
        %v735 = vsel %vm721, %v685, 0
        %v738 = vsel %vm721, %v686, 0
        %v741 = vsel %vm721, %v687, 0
        %v744 = vsel %vm721, %v688, 0
        %v747 = vsel %vm721, %v689, 0
        %v750 = vsel %vm721, %v690, 0
        %v753 = vsel %vm721, %v691, 0
        %v756 = vsel %vm721, %v692, 0
        %v759 = vsel %vm721, %v693, 0
        %v762 = vsel %vm721, %v694, 0
        %v765 = vsel %vm721, %v695, 0
        %v768 = vsel %vm721, %v696, 0
        %770 = vmatprep.subr.bf16.mxu0 0
        %771 = vmatpush1.bf16.msra.mxu0 0
        %772 = vmatprep.subr.bf16.mxu0 0
        %773 = vmatpush1.bf16.msra.mxu0 0
        %774 = vmatprep.subr.bf16.mxu0 0
        %775 = vmatpush1.bf16.msra.mxu0 0
        %776 = vmatprep.subr.bf16.mxu0 0
        %777 = vmatpush1.bf16.msra.mxu0 0
        %778 = vmatprep.subr.bf16.mxu0 0
        %779 = vmatpush1.bf16.msra.mxu0 %v716
        %780 = vmatprep.subr.bf16.mxu0 0
        %781 = vmatpush1.bf16.msra.mxu0 %v715
        %782 = vmatprep.subr.bf16.mxu0 0
        %783 = vmatpush1.bf16.msra.mxu0 %v714
        %784 = vmatprep.subr.bf16.mxu0 0
        %785 = vmatpush1.bf16.msra.mxu0 %v713
        %786 = vmatprep.subr.bf16.mxu0 0
        %787 = vmatpush2.bf16.msra.mxu0 0
        %788 = vmatprep.subr.bf16.mxu0 0
        %789 = vmatpush2.bf16.msra.mxu0 0
        %790 = vmatprep.subr.bf16.mxu0 0
        %791 = vmatpush2.bf16.msra.mxu0 0
        %792 = vmatprep.subr.bf16.mxu0 0
        %793 = vmatpush2.bf16.msra.mxu0 0
        %794 = vmatprep.subr.bf16.mxu0 0
        %795 = vmatpush2.bf16.msra.mxu0 0
        %796 = vmatprep.subr.bf16.mxu0 0
        %797 = vmatpush2.bf16.msra.mxu0 0
        %798 = vmatprep.subr.bf16.mxu0 0
        %799 = vmatpush2.bf16.msra.mxu0 0
        %800 = vmatprep.subr.bf16.mxu0 0
        %801 = vmatpush2.bf16.msra.mxu0 0
        %802 = vmatprep.mubr.bf16.mxu0 0
        %803 = vmatmul.mubr.bf16.gmra.mxu0 %v723
        %v804 = vpop.f32.mrf.mxu0
        %v805 = vadd.f32 0.0, %v804
        %v806 = vpop.f32.mrf.mxu0
        %v807 = vpop.f32.mrf.mxu0
        %v808 = vadd.f32 0.0, %v807
        %v809 = vpop.f32.mrf.mxu0
        %810 = vmatprep.mubr.bf16.mxu0 0
        %811 = vmatmul.mubr.bf16.gmra.mxu0 %v726
        %v812 = vpop.f32.mrf.mxu0
        %v813 = vadd.f32 0.0, %v812
        %v814 = vpop.f32.mrf.mxu0
        %v815 = vpop.f32.mrf.mxu0
        %v816 = vadd.f32 0.0, %v815
        %v817 = vpop.f32.mrf.mxu0
        %818 = vmatprep.mubr.bf16.mxu0 0
        %819 = vmatmul.mubr.bf16.gmra.mxu0 %v729
        %v820 = vpop.f32.mrf.mxu0
        %v821 = vadd.f32 0.0, %v820
        %v822 = vpop.f32.mrf.mxu0
        %v823 = vpop.f32.mrf.mxu0
        %v824 = vadd.f32 0.0, %v823
        %v825 = vpop.f32.mrf.mxu0
        %826 = vmatprep.mubr.bf16.mxu0 0
        %827 = vmatmul.mubr.bf16.gmra.mxu0 %v732
        %v828 = vpop.f32.mrf.mxu0
        %v829 = vadd.f32 0.0, %v828
        %v830 = vpop.f32.mrf.mxu0
        %v831 = vpop.f32.mrf.mxu0
        %v832 = vadd.f32 0.0, %v831
        %v833 = vpop.f32.mrf.mxu0
        %834 = vmatprep.mubr.bf16.mxu0 0
        %835 = vmatmul.mubr.bf16.gmra.mxu0 %v735
        %v836 = vpop.f32.mrf.mxu0
        %v837 = vadd.f32 0.0, %v836
        %v838 = vpop.f32.mrf.mxu0
        %v839 = vpop.f32.mrf.mxu0
        %v840 = vadd.f32 0.0, %v839
        %v841 = vpop.f32.mrf.mxu0
        %842 = vmatprep.mubr.bf16.mxu0 0
        %843 = vmatmul.mubr.bf16.gmra.mxu0 %v738
        %v844 = vpop.f32.mrf.mxu0
        %v845 = vadd.f32 0.0, %v844
        %v846 = vpop.f32.mrf.mxu0
        %v847 = vpop.f32.mrf.mxu0
        %v848 = vadd.f32 0.0, %v847
        %v849 = vpop.f32.mrf.mxu0
        %850 = vmatprep.mubr.bf16.mxu0 0
        %851 = vmatmul.mubr.bf16.gmra.mxu0 %v741
        %v852 = vpop.f32.mrf.mxu0
        %v853 = vadd.f32 0.0, %v852
        %v854 = vpop.f32.mrf.mxu0
        %v855 = vpop.f32.mrf.mxu0
        %v856 = vadd.f32 0.0, %v855
        %v857 = vpop.f32.mrf.mxu0
        %858 = vmatprep.mubr.bf16.mxu0 0
        %859 = vmatmul.mubr.bf16.gmra.mxu0 %v744
        %v860 = vpop.f32.mrf.mxu0
        %v861 = vadd.f32 0.0, %v860
        %v862 = vpop.f32.mrf.mxu0
        %v863 = vpop.f32.mrf.mxu0
        %v864 = vadd.f32 0.0, %v863
        %v865 = vpop.f32.mrf.mxu0
        %866 = vmatprep.mubr.bf16.mxu0 0
        %867 = vmatmul.mubr.bf16.gmra.mxu0 %v747
        %v868 = vpop.f32.mrf.mxu0
        %v869 = vadd.f32 0.0, %v868
        %v870 = vpop.f32.mrf.mxu0
        %v871 = vpop.f32.mrf.mxu0
        %v872 = vadd.f32 0.0, %v871
        %v873 = vpop.f32.mrf.mxu0
        %874 = vmatprep.mubr.bf16.mxu0 0
        %875 = vmatmul.mubr.bf16.gmra.mxu0 %v750
        %v876 = vpop.f32.mrf.mxu0
        %v877 = vadd.f32 0.0, %v876
        %v878 = vpop.f32.mrf.mxu0
        %v879 = vpop.f32.mrf.mxu0
        %v880 = vadd.f32 0.0, %v879
        %v881 = vpop.f32.mrf.mxu0
        %882 = vmatprep.mubr.bf16.mxu0 0
        %883 = vmatmul.mubr.bf16.gmra.mxu0 %v753
        %v884 = vpop.f32.mrf.mxu0
        %v885 = vadd.f32 0.0, %v884
        %v886 = vpop.f32.mrf.mxu0
        %v887 = vpop.f32.mrf.mxu0
        %v888 = vadd.f32 0.0, %v887
        %v889 = vpop.f32.mrf.mxu0
        %890 = vmatprep.mubr.bf16.mxu0 0
        %891 = vmatmul.mubr.bf16.gmra.mxu0 %v756
        %v892 = vpop.f32.mrf.mxu0
        %v893 = vadd.f32 0.0, %v892
        %v894 = vpop.f32.mrf.mxu0
        %v895 = vpop.f32.mrf.mxu0
        %v896 = vadd.f32 0.0, %v895
        %v897 = vpop.f32.mrf.mxu0
        %898 = vmatprep.mubr.bf16.mxu0 0
        %899 = vmatmul.mubr.bf16.gmra.mxu0 %v759
        %v900 = vpop.f32.mrf.mxu0
        %v901 = vadd.f32 0.0, %v900
        %v902 = vpop.f32.mrf.mxu0
        %v903 = vpop.f32.mrf.mxu0
        %v904 = vadd.f32 0.0, %v903
        %v905 = vpop.f32.mrf.mxu0
        %906 = vmatprep.mubr.bf16.mxu0 0
        %907 = vmatmul.mubr.bf16.gmra.mxu0 %v762
        %v908 = vpop.f32.mrf.mxu0
        %v909 = vadd.f32 0.0, %v908
        %v910 = vpop.f32.mrf.mxu0
        %v911 = vpop.f32.mrf.mxu0
        %v912 = vadd.f32 0.0, %v911
        %v913 = vpop.f32.mrf.mxu0
        %914 = vmatprep.mubr.bf16.mxu0 0
        %915 = vmatmul.mubr.bf16.gmra.mxu0 %v765
        %v916 = vpop.f32.mrf.mxu0
        %v917 = vadd.f32 0.0, %v916
        %v918 = vpop.f32.mrf.mxu0
        %v919 = vpop.f32.mrf.mxu0
        %v920 = vadd.f32 0.0, %v919
        %v921 = vpop.f32.mrf.mxu0
        %922 = vmatprep.mubr.bf16.mxu0 0
        %923 = vmatmul.mubr.bf16.gmra.mxu0 %v768
        %v924 = vpop.f32.mrf.mxu0
        %v925 = vadd.f32 0.0, %v924
        %v926 = vpop.f32.mrf.mxu0
        %v927 = vpop.f32.mrf.mxu0
        %v928 = vadd.f32 0.0, %v927
        %v929 = vpop.f32.mrf.mxu0
        %930 = vdwg.mxu0
        %v963 = vunpack.c.l.b16 %v197
        %v964 = vunpack.c.l.b16 %v198
        %v965 = vunpack.c.l.b16 %v199
        %v966 = vunpack.c.l.b16 %v200
        %v967 = vunpack.c.l.b16 %v201
        %v968 = vunpack.c.l.b16 %v202
        %v969 = vunpack.c.l.b16 %v203
        %v970 = vunpack.c.l.b16 %v204
        %v971 = vunpack.c.l.b16 %v205
        %v972 = vunpack.c.l.b16 %v206
        %v973 = vunpack.c.l.b16 %v207
        %v974 = vunpack.c.l.b16 %v208
        %v975 = vunpack.c.l.b16 %v209
        %v976 = vunpack.c.l.b16 %v210
        %v977 = vunpack.c.l.b16 %v211
        %v978 = vunpack.c.l.b16 %v212
        %v979 = vunpack.c.l.b16 %v213
        %v980 = vunpack.c.l.b16 %v214
        %v981 = vunpack.c.l.b16 %v215
        %v982 = vunpack.c.l.b16 %v216
        %v983 = vunpack.c.l.b16 %v217
        %v984 = vunpack.c.l.b16 %v218
        %v985 = vunpack.c.l.b16 %v219
        %v986 = vunpack.c.l.b16 %v220
        %v987 = vunpack.c.l.b16 %v221
        %v988 = vunpack.c.l.b16 %v222
        %v989 = vunpack.c.l.b16 %v223
        %v990 = vunpack.c.l.b16 %v224
        %v991 = vunpack.c.l.b16 %v225
        %v992 = vunpack.c.l.b16 %v226
        %v993 = vunpack.c.l.b16 %v227
        %v994 = vunpack.c.l.b16 %v228
        %v995 = vpack.c.b16 %v964, %v963
        %v996 = vpack.c.b16 %v966, %v965
        %v997 = vpack.c.b16 %v968, %v967
        %v998 = vpack.c.b16 %v970, %v969
        %v999 = vpack.c.b16 %v972, %v971
        %v1000 = vpack.c.b16 %v974, %v973
        %v1001 = vpack.c.b16 %v976, %v975
        %v1002 = vpack.c.b16 %v978, %v977
        %v1003 = vpack.c.b16 %v980, %v979
        %v1004 = vpack.c.b16 %v982, %v981
        %v1005 = vpack.c.b16 %v984, %v983
        %v1006 = vpack.c.b16 %v986, %v985
        %v1007 = vpack.c.b16 %v988, %v987
        %v1008 = vpack.c.b16 %v990, %v989
        %v1009 = vpack.c.b16 %v992, %v991
        %v1010 = vpack.c.b16 %v994, %v993
        %v1019 = vunpack.c.l.b16 %v229
        %v1020 = vunpack.c.l.b16 %v230
        %v1021 = vunpack.c.l.b16 %v231
        %v1022 = vunpack.c.l.b16 %v232
        %v1023 = vunpack.c.l.b16 %v233
        %v1024 = vunpack.c.l.b16 %v234
        %v1025 = vunpack.c.l.b16 %v235
        %v1026 = vunpack.c.l.b16 %v236
        %v1027 = vpack.c.b16 %v1020, %v1019
        %v1028 = vpack.c.b16 %v1022, %v1021
        %v1029 = vpack.c.b16 %v1024, %v1023
        %v1030 = vpack.c.b16 %v1026, %v1025
        %v1036 = vsel %vm721, %v995, 0
        %v1039 = vsel %vm721, %v996, 0
        %v1042 = vsel %vm721, %v997, 0
        %v1045 = vsel %vm721, %v998, 0
        %v1048 = vsel %vm721, %v999, 0
        %v1051 = vsel %vm721, %v1000, 0
        %v1054 = vsel %vm721, %v1001, 0
        %v1057 = vsel %vm721, %v1002, 0
        %v1060 = vsel %vm721, %v1003, 0
        %v1063 = vsel %vm721, %v1004, 0
        %v1066 = vsel %vm721, %v1005, 0
        %v1069 = vsel %vm721, %v1006, 0
        %v1072 = vsel %vm721, %v1007, 0
        %v1075 = vsel %vm721, %v1008, 0
        %v1078 = vsel %vm721, %v1009, 0
        %v1081 = vsel %vm721, %v1010, 0
        %1083 = vmatprep.subr.bf16.mxu0 0
        %1084 = vmatpush1.bf16.msra.mxu0 0
        %1085 = vmatprep.subr.bf16.mxu0 0
        %1086 = vmatpush1.bf16.msra.mxu0 0
        %1087 = vmatprep.subr.bf16.mxu0 0
        %1088 = vmatpush1.bf16.msra.mxu0 0
        %1089 = vmatprep.subr.bf16.mxu0 0
        %1090 = vmatpush1.bf16.msra.mxu0 0
        %1091 = vmatprep.subr.bf16.mxu0 0
        %1092 = vmatpush1.bf16.msra.mxu0 %v1030
        %1093 = vmatprep.subr.bf16.mxu0 0
        %1094 = vmatpush1.bf16.msra.mxu0 %v1029
        %1095 = vmatprep.subr.bf16.mxu0 0
        %1096 = vmatpush1.bf16.msra.mxu0 %v1028
        %1097 = vmatprep.subr.bf16.mxu0 0
        %1098 = vmatpush1.bf16.msra.mxu0 %v1027
        %1099 = vmatprep.subr.bf16.mxu0 0
        %1100 = vmatpush2.bf16.msra.mxu0 0
        %1101 = vmatprep.subr.bf16.mxu0 0
        %1102 = vmatpush2.bf16.msra.mxu0 0
        %1103 = vmatprep.subr.bf16.mxu0 0
        %1104 = vmatpush2.bf16.msra.mxu0 0
        %1105 = vmatprep.subr.bf16.mxu0 0
        %1106 = vmatpush2.bf16.msra.mxu0 0
        %1107 = vmatprep.subr.bf16.mxu0 0
        %1108 = vmatpush2.bf16.msra.mxu0 0
        %1109 = vmatprep.subr.bf16.mxu0 0
        %1110 = vmatpush2.bf16.msra.mxu0 0
        %1111 = vmatprep.subr.bf16.mxu0 0
        %1112 = vmatpush2.bf16.msra.mxu0 0
        %1113 = vmatprep.subr.bf16.mxu0 0
        %1114 = vmatpush2.bf16.msra.mxu0 0
        %1115 = vmatprep.mubr.bf16.mxu0 0
        %1116 = vmatmul.mubr.bf16.gmra.mxu0 %v1036
        %v1117 = vpop.f32.mrf.mxu0
        %v1118 = vadd.f32 %v805, %v1117
        %v1119 = vpop.f32.mrf.mxu0
        %v1120 = vpop.f32.mrf.mxu0
        %v1121 = vadd.f32 %v808, %v1120
        %v1122 = vpop.f32.mrf.mxu0
        %1123 = vmatprep.mubr.bf16.mxu0 0
        %1124 = vmatmul.mubr.bf16.gmra.mxu0 %v1039
        %v1125 = vpop.f32.mrf.mxu0
        %v1126 = vadd.f32 %v813, %v1125
        %v1127 = vpop.f32.mrf.mxu0
        %v1128 = vpop.f32.mrf.mxu0
        %v1129 = vadd.f32 %v816, %v1128
        %v1130 = vpop.f32.mrf.mxu0
        %1131 = vmatprep.mubr.bf16.mxu0 0
        %1132 = vmatmul.mubr.bf16.gmra.mxu0 %v1042
        %v1133 = vpop.f32.mrf.mxu0
        %v1134 = vadd.f32 %v821, %v1133
        %v1135 = vpop.f32.mrf.mxu0
        %v1136 = vpop.f32.mrf.mxu0
        %v1137 = vadd.f32 %v824, %v1136
        %v1138 = vpop.f32.mrf.mxu0
        %1139 = vmatprep.mubr.bf16.mxu0 0
        %1140 = vmatmul.mubr.bf16.gmra.mxu0 %v1045
        %v1141 = vpop.f32.mrf.mxu0
        %v1142 = vadd.f32 %v829, %v1141
        %v1143 = vpop.f32.mrf.mxu0
        %v1144 = vpop.f32.mrf.mxu0
        %v1145 = vadd.f32 %v832, %v1144
        %v1146 = vpop.f32.mrf.mxu0
        %1147 = vmatprep.mubr.bf16.mxu0 0
        %1148 = vmatmul.mubr.bf16.gmra.mxu0 %v1048
        %v1149 = vpop.f32.mrf.mxu0
        %v1150 = vadd.f32 %v837, %v1149
        %v1151 = vpop.f32.mrf.mxu0
        %v1152 = vpop.f32.mrf.mxu0
        %v1153 = vadd.f32 %v840, %v1152
        %v1154 = vpop.f32.mrf.mxu0
        %1155 = vmatprep.mubr.bf16.mxu0 0
        %1156 = vmatmul.mubr.bf16.gmra.mxu0 %v1051
        %v1157 = vpop.f32.mrf.mxu0
        %v1158 = vadd.f32 %v845, %v1157
        %v1159 = vpop.f32.mrf.mxu0
        %v1160 = vpop.f32.mrf.mxu0
        %v1161 = vadd.f32 %v848, %v1160
        %v1162 = vpop.f32.mrf.mxu0
        %1163 = vmatprep.mubr.bf16.mxu0 0
        %1164 = vmatmul.mubr.bf16.gmra.mxu0 %v1054
        %v1165 = vpop.f32.mrf.mxu0
        %v1166 = vadd.f32 %v853, %v1165
        %v1167 = vpop.f32.mrf.mxu0
        %v1168 = vpop.f32.mrf.mxu0
        %v1169 = vadd.f32 %v856, %v1168
        %v1170 = vpop.f32.mrf.mxu0
        %1171 = vmatprep.mubr.bf16.mxu0 0
        %1172 = vmatmul.mubr.bf16.gmra.mxu0 %v1057
        %v1173 = vpop.f32.mrf.mxu0
        %v1174 = vadd.f32 %v861, %v1173
        %v1175 = vpop.f32.mrf.mxu0
        %v1176 = vpop.f32.mrf.mxu0
        %v1177 = vadd.f32 %v864, %v1176
        %v1178 = vpop.f32.mrf.mxu0
        %1179 = vmatprep.mubr.bf16.mxu0 0
        %1180 = vmatmul.mubr.bf16.gmra.mxu0 %v1060
        %v1181 = vpop.f32.mrf.mxu0
        %v1182 = vadd.f32 %v869, %v1181
        %v1183 = vpop.f32.mrf.mxu0
        %v1184 = vpop.f32.mrf.mxu0
        %v1185 = vadd.f32 %v872, %v1184
        %v1186 = vpop.f32.mrf.mxu0
        %1187 = vmatprep.mubr.bf16.mxu0 0
        %1188 = vmatmul.mubr.bf16.gmra.mxu0 %v1063
        %v1189 = vpop.f32.mrf.mxu0
        %v1190 = vadd.f32 %v877, %v1189
        %v1191 = vpop.f32.mrf.mxu0
        %v1192 = vpop.f32.mrf.mxu0
        %v1193 = vadd.f32 %v880, %v1192
        %v1194 = vpop.f32.mrf.mxu0
        %1195 = vmatprep.mubr.bf16.mxu0 0
        %1196 = vmatmul.mubr.bf16.gmra.mxu0 %v1066
        %v1197 = vpop.f32.mrf.mxu0
        %v1198 = vadd.f32 %v885, %v1197
        %v1199 = vpop.f32.mrf.mxu0
        %v1200 = vpop.f32.mrf.mxu0
        %v1201 = vadd.f32 %v888, %v1200
        %v1202 = vpop.f32.mrf.mxu0
        %1203 = vmatprep.mubr.bf16.mxu0 0
        %1204 = vmatmul.mubr.bf16.gmra.mxu0 %v1069
        %v1205 = vpop.f32.mrf.mxu0
        %v1206 = vadd.f32 %v893, %v1205
        %v1207 = vpop.f32.mrf.mxu0
        %v1208 = vpop.f32.mrf.mxu0
        %v1209 = vadd.f32 %v896, %v1208
        %v1210 = vpop.f32.mrf.mxu0
        %1211 = vmatprep.mubr.bf16.mxu0 0
        %1212 = vmatmul.mubr.bf16.gmra.mxu0 %v1072
        %v1213 = vpop.f32.mrf.mxu0
        %v1214 = vadd.f32 %v901, %v1213
        %v1215 = vpop.f32.mrf.mxu0
        %v1216 = vpop.f32.mrf.mxu0
        %v1217 = vadd.f32 %v904, %v1216
        %v1218 = vpop.f32.mrf.mxu0
        %1219 = vmatprep.mubr.bf16.mxu0 0
        %1220 = vmatmul.mubr.bf16.gmra.mxu0 %v1075
        %v1221 = vpop.f32.mrf.mxu0
        %v1222 = vadd.f32 %v909, %v1221
        %v1223 = vpop.f32.mrf.mxu0
        %v1224 = vpop.f32.mrf.mxu0
        %v1225 = vadd.f32 %v912, %v1224
        %v1226 = vpop.f32.mrf.mxu0
        %1227 = vmatprep.mubr.bf16.mxu0 0
        %1228 = vmatmul.mubr.bf16.gmra.mxu0 %v1078
        %v1229 = vpop.f32.mrf.mxu0
        %v1230 = vadd.f32 %v917, %v1229
        %v1231 = vpop.f32.mrf.mxu0
        %v1232 = vpop.f32.mrf.mxu0
        %v1233 = vadd.f32 %v920, %v1232
        %v1234 = vpop.f32.mrf.mxu0
        %1235 = vmatprep.mubr.bf16.mxu0 0
        %1236 = vmatmul.mubr.bf16.gmra.mxu0 %v1081
        %v1237 = vpop.f32.mrf.mxu0
        %v1238 = vadd.f32 %v925, %v1237
        %v1239 = vpop.f32.mrf.mxu0
        %v1240 = vpop.f32.mrf.mxu0
        %v1241 = vadd.f32 %v928, %v1240
        %v1242 = vpop.f32.mrf.mxu0
        %1243 = vdwg.mxu0
        %v1244 = vld [vmem:[%s195] sm:$0xe]
        %v1245 = vld [vmem:[%s195 + $0xc] sm:$0xe]
        %v1246 = vld [vmem:[%s195 + $0x18] sm:$0xe]
        %v1247 = vld [vmem:[%s195 + $0x24] sm:$0xe]
        %v1248 = vld [vmem:[%s195 + $0x30] sm:$0xe]
        %v1249 = vld [vmem:[%s195 + $0x3c] sm:$0xe]
        %v1250 = vld [vmem:[%s195 + $0x48] sm:$0xe]
        %v1251 = vld [vmem:[%s195 + $0x54] sm:$0xe]
        %v1252 = vld [vmem:[%s195 + $0x60] sm:$0xe]
        %v1253 = vld [vmem:[%s195 + $0x6c] sm:$0xe]
        %v1254 = vld [vmem:[%s195 + $0x78] sm:$0xe]
        %v1255 = vld [vmem:[%s195 + $0x84] sm:$0xe]
        %v1256 = vld [vmem:[%s195 + $0x90] sm:$0xe]
        %v1257 = vld [vmem:[%s195 + $0x9c] sm:$0xe]
        %v1258 = vld [vmem:[%s195 + $0xa8] sm:$0xe]
        %v1259 = vld [vmem:[%s195 + $0xb4] sm:$0xe]
        %vm1292 = vcmask 1042432
        %vm1293 = vcmask 1046532
        %vm1294 = vmor %vm1292, %vm1293
        %v1295 = vrot.slane %v1244, 5
        %v1296 = vrot.slane %v1295, 4
        %v1297 = vrot.slane %v198, 5
        %v1298 = vsel %vm1294, %v1296, %v1297
        %v1299 = vrot.slane %v1297, 4
        %v1300 = vrot.slane %v237, 5
        %v1301 = vsel %vm1294, %v1299, %v1300
        %v1302 = vrot.slane %v1245, 5
        %v1303 = vrot.slane %v1302, 4
        %v1304 = vrot.slane %v200, 5
        %v1305 = vsel %vm1294, %v1303, %v1304
        %v1306 = vrot.slane %v1304, 4
        %v1307 = vrot.slane %v238, 5
        %v1308 = vsel %vm1294, %v1306, %v1307
        %v1309 = vrot.slane %v1246, 5
        %v1310 = vrot.slane %v1309, 4
        %v1311 = vrot.slane %v202, 5
        %v1312 = vsel %vm1294, %v1310, %v1311
        %v1313 = vrot.slane %v1311, 4
        %v1314 = vrot.slane %v239, 5
        %v1315 = vsel %vm1294, %v1313, %v1314
        %v1316 = vrot.slane %v1247, 5
        %v1317 = vrot.slane %v1316, 4
        %v1318 = vrot.slane %v204, 5
        %v1319 = vsel %vm1294, %v1317, %v1318
        %v1320 = vrot.slane %v1318, 4
        %v1321 = vrot.slane %v240, 5
        %v1322 = vsel %vm1294, %v1320, %v1321
        %v1323 = vrot.slane %v1248, 5
        %v1324 = vrot.slane %v1323, 4
        %v1325 = vrot.slane %v206, 5
        %v1326 = vsel %vm1294, %v1324, %v1325
        %v1327 = vrot.slane %v1325, 4
        %v1328 = vrot.slane %v241, 5
        %v1329 = vsel %vm1294, %v1327, %v1328
        %v1330 = vrot.slane %v1249, 5
        %v1331 = vrot.slane %v1330, 4
        %v1332 = vrot.slane %v208, 5
        %v1333 = vsel %vm1294, %v1331, %v1332
        %v1334 = vrot.slane %v1332, 4
        %v1335 = vrot.slane %v242, 5
        %v1336 = vsel %vm1294, %v1334, %v1335
        %v1337 = vrot.slane %v1250, 5
        %v1338 = vrot.slane %v1337, 4
        %v1339 = vrot.slane %v210, 5
        %v1340 = vsel %vm1294, %v1338, %v1339
        %v1341 = vrot.slane %v1339, 4
        %v1342 = vrot.slane %v243, 5
        %v1343 = vsel %vm1294, %v1341, %v1342
        %v1344 = vrot.slane %v1251, 5
        %v1345 = vrot.slane %v1344, 4
        %v1346 = vrot.slane %v212, 5
        %v1347 = vsel %vm1294, %v1345, %v1346
        %v1348 = vrot.slane %v1346, 4
        %v1349 = vrot.slane %v244, 5
        %v1350 = vsel %vm1294, %v1348, %v1349
        %v1351 = vrot.slane %v1252, 5
        %v1352 = vrot.slane %v1351, 4
        %v1353 = vrot.slane %v214, 5
        %v1354 = vsel %vm1294, %v1352, %v1353
        %v1355 = vrot.slane %v1353, 4
        %v1356 = vrot.slane %v245, 5
        %v1357 = vsel %vm1294, %v1355, %v1356
        %v1358 = vrot.slane %v1253, 5
        %v1359 = vrot.slane %v1358, 4
        %v1360 = vrot.slane %v216, 5
        %v1361 = vsel %vm1294, %v1359, %v1360
        %v1362 = vrot.slane %v1360, 4
        %v1363 = vrot.slane %v246, 5
        %v1364 = vsel %vm1294, %v1362, %v1363
        %v1365 = vrot.slane %v1254, 5
        %v1366 = vrot.slane %v1365, 4
        %v1367 = vrot.slane %v218, 5
        %v1368 = vsel %vm1294, %v1366, %v1367
        %v1369 = vrot.slane %v1367, 4
        %v1370 = vrot.slane %v247, 5
        %v1371 = vsel %vm1294, %v1369, %v1370
        %v1372 = vrot.slane %v1255, 5
        %v1373 = vrot.slane %v1372, 4
        %v1374 = vrot.slane %v220, 5
        %v1375 = vsel %vm1294, %v1373, %v1374
        %v1376 = vrot.slane %v1374, 4
        %v1377 = vrot.slane %v248, 5
        %v1378 = vsel %vm1294, %v1376, %v1377
        %v1379 = vrot.slane %v1256, 5
        %v1380 = vrot.slane %v1379, 4
        %v1381 = vrot.slane %v222, 5
        %v1382 = vsel %vm1294, %v1380, %v1381
        %v1383 = vrot.slane %v1381, 4
        %v1384 = vrot.slane %v249, 5
        %v1385 = vsel %vm1294, %v1383, %v1384
        %v1386 = vrot.slane %v1257, 5
        %v1387 = vrot.slane %v1386, 4
        %v1388 = vrot.slane %v224, 5
        %v1389 = vsel %vm1294, %v1387, %v1388
        %v1390 = vrot.slane %v1388, 4
        %v1391 = vrot.slane %v250, 5
        %v1392 = vsel %vm1294, %v1390, %v1391
        %v1393 = vrot.slane %v1258, 5
        %v1394 = vrot.slane %v1393, 4
        %v1395 = vrot.slane %v226, 5
        %v1396 = vsel %vm1294, %v1394, %v1395
        %v1397 = vrot.slane %v1395, 4
        %v1398 = vrot.slane %v251, 5
        %v1399 = vsel %vm1294, %v1397, %v1398
        %v1400 = vrot.slane %v1259, 5
        %v1401 = vrot.slane %v1400, 4
        %v1402 = vrot.slane %v228, 5
        %v1403 = vsel %vm1294, %v1401, %v1402
        %v1404 = vrot.slane %v1402, 4
        %v1405 = vrot.slane %v252, 5
        %v1406 = vsel %vm1294, %v1404, %v1405
        %s1407 = scalar_lea.vmem %s1, 64
        %v1408 = vld [vmem:[%s1407] sm:$0xf]
        %v1409 = vld [vmem:[%s1407 + $0x4] sm:$0xf]
        %v1410 = vld [vmem:[%s1407 + $0x8] sm:$0xf]
        %v1411 = vld [vmem:[%s1407 + $0xc] sm:$0xf]
        %v1412 = vld [vmem:[%s1407 + $0x10] sm:$0xf]
        %v1413 = vld [vmem:[%s1407 + $0x14] sm:$0xf]
        %v1414 = vld [vmem:[%s1407 + $0x18] sm:$0xf]
        %v1415 = vld [vmem:[%s1407 + $0x1c] sm:$0xf]
        %v1416 = vunpack.c.l.b16 %v1298
        %v1417 = vunpack.c.l.b16 %v1301
        %v1418 = vunpack.c.l.b16 %v1305
        %v1419 = vunpack.c.l.b16 %v1308
        %v1420 = vunpack.c.l.b16 %v1312
        %v1421 = vunpack.c.l.b16 %v1315
        %v1422 = vunpack.c.l.b16 %v1319
        %v1423 = vunpack.c.l.b16 %v1322
        %v1424 = vunpack.c.l.b16 %v1326
        %v1425 = vunpack.c.l.b16 %v1329
        %v1426 = vunpack.c.l.b16 %v1333
        %v1427 = vunpack.c.l.b16 %v1336
        %v1428 = vunpack.c.l.b16 %v1340
        %v1429 = vunpack.c.l.b16 %v1343
        %v1430 = vunpack.c.l.b16 %v1347
        %v1431 = vunpack.c.l.b16 %v1350
        %v1432 = vunpack.c.l.b16 %v1354
        %v1433 = vunpack.c.l.b16 %v1357
        %v1434 = vunpack.c.l.b16 %v1361
        %v1435 = vunpack.c.l.b16 %v1364
        %v1436 = vunpack.c.l.b16 %v1368
        %v1437 = vunpack.c.l.b16 %v1371
        %v1438 = vunpack.c.l.b16 %v1375
        %v1439 = vunpack.c.l.b16 %v1378
        %v1440 = vunpack.c.l.b16 %v1382
        %v1441 = vunpack.c.l.b16 %v1385
        %v1442 = vunpack.c.l.b16 %v1389
        %v1443 = vunpack.c.l.b16 %v1392
        %v1444 = vunpack.c.l.b16 %v1396
        %v1445 = vunpack.c.l.b16 %v1399
        %v1446 = vunpack.c.l.b16 %v1403
        %v1447 = vunpack.c.l.b16 %v1406
        %v1448 = vpack.c.b16 %v1417, %v1416
        %v1449 = vpack.c.b16 %v1419, %v1418
        %v1450 = vpack.c.b16 %v1421, %v1420
        %v1451 = vpack.c.b16 %v1423, %v1422
        %v1452 = vpack.c.b16 %v1425, %v1424
        %v1453 = vpack.c.b16 %v1427, %v1426
        %v1454 = vpack.c.b16 %v1429, %v1428
        %v1455 = vpack.c.b16 %v1431, %v1430
        %v1456 = vpack.c.b16 %v1433, %v1432
        %v1457 = vpack.c.b16 %v1435, %v1434
        %v1458 = vpack.c.b16 %v1437, %v1436
        %v1459 = vpack.c.b16 %v1439, %v1438
        %v1460 = vpack.c.b16 %v1441, %v1440
        %v1461 = vpack.c.b16 %v1443, %v1442
        %v1462 = vpack.c.b16 %v1445, %v1444
        %v1463 = vpack.c.b16 %v1447, %v1446
        %v1472 = vunpack.c.l.b16 %v1408
        %v1473 = vunpack.c.l.b16 %v1409
        %v1474 = vunpack.c.l.b16 %v1410
        %v1475 = vunpack.c.l.b16 %v1411
        %v1476 = vunpack.c.l.b16 %v1412
        %v1477 = vunpack.c.l.b16 %v1413
        %v1478 = vunpack.c.l.b16 %v1414
        %v1479 = vunpack.c.l.b16 %v1415
        %v1480 = vpack.c.b16 %v1473, %v1472
        %v1481 = vpack.c.b16 %v1475, %v1474
        %v1482 = vpack.c.b16 %v1477, %v1476
        %v1483 = vpack.c.b16 %v1479, %v1478
        %v1489 = vsel %vm721, %v1448, 0
        %v1492 = vsel %vm721, %v1449, 0
        %v1495 = vsel %vm721, %v1450, 0
        %v1498 = vsel %vm721, %v1451, 0
        %v1501 = vsel %vm721, %v1452, 0
        %v1504 = vsel %vm721, %v1453, 0
        %v1507 = vsel %vm721, %v1454, 0
        %v1510 = vsel %vm721, %v1455, 0
        %v1513 = vsel %vm721, %v1456, 0
        %v1516 = vsel %vm721, %v1457, 0
        %v1519 = vsel %vm721, %v1458, 0
        %v1522 = vsel %vm721, %v1459, 0
        %v1525 = vsel %vm721, %v1460, 0
        %v1528 = vsel %vm721, %v1461, 0
        %v1531 = vsel %vm721, %v1462, 0
        %v1534 = vsel %vm721, %v1463, 0
        %1536 = vmatprep.subr.bf16.mxu0 0
        %1537 = vmatpush1.bf16.msra.mxu0 0
        %1538 = vmatprep.subr.bf16.mxu0 0
        %1539 = vmatpush1.bf16.msra.mxu0 0
        %1540 = vmatprep.subr.bf16.mxu0 0
        %1541 = vmatpush1.bf16.msra.mxu0 0
        %1542 = vmatprep.subr.bf16.mxu0 0
        %1543 = vmatpush1.bf16.msra.mxu0 0
        %1544 = vmatprep.subr.bf16.mxu0 0
        %1545 = vmatpush1.bf16.msra.mxu0 %v1483
        %1546 = vmatprep.subr.bf16.mxu0 0
        %1547 = vmatpush1.bf16.msra.mxu0 %v1482
        %1548 = vmatprep.subr.bf16.mxu0 0
        %1549 = vmatpush1.bf16.msra.mxu0 %v1481
        %1550 = vmatprep.subr.bf16.mxu0 0
        %1551 = vmatpush1.bf16.msra.mxu0 %v1480
        %1552 = vmatprep.subr.bf16.mxu0 0
        %1553 = vmatpush2.bf16.msra.mxu0 0
        %1554 = vmatprep.subr.bf16.mxu0 0
        %1555 = vmatpush2.bf16.msra.mxu0 0
        %1556 = vmatprep.subr.bf16.mxu0 0
        %1557 = vmatpush2.bf16.msra.mxu0 0
        %1558 = vmatprep.subr.bf16.mxu0 0
        %1559 = vmatpush2.bf16.msra.mxu0 0
        %1560 = vmatprep.subr.bf16.mxu0 0
        %1561 = vmatpush2.bf16.msra.mxu0 0
        %1562 = vmatprep.subr.bf16.mxu0 0
        %1563 = vmatpush2.bf16.msra.mxu0 0
        %1564 = vmatprep.subr.bf16.mxu0 0
        %1565 = vmatpush2.bf16.msra.mxu0 0
        %1566 = vmatprep.subr.bf16.mxu0 0
        %1567 = vmatpush2.bf16.msra.mxu0 0
        %1568 = vmatprep.mubr.bf16.mxu0 0
        %1569 = vmatmul.mubr.bf16.gmra.mxu0 %v1489
        %v1570 = vpop.f32.mrf.mxu0
        %v1571 = vadd.f32 0.0, %v1570
        %v1572 = vpop.f32.mrf.mxu0
        %v1573 = vpop.f32.mrf.mxu0
        %v1574 = vadd.f32 0.0, %v1573
        %v1575 = vpop.f32.mrf.mxu0
        %1576 = vmatprep.mubr.bf16.mxu0 0
        %1577 = vmatmul.mubr.bf16.gmra.mxu0 %v1492
        %v1578 = vpop.f32.mrf.mxu0
        %v1579 = vadd.f32 0.0, %v1578
        %v1580 = vpop.f32.mrf.mxu0
        %v1581 = vpop.f32.mrf.mxu0
        %v1582 = vadd.f32 0.0, %v1581
        %v1583 = vpop.f32.mrf.mxu0
        %1584 = vmatprep.mubr.bf16.mxu0 0
        %1585 = vmatmul.mubr.bf16.gmra.mxu0 %v1495
        %v1586 = vpop.f32.mrf.mxu0
        %v1587 = vadd.f32 0.0, %v1586
        %v1588 = vpop.f32.mrf.mxu0
        %v1589 = vpop.f32.mrf.mxu0
        %v1590 = vadd.f32 0.0, %v1589
        %v1591 = vpop.f32.mrf.mxu0
        %1592 = vmatprep.mubr.bf16.mxu0 0
        %1593 = vmatmul.mubr.bf16.gmra.mxu0 %v1498
        %v1594 = vpop.f32.mrf.mxu0
        %v1595 = vadd.f32 0.0, %v1594
        %v1596 = vpop.f32.mrf.mxu0
        %v1597 = vpop.f32.mrf.mxu0
        %v1598 = vadd.f32 0.0, %v1597
        %v1599 = vpop.f32.mrf.mxu0
        %1600 = vmatprep.mubr.bf16.mxu0 0
        %1601 = vmatmul.mubr.bf16.gmra.mxu0 %v1501
        %v1602 = vpop.f32.mrf.mxu0
        %v1603 = vadd.f32 0.0, %v1602
        %v1604 = vpop.f32.mrf.mxu0
        %v1605 = vpop.f32.mrf.mxu0
        %v1606 = vadd.f32 0.0, %v1605
        %v1607 = vpop.f32.mrf.mxu0
        %1608 = vmatprep.mubr.bf16.mxu0 0
        %1609 = vmatmul.mubr.bf16.gmra.mxu0 %v1504
        %v1610 = vpop.f32.mrf.mxu0
        %v1611 = vadd.f32 0.0, %v1610
        %v1612 = vpop.f32.mrf.mxu0
        %v1613 = vpop.f32.mrf.mxu0
        %v1614 = vadd.f32 0.0, %v1613
        %v1615 = vpop.f32.mrf.mxu0
        %1616 = vmatprep.mubr.bf16.mxu0 0
        %1617 = vmatmul.mubr.bf16.gmra.mxu0 %v1507
        %v1618 = vpop.f32.mrf.mxu0
        %v1619 = vadd.f32 0.0, %v1618
        %v1620 = vpop.f32.mrf.mxu0
        %v1621 = vpop.f32.mrf.mxu0
        %v1622 = vadd.f32 0.0, %v1621
        %v1623 = vpop.f32.mrf.mxu0
        %1624 = vmatprep.mubr.bf16.mxu0 0
        %1625 = vmatmul.mubr.bf16.gmra.mxu0 %v1510
        %v1626 = vpop.f32.mrf.mxu0
        %v1627 = vadd.f32 0.0, %v1626
        %v1628 = vpop.f32.mrf.mxu0
        %v1629 = vpop.f32.mrf.mxu0
        %v1630 = vadd.f32 0.0, %v1629
        %v1631 = vpop.f32.mrf.mxu0
        %1632 = vmatprep.mubr.bf16.mxu0 0
        %1633 = vmatmul.mubr.bf16.gmra.mxu0 %v1513
        %v1634 = vpop.f32.mrf.mxu0
        %v1635 = vadd.f32 0.0, %v1634
        %v1636 = vpop.f32.mrf.mxu0
        %v1637 = vpop.f32.mrf.mxu0
        %v1638 = vadd.f32 0.0, %v1637
        %v1639 = vpop.f32.mrf.mxu0
        %1640 = vmatprep.mubr.bf16.mxu0 0
        %1641 = vmatmul.mubr.bf16.gmra.mxu0 %v1516
        %v1642 = vpop.f32.mrf.mxu0
        %v1643 = vadd.f32 0.0, %v1642
        %v1644 = vpop.f32.mrf.mxu0
        %v1645 = vpop.f32.mrf.mxu0
        %v1646 = vadd.f32 0.0, %v1645
        %v1647 = vpop.f32.mrf.mxu0
        %1648 = vmatprep.mubr.bf16.mxu0 0
        %1649 = vmatmul.mubr.bf16.gmra.mxu0 %v1519
        %v1650 = vpop.f32.mrf.mxu0
        %v1651 = vadd.f32 0.0, %v1650
        %v1652 = vpop.f32.mrf.mxu0
        %v1653 = vpop.f32.mrf.mxu0
        %v1654 = vadd.f32 0.0, %v1653
        %v1655 = vpop.f32.mrf.mxu0
        %1656 = vmatprep.mubr.bf16.mxu0 0
        %1657 = vmatmul.mubr.bf16.gmra.mxu0 %v1522
        %v1658 = vpop.f32.mrf.mxu0
        %v1659 = vadd.f32 0.0, %v1658
        %v1660 = vpop.f32.mrf.mxu0
        %v1661 = vpop.f32.mrf.mxu0
        %v1662 = vadd.f32 0.0, %v1661
        %v1663 = vpop.f32.mrf.mxu0
        %1664 = vmatprep.mubr.bf16.mxu0 0
        %1665 = vmatmul.mubr.bf16.gmra.mxu0 %v1525
        %v1666 = vpop.f32.mrf.mxu0
        %v1667 = vadd.f32 0.0, %v1666
        %v1668 = vpop.f32.mrf.mxu0
        %v1669 = vpop.f32.mrf.mxu0
        %v1670 = vadd.f32 0.0, %v1669
        %v1671 = vpop.f32.mrf.mxu0
        %1672 = vmatprep.mubr.bf16.mxu0 0
        %1673 = vmatmul.mubr.bf16.gmra.mxu0 %v1528
        %v1674 = vpop.f32.mrf.mxu0
        %v1675 = vadd.f32 0.0, %v1674
        %v1676 = vpop.f32.mrf.mxu0
        %v1677 = vpop.f32.mrf.mxu0
        %v1678 = vadd.f32 0.0, %v1677
        %v1679 = vpop.f32.mrf.mxu0
        %1680 = vmatprep.mubr.bf16.mxu0 0
        %1681 = vmatmul.mubr.bf16.gmra.mxu0 %v1531
        %v1682 = vpop.f32.mrf.mxu0
        %v1683 = vadd.f32 0.0, %v1682
        %v1684 = vpop.f32.mrf.mxu0
        %v1685 = vpop.f32.mrf.mxu0
        %v1686 = vadd.f32 0.0, %v1685
        %v1687 = vpop.f32.mrf.mxu0
        %1688 = vmatprep.mubr.bf16.mxu0 0
        %1689 = vmatmul.mubr.bf16.gmra.mxu0 %v1534
        %v1690 = vpop.f32.mrf.mxu0
        %v1691 = vadd.f32 0.0, %v1690
        %v1692 = vpop.f32.mrf.mxu0
        %v1693 = vpop.f32.mrf.mxu0
        %v1694 = vadd.f32 0.0, %v1693
        %v1695 = vpop.f32.mrf.mxu0
        %1696 = vdwg.mxu0
        %v1697 = vadd.f32 %v1118, %v1571
        %v1698 = vadd.f32 %v1121, %v1574
        %v1699 = vadd.f32 %v1126, %v1579
        %v1700 = vadd.f32 %v1129, %v1582
        %v1701 = vadd.f32 %v1134, %v1587
        %v1702 = vadd.f32 %v1137, %v1590
        %v1703 = vadd.f32 %v1142, %v1595
        %v1704 = vadd.f32 %v1145, %v1598
        %v1705 = vadd.f32 %v1150, %v1603
        %v1706 = vadd.f32 %v1153, %v1606
        %v1707 = vadd.f32 %v1158, %v1611
        %v1708 = vadd.f32 %v1161, %v1614
        %v1709 = vadd.f32 %v1166, %v1619
        %v1710 = vadd.f32 %v1169, %v1622
        %v1711 = vadd.f32 %v1174, %v1627
        %v1712 = vadd.f32 %v1177, %v1630
        %v1713 = vadd.f32 %v1182, %v1635
        %v1714 = vadd.f32 %v1185, %v1638
        %v1715 = vadd.f32 %v1190, %v1643
        %v1716 = vadd.f32 %v1193, %v1646
        %v1717 = vadd.f32 %v1198, %v1651
        %v1718 = vadd.f32 %v1201, %v1654
        %v1719 = vadd.f32 %v1206, %v1659
        %v1720 = vadd.f32 %v1209, %v1662
        %v1721 = vadd.f32 %v1214, %v1667
        %v1722 = vadd.f32 %v1217, %v1670
        %v1723 = vadd.f32 %v1222, %v1675
        %v1724 = vadd.f32 %v1225, %v1678
        %v1725 = vadd.f32 %v1230, %v1683
        %v1726 = vadd.f32 %v1233, %v1686
        %v1727 = vadd.f32 %v1238, %v1691
        %v1728 = vadd.f32 %v1241, %v1694
        %s1729 = scalar_lea.vmem %s195, 12
        %v1730 = vld [vmem:[%s1729] sm:$0xf]
        %v1731 = vld [vmem:[%s1729 + $0x4] sm:$0xf]
        %v1732 = vld [vmem:[%s1729 + $0xc] sm:$0xf]
        %v1733 = vld [vmem:[%s1729 + $0x10] sm:$0xf]
        %v1734 = vld [vmem:[%s1729 + $0x18] sm:$0xf]
        %v1735 = vld [vmem:[%s1729 + $0x1c] sm:$0xf]
        %v1736 = vld [vmem:[%s1729 + $0x24] sm:$0xf]
        %v1737 = vld [vmem:[%s1729 + $0x28] sm:$0xf]
        %v1738 = vld [vmem:[%s1729 + $0x30] sm:$0xf]
        %v1739 = vld [vmem:[%s1729 + $0x34] sm:$0xf]
        %v1740 = vld [vmem:[%s1729 + $0x3c] sm:$0xf]
        %v1741 = vld [vmem:[%s1729 + $0x40] sm:$0xf]
        %v1742 = vld [vmem:[%s1729 + $0x48] sm:$0xf]
        %v1743 = vld [vmem:[%s1729 + $0x4c] sm:$0xf]
        %v1744 = vld [vmem:[%s1729 + $0x54] sm:$0xf]
        %v1745 = vld [vmem:[%s1729 + $0x58] sm:$0xf]
        %v1746 = vld [vmem:[%s1729 + $0x60] sm:$0xf]
        %v1747 = vld [vmem:[%s1729 + $0x64] sm:$0xf]
        %v1748 = vld [vmem:[%s1729 + $0x6c] sm:$0xf]
        %v1749 = vld [vmem:[%s1729 + $0x70] sm:$0xf]
        %v1750 = vld [vmem:[%s1729 + $0x78] sm:$0xf]
        %v1751 = vld [vmem:[%s1729 + $0x7c] sm:$0xf]
        %v1752 = vld [vmem:[%s1729 + $0x84] sm:$0xf]
        %v1753 = vld [vmem:[%s1729 + $0x88] sm:$0xf]
        %v1754 = vld [vmem:[%s1729 + $0x90] sm:$0xf]
        %v1755 = vld [vmem:[%s1729 + $0x94] sm:$0xf]
        %v1756 = vld [vmem:[%s1729 + $0x9c] sm:$0xf]
        %v1757 = vld [vmem:[%s1729 + $0xa0] sm:$0xf]
        %v1758 = vld [vmem:[%s1729 + $0xa8] sm:$0xf]
        %v1759 = vld [vmem:[%s1729 + $0xac] sm:$0xf]
        %v1760 = vld [vmem:[%s1729 + $0xb4] sm:$0xf]
        %v1761 = vld [vmem:[%s1729 + $0xb8] sm:$0xf]
        %s1762 = scalar_lea.vmem %s1, 96
        %v1763 = vld [vmem:[%s1762] sm:$0xf]
        %v1764 = vld [vmem:[%s1762 + $0x4] sm:$0xf]
        %v1765 = vld [vmem:[%s1762 + $0x8] sm:$0xf]
        %v1766 = vld [vmem:[%s1762 + $0xc] sm:$0xf]
        %v1767 = vld [vmem:[%s1762 + $0x10] sm:$0xf]
        %v1768 = vld [vmem:[%s1762 + $0x14] sm:$0xf]
        %v1769 = vld [vmem:[%s1762 + $0x18] sm:$0xf]
        %v1770 = vld [vmem:[%s1762 + $0x1c] sm:$0xf]
        %v1803 = vunpack.c.l.b16 %v1730
        %v1804 = vunpack.c.l.b16 %v1731
        %v1805 = vunpack.c.l.b16 %v1732
        %v1806 = vunpack.c.l.b16 %v1733
        %v1807 = vunpack.c.l.b16 %v1734
        %v1808 = vunpack.c.l.b16 %v1735
        %v1809 = vunpack.c.l.b16 %v1736
        %v1810 = vunpack.c.l.b16 %v1737
        %v1811 = vunpack.c.l.b16 %v1738
        %v1812 = vunpack.c.l.b16 %v1739
        %v1813 = vunpack.c.l.b16 %v1740
        %v1814 = vunpack.c.l.b16 %v1741
        %v1815 = vunpack.c.l.b16 %v1742
        %v1816 = vunpack.c.l.b16 %v1743
        %v1817 = vunpack.c.l.b16 %v1744
        %v1818 = vunpack.c.l.b16 %v1745
        %v1819 = vunpack.c.l.b16 %v1746
        %v1820 = vunpack.c.l.b16 %v1747
        %v1821 = vunpack.c.l.b16 %v1748
        %v1822 = vunpack.c.l.b16 %v1749
        %v1823 = vunpack.c.l.b16 %v1750
        %v1824 = vunpack.c.l.b16 %v1751
        %v1825 = vunpack.c.l.b16 %v1752
        %v1826 = vunpack.c.l.b16 %v1753
        %v1827 = vunpack.c.l.b16 %v1754
        %v1828 = vunpack.c.l.b16 %v1755
        %v1829 = vunpack.c.l.b16 %v1756
        %v1830 = vunpack.c.l.b16 %v1757
        %v1831 = vunpack.c.l.b16 %v1758
        %v1832 = vunpack.c.l.b16 %v1759
        %v1833 = vunpack.c.l.b16 %v1760
        %v1834 = vunpack.c.l.b16 %v1761
        %v1835 = vpack.c.b16 %v1804, %v1803
        %v1836 = vpack.c.b16 %v1806, %v1805
        %v1837 = vpack.c.b16 %v1808, %v1807
        %v1838 = vpack.c.b16 %v1810, %v1809
        %v1839 = vpack.c.b16 %v1812, %v1811
        %v1840 = vpack.c.b16 %v1814, %v1813
        %v1841 = vpack.c.b16 %v1816, %v1815
        %v1842 = vpack.c.b16 %v1818, %v1817
        %v1843 = vpack.c.b16 %v1820, %v1819
        %v1844 = vpack.c.b16 %v1822, %v1821
        %v1845 = vpack.c.b16 %v1824, %v1823
        %v1846 = vpack.c.b16 %v1826, %v1825
        %v1847 = vpack.c.b16 %v1828, %v1827
        %v1848 = vpack.c.b16 %v1830, %v1829
        %v1849 = vpack.c.b16 %v1832, %v1831
        %v1850 = vpack.c.b16 %v1834, %v1833
        %v1859 = vunpack.c.l.b16 %v1763
        %v1860 = vunpack.c.l.b16 %v1764
        %v1861 = vunpack.c.l.b16 %v1765
        %v1862 = vunpack.c.l.b16 %v1766
        %v1863 = vunpack.c.l.b16 %v1767
        %v1864 = vunpack.c.l.b16 %v1768
        %v1865 = vunpack.c.l.b16 %v1769
        %v1866 = vunpack.c.l.b16 %v1770
        %v1867 = vpack.c.b16 %v1860, %v1859
        %v1868 = vpack.c.b16 %v1862, %v1861
        %v1869 = vpack.c.b16 %v1864, %v1863
        %v1870 = vpack.c.b16 %v1866, %v1865
        %v1876 = vsel %vm721, %v1835, 0
        %v1879 = vsel %vm721, %v1836, 0
        %v1882 = vsel %vm721, %v1837, 0
        %v1885 = vsel %vm721, %v1838, 0
        %v1888 = vsel %vm721, %v1839, 0
        %v1891 = vsel %vm721, %v1840, 0
        %v1894 = vsel %vm721, %v1841, 0
        %v1897 = vsel %vm721, %v1842, 0
        %v1900 = vsel %vm721, %v1843, 0
        %v1903 = vsel %vm721, %v1844, 0
        %v1906 = vsel %vm721, %v1845, 0
        %v1909 = vsel %vm721, %v1846, 0
        %v1912 = vsel %vm721, %v1847, 0
        %v1915 = vsel %vm721, %v1848, 0
        %v1918 = vsel %vm721, %v1849, 0
        %v1921 = vsel %vm721, %v1850, 0
        %1923 = vmatprep.subr.bf16.mxu0 0
        %1924 = vmatpush1.bf16.msra.mxu0 0
        %1925 = vmatprep.subr.bf16.mxu0 0
        %1926 = vmatpush1.bf16.msra.mxu0 0
        %1927 = vmatprep.subr.bf16.mxu0 0
        %1928 = vmatpush1.bf16.msra.mxu0 0
        %1929 = vmatprep.subr.bf16.mxu0 0
        %1930 = vmatpush1.bf16.msra.mxu0 0
        %1931 = vmatprep.subr.bf16.mxu0 0
        %1932 = vmatpush1.bf16.msra.mxu0 %v1870
        %1933 = vmatprep.subr.bf16.mxu0 0
        %1934 = vmatpush1.bf16.msra.mxu0 %v1869
        %1935 = vmatprep.subr.bf16.mxu0 0
        %1936 = vmatpush1.bf16.msra.mxu0 %v1868
        %1937 = vmatprep.subr.bf16.mxu0 0
        %1938 = vmatpush1.bf16.msra.mxu0 %v1867
        %1939 = vmatprep.subr.bf16.mxu0 0
        %1940 = vmatpush2.bf16.msra.mxu0 0
        %1941 = vmatprep.subr.bf16.mxu0 0
        %1942 = vmatpush2.bf16.msra.mxu0 0
        %1943 = vmatprep.subr.bf16.mxu0 0
        %1944 = vmatpush2.bf16.msra.mxu0 0
        %1945 = vmatprep.subr.bf16.mxu0 0
        %1946 = vmatpush2.bf16.msra.mxu0 0
        %1947 = vmatprep.subr.bf16.mxu0 0
        %1948 = vmatpush2.bf16.msra.mxu0 0
        %1949 = vmatprep.subr.bf16.mxu0 0
        %1950 = vmatpush2.bf16.msra.mxu0 0
        %1951 = vmatprep.subr.bf16.mxu0 0
        %1952 = vmatpush2.bf16.msra.mxu0 0
        %1953 = vmatprep.subr.bf16.mxu0 0
        %1954 = vmatpush2.bf16.msra.mxu0 0
        %1955 = vmatprep.mubr.bf16.mxu0 0
        %1956 = vmatmul.mubr.bf16.gmra.mxu0 %v1876
        %v1957 = vpop.f32.mrf.mxu0
        %v1958 = vadd.f32 0.0, %v1957
        %v1959 = vpop.f32.mrf.mxu0
        %v1960 = vpop.f32.mrf.mxu0
        %v1961 = vadd.f32 0.0, %v1960
        %v1962 = vpop.f32.mrf.mxu0
        %1963 = vmatprep.mubr.bf16.mxu0 0
        %1964 = vmatmul.mubr.bf16.gmra.mxu0 %v1879
        %v1965 = vpop.f32.mrf.mxu0
        %v1966 = vadd.f32 0.0, %v1965
        %v1967 = vpop.f32.mrf.mxu0
        %v1968 = vpop.f32.mrf.mxu0
        %v1969 = vadd.f32 0.0, %v1968
        %v1970 = vpop.f32.mrf.mxu0
        %1971 = vmatprep.mubr.bf16.mxu0 0
        %1972 = vmatmul.mubr.bf16.gmra.mxu0 %v1882
        %v1973 = vpop.f32.mrf.mxu0
        %v1974 = vadd.f32 0.0, %v1973
        %v1975 = vpop.f32.mrf.mxu0
        %v1976 = vpop.f32.mrf.mxu0
        %v1977 = vadd.f32 0.0, %v1976
        %v1978 = vpop.f32.mrf.mxu0
        %1979 = vmatprep.mubr.bf16.mxu0 0
        %1980 = vmatmul.mubr.bf16.gmra.mxu0 %v1885
        %v1981 = vpop.f32.mrf.mxu0
        %v1982 = vadd.f32 0.0, %v1981
        %v1983 = vpop.f32.mrf.mxu0
        %v1984 = vpop.f32.mrf.mxu0
        %v1985 = vadd.f32 0.0, %v1984
        %v1986 = vpop.f32.mrf.mxu0
        %1987 = vmatprep.mubr.bf16.mxu0 0
        %1988 = vmatmul.mubr.bf16.gmra.mxu0 %v1888
        %v1989 = vpop.f32.mrf.mxu0
        %v1990 = vadd.f32 0.0, %v1989
        %v1991 = vpop.f32.mrf.mxu0
        %v1992 = vpop.f32.mrf.mxu0
        %v1993 = vadd.f32 0.0, %v1992
        %v1994 = vpop.f32.mrf.mxu0
        %1995 = vmatprep.mubr.bf16.mxu0 0
        %1996 = vmatmul.mubr.bf16.gmra.mxu0 %v1891
        %v1997 = vpop.f32.mrf.mxu0
        %v1998 = vadd.f32 0.0, %v1997
        %v1999 = vpop.f32.mrf.mxu0
        %v2000 = vpop.f32.mrf.mxu0
        %v2001 = vadd.f32 0.0, %v2000
        %v2002 = vpop.f32.mrf.mxu0
        %2003 = vmatprep.mubr.bf16.mxu0 0
        %2004 = vmatmul.mubr.bf16.gmra.mxu0 %v1894
        %v2005 = vpop.f32.mrf.mxu0
        %v2006 = vadd.f32 0.0, %v2005
        %v2007 = vpop.f32.mrf.mxu0
        %v2008 = vpop.f32.mrf.mxu0
        %v2009 = vadd.f32 0.0, %v2008
        %v2010 = vpop.f32.mrf.mxu0
        %2011 = vmatprep.mubr.bf16.mxu0 0
        %2012 = vmatmul.mubr.bf16.gmra.mxu0 %v1897
        %v2013 = vpop.f32.mrf.mxu0
        %v2014 = vadd.f32 0.0, %v2013
        %v2015 = vpop.f32.mrf.mxu0
        %v2016 = vpop.f32.mrf.mxu0
        %v2017 = vadd.f32 0.0, %v2016
        %v2018 = vpop.f32.mrf.mxu0
        %2019 = vmatprep.mubr.bf16.mxu0 0
        %2020 = vmatmul.mubr.bf16.gmra.mxu0 %v1900
        %v2021 = vpop.f32.mrf.mxu0
        %v2022 = vadd.f32 0.0, %v2021
        %v2023 = vpop.f32.mrf.mxu0
        %v2024 = vpop.f32.mrf.mxu0
        %v2025 = vadd.f32 0.0, %v2024
        %v2026 = vpop.f32.mrf.mxu0
        %2027 = vmatprep.mubr.bf16.mxu0 0
        %2028 = vmatmul.mubr.bf16.gmra.mxu0 %v1903
        %v2029 = vpop.f32.mrf.mxu0
        %v2030 = vadd.f32 0.0, %v2029
        %v2031 = vpop.f32.mrf.mxu0
        %v2032 = vpop.f32.mrf.mxu0
        %v2033 = vadd.f32 0.0, %v2032
        %v2034 = vpop.f32.mrf.mxu0
        %2035 = vmatprep.mubr.bf16.mxu0 0
        %2036 = vmatmul.mubr.bf16.gmra.mxu0 %v1906
        %v2037 = vpop.f32.mrf.mxu0
        %v2038 = vadd.f32 0.0, %v2037
        %v2039 = vpop.f32.mrf.mxu0
        %v2040 = vpop.f32.mrf.mxu0
        %v2041 = vadd.f32 0.0, %v2040
        %v2042 = vpop.f32.mrf.mxu0
        %2043 = vmatprep.mubr.bf16.mxu0 0
        %2044 = vmatmul.mubr.bf16.gmra.mxu0 %v1909
        %v2045 = vpop.f32.mrf.mxu0
        %v2046 = vadd.f32 0.0, %v2045
        %v2047 = vpop.f32.mrf.mxu0
        %v2048 = vpop.f32.mrf.mxu0
        %v2049 = vadd.f32 0.0, %v2048
        %v2050 = vpop.f32.mrf.mxu0
        %2051 = vmatprep.mubr.bf16.mxu0 0
        %2052 = vmatmul.mubr.bf16.gmra.mxu0 %v1912
        %v2053 = vpop.f32.mrf.mxu0
        %v2054 = vadd.f32 0.0, %v2053
        %v2055 = vpop.f32.mrf.mxu0
        %v2056 = vpop.f32.mrf.mxu0
        %v2057 = vadd.f32 0.0, %v2056
        %v2058 = vpop.f32.mrf.mxu0
        %2059 = vmatprep.mubr.bf16.mxu0 0
        %2060 = vmatmul.mubr.bf16.gmra.mxu0 %v1915
        %v2061 = vpop.f32.mrf.mxu0
        %v2062 = vadd.f32 0.0, %v2061
        %v2063 = vpop.f32.mrf.mxu0
        %v2064 = vpop.f32.mrf.mxu0
        %v2065 = vadd.f32 0.0, %v2064
        %v2066 = vpop.f32.mrf.mxu0
        %2067 = vmatprep.mubr.bf16.mxu0 0
        %2068 = vmatmul.mubr.bf16.gmra.mxu0 %v1918
        %v2069 = vpop.f32.mrf.mxu0
        %v2070 = vadd.f32 0.0, %v2069
        %v2071 = vpop.f32.mrf.mxu0
        %v2072 = vpop.f32.mrf.mxu0
        %v2073 = vadd.f32 0.0, %v2072
        %v2074 = vpop.f32.mrf.mxu0
        %2075 = vmatprep.mubr.bf16.mxu0 0
        %2076 = vmatmul.mubr.bf16.gmra.mxu0 %v1921
        %v2077 = vpop.f32.mrf.mxu0
        %v2078 = vadd.f32 0.0, %v2077
        %v2079 = vpop.f32.mrf.mxu0
        %v2080 = vpop.f32.mrf.mxu0
        %v2081 = vadd.f32 0.0, %v2080
        %v2082 = vpop.f32.mrf.mxu0
        %2083 = vdwg.mxu0
        %v2084 = vadd.f32 %v1697, %v1958
        %v2085 = vadd.f32 %v1698, %v1961
        %v2086 = vadd.f32 %v1699, %v1966
        %v2087 = vadd.f32 %v1700, %v1969
        %v2088 = vadd.f32 %v1701, %v1974
        %v2089 = vadd.f32 %v1702, %v1977
        %v2090 = vadd.f32 %v1703, %v1982
        %v2091 = vadd.f32 %v1704, %v1985
        %v2092 = vadd.f32 %v1705, %v1990
        %v2093 = vadd.f32 %v1706, %v1993
        %v2094 = vadd.f32 %v1707, %v1998
        %v2095 = vadd.f32 %v1708, %v2001
        %v2096 = vadd.f32 %v1709, %v2006
        %v2097 = vadd.f32 %v1710, %v2009
        %v2098 = vadd.f32 %v1711, %v2014
        %v2099 = vadd.f32 %v1712, %v2017
        %v2100 = vadd.f32 %v1713, %v2022
        %v2101 = vadd.f32 %v1714, %v2025
        %v2102 = vadd.f32 %v1715, %v2030
        %v2103 = vadd.f32 %v1716, %v2033
        %v2104 = vadd.f32 %v1717, %v2038
        %v2105 = vadd.f32 %v1718, %v2041
        %v2106 = vadd.f32 %v1719, %v2046
        %v2107 = vadd.f32 %v1720, %v2049
        %v2108 = vadd.f32 %v1721, %v2054
        %v2109 = vadd.f32 %v1722, %v2057
        %v2110 = vadd.f32 %v1723, %v2062
        %v2111 = vadd.f32 %v1724, %v2065
        %v2112 = vadd.f32 %v1725, %v2070
        %v2113 = vadd.f32 %v1726, %v2073
        %v2114 = vadd.f32 %v1727, %v2078
        %v2115 = vadd.f32 %v1728, %v2081
        %v2116 = vld [vmem:[%s1729] sm:$0xf]
        %v2117 = vld [vmem:[%s1729 + $0x4] sm:$0xf]
        %v2118 = vld [vmem:[%s1729 + $0x8] sm:$0x1]
        %v2119 = vld [vmem:[%s1729 + $0xc] sm:$0xf]
        %v2120 = vld [vmem:[%s1729 + $0x10] sm:$0xf]
        %v2121 = vld [vmem:[%s1729 + $0x14] sm:$0x1]
        %v2122 = vld [vmem:[%s1729 + $0x18] sm:$0xf]
        %v2123 = vld [vmem:[%s1729 + $0x1c] sm:$0xf]
        %v2124 = vld [vmem:[%s1729 + $0x20] sm:$0x1]
        %v2125 = vld [vmem:[%s1729 + $0x24] sm:$0xf]
        %v2126 = vld [vmem:[%s1729 + $0x28] sm:$0xf]
        %v2127 = vld [vmem:[%s1729 + $0x2c] sm:$0x1]
        %v2128 = vld [vmem:[%s1729 + $0x30] sm:$0xf]
        %v2129 = vld [vmem:[%s1729 + $0x34] sm:$0xf]
        %v2130 = vld [vmem:[%s1729 + $0x38] sm:$0x1]
        %v2131 = vld [vmem:[%s1729 + $0x3c] sm:$0xf]
        %v2132 = vld [vmem:[%s1729 + $0x40] sm:$0xf]
        %v2133 = vld [vmem:[%s1729 + $0x44] sm:$0x1]
        %v2134 = vld [vmem:[%s1729 + $0x48] sm:$0xf]
        %v2135 = vld [vmem:[%s1729 + $0x4c] sm:$0xf]
        %v2136 = vld [vmem:[%s1729 + $0x50] sm:$0x1]
        %v2137 = vld [vmem:[%s1729 + $0x54] sm:$0xf]
        %v2138 = vld [vmem:[%s1729 + $0x58] sm:$0xf]
        %v2139 = vld [vmem:[%s1729 + $0x5c] sm:$0x1]
        %v2140 = vld [vmem:[%s1729 + $0x60] sm:$0xf]
        %v2141 = vld [vmem:[%s1729 + $0x64] sm:$0xf]
        %v2142 = vld [vmem:[%s1729 + $0x68] sm:$0x1]
        %v2143 = vld [vmem:[%s1729 + $0x6c] sm:$0xf]
        %v2144 = vld [vmem:[%s1729 + $0x70] sm:$0xf]
        %v2145 = vld [vmem:[%s1729 + $0x74] sm:$0x1]
        %v2146 = vld [vmem:[%s1729 + $0x78] sm:$0xf]
        %v2147 = vld [vmem:[%s1729 + $0x7c] sm:$0xf]
        %v2148 = vld [vmem:[%s1729 + $0x80] sm:$0x1]
        %v2149 = vld [vmem:[%s1729 + $0x84] sm:$0xf]
        %v2150 = vld [vmem:[%s1729 + $0x88] sm:$0xf]
        %v2151 = vld [vmem:[%s1729 + $0x8c] sm:$0x1]
        %v2152 = vld [vmem:[%s1729 + $0x90] sm:$0xf]
        %v2153 = vld [vmem:[%s1729 + $0x94] sm:$0xf]
        %v2154 = vld [vmem:[%s1729 + $0x98] sm:$0x1]
        %v2155 = vld [vmem:[%s1729 + $0x9c] sm:$0xf]
        %v2156 = vld [vmem:[%s1729 + $0xa0] sm:$0xf]
        %v2157 = vld [vmem:[%s1729 + $0xa4] sm:$0x1]
        %v2158 = vld [vmem:[%s1729 + $0xa8] sm:$0xf]
        %v2159 = vld [vmem:[%s1729 + $0xac] sm:$0xf]
        %v2160 = vld [vmem:[%s1729 + $0xb0] sm:$0x1]
        %v2161 = vld [vmem:[%s1729 + $0xb4] sm:$0xf]
        %v2162 = vld [vmem:[%s1729 + $0xb8] sm:$0xf]
        %v2163 = vld [vmem:[%s1729 + $0xbc] sm:$0x1]
        %v2165 = vshrl.u32 %v2116, 16
        %v2167 = vrot.slane %v2165, 4
        %v2168 = vshll.u32 %v2116, 16
        %v2170 = vrot.slane %v2168, 5
        %v2171 = vor.u32 %v2167, %v2170
        %v2172 = vrot.slane %v2171, 4
        %v2174 = vshll.u32 %v2117, 16
        %v2176 = vrot.slane %v2174, 5
        %v2177 = vsel %vm255, %v2172, %v2176
        %v2178 = vshrl.u32 %v2117, 16
        %v2180 = vrot.slane %v2178, 4
        %v2181 = vor.u32 %v2180, %v2176
        %v2182 = vrot.slane %v2181, 4
        %v2184 = vshll.u32 %v2118, 16
        %v2186 = vrot.slane %v2184, 5
        %v2187 = vsel %vm255, %v2182, %v2186
        %v2189 = vshrl.u32 %v2119, 16
        %v2191 = vrot.slane %v2189, 4
        %v2192 = vshll.u32 %v2119, 16
        %v2194 = vrot.slane %v2192, 5
        %v2195 = vor.u32 %v2191, %v2194
        %v2196 = vrot.slane %v2195, 4
        %v2198 = vshll.u32 %v2120, 16
        %v2200 = vrot.slane %v2198, 5
        %v2201 = vsel %vm255, %v2196, %v2200
        %v2202 = vshrl.u32 %v2120, 16
        %v2204 = vrot.slane %v2202, 4
        %v2205 = vor.u32 %v2204, %v2200
        %v2206 = vrot.slane %v2205, 4
        %v2208 = vshll.u32 %v2121, 16
        %v2210 = vrot.slane %v2208, 5
        %v2211 = vsel %vm255, %v2206, %v2210
        %v2213 = vshrl.u32 %v2122, 16
        %v2215 = vrot.slane %v2213, 4
        %v2216 = vshll.u32 %v2122, 16
        %v2218 = vrot.slane %v2216, 5
        %v2219 = vor.u32 %v2215, %v2218
        %v2220 = vrot.slane %v2219, 4
        %v2222 = vshll.u32 %v2123, 16
        %v2224 = vrot.slane %v2222, 5
        %v2225 = vsel %vm255, %v2220, %v2224
        %v2226 = vshrl.u32 %v2123, 16
        %v2228 = vrot.slane %v2226, 4
        %v2229 = vor.u32 %v2228, %v2224
        %v2230 = vrot.slane %v2229, 4
        %v2232 = vshll.u32 %v2124, 16
        %v2234 = vrot.slane %v2232, 5
        %v2235 = vsel %vm255, %v2230, %v2234
        %v2237 = vshrl.u32 %v2125, 16
        %v2239 = vrot.slane %v2237, 4
        %v2240 = vshll.u32 %v2125, 16
        %v2242 = vrot.slane %v2240, 5
        %v2243 = vor.u32 %v2239, %v2242
        %v2244 = vrot.slane %v2243, 4
        %v2246 = vshll.u32 %v2126, 16
        %v2248 = vrot.slane %v2246, 5
        %v2249 = vsel %vm255, %v2244, %v2248
        %v2250 = vshrl.u32 %v2126, 16
        %v2252 = vrot.slane %v2250, 4
        %v2253 = vor.u32 %v2252, %v2248
        %v2254 = vrot.slane %v2253, 4
        %v2256 = vshll.u32 %v2127, 16
        %v2258 = vrot.slane %v2256, 5
        %v2259 = vsel %vm255, %v2254, %v2258
        %v2261 = vshrl.u32 %v2128, 16
        %v2263 = vrot.slane %v2261, 4
        %v2264 = vshll.u32 %v2128, 16
        %v2266 = vrot.slane %v2264, 5
        %v2267 = vor.u32 %v2263, %v2266
        %v2268 = vrot.slane %v2267, 4
        %v2270 = vshll.u32 %v2129, 16
        %v2272 = vrot.slane %v2270, 5
        %v2273 = vsel %vm255, %v2268, %v2272
        %v2274 = vshrl.u32 %v2129, 16
        %v2276 = vrot.slane %v2274, 4
        %v2277 = vor.u32 %v2276, %v2272
        %v2278 = vrot.slane %v2277, 4
        %v2280 = vshll.u32 %v2130, 16
        %v2282 = vrot.slane %v2280, 5
        %v2283 = vsel %vm255, %v2278, %v2282
        %v2285 = vshrl.u32 %v2131, 16
        %v2287 = vrot.slane %v2285, 4
        %v2288 = vshll.u32 %v2131, 16
        %v2290 = vrot.slane %v2288, 5
        %v2291 = vor.u32 %v2287, %v2290
        %v2292 = vrot.slane %v2291, 4
        %v2294 = vshll.u32 %v2132, 16
        %v2296 = vrot.slane %v2294, 5
        %v2297 = vsel %vm255, %v2292, %v2296
        %v2298 = vshrl.u32 %v2132, 16
        %v2300 = vrot.slane %v2298, 4
        %v2301 = vor.u32 %v2300, %v2296
        %v2302 = vrot.slane %v2301, 4
        %v2304 = vshll.u32 %v2133, 16
        %v2306 = vrot.slane %v2304, 5
        %v2307 = vsel %vm255, %v2302, %v2306
        %v2309 = vshrl.u32 %v2134, 16
        %v2311 = vrot.slane %v2309, 4
        %v2312 = vshll.u32 %v2134, 16
        %v2314 = vrot.slane %v2312, 5
        %v2315 = vor.u32 %v2311, %v2314
        %v2316 = vrot.slane %v2315, 4
        %v2318 = vshll.u32 %v2135, 16
        %v2320 = vrot.slane %v2318, 5
        %v2321 = vsel %vm255, %v2316, %v2320
        %v2322 = vshrl.u32 %v2135, 16
        %v2324 = vrot.slane %v2322, 4
        %v2325 = vor.u32 %v2324, %v2320
        %v2326 = vrot.slane %v2325, 4
        %v2328 = vshll.u32 %v2136, 16
        %v2330 = vrot.slane %v2328, 5
        %v2331 = vsel %vm255, %v2326, %v2330
        %v2333 = vshrl.u32 %v2137, 16
        %v2335 = vrot.slane %v2333, 4
        %v2336 = vshll.u32 %v2137, 16
        %v2338 = vrot.slane %v2336, 5
        %v2339 = vor.u32 %v2335, %v2338
        %v2340 = vrot.slane %v2339, 4
        %v2342 = vshll.u32 %v2138, 16
        %v2344 = vrot.slane %v2342, 5
        %v2345 = vsel %vm255, %v2340, %v2344
        %v2346 = vshrl.u32 %v2138, 16
        %v2348 = vrot.slane %v2346, 4
        %v2349 = vor.u32 %v2348, %v2344
        %v2350 = vrot.slane %v2349, 4
        %v2352 = vshll.u32 %v2139, 16
        %v2354 = vrot.slane %v2352, 5
        %v2355 = vsel %vm255, %v2350, %v2354
        %v2357 = vshrl.u32 %v2140, 16
        %v2359 = vrot.slane %v2357, 4
        %v2360 = vshll.u32 %v2140, 16
        %v2362 = vrot.slane %v2360, 5
        %v2363 = vor.u32 %v2359, %v2362
        %v2364 = vrot.slane %v2363, 4
        %v2366 = vshll.u32 %v2141, 16
        %v2368 = vrot.slane %v2366, 5
        %v2369 = vsel %vm255, %v2364, %v2368
        %v2370 = vshrl.u32 %v2141, 16
        %v2372 = vrot.slane %v2370, 4
        %v2373 = vor.u32 %v2372, %v2368
        %v2374 = vrot.slane %v2373, 4
        %v2376 = vshll.u32 %v2142, 16
        %v2378 = vrot.slane %v2376, 5
        %v2379 = vsel %vm255, %v2374, %v2378
        %v2381 = vshrl.u32 %v2143, 16
        %v2383 = vrot.slane %v2381, 4
        %v2384 = vshll.u32 %v2143, 16
        %v2386 = vrot.slane %v2384, 5
        %v2387 = vor.u32 %v2383, %v2386
        %v2388 = vrot.slane %v2387, 4
        %v2390 = vshll.u32 %v2144, 16
        %v2392 = vrot.slane %v2390, 5
        %v2393 = vsel %vm255, %v2388, %v2392
        %v2394 = vshrl.u32 %v2144, 16
        %v2396 = vrot.slane %v2394, 4
        %v2397 = vor.u32 %v2396, %v2392
        %v2398 = vrot.slane %v2397, 4
        %v2400 = vshll.u32 %v2145, 16
        %v2402 = vrot.slane %v2400, 5
        %v2403 = vsel %vm255, %v2398, %v2402
        %v2405 = vshrl.u32 %v2146, 16
        %v2407 = vrot.slane %v2405, 4
        %v2408 = vshll.u32 %v2146, 16
        %v2410 = vrot.slane %v2408, 5
        %v2411 = vor.u32 %v2407, %v2410
        %v2412 = vrot.slane %v2411, 4
        %v2414 = vshll.u32 %v2147, 16
        %v2416 = vrot.slane %v2414, 5
        %v2417 = vsel %vm255, %v2412, %v2416
        %v2418 = vshrl.u32 %v2147, 16
        %v2420 = vrot.slane %v2418, 4
        %v2421 = vor.u32 %v2420, %v2416
        %v2422 = vrot.slane %v2421, 4
        %v2424 = vshll.u32 %v2148, 16
        %v2426 = vrot.slane %v2424, 5
        %v2427 = vsel %vm255, %v2422, %v2426
        %v2429 = vshrl.u32 %v2149, 16
        %v2431 = vrot.slane %v2429, 4
        %v2432 = vshll.u32 %v2149, 16
        %v2434 = vrot.slane %v2432, 5
        %v2435 = vor.u32 %v2431, %v2434
        %v2436 = vrot.slane %v2435, 4
        %v2438 = vshll.u32 %v2150, 16
        %v2440 = vrot.slane %v2438, 5
        %v2441 = vsel %vm255, %v2436, %v2440
        %v2442 = vshrl.u32 %v2150, 16
        %v2444 = vrot.slane %v2442, 4
        %v2445 = vor.u32 %v2444, %v2440
        %v2446 = vrot.slane %v2445, 4
        %v2448 = vshll.u32 %v2151, 16
        %v2450 = vrot.slane %v2448, 5
        %v2451 = vsel %vm255, %v2446, %v2450
        %v2453 = vshrl.u32 %v2152, 16
        %v2455 = vrot.slane %v2453, 4
        %v2456 = vshll.u32 %v2152, 16
        %v2458 = vrot.slane %v2456, 5
        %v2459 = vor.u32 %v2455, %v2458
        %v2460 = vrot.slane %v2459, 4
        %v2462 = vshll.u32 %v2153, 16
        %v2464 = vrot.slane %v2462, 5
        %v2465 = vsel %vm255, %v2460, %v2464
        %v2466 = vshrl.u32 %v2153, 16
        %v2468 = vrot.slane %v2466, 4
        %v2469 = vor.u32 %v2468, %v2464
        %v2470 = vrot.slane %v2469, 4
        %v2472 = vshll.u32 %v2154, 16
        %v2474 = vrot.slane %v2472, 5
        %v2475 = vsel %vm255, %v2470, %v2474
        %v2477 = vshrl.u32 %v2155, 16
        %v2479 = vrot.slane %v2477, 4
        %v2480 = vshll.u32 %v2155, 16
        %v2482 = vrot.slane %v2480, 5
        %v2483 = vor.u32 %v2479, %v2482
        %v2484 = vrot.slane %v2483, 4
        %v2486 = vshll.u32 %v2156, 16
        %v2488 = vrot.slane %v2486, 5
        %v2489 = vsel %vm255, %v2484, %v2488
        %v2490 = vshrl.u32 %v2156, 16
        %v2492 = vrot.slane %v2490, 4
        %v2493 = vor.u32 %v2492, %v2488
        %v2494 = vrot.slane %v2493, 4
        %v2496 = vshll.u32 %v2157, 16
        %v2498 = vrot.slane %v2496, 5
        %v2499 = vsel %vm255, %v2494, %v2498
        %v2501 = vshrl.u32 %v2158, 16
        %v2503 = vrot.slane %v2501, 4
        %v2504 = vshll.u32 %v2158, 16
        %v2506 = vrot.slane %v2504, 5
        %v2507 = vor.u32 %v2503, %v2506
        %v2508 = vrot.slane %v2507, 4
        %v2510 = vshll.u32 %v2159, 16
        %v2512 = vrot.slane %v2510, 5
        %v2513 = vsel %vm255, %v2508, %v2512
        %v2514 = vshrl.u32 %v2159, 16
        %v2516 = vrot.slane %v2514, 4
        %v2517 = vor.u32 %v2516, %v2512
        %v2518 = vrot.slane %v2517, 4
        %v2520 = vshll.u32 %v2160, 16
        %v2522 = vrot.slane %v2520, 5
        %v2523 = vsel %vm255, %v2518, %v2522
        %v2525 = vshrl.u32 %v2161, 16
        %v2527 = vrot.slane %v2525, 4
        %v2528 = vshll.u32 %v2161, 16
        %v2530 = vrot.slane %v2528, 5
        %v2531 = vor.u32 %v2527, %v2530
        %v2532 = vrot.slane %v2531, 4
        %v2534 = vshll.u32 %v2162, 16
        %v2536 = vrot.slane %v2534, 5
        %v2537 = vsel %vm255, %v2532, %v2536
        %v2538 = vshrl.u32 %v2162, 16
        %v2540 = vrot.slane %v2538, 4
        %v2541 = vor.u32 %v2540, %v2536
        %v2542 = vrot.slane %v2541, 4
        %v2544 = vshll.u32 %v2163, 16
        %v2546 = vrot.slane %v2544, 5
        %v2547 = vsel %vm255, %v2542, %v2546
        %s2548 = scalar_lea.vmem %s1, 128
        %v2549 = vld [vmem:[%s2548] sm:$0xf]
        %v2550 = vld [vmem:[%s2548 + $0x4] sm:$0xf]
        %v2551 = vld [vmem:[%s2548 + $0x8] sm:$0xf]
        %v2552 = vld [vmem:[%s2548 + $0xc] sm:$0xf]
        %v2553 = vld [vmem:[%s2548 + $0x10] sm:$0xf]
        %v2554 = vld [vmem:[%s2548 + $0x14] sm:$0xf]
        %v2555 = vld [vmem:[%s2548 + $0x18] sm:$0xf]
        %v2556 = vld [vmem:[%s2548 + $0x1c] sm:$0xf]
        %v2557 = vunpack.c.l.b16 %v2177
        %v2558 = vunpack.c.l.b16 %v2187
        %v2559 = vunpack.c.l.b16 %v2201
        %v2560 = vunpack.c.l.b16 %v2211
        %v2561 = vunpack.c.l.b16 %v2225
        %v2562 = vunpack.c.l.b16 %v2235
        %v2563 = vunpack.c.l.b16 %v2249
        %v2564 = vunpack.c.l.b16 %v2259
        %v2565 = vunpack.c.l.b16 %v2273
        %v2566 = vunpack.c.l.b16 %v2283
        %v2567 = vunpack.c.l.b16 %v2297
        %v2568 = vunpack.c.l.b16 %v2307
        %v2569 = vunpack.c.l.b16 %v2321
        %v2570 = vunpack.c.l.b16 %v2331
        %v2571 = vunpack.c.l.b16 %v2345
        %v2572 = vunpack.c.l.b16 %v2355
        %v2573 = vunpack.c.l.b16 %v2369
        %v2574 = vunpack.c.l.b16 %v2379
        %v2575 = vunpack.c.l.b16 %v2393
        %v2576 = vunpack.c.l.b16 %v2403
        %v2577 = vunpack.c.l.b16 %v2417
        %v2578 = vunpack.c.l.b16 %v2427
        %v2579 = vunpack.c.l.b16 %v2441
        %v2580 = vunpack.c.l.b16 %v2451
        %v2581 = vunpack.c.l.b16 %v2465
        %v2582 = vunpack.c.l.b16 %v2475
        %v2583 = vunpack.c.l.b16 %v2489
        %v2584 = vunpack.c.l.b16 %v2499
        %v2585 = vunpack.c.l.b16 %v2513
        %v2586 = vunpack.c.l.b16 %v2523
        %v2587 = vunpack.c.l.b16 %v2537
        %v2588 = vunpack.c.l.b16 %v2547
        %v2589 = vpack.c.b16 %v2558, %v2557
        %v2590 = vpack.c.b16 %v2560, %v2559
        %v2591 = vpack.c.b16 %v2562, %v2561
        %v2592 = vpack.c.b16 %v2564, %v2563
        %v2593 = vpack.c.b16 %v2566, %v2565
        %v2594 = vpack.c.b16 %v2568, %v2567
        %v2595 = vpack.c.b16 %v2570, %v2569
        %v2596 = vpack.c.b16 %v2572, %v2571
        %v2597 = vpack.c.b16 %v2574, %v2573
        %v2598 = vpack.c.b16 %v2576, %v2575
        %v2599 = vpack.c.b16 %v2578, %v2577
        %v2600 = vpack.c.b16 %v2580, %v2579
        %v2601 = vpack.c.b16 %v2582, %v2581
        %v2602 = vpack.c.b16 %v2584, %v2583
        %v2603 = vpack.c.b16 %v2586, %v2585
        %v2604 = vpack.c.b16 %v2588, %v2587
        %v2613 = vunpack.c.l.b16 %v2549
        %v2614 = vunpack.c.l.b16 %v2550
        %v2615 = vunpack.c.l.b16 %v2551
        %v2616 = vunpack.c.l.b16 %v2552
        %v2617 = vunpack.c.l.b16 %v2553
        %v2618 = vunpack.c.l.b16 %v2554
        %v2619 = vunpack.c.l.b16 %v2555
        %v2620 = vunpack.c.l.b16 %v2556
        %v2621 = vpack.c.b16 %v2614, %v2613
        %v2622 = vpack.c.b16 %v2616, %v2615
        %v2623 = vpack.c.b16 %v2618, %v2617
        %v2624 = vpack.c.b16 %v2620, %v2619
        %v2630 = vsel %vm721, %v2589, 0
        %v2633 = vsel %vm721, %v2590, 0
        %v2636 = vsel %vm721, %v2591, 0
        %v2639 = vsel %vm721, %v2592, 0
        %v2642 = vsel %vm721, %v2593, 0
        %v2645 = vsel %vm721, %v2594, 0
        %v2648 = vsel %vm721, %v2595, 0
        %v2651 = vsel %vm721, %v2596, 0
        %v2654 = vsel %vm721, %v2597, 0
        %v2657 = vsel %vm721, %v2598, 0
        %v2660 = vsel %vm721, %v2599, 0
        %v2663 = vsel %vm721, %v2600, 0
        %v2666 = vsel %vm721, %v2601, 0
        %v2669 = vsel %vm721, %v2602, 0
        %v2672 = vsel %vm721, %v2603, 0
        %v2675 = vsel %vm721, %v2604, 0
        %2677 = vmatprep.subr.bf16.mxu0 0
        %2678 = vmatpush1.bf16.msra.mxu0 0
        %2679 = vmatprep.subr.bf16.mxu0 0
        %2680 = vmatpush1.bf16.msra.mxu0 0
        %2681 = vmatprep.subr.bf16.mxu0 0
        %2682 = vmatpush1.bf16.msra.mxu0 0
        %2683 = vmatprep.subr.bf16.mxu0 0
        %2684 = vmatpush1.bf16.msra.mxu0 0
        %2685 = vmatprep.subr.bf16.mxu0 0
        %2686 = vmatpush1.bf16.msra.mxu0 %v2624
        %2687 = vmatprep.subr.bf16.mxu0 0
        %2688 = vmatpush1.bf16.msra.mxu0 %v2623
        %2689 = vmatprep.subr.bf16.mxu0 0
        %2690 = vmatpush1.bf16.msra.mxu0 %v2622
        %2691 = vmatprep.subr.bf16.mxu0 0
        %2692 = vmatpush1.bf16.msra.mxu0 %v2621
        %2693 = vmatprep.subr.bf16.mxu0 0
        %2694 = vmatpush2.bf16.msra.mxu0 0
        %2695 = vmatprep.subr.bf16.mxu0 0
        %2696 = vmatpush2.bf16.msra.mxu0 0
        %2697 = vmatprep.subr.bf16.mxu0 0
        %2698 = vmatpush2.bf16.msra.mxu0 0
        %2699 = vmatprep.subr.bf16.mxu0 0
        %2700 = vmatpush2.bf16.msra.mxu0 0
        %2701 = vmatprep.subr.bf16.mxu0 0
        %2702 = vmatpush2.bf16.msra.mxu0 0
        %2703 = vmatprep.subr.bf16.mxu0 0
        %2704 = vmatpush2.bf16.msra.mxu0 0
        %2705 = vmatprep.subr.bf16.mxu0 0
        %2706 = vmatpush2.bf16.msra.mxu0 0
        %2707 = vmatprep.subr.bf16.mxu0 0
        %2708 = vmatpush2.bf16.msra.mxu0 0
        %2709 = vmatprep.mubr.bf16.mxu0 0
        %2710 = vmatmul.mubr.bf16.gmra.mxu0 %v2630
        %v2711 = vpop.f32.mrf.mxu0
        %v2712 = vadd.f32 0.0, %v2711
        %v2713 = vpop.f32.mrf.mxu0
        %v2714 = vpop.f32.mrf.mxu0
        %v2715 = vadd.f32 0.0, %v2714
        %v2716 = vpop.f32.mrf.mxu0
        %2717 = vmatprep.mubr.bf16.mxu0 0
        %2718 = vmatmul.mubr.bf16.gmra.mxu0 %v2633
        %v2719 = vpop.f32.mrf.mxu0
        %v2720 = vadd.f32 0.0, %v2719
        %v2721 = vpop.f32.mrf.mxu0
        %v2722 = vpop.f32.mrf.mxu0
        %v2723 = vadd.f32 0.0, %v2722
        %v2724 = vpop.f32.mrf.mxu0
        %2725 = vmatprep.mubr.bf16.mxu0 0
        %2726 = vmatmul.mubr.bf16.gmra.mxu0 %v2636
        %v2727 = vpop.f32.mrf.mxu0
        %v2728 = vadd.f32 0.0, %v2727
        %v2729 = vpop.f32.mrf.mxu0
        %v2730 = vpop.f32.mrf.mxu0
        %v2731 = vadd.f32 0.0, %v2730
        %v2732 = vpop.f32.mrf.mxu0
        %2733 = vmatprep.mubr.bf16.mxu0 0
        %2734 = vmatmul.mubr.bf16.gmra.mxu0 %v2639
        %v2735 = vpop.f32.mrf.mxu0
        %v2736 = vadd.f32 0.0, %v2735
        %v2737 = vpop.f32.mrf.mxu0
        %v2738 = vpop.f32.mrf.mxu0
        %v2739 = vadd.f32 0.0, %v2738
        %v2740 = vpop.f32.mrf.mxu0
        %2741 = vmatprep.mubr.bf16.mxu0 0
        %2742 = vmatmul.mubr.bf16.gmra.mxu0 %v2642
        %v2743 = vpop.f32.mrf.mxu0
        %v2744 = vadd.f32 0.0, %v2743
        %v2745 = vpop.f32.mrf.mxu0
        %v2746 = vpop.f32.mrf.mxu0
        %v2747 = vadd.f32 0.0, %v2746
        %v2748 = vpop.f32.mrf.mxu0
        %2749 = vmatprep.mubr.bf16.mxu0 0
        %2750 = vmatmul.mubr.bf16.gmra.mxu0 %v2645
        %v2751 = vpop.f32.mrf.mxu0
        %v2752 = vadd.f32 0.0, %v2751
        %v2753 = vpop.f32.mrf.mxu0
        %v2754 = vpop.f32.mrf.mxu0
        %v2755 = vadd.f32 0.0, %v2754
        %v2756 = vpop.f32.mrf.mxu0
        %2757 = vmatprep.mubr.bf16.mxu0 0
        %2758 = vmatmul.mubr.bf16.gmra.mxu0 %v2648
        %v2759 = vpop.f32.mrf.mxu0
        %v2760 = vadd.f32 0.0, %v2759
        %v2761 = vpop.f32.mrf.mxu0
        %v2762 = vpop.f32.mrf.mxu0
        %v2763 = vadd.f32 0.0, %v2762
        %v2764 = vpop.f32.mrf.mxu0
        %2765 = vmatprep.mubr.bf16.mxu0 0
        %2766 = vmatmul.mubr.bf16.gmra.mxu0 %v2651
        %v2767 = vpop.f32.mrf.mxu0
        %v2768 = vadd.f32 0.0, %v2767
        %v2769 = vpop.f32.mrf.mxu0
        %v2770 = vpop.f32.mrf.mxu0
        %v2771 = vadd.f32 0.0, %v2770
        %v2772 = vpop.f32.mrf.mxu0
        %2773 = vmatprep.mubr.bf16.mxu0 0
        %2774 = vmatmul.mubr.bf16.gmra.mxu0 %v2654
        %v2775 = vpop.f32.mrf.mxu0
        %v2776 = vadd.f32 0.0, %v2775
        %v2777 = vpop.f32.mrf.mxu0
        %v2778 = vpop.f32.mrf.mxu0
        %v2779 = vadd.f32 0.0, %v2778
        %v2780 = vpop.f32.mrf.mxu0
        %2781 = vmatprep.mubr.bf16.mxu0 0
        %2782 = vmatmul.mubr.bf16.gmra.mxu0 %v2657
        %v2783 = vpop.f32.mrf.mxu0
        %v2784 = vadd.f32 0.0, %v2783
        %v2785 = vpop.f32.mrf.mxu0
        %v2786 = vpop.f32.mrf.mxu0
        %v2787 = vadd.f32 0.0, %v2786
        %v2788 = vpop.f32.mrf.mxu0
        %2789 = vmatprep.mubr.bf16.mxu0 0
        %2790 = vmatmul.mubr.bf16.gmra.mxu0 %v2660
        %v2791 = vpop.f32.mrf.mxu0
        %v2792 = vadd.f32 0.0, %v2791
        %v2793 = vpop.f32.mrf.mxu0
        %v2794 = vpop.f32.mrf.mxu0
        %v2795 = vadd.f32 0.0, %v2794
        %v2796 = vpop.f32.mrf.mxu0
        %2797 = vmatprep.mubr.bf16.mxu0 0
        %2798 = vmatmul.mubr.bf16.gmra.mxu0 %v2663
        %v2799 = vpop.f32.mrf.mxu0
        %v2800 = vadd.f32 0.0, %v2799
        %v2801 = vpop.f32.mrf.mxu0
        %v2802 = vpop.f32.mrf.mxu0
        %v2803 = vadd.f32 0.0, %v2802
        %v2804 = vpop.f32.mrf.mxu0
        %2805 = vmatprep.mubr.bf16.mxu0 0
        %2806 = vmatmul.mubr.bf16.gmra.mxu0 %v2666
        %v2807 = vpop.f32.mrf.mxu0
        %v2808 = vadd.f32 0.0, %v2807
        %v2809 = vpop.f32.mrf.mxu0
        %v2810 = vpop.f32.mrf.mxu0
        %v2811 = vadd.f32 0.0, %v2810
        %v2812 = vpop.f32.mrf.mxu0
        %2813 = vmatprep.mubr.bf16.mxu0 0
        %2814 = vmatmul.mubr.bf16.gmra.mxu0 %v2669
        %v2815 = vpop.f32.mrf.mxu0
        %v2816 = vadd.f32 0.0, %v2815
        %v2817 = vpop.f32.mrf.mxu0
        %v2818 = vpop.f32.mrf.mxu0
        %v2819 = vadd.f32 0.0, %v2818
        %v2820 = vpop.f32.mrf.mxu0
        %2821 = vmatprep.mubr.bf16.mxu0 0
        %2822 = vmatmul.mubr.bf16.gmra.mxu0 %v2672
        %v2823 = vpop.f32.mrf.mxu0
        %v2824 = vadd.f32 0.0, %v2823
        %v2825 = vpop.f32.mrf.mxu0
        %v2826 = vpop.f32.mrf.mxu0
        %v2827 = vadd.f32 0.0, %v2826
        %v2828 = vpop.f32.mrf.mxu0
        %2829 = vmatprep.mubr.bf16.mxu0 0
        %2830 = vmatmul.mubr.bf16.gmra.mxu0 %v2675
        %v2831 = vpop.f32.mrf.mxu0
        %v2832 = vadd.f32 0.0, %v2831
        %v2833 = vpop.f32.mrf.mxu0
        %v2834 = vpop.f32.mrf.mxu0
        %v2835 = vadd.f32 0.0, %v2834
        %v2836 = vpop.f32.mrf.mxu0
        %2837 = vdwg.mxu0
        %v2838 = vadd.f32 %v2084, %v2712
        %v2839 = vadd.f32 %v2085, %v2715
        %v2840 = vadd.f32 %v2086, %v2720
        %v2841 = vadd.f32 %v2087, %v2723
        %v2842 = vadd.f32 %v2088, %v2728
        %v2843 = vadd.f32 %v2089, %v2731
        %v2844 = vadd.f32 %v2090, %v2736
        %v2845 = vadd.f32 %v2091, %v2739
        %v2846 = vadd.f32 %v2092, %v2744
        %v2847 = vadd.f32 %v2093, %v2747
        %v2848 = vadd.f32 %v2094, %v2752
        %v2849 = vadd.f32 %v2095, %v2755
        %v2850 = vadd.f32 %v2096, %v2760
        %v2851 = vadd.f32 %v2097, %v2763
        %v2852 = vadd.f32 %v2098, %v2768
        %v2853 = vadd.f32 %v2099, %v2771
        %v2854 = vadd.f32 %v2100, %v2776
        %v2855 = vadd.f32 %v2101, %v2779
        %v2856 = vadd.f32 %v2102, %v2784
        %v2857 = vadd.f32 %v2103, %v2787
        %v2858 = vadd.f32 %v2104, %v2792
        %v2859 = vadd.f32 %v2105, %v2795
        %v2860 = vadd.f32 %v2106, %v2800
        %v2861 = vadd.f32 %v2107, %v2803
        %v2862 = vadd.f32 %v2108, %v2808
        %v2863 = vadd.f32 %v2109, %v2811
        %v2864 = vadd.f32 %v2110, %v2816
        %v2865 = vadd.f32 %v2111, %v2819
        %v2866 = vadd.f32 %v2112, %v2824
        %v2867 = vadd.f32 %v2113, %v2827
        %v2868 = vadd.f32 %v2114, %v2832
        %v2869 = vadd.f32 %v2115, %v2835
        %v2870 = vld [vmem:[%s1729] sm:$0xe]
        %v2871 = vld [vmem:[%s1729 + $0xc] sm:$0xe]
        %v2872 = vld [vmem:[%s1729 + $0x18] sm:$0xe]
        %v2873 = vld [vmem:[%s1729 + $0x24] sm:$0xe]
        %v2874 = vld [vmem:[%s1729 + $0x30] sm:$0xe]
        %v2875 = vld [vmem:[%s1729 + $0x3c] sm:$0xe]
        %v2876 = vld [vmem:[%s1729 + $0x48] sm:$0xe]
        %v2877 = vld [vmem:[%s1729 + $0x54] sm:$0xe]
        %v2878 = vld [vmem:[%s1729 + $0x60] sm:$0xe]
        %v2879 = vld [vmem:[%s1729 + $0x6c] sm:$0xe]
        %v2880 = vld [vmem:[%s1729 + $0x78] sm:$0xe]
        %v2881 = vld [vmem:[%s1729 + $0x84] sm:$0xe]
        %v2882 = vld [vmem:[%s1729 + $0x90] sm:$0xe]
        %v2883 = vld [vmem:[%s1729 + $0x9c] sm:$0xe]
        %v2884 = vld [vmem:[%s1729 + $0xa8] sm:$0xe]
        %v2885 = vld [vmem:[%s1729 + $0xb4] sm:$0xe]
        %v2934 = vrot.slane %v2870, 5
        %v2935 = vrot.slane %v2934, 4
        %v2936 = vrot.slane %v2117, 5
        %v2937 = vsel %vm1294, %v2935, %v2936
        %v2938 = vrot.slane %v2936, 4
        %v2939 = vrot.slane %v2118, 5
        %v2940 = vsel %vm1294, %v2938, %v2939
        %v2941 = vrot.slane %v2871, 5
        %v2942 = vrot.slane %v2941, 4
        %v2943 = vrot.slane %v2120, 5
        %v2944 = vsel %vm1294, %v2942, %v2943
        %v2945 = vrot.slane %v2943, 4
        %v2946 = vrot.slane %v2121, 5
        %v2947 = vsel %vm1294, %v2945, %v2946
        %v2948 = vrot.slane %v2872, 5
        %v2949 = vrot.slane %v2948, 4
        %v2950 = vrot.slane %v2123, 5
        %v2951 = vsel %vm1294, %v2949, %v2950
        %v2952 = vrot.slane %v2950, 4
        %v2953 = vrot.slane %v2124, 5
        %v2954 = vsel %vm1294, %v2952, %v2953
        %v2955 = vrot.slane %v2873, 5
        %v2956 = vrot.slane %v2955, 4
        %v2957 = vrot.slane %v2126, 5
        %v2958 = vsel %vm1294, %v2956, %v2957
        %v2959 = vrot.slane %v2957, 4
        %v2960 = vrot.slane %v2127, 5
        %v2961 = vsel %vm1294, %v2959, %v2960
        %v2962 = vrot.slane %v2874, 5
        %v2963 = vrot.slane %v2962, 4
        %v2964 = vrot.slane %v2129, 5
        %v2965 = vsel %vm1294, %v2963, %v2964
        %v2966 = vrot.slane %v2964, 4
        %v2967 = vrot.slane %v2130, 5
        %v2968 = vsel %vm1294, %v2966, %v2967
        %v2969 = vrot.slane %v2875, 5
        %v2970 = vrot.slane %v2969, 4
        %v2971 = vrot.slane %v2132, 5
        %v2972 = vsel %vm1294, %v2970, %v2971
        %v2973 = vrot.slane %v2971, 4
        %v2974 = vrot.slane %v2133, 5
        %v2975 = vsel %vm1294, %v2973, %v2974
        %v2976 = vrot.slane %v2876, 5
        %v2977 = vrot.slane %v2976, 4
        %v2978 = vrot.slane %v2135, 5
        %v2979 = vsel %vm1294, %v2977, %v2978
        %v2980 = vrot.slane %v2978, 4
        %v2981 = vrot.slane %v2136, 5
        %v2982 = vsel %vm1294, %v2980, %v2981
        %v2983 = vrot.slane %v2877, 5
        %v2984 = vrot.slane %v2983, 4
        %v2985 = vrot.slane %v2138, 5
        %v2986 = vsel %vm1294, %v2984, %v2985
        %v2987 = vrot.slane %v2985, 4
        %v2988 = vrot.slane %v2139, 5
        %v2989 = vsel %vm1294, %v2987, %v2988
        %v2990 = vrot.slane %v2878, 5
        %v2991 = vrot.slane %v2990, 4
        %v2992 = vrot.slane %v2141, 5
        %v2993 = vsel %vm1294, %v2991, %v2992
        %v2994 = vrot.slane %v2992, 4
        %v2995 = vrot.slane %v2142, 5
        %v2996 = vsel %vm1294, %v2994, %v2995
        %v2997 = vrot.slane %v2879, 5
        %v2998 = vrot.slane %v2997, 4
        %v2999 = vrot.slane %v2144, 5
        %v3000 = vsel %vm1294, %v2998, %v2999
        %v3001 = vrot.slane %v2999, 4
        %v3002 = vrot.slane %v2145, 5
        %v3003 = vsel %vm1294, %v3001, %v3002
        %v3004 = vrot.slane %v2880, 5
        %v3005 = vrot.slane %v3004, 4
        %v3006 = vrot.slane %v2147, 5
        %v3007 = vsel %vm1294, %v3005, %v3006
        %v3008 = vrot.slane %v3006, 4
        %v3009 = vrot.slane %v2148, 5
        %v3010 = vsel %vm1294, %v3008, %v3009
        %v3011 = vrot.slane %v2881, 5
        %v3012 = vrot.slane %v3011, 4
        %v3013 = vrot.slane %v2150, 5
        %v3014 = vsel %vm1294, %v3012, %v3013
        %v3015 = vrot.slane %v3013, 4
        %v3016 = vrot.slane %v2151, 5
        %v3017 = vsel %vm1294, %v3015, %v3016
        %v3018 = vrot.slane %v2882, 5
        %v3019 = vrot.slane %v3018, 4
        %v3020 = vrot.slane %v2153, 5
        %v3021 = vsel %vm1294, %v3019, %v3020
        %v3022 = vrot.slane %v3020, 4
        %v3023 = vrot.slane %v2154, 5
        %v3024 = vsel %vm1294, %v3022, %v3023
        %v3025 = vrot.slane %v2883, 5
        %v3026 = vrot.slane %v3025, 4
        %v3027 = vrot.slane %v2156, 5
        %v3028 = vsel %vm1294, %v3026, %v3027
        %v3029 = vrot.slane %v3027, 4
        %v3030 = vrot.slane %v2157, 5
        %v3031 = vsel %vm1294, %v3029, %v3030
        %v3032 = vrot.slane %v2884, 5
        %v3033 = vrot.slane %v3032, 4
        %v3034 = vrot.slane %v2159, 5
        %v3035 = vsel %vm1294, %v3033, %v3034
        %v3036 = vrot.slane %v3034, 4
        %v3037 = vrot.slane %v2160, 5
        %v3038 = vsel %vm1294, %v3036, %v3037
        %v3039 = vrot.slane %v2885, 5
        %v3040 = vrot.slane %v3039, 4
        %v3041 = vrot.slane %v2162, 5
        %v3042 = vsel %vm1294, %v3040, %v3041
        %v3043 = vrot.slane %v3041, 4
        %v3044 = vrot.slane %v2163, 5
        %v3045 = vsel %vm1294, %v3043, %v3044
        %s3046 = scalar_lea.vmem %s1, 160
        %v3047 = vld [vmem:[%s3046] sm:$0xf]
        %v3048 = vld [vmem:[%s3046 + $0x4] sm:$0xf]
        %v3049 = vld [vmem:[%s3046 + $0x8] sm:$0xf]
        %v3050 = vld [vmem:[%s3046 + $0xc] sm:$0xf]
        %v3051 = vld [vmem:[%s3046 + $0x10] sm:$0xf]
        %v3052 = vld [vmem:[%s3046 + $0x14] sm:$0xf]
        %v3053 = vld [vmem:[%s3046 + $0x18] sm:$0xf]
        %v3054 = vld [vmem:[%s3046 + $0x1c] sm:$0xf]
        %v3055 = vunpack.c.l.b16 %v2937
        %v3056 = vunpack.c.l.b16 %v2940
        %v3057 = vunpack.c.l.b16 %v2944
        %v3058 = vunpack.c.l.b16 %v2947
        %v3059 = vunpack.c.l.b16 %v2951
        %v3060 = vunpack.c.l.b16 %v2954
        %v3061 = vunpack.c.l.b16 %v2958
        %v3062 = vunpack.c.l.b16 %v2961
        %v3063 = vunpack.c.l.b16 %v2965
        %v3064 = vunpack.c.l.b16 %v2968
        %v3065 = vunpack.c.l.b16 %v2972
        %v3066 = vunpack.c.l.b16 %v2975
        %v3067 = vunpack.c.l.b16 %v2979
        %v3068 = vunpack.c.l.b16 %v2982
        %v3069 = vunpack.c.l.b16 %v2986
        %v3070 = vunpack.c.l.b16 %v2989
        %v3071 = vunpack.c.l.b16 %v2993
        %v3072 = vunpack.c.l.b16 %v2996
        %v3073 = vunpack.c.l.b16 %v3000
        %v3074 = vunpack.c.l.b16 %v3003
        %v3075 = vunpack.c.l.b16 %v3007
        %v3076 = vunpack.c.l.b16 %v3010
        %v3077 = vunpack.c.l.b16 %v3014
        %v3078 = vunpack.c.l.b16 %v3017
        %v3079 = vunpack.c.l.b16 %v3021
        %v3080 = vunpack.c.l.b16 %v3024
        %v3081 = vunpack.c.l.b16 %v3028
        %v3082 = vunpack.c.l.b16 %v3031
        %v3083 = vunpack.c.l.b16 %v3035
        %v3084 = vunpack.c.l.b16 %v3038
        %v3085 = vunpack.c.l.b16 %v3042
        %v3086 = vunpack.c.l.b16 %v3045
        %v3087 = vpack.c.b16 %v3056, %v3055
        %v3088 = vpack.c.b16 %v3058, %v3057
        %v3089 = vpack.c.b16 %v3060, %v3059
        %v3090 = vpack.c.b16 %v3062, %v3061
        %v3091 = vpack.c.b16 %v3064, %v3063
        %v3092 = vpack.c.b16 %v3066, %v3065
        %v3093 = vpack.c.b16 %v3068, %v3067
        %v3094 = vpack.c.b16 %v3070, %v3069
        %v3095 = vpack.c.b16 %v3072, %v3071
        %v3096 = vpack.c.b16 %v3074, %v3073
        %v3097 = vpack.c.b16 %v3076, %v3075
        %v3098 = vpack.c.b16 %v3078, %v3077
        %v3099 = vpack.c.b16 %v3080, %v3079
        %v3100 = vpack.c.b16 %v3082, %v3081
        %v3101 = vpack.c.b16 %v3084, %v3083
        %v3102 = vpack.c.b16 %v3086, %v3085
        %v3111 = vunpack.c.l.b16 %v3047
        %v3112 = vunpack.c.l.b16 %v3048
        %v3113 = vunpack.c.l.b16 %v3049
        %v3114 = vunpack.c.l.b16 %v3050
        %v3115 = vunpack.c.l.b16 %v3051
        %v3116 = vunpack.c.l.b16 %v3052
        %v3117 = vunpack.c.l.b16 %v3053
        %v3118 = vunpack.c.l.b16 %v3054
        %v3119 = vpack.c.b16 %v3112, %v3111
        %v3120 = vpack.c.b16 %v3114, %v3113
        %v3121 = vpack.c.b16 %v3116, %v3115
        %v3122 = vpack.c.b16 %v3118, %v3117
        %v3128 = vsel %vm721, %v3087, 0
        %v3131 = vsel %vm721, %v3088, 0
        %v3134 = vsel %vm721, %v3089, 0
        %v3137 = vsel %vm721, %v3090, 0
        %v3140 = vsel %vm721, %v3091, 0
        %v3143 = vsel %vm721, %v3092, 0
        %v3146 = vsel %vm721, %v3093, 0
        %v3149 = vsel %vm721, %v3094, 0
        %v3152 = vsel %vm721, %v3095, 0
        %v3155 = vsel %vm721, %v3096, 0
        %v3158 = vsel %vm721, %v3097, 0
        %v3161 = vsel %vm721, %v3098, 0
        %v3164 = vsel %vm721, %v3099, 0
        %v3167 = vsel %vm721, %v3100, 0
        %v3170 = vsel %vm721, %v3101, 0
        %v3173 = vsel %vm721, %v3102, 0
        %3175 = vmatprep.subr.bf16.mxu0 0
        %3176 = vmatpush1.bf16.msra.mxu0 0
        %3177 = vmatprep.subr.bf16.mxu0 0
        %3178 = vmatpush1.bf16.msra.mxu0 0
        %3179 = vmatprep.subr.bf16.mxu0 0
        %3180 = vmatpush1.bf16.msra.mxu0 0
        %3181 = vmatprep.subr.bf16.mxu0 0
        %3182 = vmatpush1.bf16.msra.mxu0 0
        %3183 = vmatprep.subr.bf16.mxu0 0
        %3184 = vmatpush1.bf16.msra.mxu0 %v3122
        %3185 = vmatprep.subr.bf16.mxu0 0
        %3186 = vmatpush1.bf16.msra.mxu0 %v3121
        %3187 = vmatprep.subr.bf16.mxu0 0
        %3188 = vmatpush1.bf16.msra.mxu0 %v3120
        %3189 = vmatprep.subr.bf16.mxu0 0
        %3190 = vmatpush1.bf16.msra.mxu0 %v3119
        %3191 = vmatprep.subr.bf16.mxu0 0
        %3192 = vmatpush2.bf16.msra.mxu0 0
        %3193 = vmatprep.subr.bf16.mxu0 0
        %3194 = vmatpush2.bf16.msra.mxu0 0
        %3195 = vmatprep.subr.bf16.mxu0 0
        %3196 = vmatpush2.bf16.msra.mxu0 0
        %3197 = vmatprep.subr.bf16.mxu0 0
        %3198 = vmatpush2.bf16.msra.mxu0 0
        %3199 = vmatprep.subr.bf16.mxu0 0
        %3200 = vmatpush2.bf16.msra.mxu0 0
        %3201 = vmatprep.subr.bf16.mxu0 0
        %3202 = vmatpush2.bf16.msra.mxu0 0
        %3203 = vmatprep.subr.bf16.mxu0 0
        %3204 = vmatpush2.bf16.msra.mxu0 0
        %3205 = vmatprep.subr.bf16.mxu0 0
        %3206 = vmatpush2.bf16.msra.mxu0 0
        %3207 = vmatprep.mubr.bf16.mxu0 0
        %3208 = vmatmul.mubr.bf16.gmra.mxu0 %v3128
        %v3209 = vpop.f32.mrf.mxu0
        %v3210 = vadd.f32 0.0, %v3209
        %v3211 = vpop.f32.mrf.mxu0
        %v3212 = vpop.f32.mrf.mxu0
        %v3213 = vadd.f32 0.0, %v3212
        %v3214 = vpop.f32.mrf.mxu0
        %3215 = vmatprep.mubr.bf16.mxu0 0
        %3216 = vmatmul.mubr.bf16.gmra.mxu0 %v3131
        %v3217 = vpop.f32.mrf.mxu0
        %v3218 = vadd.f32 0.0, %v3217
        %v3219 = vpop.f32.mrf.mxu0
        %v3220 = vpop.f32.mrf.mxu0
        %v3221 = vadd.f32 0.0, %v3220
        %v3222 = vpop.f32.mrf.mxu0
        %3223 = vmatprep.mubr.bf16.mxu0 0
        %3224 = vmatmul.mubr.bf16.gmra.mxu0 %v3134
        %v3225 = vpop.f32.mrf.mxu0
        %v3226 = vadd.f32 0.0, %v3225
        %v3227 = vpop.f32.mrf.mxu0
        %v3228 = vpop.f32.mrf.mxu0
        %v3229 = vadd.f32 0.0, %v3228
        %v3230 = vpop.f32.mrf.mxu0
        %3231 = vmatprep.mubr.bf16.mxu0 0
        %3232 = vmatmul.mubr.bf16.gmra.mxu0 %v3137
        %v3233 = vpop.f32.mrf.mxu0
        %v3234 = vadd.f32 0.0, %v3233
        %v3235 = vpop.f32.mrf.mxu0
        %v3236 = vpop.f32.mrf.mxu0
        %v3237 = vadd.f32 0.0, %v3236
        %v3238 = vpop.f32.mrf.mxu0
        %3239 = vmatprep.mubr.bf16.mxu0 0
        %3240 = vmatmul.mubr.bf16.gmra.mxu0 %v3140
        %v3241 = vpop.f32.mrf.mxu0
        %v3242 = vadd.f32 0.0, %v3241
        %v3243 = vpop.f32.mrf.mxu0
        %v3244 = vpop.f32.mrf.mxu0
        %v3245 = vadd.f32 0.0, %v3244
        %v3246 = vpop.f32.mrf.mxu0
        %3247 = vmatprep.mubr.bf16.mxu0 0
        %3248 = vmatmul.mubr.bf16.gmra.mxu0 %v3143
        %v3249 = vpop.f32.mrf.mxu0
        %v3250 = vadd.f32 0.0, %v3249
        %v3251 = vpop.f32.mrf.mxu0
        %v3252 = vpop.f32.mrf.mxu0
        %v3253 = vadd.f32 0.0, %v3252
        %v3254 = vpop.f32.mrf.mxu0
        %3255 = vmatprep.mubr.bf16.mxu0 0
        %3256 = vmatmul.mubr.bf16.gmra.mxu0 %v3146
        %v3257 = vpop.f32.mrf.mxu0
        %v3258 = vadd.f32 0.0, %v3257
        %v3259 = vpop.f32.mrf.mxu0
        %v3260 = vpop.f32.mrf.mxu0
        %v3261 = vadd.f32 0.0, %v3260
        %v3262 = vpop.f32.mrf.mxu0
        %3263 = vmatprep.mubr.bf16.mxu0 0
        %3264 = vmatmul.mubr.bf16.gmra.mxu0 %v3149
        %v3265 = vpop.f32.mrf.mxu0
        %v3266 = vadd.f32 0.0, %v3265
        %v3267 = vpop.f32.mrf.mxu0
        %v3268 = vpop.f32.mrf.mxu0
        %v3269 = vadd.f32 0.0, %v3268
        %v3270 = vpop.f32.mrf.mxu0
        %3271 = vmatprep.mubr.bf16.mxu0 0
        %3272 = vmatmul.mubr.bf16.gmra.mxu0 %v3152
        %v3273 = vpop.f32.mrf.mxu0
        %v3274 = vadd.f32 0.0, %v3273
        %v3275 = vpop.f32.mrf.mxu0
        %v3276 = vpop.f32.mrf.mxu0
        %v3277 = vadd.f32 0.0, %v3276
        %v3278 = vpop.f32.mrf.mxu0
        %3279 = vmatprep.mubr.bf16.mxu0 0
        %3280 = vmatmul.mubr.bf16.gmra.mxu0 %v3155
        %v3281 = vpop.f32.mrf.mxu0
        %v3282 = vadd.f32 0.0, %v3281
        %v3283 = vpop.f32.mrf.mxu0
        %v3284 = vpop.f32.mrf.mxu0
        %v3285 = vadd.f32 0.0, %v3284
        %v3286 = vpop.f32.mrf.mxu0
        %3287 = vmatprep.mubr.bf16.mxu0 0
        %3288 = vmatmul.mubr.bf16.gmra.mxu0 %v3158
        %v3289 = vpop.f32.mrf.mxu0
        %v3290 = vadd.f32 0.0, %v3289
        %v3291 = vpop.f32.mrf.mxu0
        %v3292 = vpop.f32.mrf.mxu0
        %v3293 = vadd.f32 0.0, %v3292
        %v3294 = vpop.f32.mrf.mxu0
        %3295 = vmatprep.mubr.bf16.mxu0 0
        %3296 = vmatmul.mubr.bf16.gmra.mxu0 %v3161
        %v3297 = vpop.f32.mrf.mxu0
        %v3298 = vadd.f32 0.0, %v3297
        %v3299 = vpop.f32.mrf.mxu0
        %v3300 = vpop.f32.mrf.mxu0
        %v3301 = vadd.f32 0.0, %v3300
        %v3302 = vpop.f32.mrf.mxu0
        %3303 = vmatprep.mubr.bf16.mxu0 0
        %3304 = vmatmul.mubr.bf16.gmra.mxu0 %v3164
        %v3305 = vpop.f32.mrf.mxu0
        %v3306 = vadd.f32 0.0, %v3305
        %v3307 = vpop.f32.mrf.mxu0
        %v3308 = vpop.f32.mrf.mxu0
        %v3309 = vadd.f32 0.0, %v3308
        %v3310 = vpop.f32.mrf.mxu0
        %3311 = vmatprep.mubr.bf16.mxu0 0
        %3312 = vmatmul.mubr.bf16.gmra.mxu0 %v3167
        %v3313 = vpop.f32.mrf.mxu0
        %v3314 = vadd.f32 0.0, %v3313
        %v3315 = vpop.f32.mrf.mxu0
        %v3316 = vpop.f32.mrf.mxu0
        %v3317 = vadd.f32 0.0, %v3316
        %v3318 = vpop.f32.mrf.mxu0
        %3319 = vmatprep.mubr.bf16.mxu0 0
        %3320 = vmatmul.mubr.bf16.gmra.mxu0 %v3170
        %v3321 = vpop.f32.mrf.mxu0
        %v3322 = vadd.f32 0.0, %v3321
        %v3323 = vpop.f32.mrf.mxu0
        %v3324 = vpop.f32.mrf.mxu0
        %v3325 = vadd.f32 0.0, %v3324
        %v3326 = vpop.f32.mrf.mxu0
        %3327 = vmatprep.mubr.bf16.mxu0 0
        %3328 = vmatmul.mubr.bf16.gmra.mxu0 %v3173
        %v3329 = vpop.f32.mrf.mxu0
        %v3330 = vadd.f32 0.0, %v3329
        %v3331 = vpop.f32.mrf.mxu0
        %v3332 = vpop.f32.mrf.mxu0
        %v3333 = vadd.f32 0.0, %v3332
        %v3334 = vpop.f32.mrf.mxu0
        %3335 = vdwg.mxu0
        %v3336 = vadd.f32 %v2838, %v3210
        %v3337 = vadd.f32 %v2839, %v3213
        %v3338 = vadd.f32 %v2840, %v3218
        %v3339 = vadd.f32 %v2841, %v3221
        %v3340 = vadd.f32 %v2842, %v3226
        %v3341 = vadd.f32 %v2843, %v3229
        %v3342 = vadd.f32 %v2844, %v3234
        %v3343 = vadd.f32 %v2845, %v3237
        %v3344 = vadd.f32 %v2846, %v3242
        %v3345 = vadd.f32 %v2847, %v3245
        %v3346 = vadd.f32 %v2848, %v3250
        %v3347 = vadd.f32 %v2849, %v3253
        %v3348 = vadd.f32 %v2850, %v3258
        %v3349 = vadd.f32 %v2851, %v3261
        %v3350 = vadd.f32 %v2852, %v3266
        %v3351 = vadd.f32 %v2853, %v3269
        %v3352 = vadd.f32 %v2854, %v3274
        %v3353 = vadd.f32 %v2855, %v3277
        %v3354 = vadd.f32 %v2856, %v3282
        %v3355 = vadd.f32 %v2857, %v3285
        %v3356 = vadd.f32 %v2858, %v3290
        %v3357 = vadd.f32 %v2859, %v3293
        %v3358 = vadd.f32 %v2860, %v3298
        %v3359 = vadd.f32 %v2861, %v3301
        %v3360 = vadd.f32 %v2862, %v3306
        %v3361 = vadd.f32 %v2863, %v3309
        %v3362 = vadd.f32 %v2864, %v3314
        %v3363 = vadd.f32 %v2865, %v3317
        %v3364 = vadd.f32 %v2866, %v3322
        %v3365 = vadd.f32 %v2867, %v3325
        %v3366 = vadd.f32 %v2868, %v3330
        %v3367 = vadd.f32 %v2869, %v3333
        %s3368 = scalar_lea.vmem %s195, 24
        %v3369 = vld [vmem:[%s3368] sm:$0xf]
        %v3370 = vld [vmem:[%s3368 + $0x4] sm:$0xf]
        %v3371 = vld [vmem:[%s3368 + $0xc] sm:$0xf]
        %v3372 = vld [vmem:[%s3368 + $0x10] sm:$0xf]
        %v3373 = vld [vmem:[%s3368 + $0x18] sm:$0xf]
        %v3374 = vld [vmem:[%s3368 + $0x1c] sm:$0xf]
        %v3375 = vld [vmem:[%s3368 + $0x24] sm:$0xf]
        %v3376 = vld [vmem:[%s3368 + $0x28] sm:$0xf]
        %v3377 = vld [vmem:[%s3368 + $0x30] sm:$0xf]
        %v3378 = vld [vmem:[%s3368 + $0x34] sm:$0xf]
        %v3379 = vld [vmem:[%s3368 + $0x3c] sm:$0xf]
        %v3380 = vld [vmem:[%s3368 + $0x40] sm:$0xf]
        %v3381 = vld [vmem:[%s3368 + $0x48] sm:$0xf]
        %v3382 = vld [vmem:[%s3368 + $0x4c] sm:$0xf]
        %v3383 = vld [vmem:[%s3368 + $0x54] sm:$0xf]
        %v3384 = vld [vmem:[%s3368 + $0x58] sm:$0xf]
        %v3385 = vld [vmem:[%s3368 + $0x60] sm:$0xf]
        %v3386 = vld [vmem:[%s3368 + $0x64] sm:$0xf]
        %v3387 = vld [vmem:[%s3368 + $0x6c] sm:$0xf]
        %v3388 = vld [vmem:[%s3368 + $0x70] sm:$0xf]
        %v3389 = vld [vmem:[%s3368 + $0x78] sm:$0xf]
        %v3390 = vld [vmem:[%s3368 + $0x7c] sm:$0xf]
        %v3391 = vld [vmem:[%s3368 + $0x84] sm:$0xf]
        %v3392 = vld [vmem:[%s3368 + $0x88] sm:$0xf]
        %v3393 = vld [vmem:[%s3368 + $0x90] sm:$0xf]
        %v3394 = vld [vmem:[%s3368 + $0x94] sm:$0xf]
        %v3395 = vld [vmem:[%s3368 + $0x9c] sm:$0xf]
        %v3396 = vld [vmem:[%s3368 + $0xa0] sm:$0xf]
        %v3397 = vld [vmem:[%s3368 + $0xa8] sm:$0xf]
        %v3398 = vld [vmem:[%s3368 + $0xac] sm:$0xf]
        %v3399 = vld [vmem:[%s3368 + $0xb4] sm:$0xf]
        %v3400 = vld [vmem:[%s3368 + $0xb8] sm:$0xf]
        %s3401 = scalar_lea.vmem %s1, 192
        %v3402 = vld [vmem:[%s3401] sm:$0xf]
        %v3403 = vld [vmem:[%s3401 + $0x4] sm:$0xf]
        %v3404 = vld [vmem:[%s3401 + $0x8] sm:$0xf]
        %v3405 = vld [vmem:[%s3401 + $0xc] sm:$0xf]
        %v3406 = vld [vmem:[%s3401 + $0x10] sm:$0xf]
        %v3407 = vld [vmem:[%s3401 + $0x14] sm:$0xf]
        %v3408 = vld [vmem:[%s3401 + $0x18] sm:$0xf]
        %v3409 = vld [vmem:[%s3401 + $0x1c] sm:$0xf]
        %v3442 = vunpack.c.l.b16 %v3369
        %v3443 = vunpack.c.l.b16 %v3370
        %v3444 = vunpack.c.l.b16 %v3371
        %v3445 = vunpack.c.l.b16 %v3372
        %v3446 = vunpack.c.l.b16 %v3373
        %v3447 = vunpack.c.l.b16 %v3374
        %v3448 = vunpack.c.l.b16 %v3375
        %v3449 = vunpack.c.l.b16 %v3376
        %v3450 = vunpack.c.l.b16 %v3377
        %v3451 = vunpack.c.l.b16 %v3378
        %v3452 = vunpack.c.l.b16 %v3379
        %v3453 = vunpack.c.l.b16 %v3380
        %v3454 = vunpack.c.l.b16 %v3381
        %v3455 = vunpack.c.l.b16 %v3382
        %v3456 = vunpack.c.l.b16 %v3383
        %v3457 = vunpack.c.l.b16 %v3384
        %v3458 = vunpack.c.l.b16 %v3385
        %v3459 = vunpack.c.l.b16 %v3386
        %v3460 = vunpack.c.l.b16 %v3387
        %v3461 = vunpack.c.l.b16 %v3388
        %v3462 = vunpack.c.l.b16 %v3389
        %v3463 = vunpack.c.l.b16 %v3390
        %v3464 = vunpack.c.l.b16 %v3391
        %v3465 = vunpack.c.l.b16 %v3392
        %v3466 = vunpack.c.l.b16 %v3393
        %v3467 = vunpack.c.l.b16 %v3394
        %v3468 = vunpack.c.l.b16 %v3395
        %v3469 = vunpack.c.l.b16 %v3396
        %v3470 = vunpack.c.l.b16 %v3397
        %v3471 = vunpack.c.l.b16 %v3398
        %v3472 = vunpack.c.l.b16 %v3399
        %v3473 = vunpack.c.l.b16 %v3400
        %v3474 = vpack.c.b16 %v3443, %v3442
        %v3475 = vpack.c.b16 %v3445, %v3444
        %v3476 = vpack.c.b16 %v3447, %v3446
        %v3477 = vpack.c.b16 %v3449, %v3448
        %v3478 = vpack.c.b16 %v3451, %v3450
        %v3479 = vpack.c.b16 %v3453, %v3452
        %v3480 = vpack.c.b16 %v3455, %v3454
        %v3481 = vpack.c.b16 %v3457, %v3456
        %v3482 = vpack.c.b16 %v3459, %v3458
        %v3483 = vpack.c.b16 %v3461, %v3460
        %v3484 = vpack.c.b16 %v3463, %v3462
        %v3485 = vpack.c.b16 %v3465, %v3464
        %v3486 = vpack.c.b16 %v3467, %v3466
        %v3487 = vpack.c.b16 %v3469, %v3468
        %v3488 = vpack.c.b16 %v3471, %v3470
        %v3489 = vpack.c.b16 %v3473, %v3472
        %v3498 = vunpack.c.l.b16 %v3402
        %v3499 = vunpack.c.l.b16 %v3403
        %v3500 = vunpack.c.l.b16 %v3404
        %v3501 = vunpack.c.l.b16 %v3405
        %v3502 = vunpack.c.l.b16 %v3406
        %v3503 = vunpack.c.l.b16 %v3407
        %v3504 = vunpack.c.l.b16 %v3408
        %v3505 = vunpack.c.l.b16 %v3409
        %v3506 = vpack.c.b16 %v3499, %v3498
        %v3507 = vpack.c.b16 %v3501, %v3500
        %v3508 = vpack.c.b16 %v3503, %v3502
        %v3509 = vpack.c.b16 %v3505, %v3504
        %v3515 = vsel %vm721, %v3474, 0
        %v3518 = vsel %vm721, %v3475, 0
        %v3521 = vsel %vm721, %v3476, 0
        %v3524 = vsel %vm721, %v3477, 0
        %v3527 = vsel %vm721, %v3478, 0
        %v3530 = vsel %vm721, %v3479, 0
        %v3533 = vsel %vm721, %v3480, 0
        %v3536 = vsel %vm721, %v3481, 0
        %v3539 = vsel %vm721, %v3482, 0
        %v3542 = vsel %vm721, %v3483, 0
        %v3545 = vsel %vm721, %v3484, 0
        %v3548 = vsel %vm721, %v3485, 0
        %v3551 = vsel %vm721, %v3486, 0
        %v3554 = vsel %vm721, %v3487, 0
        %v3557 = vsel %vm721, %v3488, 0
        %v3560 = vsel %vm721, %v3489, 0
        %3562 = vmatprep.subr.bf16.mxu0 0
        %3563 = vmatpush1.bf16.msra.mxu0 0
        %3564 = vmatprep.subr.bf16.mxu0 0
        %3565 = vmatpush1.bf16.msra.mxu0 0
        %3566 = vmatprep.subr.bf16.mxu0 0
        %3567 = vmatpush1.bf16.msra.mxu0 0
        %3568 = vmatprep.subr.bf16.mxu0 0
        %3569 = vmatpush1.bf16.msra.mxu0 0
        %3570 = vmatprep.subr.bf16.mxu0 0
        %3571 = vmatpush1.bf16.msra.mxu0 %v3509
        %3572 = vmatprep.subr.bf16.mxu0 0
        %3573 = vmatpush1.bf16.msra.mxu0 %v3508
        %3574 = vmatprep.subr.bf16.mxu0 0
        %3575 = vmatpush1.bf16.msra.mxu0 %v3507
        %3576 = vmatprep.subr.bf16.mxu0 0
        %3577 = vmatpush1.bf16.msra.mxu0 %v3506
        %3578 = vmatprep.subr.bf16.mxu0 0
        %3579 = vmatpush2.bf16.msra.mxu0 0
        %3580 = vmatprep.subr.bf16.mxu0 0
        %3581 = vmatpush2.bf16.msra.mxu0 0
        %3582 = vmatprep.subr.bf16.mxu0 0
        %3583 = vmatpush2.bf16.msra.mxu0 0
        %3584 = vmatprep.subr.bf16.mxu0 0
        %3585 = vmatpush2.bf16.msra.mxu0 0
        %3586 = vmatprep.subr.bf16.mxu0 0
        %3587 = vmatpush2.bf16.msra.mxu0 0
        %3588 = vmatprep.subr.bf16.mxu0 0
        %3589 = vmatpush2.bf16.msra.mxu0 0
        %3590 = vmatprep.subr.bf16.mxu0 0
        %3591 = vmatpush2.bf16.msra.mxu0 0
        %3592 = vmatprep.subr.bf16.mxu0 0
        %3593 = vmatpush2.bf16.msra.mxu0 0
        %3594 = vmatprep.mubr.bf16.mxu0 0
        %3595 = vmatmul.mubr.bf16.gmra.mxu0 %v3515
        %v3596 = vpop.f32.mrf.mxu0
        %v3597 = vadd.f32 0.0, %v3596
        %v3598 = vpop.f32.mrf.mxu0
        %v3599 = vpop.f32.mrf.mxu0
        %v3600 = vadd.f32 0.0, %v3599
        %v3601 = vpop.f32.mrf.mxu0
        %3602 = vmatprep.mubr.bf16.mxu0 0
        %3603 = vmatmul.mubr.bf16.gmra.mxu0 %v3518
        %v3604 = vpop.f32.mrf.mxu0
        %v3605 = vadd.f32 0.0, %v3604
        %v3606 = vpop.f32.mrf.mxu0
        %v3607 = vpop.f32.mrf.mxu0
        %v3608 = vadd.f32 0.0, %v3607
        %v3609 = vpop.f32.mrf.mxu0
        %3610 = vmatprep.mubr.bf16.mxu0 0
        %3611 = vmatmul.mubr.bf16.gmra.mxu0 %v3521
        %v3612 = vpop.f32.mrf.mxu0
        %v3613 = vadd.f32 0.0, %v3612
        %v3614 = vpop.f32.mrf.mxu0
        %v3615 = vpop.f32.mrf.mxu0
        %v3616 = vadd.f32 0.0, %v3615
        %v3617 = vpop.f32.mrf.mxu0
        %3618 = vmatprep.mubr.bf16.mxu0 0
        %3619 = vmatmul.mubr.bf16.gmra.mxu0 %v3524
        %v3620 = vpop.f32.mrf.mxu0
        %v3621 = vadd.f32 0.0, %v3620
        %v3622 = vpop.f32.mrf.mxu0
        %v3623 = vpop.f32.mrf.mxu0
        %v3624 = vadd.f32 0.0, %v3623
        %v3625 = vpop.f32.mrf.mxu0
        %3626 = vmatprep.mubr.bf16.mxu0 0
        %3627 = vmatmul.mubr.bf16.gmra.mxu0 %v3527
        %v3628 = vpop.f32.mrf.mxu0
        %v3629 = vadd.f32 0.0, %v3628
        %v3630 = vpop.f32.mrf.mxu0
        %v3631 = vpop.f32.mrf.mxu0
        %v3632 = vadd.f32 0.0, %v3631
        %v3633 = vpop.f32.mrf.mxu0
        %3634 = vmatprep.mubr.bf16.mxu0 0
        %3635 = vmatmul.mubr.bf16.gmra.mxu0 %v3530
        %v3636 = vpop.f32.mrf.mxu0
        %v3637 = vadd.f32 0.0, %v3636
        %v3638 = vpop.f32.mrf.mxu0
        %v3639 = vpop.f32.mrf.mxu0
        %v3640 = vadd.f32 0.0, %v3639
        %v3641 = vpop.f32.mrf.mxu0
        %3642 = vmatprep.mubr.bf16.mxu0 0
        %3643 = vmatmul.mubr.bf16.gmra.mxu0 %v3533
        %v3644 = vpop.f32.mrf.mxu0
        %v3645 = vadd.f32 0.0, %v3644
        %v3646 = vpop.f32.mrf.mxu0
        %v3647 = vpop.f32.mrf.mxu0
        %v3648 = vadd.f32 0.0, %v3647
        %v3649 = vpop.f32.mrf.mxu0
        %3650 = vmatprep.mubr.bf16.mxu0 0
        %3651 = vmatmul.mubr.bf16.gmra.mxu0 %v3536
        %v3652 = vpop.f32.mrf.mxu0
        %v3653 = vadd.f32 0.0, %v3652
        %v3654 = vpop.f32.mrf.mxu0
        %v3655 = vpop.f32.mrf.mxu0
        %v3656 = vadd.f32 0.0, %v3655
        %v3657 = vpop.f32.mrf.mxu0
        %3658 = vmatprep.mubr.bf16.mxu0 0
        %3659 = vmatmul.mubr.bf16.gmra.mxu0 %v3539
        %v3660 = vpop.f32.mrf.mxu0
        %v3661 = vadd.f32 0.0, %v3660
        %v3662 = vpop.f32.mrf.mxu0
        %v3663 = vpop.f32.mrf.mxu0
        %v3664 = vadd.f32 0.0, %v3663
        %v3665 = vpop.f32.mrf.mxu0
        %3666 = vmatprep.mubr.bf16.mxu0 0
        %3667 = vmatmul.mubr.bf16.gmra.mxu0 %v3542
        %v3668 = vpop.f32.mrf.mxu0
        %v3669 = vadd.f32 0.0, %v3668
        %v3670 = vpop.f32.mrf.mxu0
        %v3671 = vpop.f32.mrf.mxu0
        %v3672 = vadd.f32 0.0, %v3671
        %v3673 = vpop.f32.mrf.mxu0
        %3674 = vmatprep.mubr.bf16.mxu0 0
        %3675 = vmatmul.mubr.bf16.gmra.mxu0 %v3545
        %v3676 = vpop.f32.mrf.mxu0
        %v3677 = vadd.f32 0.0, %v3676
        %v3678 = vpop.f32.mrf.mxu0
        %v3679 = vpop.f32.mrf.mxu0
        %v3680 = vadd.f32 0.0, %v3679
        %v3681 = vpop.f32.mrf.mxu0
        %3682 = vmatprep.mubr.bf16.mxu0 0
        %3683 = vmatmul.mubr.bf16.gmra.mxu0 %v3548
        %v3684 = vpop.f32.mrf.mxu0
        %v3685 = vadd.f32 0.0, %v3684
        %v3686 = vpop.f32.mrf.mxu0
        %v3687 = vpop.f32.mrf.mxu0
        %v3688 = vadd.f32 0.0, %v3687
        %v3689 = vpop.f32.mrf.mxu0
        %3690 = vmatprep.mubr.bf16.mxu0 0
        %3691 = vmatmul.mubr.bf16.gmra.mxu0 %v3551
        %v3692 = vpop.f32.mrf.mxu0
        %v3693 = vadd.f32 0.0, %v3692
        %v3694 = vpop.f32.mrf.mxu0
        %v3695 = vpop.f32.mrf.mxu0
        %v3696 = vadd.f32 0.0, %v3695
        %v3697 = vpop.f32.mrf.mxu0
        %3698 = vmatprep.mubr.bf16.mxu0 0
        %3699 = vmatmul.mubr.bf16.gmra.mxu0 %v3554
        %v3700 = vpop.f32.mrf.mxu0
        %v3701 = vadd.f32 0.0, %v3700
        %v3702 = vpop.f32.mrf.mxu0
        %v3703 = vpop.f32.mrf.mxu0
        %v3704 = vadd.f32 0.0, %v3703
        %v3705 = vpop.f32.mrf.mxu0
        %3706 = vmatprep.mubr.bf16.mxu0 0
        %3707 = vmatmul.mubr.bf16.gmra.mxu0 %v3557
        %v3708 = vpop.f32.mrf.mxu0
        %v3709 = vadd.f32 0.0, %v3708
        %v3710 = vpop.f32.mrf.mxu0
        %v3711 = vpop.f32.mrf.mxu0
        %v3712 = vadd.f32 0.0, %v3711
        %v3713 = vpop.f32.mrf.mxu0
        %3714 = vmatprep.mubr.bf16.mxu0 0
        %3715 = vmatmul.mubr.bf16.gmra.mxu0 %v3560
        %v3716 = vpop.f32.mrf.mxu0
        %v3717 = vadd.f32 0.0, %v3716
        %v3718 = vpop.f32.mrf.mxu0
        %v3719 = vpop.f32.mrf.mxu0
        %v3720 = vadd.f32 0.0, %v3719
        %v3721 = vpop.f32.mrf.mxu0
        %3722 = vdwg.mxu0
        %v3723 = vadd.f32 %v3336, %v3597
        %v3724 = vadd.f32 %v3337, %v3600
        %v3725 = vadd.f32 %v3338, %v3605
        %v3726 = vadd.f32 %v3339, %v3608
        %v3727 = vadd.f32 %v3340, %v3613
        %v3728 = vadd.f32 %v3341, %v3616
        %v3729 = vadd.f32 %v3342, %v3621
        %v3730 = vadd.f32 %v3343, %v3624
        %v3731 = vadd.f32 %v3344, %v3629
        %v3732 = vadd.f32 %v3345, %v3632
        %v3733 = vadd.f32 %v3346, %v3637
        %v3734 = vadd.f32 %v3347, %v3640
        %v3735 = vadd.f32 %v3348, %v3645
        %v3736 = vadd.f32 %v3349, %v3648
        %v3737 = vadd.f32 %v3350, %v3653
        %v3738 = vadd.f32 %v3351, %v3656
        %v3739 = vadd.f32 %v3352, %v3661
        %v3740 = vadd.f32 %v3353, %v3664
        %v3741 = vadd.f32 %v3354, %v3669
        %v3742 = vadd.f32 %v3355, %v3672
        %v3743 = vadd.f32 %v3356, %v3677
        %v3744 = vadd.f32 %v3357, %v3680
        %v3745 = vadd.f32 %v3358, %v3685
        %v3746 = vadd.f32 %v3359, %v3688
        %v3747 = vadd.f32 %v3360, %v3693
        %v3748 = vadd.f32 %v3361, %v3696
        %v3749 = vadd.f32 %v3362, %v3701
        %v3750 = vadd.f32 %v3363, %v3704
        %v3751 = vadd.f32 %v3364, %v3709
        %v3752 = vadd.f32 %v3365, %v3712
        %v3753 = vadd.f32 %v3366, %v3717
        %v3754 = vadd.f32 %v3367, %v3720
        %v3755 = vld [vmem:[%s3368] sm:$0xf]
        %v3756 = vld [vmem:[%s3368 + $0x4] sm:$0xf]
        %v3757 = vld [vmem:[%s3368 + $0x8] sm:$0x1]
        %v3758 = vld [vmem:[%s3368 + $0xc] sm:$0xf]
        %v3759 = vld [vmem:[%s3368 + $0x10] sm:$0xf]
        %v3760 = vld [vmem:[%s3368 + $0x14] sm:$0x1]
        %v3761 = vld [vmem:[%s3368 + $0x18] sm:$0xf]
        %v3762 = vld [vmem:[%s3368 + $0x1c] sm:$0xf]
        %v3763 = vld [vmem:[%s3368 + $0x20] sm:$0x1]
        %v3764 = vld [vmem:[%s3368 + $0x24] sm:$0xf]
        %v3765 = vld [vmem:[%s3368 + $0x28] sm:$0xf]
        %v3766 = vld [vmem:[%s3368 + $0x2c] sm:$0x1]
        %v3767 = vld [vmem:[%s3368 + $0x30] sm:$0xf]
        %v3768 = vld [vmem:[%s3368 + $0x34] sm:$0xf]
        %v3769 = vld [vmem:[%s3368 + $0x38] sm:$0x1]
        %v3770 = vld [vmem:[%s3368 + $0x3c] sm:$0xf]
        %v3771 = vld [vmem:[%s3368 + $0x40] sm:$0xf]
        %v3772 = vld [vmem:[%s3368 + $0x44] sm:$0x1]
        %v3773 = vld [vmem:[%s3368 + $0x48] sm:$0xf]
        %v3774 = vld [vmem:[%s3368 + $0x4c] sm:$0xf]
        %v3775 = vld [vmem:[%s3368 + $0x50] sm:$0x1]
        %v3776 = vld [vmem:[%s3368 + $0x54] sm:$0xf]
        %v3777 = vld [vmem:[%s3368 + $0x58] sm:$0xf]
        %v3778 = vld [vmem:[%s3368 + $0x5c] sm:$0x1]
        %v3779 = vld [vmem:[%s3368 + $0x60] sm:$0xf]
        %v3780 = vld [vmem:[%s3368 + $0x64] sm:$0xf]
        %v3781 = vld [vmem:[%s3368 + $0x68] sm:$0x1]
        %v3782 = vld [vmem:[%s3368 + $0x6c] sm:$0xf]
        %v3783 = vld [vmem:[%s3368 + $0x70] sm:$0xf]
        %v3784 = vld [vmem:[%s3368 + $0x74] sm:$0x1]
        %v3785 = vld [vmem:[%s3368 + $0x78] sm:$0xf]
        %v3786 = vld [vmem:[%s3368 + $0x7c] sm:$0xf]
        %v3787 = vld [vmem:[%s3368 + $0x80] sm:$0x1]
        %v3788 = vld [vmem:[%s3368 + $0x84] sm:$0xf]
        %v3789 = vld [vmem:[%s3368 + $0x88] sm:$0xf]
        %v3790 = vld [vmem:[%s3368 + $0x8c] sm:$0x1]
        %v3791 = vld [vmem:[%s3368 + $0x90] sm:$0xf]
        %v3792 = vld [vmem:[%s3368 + $0x94] sm:$0xf]
        %v3793 = vld [vmem:[%s3368 + $0x98] sm:$0x1]
        %v3794 = vld [vmem:[%s3368 + $0x9c] sm:$0xf]
        %v3795 = vld [vmem:[%s3368 + $0xa0] sm:$0xf]
        %v3796 = vld [vmem:[%s3368 + $0xa4] sm:$0x1]
        %v3797 = vld [vmem:[%s3368 + $0xa8] sm:$0xf]
        %v3798 = vld [vmem:[%s3368 + $0xac] sm:$0xf]
        %v3799 = vld [vmem:[%s3368 + $0xb0] sm:$0x1]
        %v3800 = vld [vmem:[%s3368 + $0xb4] sm:$0xf]
        %v3801 = vld [vmem:[%s3368 + $0xb8] sm:$0xf]
        %v3802 = vld [vmem:[%s3368 + $0xbc] sm:$0x1]
        %v3804 = vshrl.u32 %v3755, 16
        %v3806 = vrot.slane %v3804, 4
        %v3807 = vshll.u32 %v3755, 16
        %v3809 = vrot.slane %v3807, 5
        %v3810 = vor.u32 %v3806, %v3809
        %v3811 = vrot.slane %v3810, 4
        %v3813 = vshll.u32 %v3756, 16
        %v3815 = vrot.slane %v3813, 5
        %v3816 = vsel %vm255, %v3811, %v3815
        %v3817 = vshrl.u32 %v3756, 16
        %v3819 = vrot.slane %v3817, 4
        %v3820 = vor.u32 %v3819, %v3815
        %v3821 = vrot.slane %v3820, 4
        %v3823 = vshll.u32 %v3757, 16
        %v3825 = vrot.slane %v3823, 5
        %v3826 = vsel %vm255, %v3821, %v3825
        %v3828 = vshrl.u32 %v3758, 16
        %v3830 = vrot.slane %v3828, 4
        %v3831 = vshll.u32 %v3758, 16
        %v3833 = vrot.slane %v3831, 5
        %v3834 = vor.u32 %v3830, %v3833
        %v3835 = vrot.slane %v3834, 4
        %v3837 = vshll.u32 %v3759, 16
        %v3839 = vrot.slane %v3837, 5
        %v3840 = vsel %vm255, %v3835, %v3839
        %v3841 = vshrl.u32 %v3759, 16
        %v3843 = vrot.slane %v3841, 4
        %v3844 = vor.u32 %v3843, %v3839
        %v3845 = vrot.slane %v3844, 4
        %v3847 = vshll.u32 %v3760, 16
        %v3849 = vrot.slane %v3847, 5
        %v3850 = vsel %vm255, %v3845, %v3849
        %v3852 = vshrl.u32 %v3761, 16
        %v3854 = vrot.slane %v3852, 4
        %v3855 = vshll.u32 %v3761, 16
        %v3857 = vrot.slane %v3855, 5
        %v3858 = vor.u32 %v3854, %v3857
        %v3859 = vrot.slane %v3858, 4
        %v3861 = vshll.u32 %v3762, 16
        %v3863 = vrot.slane %v3861, 5
        %v3864 = vsel %vm255, %v3859, %v3863
        %v3865 = vshrl.u32 %v3762, 16
        %v3867 = vrot.slane %v3865, 4
        %v3868 = vor.u32 %v3867, %v3863
        %v3869 = vrot.slane %v3868, 4
        %v3871 = vshll.u32 %v3763, 16
        %v3873 = vrot.slane %v3871, 5
        %v3874 = vsel %vm255, %v3869, %v3873
        %v3876 = vshrl.u32 %v3764, 16
        %v3878 = vrot.slane %v3876, 4
        %v3879 = vshll.u32 %v3764, 16
        %v3881 = vrot.slane %v3879, 5
        %v3882 = vor.u32 %v3878, %v3881
        %v3883 = vrot.slane %v3882, 4
        %v3885 = vshll.u32 %v3765, 16
        %v3887 = vrot.slane %v3885, 5
        %v3888 = vsel %vm255, %v3883, %v3887
        %v3889 = vshrl.u32 %v3765, 16
        %v3891 = vrot.slane %v3889, 4
        %v3892 = vor.u32 %v3891, %v3887
        %v3893 = vrot.slane %v3892, 4
        %v3895 = vshll.u32 %v3766, 16
        %v3897 = vrot.slane %v3895, 5
        %v3898 = vsel %vm255, %v3893, %v3897
        %v3900 = vshrl.u32 %v3767, 16
        %v3902 = vrot.slane %v3900, 4
        %v3903 = vshll.u32 %v3767, 16
        %v3905 = vrot.slane %v3903, 5
        %v3906 = vor.u32 %v3902, %v3905
        %v3907 = vrot.slane %v3906, 4
        %v3909 = vshll.u32 %v3768, 16
        %v3911 = vrot.slane %v3909, 5
        %v3912 = vsel %vm255, %v3907, %v3911
        %v3913 = vshrl.u32 %v3768, 16
        %v3915 = vrot.slane %v3913, 4
        %v3916 = vor.u32 %v3915, %v3911
        %v3917 = vrot.slane %v3916, 4
        %v3919 = vshll.u32 %v3769, 16
        %v3921 = vrot.slane %v3919, 5
        %v3922 = vsel %vm255, %v3917, %v3921
        %v3924 = vshrl.u32 %v3770, 16
        %v3926 = vrot.slane %v3924, 4
        %v3927 = vshll.u32 %v3770, 16
        %v3929 = vrot.slane %v3927, 5
        %v3930 = vor.u32 %v3926, %v3929
        %v3931 = vrot.slane %v3930, 4
        %v3933 = vshll.u32 %v3771, 16
        %v3935 = vrot.slane %v3933, 5
        %v3936 = vsel %vm255, %v3931, %v3935
        %v3937 = vshrl.u32 %v3771, 16
        %v3939 = vrot.slane %v3937, 4
        %v3940 = vor.u32 %v3939, %v3935
        %v3941 = vrot.slane %v3940, 4
        %v3943 = vshll.u32 %v3772, 16
        %v3945 = vrot.slane %v3943, 5
        %v3946 = vsel %vm255, %v3941, %v3945
        %v3948 = vshrl.u32 %v3773, 16
        %v3950 = vrot.slane %v3948, 4
        %v3951 = vshll.u32 %v3773, 16
        %v3953 = vrot.slane %v3951, 5
        %v3954 = vor.u32 %v3950, %v3953
        %v3955 = vrot.slane %v3954, 4
        %v3957 = vshll.u32 %v3774, 16
        %v3959 = vrot.slane %v3957, 5
        %v3960 = vsel %vm255, %v3955, %v3959
        %v3961 = vshrl.u32 %v3774, 16
        %v3963 = vrot.slane %v3961, 4
        %v3964 = vor.u32 %v3963, %v3959
        %v3965 = vrot.slane %v3964, 4
        %v3967 = vshll.u32 %v3775, 16
        %v3969 = vrot.slane %v3967, 5
        %v3970 = vsel %vm255, %v3965, %v3969
        %v3972 = vshrl.u32 %v3776, 16
        %v3974 = vrot.slane %v3972, 4
        %v3975 = vshll.u32 %v3776, 16
        %v3977 = vrot.slane %v3975, 5
        %v3978 = vor.u32 %v3974, %v3977
        %v3979 = vrot.slane %v3978, 4
        %v3981 = vshll.u32 %v3777, 16
        %v3983 = vrot.slane %v3981, 5
        %v3984 = vsel %vm255, %v3979, %v3983
        %v3985 = vshrl.u32 %v3777, 16
        %v3987 = vrot.slane %v3985, 4
        %v3988 = vor.u32 %v3987, %v3983
        %v3989 = vrot.slane %v3988, 4
        %v3991 = vshll.u32 %v3778, 16
        %v3993 = vrot.slane %v3991, 5
        %v3994 = vsel %vm255, %v3989, %v3993
        %v3996 = vshrl.u32 %v3779, 16
        %v3998 = vrot.slane %v3996, 4
        %v3999 = vshll.u32 %v3779, 16
        %v4001 = vrot.slane %v3999, 5
        %v4002 = vor.u32 %v3998, %v4001
        %v4003 = vrot.slane %v4002, 4
        %v4005 = vshll.u32 %v3780, 16
        %v4007 = vrot.slane %v4005, 5
        %v4008 = vsel %vm255, %v4003, %v4007
        %v4009 = vshrl.u32 %v3780, 16
        %v4011 = vrot.slane %v4009, 4
        %v4012 = vor.u32 %v4011, %v4007
        %v4013 = vrot.slane %v4012, 4
        %v4015 = vshll.u32 %v3781, 16
        %v4017 = vrot.slane %v4015, 5
        %v4018 = vsel %vm255, %v4013, %v4017
        %v4020 = vshrl.u32 %v3782, 16
        %v4022 = vrot.slane %v4020, 4
        %v4023 = vshll.u32 %v3782, 16
        %v4025 = vrot.slane %v4023, 5
        %v4026 = vor.u32 %v4022, %v4025
        %v4027 = vrot.slane %v4026, 4
        %v4029 = vshll.u32 %v3783, 16
        %v4031 = vrot.slane %v4029, 5
        %v4032 = vsel %vm255, %v4027, %v4031
        %v4033 = vshrl.u32 %v3783, 16
        %v4035 = vrot.slane %v4033, 4
        %v4036 = vor.u32 %v4035, %v4031
        %v4037 = vrot.slane %v4036, 4
        %v4039 = vshll.u32 %v3784, 16
        %v4041 = vrot.slane %v4039, 5
        %v4042 = vsel %vm255, %v4037, %v4041
        %v4044 = vshrl.u32 %v3785, 16
        %v4046 = vrot.slane %v4044, 4
        %v4047 = vshll.u32 %v3785, 16
        %v4049 = vrot.slane %v4047, 5
        %v4050 = vor.u32 %v4046, %v4049
        %v4051 = vrot.slane %v4050, 4
        %v4053 = vshll.u32 %v3786, 16
        %v4055 = vrot.slane %v4053, 5
        %v4056 = vsel %vm255, %v4051, %v4055
        %v4057 = vshrl.u32 %v3786, 16
        %v4059 = vrot.slane %v4057, 4
        %v4060 = vor.u32 %v4059, %v4055
        %v4061 = vrot.slane %v4060, 4
        %v4063 = vshll.u32 %v3787, 16
        %v4065 = vrot.slane %v4063, 5
        %v4066 = vsel %vm255, %v4061, %v4065
        %v4068 = vshrl.u32 %v3788, 16
        %v4070 = vrot.slane %v4068, 4
        %v4071 = vshll.u32 %v3788, 16
        %v4073 = vrot.slane %v4071, 5
        %v4074 = vor.u32 %v4070, %v4073
        %v4075 = vrot.slane %v4074, 4
        %v4077 = vshll.u32 %v3789, 16
        %v4079 = vrot.slane %v4077, 5
        %v4080 = vsel %vm255, %v4075, %v4079
        %v4081 = vshrl.u32 %v3789, 16
        %v4083 = vrot.slane %v4081, 4
        %v4084 = vor.u32 %v4083, %v4079
        %v4085 = vrot.slane %v4084, 4
        %v4087 = vshll.u32 %v3790, 16
        %v4089 = vrot.slane %v4087, 5
        %v4090 = vsel %vm255, %v4085, %v4089
        %v4092 = vshrl.u32 %v3791, 16
        %v4094 = vrot.slane %v4092, 4
        %v4095 = vshll.u32 %v3791, 16
        %v4097 = vrot.slane %v4095, 5
        %v4098 = vor.u32 %v4094, %v4097
        %v4099 = vrot.slane %v4098, 4
        %v4101 = vshll.u32 %v3792, 16
        %v4103 = vrot.slane %v4101, 5
        %v4104 = vsel %vm255, %v4099, %v4103
        %v4105 = vshrl.u32 %v3792, 16
        %v4107 = vrot.slane %v4105, 4
        %v4108 = vor.u32 %v4107, %v4103
        %v4109 = vrot.slane %v4108, 4
        %v4111 = vshll.u32 %v3793, 16
        %v4113 = vrot.slane %v4111, 5
        %v4114 = vsel %vm255, %v4109, %v4113
        %v4116 = vshrl.u32 %v3794, 16
        %v4118 = vrot.slane %v4116, 4
        %v4119 = vshll.u32 %v3794, 16
        %v4121 = vrot.slane %v4119, 5
        %v4122 = vor.u32 %v4118, %v4121
        %v4123 = vrot.slane %v4122, 4
        %v4125 = vshll.u32 %v3795, 16
        %v4127 = vrot.slane %v4125, 5
        %v4128 = vsel %vm255, %v4123, %v4127
        %v4129 = vshrl.u32 %v3795, 16
        %v4131 = vrot.slane %v4129, 4
        %v4132 = vor.u32 %v4131, %v4127
        %v4133 = vrot.slane %v4132, 4
        %v4135 = vshll.u32 %v3796, 16
        %v4137 = vrot.slane %v4135, 5
        %v4138 = vsel %vm255, %v4133, %v4137
        %v4140 = vshrl.u32 %v3797, 16
        %v4142 = vrot.slane %v4140, 4
        %v4143 = vshll.u32 %v3797, 16
        %v4145 = vrot.slane %v4143, 5
        %v4146 = vor.u32 %v4142, %v4145
        %v4147 = vrot.slane %v4146, 4
        %v4149 = vshll.u32 %v3798, 16
        %v4151 = vrot.slane %v4149, 5
        %v4152 = vsel %vm255, %v4147, %v4151
        %v4153 = vshrl.u32 %v3798, 16
        %v4155 = vrot.slane %v4153, 4
        %v4156 = vor.u32 %v4155, %v4151
        %v4157 = vrot.slane %v4156, 4
        %v4159 = vshll.u32 %v3799, 16
        %v4161 = vrot.slane %v4159, 5
        %v4162 = vsel %vm255, %v4157, %v4161
        %v4164 = vshrl.u32 %v3800, 16
        %v4166 = vrot.slane %v4164, 4
        %v4167 = vshll.u32 %v3800, 16
        %v4169 = vrot.slane %v4167, 5
        %v4170 = vor.u32 %v4166, %v4169
        %v4171 = vrot.slane %v4170, 4
        %v4173 = vshll.u32 %v3801, 16
        %v4175 = vrot.slane %v4173, 5
        %v4176 = vsel %vm255, %v4171, %v4175
        %v4177 = vshrl.u32 %v3801, 16
        %v4179 = vrot.slane %v4177, 4
        %v4180 = vor.u32 %v4179, %v4175
        %v4181 = vrot.slane %v4180, 4
        %v4183 = vshll.u32 %v3802, 16
        %v4185 = vrot.slane %v4183, 5
        %v4186 = vsel %vm255, %v4181, %v4185
        %s4187 = scalar_lea.vmem %s1, 224
        %v4188 = vld [vmem:[%s4187] sm:$0xf]
        %v4189 = vld [vmem:[%s4187 + $0x4] sm:$0xf]
        %v4190 = vld [vmem:[%s4187 + $0x8] sm:$0xf]
        %v4191 = vld [vmem:[%s4187 + $0xc] sm:$0xf]
        %v4192 = vld [vmem:[%s4187 + $0x10] sm:$0xf]
        %v4193 = vld [vmem:[%s4187 + $0x14] sm:$0xf]
        %v4194 = vld [vmem:[%s4187 + $0x18] sm:$0xf]
        %v4195 = vld [vmem:[%s4187 + $0x1c] sm:$0xf]
        %v4196 = vunpack.c.l.b16 %v3816
        %v4197 = vunpack.c.l.b16 %v3826
        %v4198 = vunpack.c.l.b16 %v3840
        %v4199 = vunpack.c.l.b16 %v3850
        %v4200 = vunpack.c.l.b16 %v3864
        %v4201 = vunpack.c.l.b16 %v3874
        %v4202 = vunpack.c.l.b16 %v3888
        %v4203 = vunpack.c.l.b16 %v3898
        %v4204 = vunpack.c.l.b16 %v3912
        %v4205 = vunpack.c.l.b16 %v3922
        %v4206 = vunpack.c.l.b16 %v3936
        %v4207 = vunpack.c.l.b16 %v3946
        %v4208 = vunpack.c.l.b16 %v3960
        %v4209 = vunpack.c.l.b16 %v3970
        %v4210 = vunpack.c.l.b16 %v3984
        %v4211 = vunpack.c.l.b16 %v3994
        %v4212 = vunpack.c.l.b16 %v4008
        %v4213 = vunpack.c.l.b16 %v4018
        %v4214 = vunpack.c.l.b16 %v4032
        %v4215 = vunpack.c.l.b16 %v4042
        %v4216 = vunpack.c.l.b16 %v4056
        %v4217 = vunpack.c.l.b16 %v4066
        %v4218 = vunpack.c.l.b16 %v4080
        %v4219 = vunpack.c.l.b16 %v4090
        %v4220 = vunpack.c.l.b16 %v4104
        %v4221 = vunpack.c.l.b16 %v4114
        %v4222 = vunpack.c.l.b16 %v4128
        %v4223 = vunpack.c.l.b16 %v4138
        %v4224 = vunpack.c.l.b16 %v4152
        %v4225 = vunpack.c.l.b16 %v4162
        %v4226 = vunpack.c.l.b16 %v4176
        %v4227 = vunpack.c.l.b16 %v4186
        %v4228 = vpack.c.b16 %v4197, %v4196
        %v4229 = vpack.c.b16 %v4199, %v4198
        %v4230 = vpack.c.b16 %v4201, %v4200
        %v4231 = vpack.c.b16 %v4203, %v4202
        %v4232 = vpack.c.b16 %v4205, %v4204
        %v4233 = vpack.c.b16 %v4207, %v4206
        %v4234 = vpack.c.b16 %v4209, %v4208
        %v4235 = vpack.c.b16 %v4211, %v4210
        %v4236 = vpack.c.b16 %v4213, %v4212
        %v4237 = vpack.c.b16 %v4215, %v4214
        %v4238 = vpack.c.b16 %v4217, %v4216
        %v4239 = vpack.c.b16 %v4219, %v4218
        %v4240 = vpack.c.b16 %v4221, %v4220
        %v4241 = vpack.c.b16 %v4223, %v4222
        %v4242 = vpack.c.b16 %v4225, %v4224
        %v4243 = vpack.c.b16 %v4227, %v4226
        %v4252 = vunpack.c.l.b16 %v4188
        %v4253 = vunpack.c.l.b16 %v4189
        %v4254 = vunpack.c.l.b16 %v4190
        %v4255 = vunpack.c.l.b16 %v4191
        %v4256 = vunpack.c.l.b16 %v4192
        %v4257 = vunpack.c.l.b16 %v4193
        %v4258 = vunpack.c.l.b16 %v4194
        %v4259 = vunpack.c.l.b16 %v4195
        %v4260 = vpack.c.b16 %v4253, %v4252
        %v4261 = vpack.c.b16 %v4255, %v4254
        %v4262 = vpack.c.b16 %v4257, %v4256
        %v4263 = vpack.c.b16 %v4259, %v4258
        %v4269 = vsel %vm721, %v4228, 0
        %v4272 = vsel %vm721, %v4229, 0
        %v4275 = vsel %vm721, %v4230, 0
        %v4278 = vsel %vm721, %v4231, 0
        %v4281 = vsel %vm721, %v4232, 0
        %v4284 = vsel %vm721, %v4233, 0
        %v4287 = vsel %vm721, %v4234, 0
        %v4290 = vsel %vm721, %v4235, 0
        %v4293 = vsel %vm721, %v4236, 0
        %v4296 = vsel %vm721, %v4237, 0
        %v4299 = vsel %vm721, %v4238, 0
        %v4302 = vsel %vm721, %v4239, 0
        %v4305 = vsel %vm721, %v4240, 0
        %v4308 = vsel %vm721, %v4241, 0
        %v4311 = vsel %vm721, %v4242, 0
        %v4314 = vsel %vm721, %v4243, 0
        %4316 = vmatprep.subr.bf16.mxu0 0
        %4317 = vmatpush1.bf16.msra.mxu0 0
        %4318 = vmatprep.subr.bf16.mxu0 0
        %4319 = vmatpush1.bf16.msra.mxu0 0
        %4320 = vmatprep.subr.bf16.mxu0 0
        %4321 = vmatpush1.bf16.msra.mxu0 0
        %4322 = vmatprep.subr.bf16.mxu0 0
        %4323 = vmatpush1.bf16.msra.mxu0 0
        %4324 = vmatprep.subr.bf16.mxu0 0
        %4325 = vmatpush1.bf16.msra.mxu0 %v4263
        %4326 = vmatprep.subr.bf16.mxu0 0
        %4327 = vmatpush1.bf16.msra.mxu0 %v4262
        %4328 = vmatprep.subr.bf16.mxu0 0
        %4329 = vmatpush1.bf16.msra.mxu0 %v4261
        %4330 = vmatprep.subr.bf16.mxu0 0
        %4331 = vmatpush1.bf16.msra.mxu0 %v4260
        %4332 = vmatprep.subr.bf16.mxu0 0
        %4333 = vmatpush2.bf16.msra.mxu0 0
        %4334 = vmatprep.subr.bf16.mxu0 0
        %4335 = vmatpush2.bf16.msra.mxu0 0
        %4336 = vmatprep.subr.bf16.mxu0 0
        %4337 = vmatpush2.bf16.msra.mxu0 0
        %4338 = vmatprep.subr.bf16.mxu0 0
        %4339 = vmatpush2.bf16.msra.mxu0 0
        %4340 = vmatprep.subr.bf16.mxu0 0
        %4341 = vmatpush2.bf16.msra.mxu0 0
        %4342 = vmatprep.subr.bf16.mxu0 0
        %4343 = vmatpush2.bf16.msra.mxu0 0
        %4344 = vmatprep.subr.bf16.mxu0 0
        %4345 = vmatpush2.bf16.msra.mxu0 0
        %4346 = vmatprep.subr.bf16.mxu0 0
        %4347 = vmatpush2.bf16.msra.mxu0 0
        %4348 = vmatprep.mubr.bf16.mxu0 0
        %4349 = vmatmul.mubr.bf16.gmra.mxu0 %v4269
        %v4350 = vpop.f32.mrf.mxu0
        %v4351 = vadd.f32 0.0, %v4350
        %v4352 = vpop.f32.mrf.mxu0
        %v4353 = vpop.f32.mrf.mxu0
        %v4354 = vadd.f32 0.0, %v4353
        %v4355 = vpop.f32.mrf.mxu0
        %4356 = vmatprep.mubr.bf16.mxu0 0
        %4357 = vmatmul.mubr.bf16.gmra.mxu0 %v4272
        %v4358 = vpop.f32.mrf.mxu0
        %v4359 = vadd.f32 0.0, %v4358
        %v4360 = vpop.f32.mrf.mxu0
        %v4361 = vpop.f32.mrf.mxu0
        %v4362 = vadd.f32 0.0, %v4361
        %v4363 = vpop.f32.mrf.mxu0
        %4364 = vmatprep.mubr.bf16.mxu0 0
        %4365 = vmatmul.mubr.bf16.gmra.mxu0 %v4275
        %v4366 = vpop.f32.mrf.mxu0
        %v4367 = vadd.f32 0.0, %v4366
        %v4368 = vpop.f32.mrf.mxu0
        %v4369 = vpop.f32.mrf.mxu0
        %v4370 = vadd.f32 0.0, %v4369
        %v4371 = vpop.f32.mrf.mxu0
        %4372 = vmatprep.mubr.bf16.mxu0 0
        %4373 = vmatmul.mubr.bf16.gmra.mxu0 %v4278
        %v4374 = vpop.f32.mrf.mxu0
        %v4375 = vadd.f32 0.0, %v4374
        %v4376 = vpop.f32.mrf.mxu0
        %v4377 = vpop.f32.mrf.mxu0
        %v4378 = vadd.f32 0.0, %v4377
        %v4379 = vpop.f32.mrf.mxu0
        %4380 = vmatprep.mubr.bf16.mxu0 0
        %4381 = vmatmul.mubr.bf16.gmra.mxu0 %v4281
        %v4382 = vpop.f32.mrf.mxu0
        %v4383 = vadd.f32 0.0, %v4382
        %v4384 = vpop.f32.mrf.mxu0
        %v4385 = vpop.f32.mrf.mxu0
        %v4386 = vadd.f32 0.0, %v4385
        %v4387 = vpop.f32.mrf.mxu0
        %4388 = vmatprep.mubr.bf16.mxu0 0
        %4389 = vmatmul.mubr.bf16.gmra.mxu0 %v4284
        %v4390 = vpop.f32.mrf.mxu0
        %v4391 = vadd.f32 0.0, %v4390
        %v4392 = vpop.f32.mrf.mxu0
        %v4393 = vpop.f32.mrf.mxu0
        %v4394 = vadd.f32 0.0, %v4393
        %v4395 = vpop.f32.mrf.mxu0
        %4396 = vmatprep.mubr.bf16.mxu0 0
        %4397 = vmatmul.mubr.bf16.gmra.mxu0 %v4287
        %v4398 = vpop.f32.mrf.mxu0
        %v4399 = vadd.f32 0.0, %v4398
        %v4400 = vpop.f32.mrf.mxu0
        %v4401 = vpop.f32.mrf.mxu0
        %v4402 = vadd.f32 0.0, %v4401
        %v4403 = vpop.f32.mrf.mxu0
        %4404 = vmatprep.mubr.bf16.mxu0 0
        %4405 = vmatmul.mubr.bf16.gmra.mxu0 %v4290
        %v4406 = vpop.f32.mrf.mxu0
        %v4407 = vadd.f32 0.0, %v4406
        %v4408 = vpop.f32.mrf.mxu0
        %v4409 = vpop.f32.mrf.mxu0
        %v4410 = vadd.f32 0.0, %v4409
        %v4411 = vpop.f32.mrf.mxu0
        %4412 = vmatprep.mubr.bf16.mxu0 0
        %4413 = vmatmul.mubr.bf16.gmra.mxu0 %v4293
        %v4414 = vpop.f32.mrf.mxu0
        %v4415 = vadd.f32 0.0, %v4414
        %v4416 = vpop.f32.mrf.mxu0
        %v4417 = vpop.f32.mrf.mxu0
        %v4418 = vadd.f32 0.0, %v4417
        %v4419 = vpop.f32.mrf.mxu0
        %4420 = vmatprep.mubr.bf16.mxu0 0
        %4421 = vmatmul.mubr.bf16.gmra.mxu0 %v4296
        %v4422 = vpop.f32.mrf.mxu0
        %v4423 = vadd.f32 0.0, %v4422
        %v4424 = vpop.f32.mrf.mxu0
        %v4425 = vpop.f32.mrf.mxu0
        %v4426 = vadd.f32 0.0, %v4425
        %v4427 = vpop.f32.mrf.mxu0
        %4428 = vmatprep.mubr.bf16.mxu0 0
        %4429 = vmatmul.mubr.bf16.gmra.mxu0 %v4299
        %v4430 = vpop.f32.mrf.mxu0
        %v4431 = vadd.f32 0.0, %v4430
        %v4432 = vpop.f32.mrf.mxu0
        %v4433 = vpop.f32.mrf.mxu0
        %v4434 = vadd.f32 0.0, %v4433
        %v4435 = vpop.f32.mrf.mxu0
        %4436 = vmatprep.mubr.bf16.mxu0 0
        %4437 = vmatmul.mubr.bf16.gmra.mxu0 %v4302
        %v4438 = vpop.f32.mrf.mxu0
        %v4439 = vadd.f32 0.0, %v4438
        %v4440 = vpop.f32.mrf.mxu0
        %v4441 = vpop.f32.mrf.mxu0
        %v4442 = vadd.f32 0.0, %v4441
        %v4443 = vpop.f32.mrf.mxu0
        %4444 = vmatprep.mubr.bf16.mxu0 0
        %4445 = vmatmul.mubr.bf16.gmra.mxu0 %v4305
        %v4446 = vpop.f32.mrf.mxu0
        %v4447 = vadd.f32 0.0, %v4446
        %v4448 = vpop.f32.mrf.mxu0
        %v4449 = vpop.f32.mrf.mxu0
        %v4450 = vadd.f32 0.0, %v4449
        %v4451 = vpop.f32.mrf.mxu0
        %4452 = vmatprep.mubr.bf16.mxu0 0
        %4453 = vmatmul.mubr.bf16.gmra.mxu0 %v4308
        %v4454 = vpop.f32.mrf.mxu0
        %v4455 = vadd.f32 0.0, %v4454
        %v4456 = vpop.f32.mrf.mxu0
        %v4457 = vpop.f32.mrf.mxu0
        %v4458 = vadd.f32 0.0, %v4457
        %v4459 = vpop.f32.mrf.mxu0
        %4460 = vmatprep.mubr.bf16.mxu0 0
        %4461 = vmatmul.mubr.bf16.gmra.mxu0 %v4311
        %v4462 = vpop.f32.mrf.mxu0
        %v4463 = vadd.f32 0.0, %v4462
        %v4464 = vpop.f32.mrf.mxu0
        %v4465 = vpop.f32.mrf.mxu0
        %v4466 = vadd.f32 0.0, %v4465
        %v4467 = vpop.f32.mrf.mxu0
        %4468 = vmatprep.mubr.bf16.mxu0 0
        %4469 = vmatmul.mubr.bf16.gmra.mxu0 %v4314
        %v4470 = vpop.f32.mrf.mxu0
        %v4471 = vadd.f32 0.0, %v4470
        %v4472 = vpop.f32.mrf.mxu0
        %v4473 = vpop.f32.mrf.mxu0
        %v4474 = vadd.f32 0.0, %v4473
        %v4475 = vpop.f32.mrf.mxu0
        %4476 = vdwg.mxu0
        %v4477 = vadd.f32 %v3723, %v4351
        %v4478 = vadd.f32 %v3724, %v4354
        %v4479 = vadd.f32 %v3725, %v4359
        %v4480 = vadd.f32 %v3726, %v4362
        %v4481 = vadd.f32 %v3727, %v4367
        %v4482 = vadd.f32 %v3728, %v4370
        %v4483 = vadd.f32 %v3729, %v4375
        %v4484 = vadd.f32 %v3730, %v4378
        %v4485 = vadd.f32 %v3731, %v4383
        %v4486 = vadd.f32 %v3732, %v4386
        %v4487 = vadd.f32 %v3733, %v4391
        %v4488 = vadd.f32 %v3734, %v4394
        %v4489 = vadd.f32 %v3735, %v4399
        %v4490 = vadd.f32 %v3736, %v4402
        %v4491 = vadd.f32 %v3737, %v4407
        %v4492 = vadd.f32 %v3738, %v4410
        %v4493 = vadd.f32 %v3739, %v4415
        %v4494 = vadd.f32 %v3740, %v4418
        %v4495 = vadd.f32 %v3741, %v4423
        %v4496 = vadd.f32 %v3742, %v4426
        %v4497 = vadd.f32 %v3743, %v4431
        %v4498 = vadd.f32 %v3744, %v4434
        %v4499 = vadd.f32 %v3745, %v4439
        %v4500 = vadd.f32 %v3746, %v4442
        %v4501 = vadd.f32 %v3747, %v4447
        %v4502 = vadd.f32 %v3748, %v4450
        %v4503 = vadd.f32 %v3749, %v4455
        %v4504 = vadd.f32 %v3750, %v4458
        %v4505 = vadd.f32 %v3751, %v4463
        %v4506 = vadd.f32 %v3752, %v4466
        %v4507 = vadd.f32 %v3753, %v4471
        %v4508 = vadd.f32 %v3754, %v4474
        %v4509 = vld [vmem:[%s3368] sm:$0xe]
        %v4510 = vld [vmem:[%s3368 + $0xc] sm:$0xe]
        %v4511 = vld [vmem:[%s3368 + $0x18] sm:$0xe]
        %v4512 = vld [vmem:[%s3368 + $0x24] sm:$0xe]
        %v4513 = vld [vmem:[%s3368 + $0x30] sm:$0xe]
        %v4514 = vld [vmem:[%s3368 + $0x3c] sm:$0xe]
        %v4515 = vld [vmem:[%s3368 + $0x48] sm:$0xe]
        %v4516 = vld [vmem:[%s3368 + $0x54] sm:$0xe]
        %v4517 = vld [vmem:[%s3368 + $0x60] sm:$0xe]
        %v4518 = vld [vmem:[%s3368 + $0x6c] sm:$0xe]
        %v4519 = vld [vmem:[%s3368 + $0x78] sm:$0xe]
        %v4520 = vld [vmem:[%s3368 + $0x84] sm:$0xe]
        %v4521 = vld [vmem:[%s3368 + $0x90] sm:$0xe]
        %v4522 = vld [vmem:[%s3368 + $0x9c] sm:$0xe]
        %v4523 = vld [vmem:[%s3368 + $0xa8] sm:$0xe]
        %v4524 = vld [vmem:[%s3368 + $0xb4] sm:$0xe]
        %v4573 = vrot.slane %v4509, 5
        %v4574 = vrot.slane %v4573, 4
        %v4575 = vrot.slane %v3756, 5
        %v4576 = vsel %vm1294, %v4574, %v4575
        %v4577 = vrot.slane %v4575, 4
        %v4578 = vrot.slane %v3757, 5
        %v4579 = vsel %vm1294, %v4577, %v4578
        %v4580 = vrot.slane %v4510, 5
        %v4581 = vrot.slane %v4580, 4
        %v4582 = vrot.slane %v3759, 5
        %v4583 = vsel %vm1294, %v4581, %v4582
        %v4584 = vrot.slane %v4582, 4
        %v4585 = vrot.slane %v3760, 5
        %v4586 = vsel %vm1294, %v4584, %v4585
        %v4587 = vrot.slane %v4511, 5
        %v4588 = vrot.slane %v4587, 4
        %v4589 = vrot.slane %v3762, 5
        %v4590 = vsel %vm1294, %v4588, %v4589
        %v4591 = vrot.slane %v4589, 4
        %v4592 = vrot.slane %v3763, 5
        %v4593 = vsel %vm1294, %v4591, %v4592
        %v4594 = vrot.slane %v4512, 5
        %v4595 = vrot.slane %v4594, 4
        %v4596 = vrot.slane %v3765, 5
        %v4597 = vsel %vm1294, %v4595, %v4596
        %v4598 = vrot.slane %v4596, 4
        %v4599 = vrot.slane %v3766, 5
        %v4600 = vsel %vm1294, %v4598, %v4599
        %v4601 = vrot.slane %v4513, 5
        %v4602 = vrot.slane %v4601, 4
        %v4603 = vrot.slane %v3768, 5
        %v4604 = vsel %vm1294, %v4602, %v4603
        %v4605 = vrot.slane %v4603, 4
        %v4606 = vrot.slane %v3769, 5
        %v4607 = vsel %vm1294, %v4605, %v4606
        %v4608 = vrot.slane %v4514, 5
        %v4609 = vrot.slane %v4608, 4
        %v4610 = vrot.slane %v3771, 5
        %v4611 = vsel %vm1294, %v4609, %v4610
        %v4612 = vrot.slane %v4610, 4
        %v4613 = vrot.slane %v3772, 5
        %v4614 = vsel %vm1294, %v4612, %v4613
        %v4615 = vrot.slane %v4515, 5
        %v4616 = vrot.slane %v4615, 4
        %v4617 = vrot.slane %v3774, 5
        %v4618 = vsel %vm1294, %v4616, %v4617
        %v4619 = vrot.slane %v4617, 4
        %v4620 = vrot.slane %v3775, 5
        %v4621 = vsel %vm1294, %v4619, %v4620
        %v4622 = vrot.slane %v4516, 5
        %v4623 = vrot.slane %v4622, 4
        %v4624 = vrot.slane %v3777, 5
        %v4625 = vsel %vm1294, %v4623, %v4624
        %v4626 = vrot.slane %v4624, 4
        %v4627 = vrot.slane %v3778, 5
        %v4628 = vsel %vm1294, %v4626, %v4627
        %v4629 = vrot.slane %v4517, 5
        %v4630 = vrot.slane %v4629, 4
        %v4631 = vrot.slane %v3780, 5
        %v4632 = vsel %vm1294, %v4630, %v4631
        %v4633 = vrot.slane %v4631, 4
        %v4634 = vrot.slane %v3781, 5
        %v4635 = vsel %vm1294, %v4633, %v4634
        %v4636 = vrot.slane %v4518, 5
        %v4637 = vrot.slane %v4636, 4
        %v4638 = vrot.slane %v3783, 5
        %v4639 = vsel %vm1294, %v4637, %v4638
        %v4640 = vrot.slane %v4638, 4
        %v4641 = vrot.slane %v3784, 5
        %v4642 = vsel %vm1294, %v4640, %v4641
        %v4643 = vrot.slane %v4519, 5
        %v4644 = vrot.slane %v4643, 4
        %v4645 = vrot.slane %v3786, 5
        %v4646 = vsel %vm1294, %v4644, %v4645
        %v4647 = vrot.slane %v4645, 4
        %v4648 = vrot.slane %v3787, 5
        %v4649 = vsel %vm1294, %v4647, %v4648
        %v4650 = vrot.slane %v4520, 5
        %v4651 = vrot.slane %v4650, 4
        %v4652 = vrot.slane %v3789, 5
        %v4653 = vsel %vm1294, %v4651, %v4652
        %v4654 = vrot.slane %v4652, 4
        %v4655 = vrot.slane %v3790, 5
        %v4656 = vsel %vm1294, %v4654, %v4655
        %v4657 = vrot.slane %v4521, 5
        %v4658 = vrot.slane %v4657, 4
        %v4659 = vrot.slane %v3792, 5
        %v4660 = vsel %vm1294, %v4658, %v4659
        %v4661 = vrot.slane %v4659, 4
        %v4662 = vrot.slane %v3793, 5
        %v4663 = vsel %vm1294, %v4661, %v4662
        %v4664 = vrot.slane %v4522, 5
        %v4665 = vrot.slane %v4664, 4
        %v4666 = vrot.slane %v3795, 5
        %v4667 = vsel %vm1294, %v4665, %v4666
        %v4668 = vrot.slane %v4666, 4
        %v4669 = vrot.slane %v3796, 5
        %v4670 = vsel %vm1294, %v4668, %v4669
        %v4671 = vrot.slane %v4523, 5
        %v4672 = vrot.slane %v4671, 4
        %v4673 = vrot.slane %v3798, 5
        %v4674 = vsel %vm1294, %v4672, %v4673
        %v4675 = vrot.slane %v4673, 4
        %v4676 = vrot.slane %v3799, 5
        %v4677 = vsel %vm1294, %v4675, %v4676
        %v4678 = vrot.slane %v4524, 5
        %v4679 = vrot.slane %v4678, 4
        %v4680 = vrot.slane %v3801, 5
        %v4681 = vsel %vm1294, %v4679, %v4680
        %v4682 = vrot.slane %v4680, 4
        %v4683 = vrot.slane %v3802, 5
        %v4684 = vsel %vm1294, %v4682, %v4683
        %s4685 = scalar_lea.vmem %s1, 256
        %v4686 = vld [vmem:[%s4685] sm:$0xf]
        %v4687 = vld [vmem:[%s4685 + $0x4] sm:$0xf]
        %v4688 = vld [vmem:[%s4685 + $0x8] sm:$0xf]
        %v4689 = vld [vmem:[%s4685 + $0xc] sm:$0xf]
        %v4690 = vld [vmem:[%s4685 + $0x10] sm:$0xf]
        %v4691 = vld [vmem:[%s4685 + $0x14] sm:$0xf]
        %v4692 = vld [vmem:[%s4685 + $0x18] sm:$0xf]
        %v4693 = vld [vmem:[%s4685 + $0x1c] sm:$0xf]
        %v4694 = vunpack.c.l.b16 %v4576
        %v4695 = vunpack.c.l.b16 %v4579
        %v4696 = vunpack.c.l.b16 %v4583
        %v4697 = vunpack.c.l.b16 %v4586
        %v4698 = vunpack.c.l.b16 %v4590
        %v4699 = vunpack.c.l.b16 %v4593
        %v4700 = vunpack.c.l.b16 %v4597
        %v4701 = vunpack.c.l.b16 %v4600
        %v4702 = vunpack.c.l.b16 %v4604
        %v4703 = vunpack.c.l.b16 %v4607
        %v4704 = vunpack.c.l.b16 %v4611
        %v4705 = vunpack.c.l.b16 %v4614
        %v4706 = vunpack.c.l.b16 %v4618
        %v4707 = vunpack.c.l.b16 %v4621
        %v4708 = vunpack.c.l.b16 %v4625
        %v4709 = vunpack.c.l.b16 %v4628
        %v4710 = vunpack.c.l.b16 %v4632
        %v4711 = vunpack.c.l.b16 %v4635
        %v4712 = vunpack.c.l.b16 %v4639
        %v4713 = vunpack.c.l.b16 %v4642
        %v4714 = vunpack.c.l.b16 %v4646
        %v4715 = vunpack.c.l.b16 %v4649
        %v4716 = vunpack.c.l.b16 %v4653
        %v4717 = vunpack.c.l.b16 %v4656
        %v4718 = vunpack.c.l.b16 %v4660
        %v4719 = vunpack.c.l.b16 %v4663
        %v4720 = vunpack.c.l.b16 %v4667
        %v4721 = vunpack.c.l.b16 %v4670
        %v4722 = vunpack.c.l.b16 %v4674
        %v4723 = vunpack.c.l.b16 %v4677
        %v4724 = vunpack.c.l.b16 %v4681
        %v4725 = vunpack.c.l.b16 %v4684
        %v4726 = vpack.c.b16 %v4695, %v4694
        %v4727 = vpack.c.b16 %v4697, %v4696
        %v4728 = vpack.c.b16 %v4699, %v4698
        %v4729 = vpack.c.b16 %v4701, %v4700
        %v4730 = vpack.c.b16 %v4703, %v4702
        %v4731 = vpack.c.b16 %v4705, %v4704
        %v4732 = vpack.c.b16 %v4707, %v4706
        %v4733 = vpack.c.b16 %v4709, %v4708
        %v4734 = vpack.c.b16 %v4711, %v4710
        %v4735 = vpack.c.b16 %v4713, %v4712
        %v4736 = vpack.c.b16 %v4715, %v4714
        %v4737 = vpack.c.b16 %v4717, %v4716
        %v4738 = vpack.c.b16 %v4719, %v4718
        %v4739 = vpack.c.b16 %v4721, %v4720
        %v4740 = vpack.c.b16 %v4723, %v4722
        %v4741 = vpack.c.b16 %v4725, %v4724
        %v4750 = vunpack.c.l.b16 %v4686
        %v4751 = vunpack.c.l.b16 %v4687
        %v4752 = vunpack.c.l.b16 %v4688
        %v4753 = vunpack.c.l.b16 %v4689
        %v4754 = vunpack.c.l.b16 %v4690
        %v4755 = vunpack.c.l.b16 %v4691
        %v4756 = vunpack.c.l.b16 %v4692
        %v4757 = vunpack.c.l.b16 %v4693
        %v4758 = vpack.c.b16 %v4751, %v4750
        %v4759 = vpack.c.b16 %v4753, %v4752
        %v4760 = vpack.c.b16 %v4755, %v4754
        %v4761 = vpack.c.b16 %v4757, %v4756
        %v4767 = vsel %vm721, %v4726, 0
        %v4770 = vsel %vm721, %v4727, 0
        %v4773 = vsel %vm721, %v4728, 0
        %v4776 = vsel %vm721, %v4729, 0
        %v4779 = vsel %vm721, %v4730, 0
        %v4782 = vsel %vm721, %v4731, 0
        %v4785 = vsel %vm721, %v4732, 0
        %v4788 = vsel %vm721, %v4733, 0
        %v4791 = vsel %vm721, %v4734, 0
        %v4794 = vsel %vm721, %v4735, 0
        %v4797 = vsel %vm721, %v4736, 0
        %v4800 = vsel %vm721, %v4737, 0
        %v4803 = vsel %vm721, %v4738, 0
        %v4806 = vsel %vm721, %v4739, 0
        %v4809 = vsel %vm721, %v4740, 0
        %v4812 = vsel %vm721, %v4741, 0
        %4814 = vmatprep.subr.bf16.mxu0 0
        %4815 = vmatpush1.bf16.msra.mxu0 0
        %4816 = vmatprep.subr.bf16.mxu0 0
        %4817 = vmatpush1.bf16.msra.mxu0 0
        %4818 = vmatprep.subr.bf16.mxu0 0
        %4819 = vmatpush1.bf16.msra.mxu0 0
        %4820 = vmatprep.subr.bf16.mxu0 0
        %4821 = vmatpush1.bf16.msra.mxu0 0
        %4822 = vmatprep.subr.bf16.mxu0 0
        %4823 = vmatpush1.bf16.msra.mxu0 %v4761
        %4824 = vmatprep.subr.bf16.mxu0 0
        %4825 = vmatpush1.bf16.msra.mxu0 %v4760
        %4826 = vmatprep.subr.bf16.mxu0 0
        %4827 = vmatpush1.bf16.msra.mxu0 %v4759
        %4828 = vmatprep.subr.bf16.mxu0 0
        %4829 = vmatpush1.bf16.msra.mxu0 %v4758
        %4830 = vmatprep.subr.bf16.mxu0 0
        %4831 = vmatpush2.bf16.msra.mxu0 0
        %4832 = vmatprep.subr.bf16.mxu0 0
        %4833 = vmatpush2.bf16.msra.mxu0 0
        %4834 = vmatprep.subr.bf16.mxu0 0
        %4835 = vmatpush2.bf16.msra.mxu0 0
        %4836 = vmatprep.subr.bf16.mxu0 0
        %4837 = vmatpush2.bf16.msra.mxu0 0
        %4838 = vmatprep.subr.bf16.mxu0 0
        %4839 = vmatpush2.bf16.msra.mxu0 0
        %4840 = vmatprep.subr.bf16.mxu0 0
        %4841 = vmatpush2.bf16.msra.mxu0 0
        %4842 = vmatprep.subr.bf16.mxu0 0
        %4843 = vmatpush2.bf16.msra.mxu0 0
        %4844 = vmatprep.subr.bf16.mxu0 0
        %4845 = vmatpush2.bf16.msra.mxu0 0
        %4846 = vmatprep.mubr.bf16.mxu0 0
        %4847 = vmatmul.mubr.bf16.gmra.mxu0 %v4767
        %v4848 = vpop.f32.mrf.mxu0
        %v4849 = vadd.f32 0.0, %v4848
        %v4850 = vpop.f32.mrf.mxu0
        %v4851 = vpop.f32.mrf.mxu0
        %v4852 = vadd.f32 0.0, %v4851
        %v4853 = vpop.f32.mrf.mxu0
        %4854 = vmatprep.mubr.bf16.mxu0 0
        %4855 = vmatmul.mubr.bf16.gmra.mxu0 %v4770
        %v4856 = vpop.f32.mrf.mxu0
        %v4857 = vadd.f32 0.0, %v4856
        %v4858 = vpop.f32.mrf.mxu0
        %v4859 = vpop.f32.mrf.mxu0
        %v4860 = vadd.f32 0.0, %v4859
        %v4861 = vpop.f32.mrf.mxu0
        %4862 = vmatprep.mubr.bf16.mxu0 0
        %4863 = vmatmul.mubr.bf16.gmra.mxu0 %v4773
        %v4864 = vpop.f32.mrf.mxu0
        %v4865 = vadd.f32 0.0, %v4864
        %v4866 = vpop.f32.mrf.mxu0
        %v4867 = vpop.f32.mrf.mxu0
        %v4868 = vadd.f32 0.0, %v4867
        %v4869 = vpop.f32.mrf.mxu0
        %4870 = vmatprep.mubr.bf16.mxu0 0
        %4871 = vmatmul.mubr.bf16.gmra.mxu0 %v4776
        %v4872 = vpop.f32.mrf.mxu0
        %v4873 = vadd.f32 0.0, %v4872
        %v4874 = vpop.f32.mrf.mxu0
        %v4875 = vpop.f32.mrf.mxu0
        %v4876 = vadd.f32 0.0, %v4875
        %v4877 = vpop.f32.mrf.mxu0
        %4878 = vmatprep.mubr.bf16.mxu0 0
        %4879 = vmatmul.mubr.bf16.gmra.mxu0 %v4779
        %v4880 = vpop.f32.mrf.mxu0
        %v4881 = vadd.f32 0.0, %v4880
        %v4882 = vpop.f32.mrf.mxu0
        %v4883 = vpop.f32.mrf.mxu0
        %v4884 = vadd.f32 0.0, %v4883
        %v4885 = vpop.f32.mrf.mxu0
        %4886 = vmatprep.mubr.bf16.mxu0 0
        %4887 = vmatmul.mubr.bf16.gmra.mxu0 %v4782
        %v4888 = vpop.f32.mrf.mxu0
        %v4889 = vadd.f32 0.0, %v4888
        %v4890 = vpop.f32.mrf.mxu0
        %v4891 = vpop.f32.mrf.mxu0
        %v4892 = vadd.f32 0.0, %v4891
        %v4893 = vpop.f32.mrf.mxu0
        %4894 = vmatprep.mubr.bf16.mxu0 0
        %4895 = vmatmul.mubr.bf16.gmra.mxu0 %v4785
        %v4896 = vpop.f32.mrf.mxu0
        %v4897 = vadd.f32 0.0, %v4896
        %v4898 = vpop.f32.mrf.mxu0
        %v4899 = vpop.f32.mrf.mxu0
        %v4900 = vadd.f32 0.0, %v4899
        %v4901 = vpop.f32.mrf.mxu0
        %4902 = vmatprep.mubr.bf16.mxu0 0
        %4903 = vmatmul.mubr.bf16.gmra.mxu0 %v4788
        %v4904 = vpop.f32.mrf.mxu0
        %v4905 = vadd.f32 0.0, %v4904
        %v4906 = vpop.f32.mrf.mxu0
        %v4907 = vpop.f32.mrf.mxu0
        %v4908 = vadd.f32 0.0, %v4907
        %v4909 = vpop.f32.mrf.mxu0
        %4910 = vmatprep.mubr.bf16.mxu0 0
        %4911 = vmatmul.mubr.bf16.gmra.mxu0 %v4791
        %v4912 = vpop.f32.mrf.mxu0
        %v4913 = vadd.f32 0.0, %v4912
        %v4914 = vpop.f32.mrf.mxu0
        %v4915 = vpop.f32.mrf.mxu0
        %v4916 = vadd.f32 0.0, %v4915
        %v4917 = vpop.f32.mrf.mxu0
        %4918 = vmatprep.mubr.bf16.mxu0 0
        %4919 = vmatmul.mubr.bf16.gmra.mxu0 %v4794
        %v4920 = vpop.f32.mrf.mxu0
        %v4921 = vadd.f32 0.0, %v4920
        %v4922 = vpop.f32.mrf.mxu0
        %v4923 = vpop.f32.mrf.mxu0
        %v4924 = vadd.f32 0.0, %v4923
        %v4925 = vpop.f32.mrf.mxu0
        %4926 = vmatprep.mubr.bf16.mxu0 0
        %4927 = vmatmul.mubr.bf16.gmra.mxu0 %v4797
        %v4928 = vpop.f32.mrf.mxu0
        %v4929 = vadd.f32 0.0, %v4928
        %v4930 = vpop.f32.mrf.mxu0
        %v4931 = vpop.f32.mrf.mxu0
        %v4932 = vadd.f32 0.0, %v4931
        %v4933 = vpop.f32.mrf.mxu0
        %4934 = vmatprep.mubr.bf16.mxu0 0
        %4935 = vmatmul.mubr.bf16.gmra.mxu0 %v4800
        %v4936 = vpop.f32.mrf.mxu0
        %v4937 = vadd.f32 0.0, %v4936
        %v4938 = vpop.f32.mrf.mxu0
        %v4939 = vpop.f32.mrf.mxu0
        %v4940 = vadd.f32 0.0, %v4939
        %v4941 = vpop.f32.mrf.mxu0
        %4942 = vmatprep.mubr.bf16.mxu0 0
        %4943 = vmatmul.mubr.bf16.gmra.mxu0 %v4803
        %v4944 = vpop.f32.mrf.mxu0
        %v4945 = vadd.f32 0.0, %v4944
        %v4946 = vpop.f32.mrf.mxu0
        %v4947 = vpop.f32.mrf.mxu0
        %v4948 = vadd.f32 0.0, %v4947
        %v4949 = vpop.f32.mrf.mxu0
        %4950 = vmatprep.mubr.bf16.mxu0 0
        %4951 = vmatmul.mubr.bf16.gmra.mxu0 %v4806
        %v4952 = vpop.f32.mrf.mxu0
        %v4953 = vadd.f32 0.0, %v4952
        %v4954 = vpop.f32.mrf.mxu0
        %v4955 = vpop.f32.mrf.mxu0
        %v4956 = vadd.f32 0.0, %v4955
        %v4957 = vpop.f32.mrf.mxu0
        %4958 = vmatprep.mubr.bf16.mxu0 0
        %4959 = vmatmul.mubr.bf16.gmra.mxu0 %v4809
        %v4960 = vpop.f32.mrf.mxu0
        %v4961 = vadd.f32 0.0, %v4960
        %v4962 = vpop.f32.mrf.mxu0
        %v4963 = vpop.f32.mrf.mxu0
        %v4964 = vadd.f32 0.0, %v4963
        %v4965 = vpop.f32.mrf.mxu0
        %4966 = vmatprep.mubr.bf16.mxu0 0
        %4967 = vmatmul.mubr.bf16.gmra.mxu0 %v4812
        %v4968 = vpop.f32.mrf.mxu0
        %v4969 = vadd.f32 0.0, %v4968
        %v4970 = vpop.f32.mrf.mxu0
        %v4971 = vpop.f32.mrf.mxu0
        %v4972 = vadd.f32 0.0, %v4971
        %v4973 = vpop.f32.mrf.mxu0
        %4974 = vdwg.mxu0
        %v4975 = vadd.f32 %v4477, %v4849
        %v4976 = vadd.f32 %v4478, %v4852
        %v4977 = vadd.f32 %v4479, %v4857
        %v4978 = vadd.f32 %v4480, %v4860
        %v4979 = vadd.f32 %v4481, %v4865
        %v4980 = vadd.f32 %v4482, %v4868
        %v4981 = vadd.f32 %v4483, %v4873
        %v4982 = vadd.f32 %v4484, %v4876
        %v4983 = vadd.f32 %v4485, %v4881
        %v4984 = vadd.f32 %v4486, %v4884
        %v4985 = vadd.f32 %v4487, %v4889
        %v4986 = vadd.f32 %v4488, %v4892
        %v4987 = vadd.f32 %v4489, %v4897
        %v4988 = vadd.f32 %v4490, %v4900
        %v4989 = vadd.f32 %v4491, %v4905
        %v4990 = vadd.f32 %v4492, %v4908
        %v4991 = vadd.f32 %v4493, %v4913
        %v4992 = vadd.f32 %v4494, %v4916
        %v4993 = vadd.f32 %v4495, %v4921
        %v4994 = vadd.f32 %v4496, %v4924
        %v4995 = vadd.f32 %v4497, %v4929
        %v4996 = vadd.f32 %v4498, %v4932
        %v4997 = vadd.f32 %v4499, %v4937
        %v4998 = vadd.f32 %v4500, %v4940
        %v4999 = vadd.f32 %v4501, %v4945
        %v5000 = vadd.f32 %v4502, %v4948
        %v5001 = vadd.f32 %v4503, %v4953
        %v5002 = vadd.f32 %v4504, %v4956
        %v5003 = vadd.f32 %v4505, %v4961
        %v5004 = vadd.f32 %v4506, %v4964
        %v5005 = vadd.f32 %v4507, %v4969
        %v5006 = vadd.f32 %v4508, %v4972
        %v5007 = vld [vmem:[%s2] sm:$0x1]
        %v5009 = vlaneseq
        %v5010 = vshrl.u32 %v5009, 7
        %v5011 = vsub.s32 0, %v5010
        %v5012 = vrot.slane %v5007, %v5011
        %v5014 = vmul.f32 %v4975, %v5012
        %v5015 = vmul.f32 %v4976, %v5012
        %v5016 = vmul.f32 %v4977, %v5012
        %v5017 = vmul.f32 %v4978, %v5012
        %v5018 = vmul.f32 %v4979, %v5012
        %v5019 = vmul.f32 %v4980, %v5012
        %v5020 = vmul.f32 %v4981, %v5012
        %v5021 = vmul.f32 %v4982, %v5012
        %v5022 = vmul.f32 %v4983, %v5012
        %v5023 = vmul.f32 %v4984, %v5012
        %v5024 = vmul.f32 %v4985, %v5012
        %v5025 = vmul.f32 %v4986, %v5012
        %v5026 = vmul.f32 %v4987, %v5012
        %v5027 = vmul.f32 %v4988, %v5012
        %v5028 = vmul.f32 %v4989, %v5012
        %v5029 = vmul.f32 %v4990, %v5012
        %v5030 = vmul.f32 %v4991, %v5012
        %v5031 = vmul.f32 %v4992, %v5012
        %v5032 = vmul.f32 %v4993, %v5012
        %v5033 = vmul.f32 %v4994, %v5012
        %v5034 = vmul.f32 %v4995, %v5012
        %v5035 = vmul.f32 %v4996, %v5012
        %v5036 = vmul.f32 %v4997, %v5012
        %v5037 = vmul.f32 %v4998, %v5012
        %v5038 = vmul.f32 %v4999, %v5012
        %v5039 = vmul.f32 %v5000, %v5012
        %v5040 = vmul.f32 %v5001, %v5012
        %v5041 = vmul.f32 %v5002, %v5012
        %v5042 = vmul.f32 %v5003, %v5012
        %v5043 = vmul.f32 %v5004, %v5012
        %v5044 = vmul.f32 %v5005, %v5012
        %v5045 = vmul.f32 %v5006, %v5012
        %v5046 = vld [vmem:[%s3] sm:$0x1]
        %v5048 = vlaneseq
        %v5049 = vshrl.u32 %v5048, 7
        %v5050 = vsub.s32 0, %v5049
        %v5051 = vrot.slane %v5046, %v5050
        %v5053 = vadd.f32 %v5014, %v5051
        %v5054 = vadd.f32 %v5015, %v5051
        %v5055 = vadd.f32 %v5016, %v5051
        %v5056 = vadd.f32 %v5017, %v5051
        %v5057 = vadd.f32 %v5018, %v5051
        %v5058 = vadd.f32 %v5019, %v5051
        %v5059 = vadd.f32 %v5020, %v5051
        %v5060 = vadd.f32 %v5021, %v5051
        %v5061 = vadd.f32 %v5022, %v5051
        %v5062 = vadd.f32 %v5023, %v5051
        %v5063 = vadd.f32 %v5024, %v5051
        %v5064 = vadd.f32 %v5025, %v5051
        %v5065 = vadd.f32 %v5026, %v5051
        %v5066 = vadd.f32 %v5027, %v5051
        %v5067 = vadd.f32 %v5028, %v5051
        %v5068 = vadd.f32 %v5029, %v5051
        %v5069 = vadd.f32 %v5030, %v5051
        %v5070 = vadd.f32 %v5031, %v5051
        %v5071 = vadd.f32 %v5032, %v5051
        %v5072 = vadd.f32 %v5033, %v5051
        %v5073 = vadd.f32 %v5034, %v5051
        %v5074 = vadd.f32 %v5035, %v5051
        %v5075 = vadd.f32 %v5036, %v5051
        %v5076 = vadd.f32 %v5037, %v5051
        %v5077 = vadd.f32 %v5038, %v5051
        %v5078 = vadd.f32 %v5039, %v5051
        %v5079 = vadd.f32 %v5040, %v5051
        %v5080 = vadd.f32 %v5041, %v5051
        %v5081 = vadd.f32 %v5042, %v5051
        %v5082 = vadd.f32 %v5043, %v5051
        %v5083 = vadd.f32 %v5044, %v5051
        %v5084 = vadd.f32 %v5045, %v5051
        %v5085 = vmax.f32 %v5053, 0.0
        %v5086 = vmax.f32 %v5054, 0.0
        %v5087 = vmax.f32 %v5055, 0.0
        %v5088 = vmax.f32 %v5056, 0.0
        %v5089 = vmax.f32 %v5057, 0.0
        %v5090 = vmax.f32 %v5058, 0.0
        %v5091 = vmax.f32 %v5059, 0.0
        %v5092 = vmax.f32 %v5060, 0.0
        %v5093 = vmax.f32 %v5061, 0.0
        %v5094 = vmax.f32 %v5062, 0.0
        %v5095 = vmax.f32 %v5063, 0.0
        %v5096 = vmax.f32 %v5064, 0.0
        %v5097 = vmax.f32 %v5065, 0.0
        %v5098 = vmax.f32 %v5066, 0.0
        %v5099 = vmax.f32 %v5067, 0.0
        %v5100 = vmax.f32 %v5068, 0.0
        %v5101 = vmax.f32 %v5069, 0.0
        %v5102 = vmax.f32 %v5070, 0.0
        %v5103 = vmax.f32 %v5071, 0.0
        %v5104 = vmax.f32 %v5072, 0.0
        %v5105 = vmax.f32 %v5073, 0.0
        %v5106 = vmax.f32 %v5074, 0.0
        %v5107 = vmax.f32 %v5075, 0.0
        %v5108 = vmax.f32 %v5076, 0.0
        %v5109 = vmax.f32 %v5077, 0.0
        %v5110 = vmax.f32 %v5078, 0.0
        %v5111 = vmax.f32 %v5079, 0.0
        %v5112 = vmax.f32 %v5080, 0.0
        %v5113 = vmax.f32 %v5081, 0.0
        %v5114 = vmax.f32 %v5082, 0.0
        %v5115 = vmax.f32 %v5083, 0.0
        %v5116 = vmax.f32 %v5084, 0.0
        %5117 = vst.msk [vmem:[%s190] sm:$0xff] %vm721, %v5085
        %5118 = vst.msk [vmem:[%s190 + $0x8] sm:$0xff] %vm721, %v5086
        %5119 = vst.msk [vmem:[%s190 + $0x10] sm:$0xff] %vm721, %v5087
        %5120 = vst.msk [vmem:[%s190 + $0x18] sm:$0xff] %vm721, %v5088
        %5121 = vst.msk [vmem:[%s190 + $0x20] sm:$0xff] %vm721, %v5089
        %5122 = vst.msk [vmem:[%s190 + $0x28] sm:$0xff] %vm721, %v5090
        %5123 = vst.msk [vmem:[%s190 + $0x30] sm:$0xff] %vm721, %v5091
        %5124 = vst.msk [vmem:[%s190 + $0x38] sm:$0xff] %vm721, %v5092
        %5125 = vst.msk [vmem:[%s190 + $0x40] sm:$0xff] %vm721, %v5093
        %5126 = vst.msk [vmem:[%s190 + $0x48] sm:$0xff] %vm721, %v5094
        %5127 = vst.msk [vmem:[%s190 + $0x50] sm:$0xff] %vm721, %v5095
        %5128 = vst.msk [vmem:[%s190 + $0x58] sm:$0xff] %vm721, %v5096
        %5129 = vst.msk [vmem:[%s190 + $0x60] sm:$0xff] %vm721, %v5097
        %5130 = vst.msk [vmem:[%s190 + $0x68] sm:$0xff] %vm721, %v5098
        %5131 = vst.msk [vmem:[%s190 + $0x70] sm:$0xff] %vm721, %v5099
        %5132 = vst.msk [vmem:[%s190 + $0x78] sm:$0xff] %vm721, %v5100
        %5133 = vst.msk [vmem:[%s190 + $0x80] sm:$0xff] %vm721, %v5101
        %5134 = vst.msk [vmem:[%s190 + $0x88] sm:$0xff] %vm721, %v5102
        %5135 = vst.msk [vmem:[%s190 + $0x90] sm:$0xff] %vm721, %v5103
        %5136 = vst.msk [vmem:[%s190 + $0x98] sm:$0xff] %vm721, %v5104
        %5137 = vst.msk [vmem:[%s190 + $0xa0] sm:$0xff] %vm721, %v5105
        %5138 = vst.msk [vmem:[%s190 + $0xa8] sm:$0xff] %vm721, %v5106
        %5139 = vst.msk [vmem:[%s190 + $0xb0] sm:$0xff] %vm721, %v5107
        %5140 = vst.msk [vmem:[%s190 + $0xb8] sm:$0xff] %vm721, %v5108
        %5141 = vst.msk [vmem:[%s190 + $0xc0] sm:$0xff] %vm721, %v5109
        %5142 = vst.msk [vmem:[%s190 + $0xc8] sm:$0xff] %vm721, %v5110
        %5143 = vst.msk [vmem:[%s190 + $0xd0] sm:$0xff] %vm721, %v5111
        %5144 = vst.msk [vmem:[%s190 + $0xd8] sm:$0xff] %vm721, %v5112
        %5145 = vst.msk [vmem:[%s190 + $0xe0] sm:$0xff] %vm721, %v5113
        %5146 = vst.msk [vmem:[%s190 + $0xe8] sm:$0xff] %vm721, %v5114
        %5147 = vst.msk [vmem:[%s190 + $0xf0] sm:$0xff] %vm721, %v5115
        %5148 = vst.msk [vmem:[%s190 + $0xf8] sm:$0xff] %vm721, %v5116
        %s5149 = sand.u32 %s115, 1
        %s5150 = scalar_lea.sflag [#allocation3], %s5149
        %s5151 = sand.u32 %s115, 1
        %s5152 = smul.addr %s5151, 256
        %s5153 = scalar_lea.vmem [#allocation2], %s5152
        // Predicated region
        $region37: #{up_forward.5} parent=35 // pred_check
          %p5154 = pneg %p125
        $region38: #{up_forward.5} parent=35 // pred_check_branch
          %5156 = sbr.rel (%p5154) target = $region40
        $region39: #{up_forward.5} parent=35 // pred_region
          %s5158 = ssub.s32 4096, 4096
          %5159 = vsyncadd %s5150, %s5158
          %s5160 = smul.addr %s18, 32
          %s5161 = smul.addr %s5160, 128
          %s5162 = scalar_lea.hbm %s4, %s5161
          %s5163 = sshll.u32 %s5153, 4
          %s5164 = int_to_ptr.vmem [resolvable:$true] %s5163
          %5169 = dma.vmem_to_hbm [thread:$0]  %s5164, 4096, %s5162, %s5150, 128, 128, 8
        $region40: #{up_forward.5} parent=35 // pred_fallthru
          _
      $region36: #{up_forward.5} parent=5 // pred_fallthru
        _
      %p5170 = scmp.le.s32.totalorder 2, %s13
      // Predicated region
      $region41: #{up_forward.5} parent=5 // pred_check
        %p5171 = pneg %p5170
      $region42: #{up_forward.5} parent=5 // pred_check_branch
        %5173 = sbr.rel (%p5171) target = $region44
      $region43: #{up_forward.5} parent=5 // pred_region
        %s5174 = ssub.s32 %s13, 2
        // Predicated region
        $region45: #{up_forward.5} parent=43 // pred_check
          %p5175 = pneg %p131
        $region46: #{up_forward.5} parent=43 // pred_check_branch
          %5177 = sbr.rel (%p5175) target = $region48
        $region47: #{up_forward.5} parent=43 // pred_region
          %s5178 = sand.u32 %s116, 1
          %s5179 = scalar_lea.sflag [#allocation3], %s5178
          %s5180 = sand.u32 %s116, 1
          %s5181 = smul.addr %s5180, 256
          %s5182 = scalar_lea.vmem [#allocation2], %s5181
          %5183 = dma.done %s5179, 4096
        $region48: #{up_forward.5} parent=43 // pred_fallthru
          _
      $region44: #{up_forward.5} parent=5 // pred_fallthru
        _
    $region6: #{up_forward.5} parent=1 // loop_footer
      %s17 = sadd.s32 1, %s13
    $region7: #{up_forward.5} parent=1 // loop_footer_branch
      %12 = sbr.rel target = $region3
    $region8: #{up_forward.5} parent=1 // loop_exit
      _
    %5184 = vsyncpa [#allocation3], 1
    %s5185 = scalar_lea.sflag [#allocation3], 1
    %5186 = vsyncpa %s5185, 1

</llo_original>
